<compile_context>
chip_gen: v5e
topology: v5e:2x2
jax: 0.10.0
libtpu: 0.0.40
codegen_flags: <defaults>
</compile_context>

<pallas_src>
import functools
import numpy as np
import jax
import jax.numpy as jnp
from jax import lax
from jax.experimental import pallas as pl
from jax.experimental.pallas import tpu as pltpu

_BN_EPS = 1e-5
_BF16 = jnp.bfloat16
_VMEM_LIMIT = 32 * 1024 * 1024        # <= 50% of v7x's 64 MiB per-TC VMEM


# ----------------------------------------------------------------------------------
# Tiling helpers
# ----------------------------------------------------------------------------------
def _pick_tile_mult8(n, cap):
    """Largest divisor of n that is a multiple of 8 and <= cap.  Among candidates
    within 2x of the largest, prefer one giving an even grid (keeps both v7x TCs busy)."""
    start = min(cap, n)
    start -= start % 8
    best = None
    t = start
    while t >= 8:
        if n % t == 0:
            if best is None:
                best = t
            if (n // t) % 2 == 0:
                return t
            if 2 * t <= best:          # don't shrink tiles below half the max
                break
        t -= 8
    return best


def _pallas_mm_tile(M, K, N):
    """M-tile for the Pallas matmul path, or None -> XLA.
    Narrow N (<64) => masked partial stores + near-empty MXU output: leave to XLA."""
    if not (M >= 256 and M % 8 == 0 and 64 <= N <= 1024 and K <= 4096):
        return None
    # ~12 MiB of double-buffered x/out tiles per step (weights add <= ~2.4 MiB).
    cap = max(256, min(8192, (12 * 1024 * 1024) // max(1, 4 * K + 8 * N)))
    return _pick_tile_mult8(M, cap)


# ----------------------------------------------------------------------------------
# Pallas kernel 1: matmul with fused per-column scale/shift + activation
#   (single K block, single N block -> no reduction grid, no accumulator scratch)
# ----------------------------------------------------------------------------------
def _mm_kernel(x_ref, w_ref, sc_ref, sh_ref, o_ref, *, act):
    y = jnp.dot(x_ref[...], w_ref[...], preferred_element_type=jnp.float32)
    y = y * sc_ref[...] + sh_ref[...]
    if act == "relu":
        y = jnp.maximum(y, 0.0)
    elif act == "sigmoid":
        y = jax.nn.sigmoid(y)
    o_ref[...] = y.astype(o_ref.dtype)


def dense(x, w, scale=None, shift=None, act="none", out_dtype=_BF16):
    """y = act((x @ w) * scale + shift); x:(M,K) w:(K,N).
    MXU-friendly shapes -> Pallas (bf16 MXU, f32 epilogue); narrow / tiny -> XLA bf16 dot."""
    M, K = x.shape
    K2, N = w.shape
    assert K == K2
    if scale is None:
        scale = jnp.ones((N,), jnp.float32)
    if shift is None:
        shift = jnp.zeros((N,), jnp.float32)
    scale = scale.astype(jnp.float32)
    shift = shift.astype(jnp.float32)

    tm = _pallas_mm_tile(M, K, N)
    if tm is None:
        y = jnp.dot(x.astype(_BF16), w.astype(_BF16),
                    preferred_element_type=jnp.float32)
        y = y * scale[None, :] + shift[None, :]
        if act == "relu":
            y = jnp.maximum(y, 0.0)
        elif act == "sigmoid":
            y = jax.nn.sigmoid(y)
        return y.astype(out_dtype)

    xb = x.astype(_BF16)
    wb = w.astype(_BF16)
    sc = scale.reshape(1, N)
    sh = shift.reshape(1, N)
    out = pl.pallas_call(
        functools.partial(_mm_kernel, act=act),
        out_shape=jax.ShapeDtypeStruct((M, N), out_dtype),
        grid_spec=pltpu.PrefetchScalarGridSpec(
            num_scalar_prefetch=0,
            grid=(M // tm,),
            in_specs=[
                pl.BlockSpec((tm, K), lambda i: (i, 0)),
                pl.BlockSpec((K, N), lambda i: (0, 0)),
                pl.BlockSpec((1, N), lambda i: (0, 0)),
                pl.BlockSpec((1, N), lambda i: (0, 0)),
            ],
            out_specs=pl.BlockSpec((tm, N), lambda i: (i, 0)),
        ),
        compiler_params=pltpu.CompilerParams(
            dimension_semantics=("parallel",),
            vmem_limit_bytes=_VMEM_LIMIT),
    )(xb, wb, sc, sh)
    return out


# ----------------------------------------------------------------------------------
# Convolution front-end
# ----------------------------------------------------------------------------------
def _fold_bn(bias, bn, out_ch):
    """Per-output-channel (scale, shift) folding conv bias + eval BatchNorm."""
    if bn is None:
        scale = jnp.ones((out_ch,), jnp.float32)
        shift = bias if bias is not None else jnp.zeros((out_ch,), jnp.float32)
        return scale, shift.astype(jnp.float32)
    gamma, beta, mean, var = bn
    s = gamma / jnp.sqrt(var + _BN_EPS)
    b0 = bias if bias is not None else jnp.zeros((out_ch,), jnp.float32)
    return s.astype(jnp.float32), ((b0 - mean) * s + beta).astype(jnp.float32)


def conv2d(x, w, b=None, bn=None, act="none", out_dtype=_BF16):
    """'same'-padded stride-1 conv.  x:(N,H,W,Cin); w: torch layout (O,I,kh,kw)."""
    N, H, Wd, C = x.shape
    O, I, kh, kw = w.shape
    assert I == C
    scale, shift = _fold_bn(b, bn, O)

    if kh == 1 and kw == 1:            # 1x1 conv == matmul over pixels
        y = dense(x.reshape(N * H * Wd, C), w.reshape(O, C).T,
                  scale, shift, act, out_dtype)
        return y.reshape(N, H, Wd, O)

    M = N * H * Wd
    K = kh * kw * C
    if _pallas_mm_tile(M, K, O) is not None:
        # MXU-dense path: channel-axis im2col (kh*kw*C) -> one big matmul per M-tile.
        ph, pw = kh // 2, kw // 2
        xp = jnp.pad(x.astype(_BF16), ((0, 0), (ph, ph), (pw, pw), (0, 0)))
        cols = [xp[:, dy:dy + H, dx:dx + Wd, :] for dy in range(kh) for dx in range(kw)]
        xim = jnp.concatenate(cols, axis=-1).reshape(M, K)
        wm = jnp.transpose(w, (2, 3, 1, 0)).reshape(K, O)      # (ky,kx,ci) ordering
        y = dense(xim, wm, scale, shift, act, out_dtype)
        return y.reshape(N, H, Wd, O)

    # Narrow-output / small convs: XLA bf16 conv on the raw input
    # (no im2col HBM blow-up on the bandwidth-bound big-spatial levels).
    y = lax.conv_general_dilated(
        x.astype(_BF16), jnp.transpose(w, (2, 3, 1, 0)).astype(_BF16),
        window_strides=(1, 1), padding='SAME',
        dimension_numbers=('NHWC', 'HWIO', 'NHWC'),
        preferred_element_type=jnp.float32)
    y = y * scale[None, None, None, :] + shift[None, None, None, :]
    if act == "relu":
        y = jnp.maximum(y, 0.0)
    elif act == "sigmoid":
        y = jax.nn.sigmoid(y)
    return y.astype(out_dtype)


# ----------------------------------------------------------------------------------
# Pallas kernel 2: batched non-local (embedded Gaussian) attention.
#   One grid step per sample; the (HW, HW) score matrix never leaves VMEM.
#   theta/phi/g arrive fused on the lane axis and are sliced in-kernel.
# ----------------------------------------------------------------------------------
def _nl_attn_kernel(qkv_ref, o_ref, *, inter):
    qkv = qkv_ref[0]                           # (HW, 3*inter) bf16
    t = qkv[:, 0:inter]
    p = qkv[:, inter:2 * inter]
    g = qkv[:, 2 * inter:3 * inter]
    s = lax.dot_general(t, p, (((1,), (1,)), ((), ())),
                        preferred_element_type=jnp.float32)      # (HW, HW) f32
    m = jnp.max(s, axis=-1, keepdims=True)
    e = jnp.exp(s - m)
    den = jnp.sum(e, axis=-1, keepdims=True)
    # Deferred normalization: un-normalized AV matmul in bf16, then scale the small
    # (HW, inter) result with an EUP approx reciprocal of the (HW, 1) denominator.
    y = lax.dot_general(e.astype(g.dtype), g, (((1,), (0,)), ((), ())),
                        preferred_element_type=jnp.float32)      # (HW, inter) f32
    y = y * pl.reciprocal(den, approx=True)
    o_ref[0] = y.astype(o_ref.dtype)


def nonlocal_attention(qkv, inter):
    N, HW, C3 = qkv.shape
    assert C3 == 3 * inter
    return pl.pallas_call(
        functools.partial(_nl_attn_kernel, inter=inter),
        out_shape=jax.ShapeDtypeStruct((N, HW, inter), _BF16),
        grid_spec=pltpu.PrefetchScalarGridSpec(
            num_scalar_prefetch=0,
            grid=(N,),
            in_specs=[pl.BlockSpec((1, HW, C3), lambda n: (n, 0, 0))],
            out_specs=pl.BlockSpec((1, HW, inter), lambda n: (n, 0, 0)),
        ),
        compiler_params=pltpu.CompilerParams(
            dimension_semantics=("parallel",),
            vmem_limit_bytes=_VMEM_LIMIT),
    )(qkv.astype(_BF16))


# ----------------------------------------------------------------------------------
# Small XLA glue ops (cheap / tiny - not worth a Pallas launch)
# ----------------------------------------------------------------------------------
def deconv2x2(x, w, b):
    """ConvTranspose2d(kernel=2, stride=2).  w: torch (Cin, Cout, 2, 2)."""
    N, H, W, Ci = x.shape
    Co = w.shape[1]
    wm = jnp.transpose(w, (0, 2, 3, 1)).reshape(Ci, 4 * Co)   # cols ordered (kh,kw,co)
    shift = jnp.tile(b, 4)
    y = dense(x.reshape(N * H * W, Ci), wm, None, shift)
    y = y.reshape(N, H, W, 2, 2, Co).transpose(0, 1, 3, 2, 4, 5)
    return y.reshape(N, 2 * H, 2 * W, Co)


def linear(x, w, b, act="none"):
    """x:(M,in), torch weight (out,in).  Tiny M -> runs as XLA inside dense()."""
    return dense(x, jnp.transpose(w), None, b, act, out_dtype=jnp.float32)


def maxpool2x2(x):
    N, H, W, C = x.shape
    H2, W2 = H // 2, W // 2
    x = x[:, :H2 * 2, :W2 * 2, :].reshape(N, H2, 2, W2, 2, C)
    return jnp.max(x, axis=(2, 4))


def _interp_matrix(in_size, out_size, align_corners):
    m = np.zeros((out_size, in_size), np.float32)
    for d in range(out_size):
        if align_corners:
            src = d * (in_size - 1) / (out_size - 1) if out_size > 1 else 0.0
        else:
            src = (d + 0.5) * in_size / out_size - 0.5
            src = min(max(src, 0.0), in_size - 1)
        i0 = min(int(np.floor(src)), in_size - 1)
        i1 = min(i0 + 1, in_size - 1)
        w1 = src - i0
        m[d, i0] += 1.0 - w1
        m[d, i1] += w1
    return jnp.asarray(m)


def bilinear_resize(x, out_h, out_w, align_corners):
    """Separable bilinear resize as channel-last contractions (no layout transposes)."""
    x = x.astype(jnp.float32)
    N, H, W, C = x.shape
    if H != out_h:
        Rh = _interp_matrix(H, out_h, align_corners)
        x = jnp.einsum('oh,nhwc->nowc', Rh, x)
    if W != out_w:
        Rw = _interp_matrix(W, out_w, align_corners)
        x = jnp.einsum('ow,nhwc->nhoc', Rw, x)
    return x


# ----------------------------------------------------------------------------------
# CA-Net modules
# ----------------------------------------------------------------------------------
def conv_block(p, x):
    x = conv2d(x, p['w1'], p['b1'], bn=p['bn1'], act="relu")
    x = conv2d(x, p['w2'], p['b2'], bn=p['bn2'], act="relu")
    # TODO(synk): Dropout2d is stochastic in training mode; eval-mode identity used here.
    return x


def upcat(p, skip, down, key):
    up = deconv2x2(down, p['w'], p['b'])
    off = skip.shape[2] - up.shape[2]      # width offset (NHWC axis 2 == NCHW dim 3)
    if off > 0:
        # Reference CA-Net UpCat pads the deconv output with torch.rand values.
        add = jax.random.uniform(key, (up.shape[0], up.shape[1], off, up.shape[3]),
                                 dtype=jnp.float32).astype(up.dtype)
        up = jnp.concatenate([up, add], axis=2)
    return jnp.concatenate([skip.astype(up.dtype), up], axis=-1)


def se_conv_block(p, x):
    x = conv2d(x, p['c1_w'], p['c1_b'], bn=p['c1_bn'], act="relu")
    x = conv2d(x, p['c2_w'], p['c2_b'], bn=p['c2_bn'], act="relu")
    xf = x.astype(jnp.float32)
    avg = jnp.mean(xf, axis=(1, 2))
    mx = jnp.max(xf, axis=(1, 2))

    def mlp(v):
        h = linear(v, p['fc1_w'], p['fc1_b'], act="relu")
        return linear(h, p['fc2_w'], p['fc2_b'])

    att = jax.nn.sigmoid(mlp(avg) + mlp(mx))      # (N, C)
    out = (xf * att[:, None, None, :]).astype(_BF16)
    # TODO(synk): drop_out branch treated as identity (eval semantics).
    return out, att


def grid_attention(p, x, g):
    theta_x = conv2d(x, p['theta_w'])                                    # no bias
    phi_g = conv2d(g, p['phi_w'], p['phi_b'])
    phi_g = bilinear_resize(phi_g, x.shape[1], x.shape[2], align_corners=False)
    f = jnp.maximum(theta_x.astype(jnp.float32) + phi_g, 0.0)
    sig = conv2d(f, p['psi_w'], p['psi_b'], act="sigmoid",
                 out_dtype=jnp.float32)                                  # (N,H,W,1)
    y = sig * x.astype(jnp.float32)
    wy = conv2d(y, p['Wc_w'], p['Wc_b'], bn=p['Wc_bn'])
    return wy, sig


def multi_attention_block(p, x, g):
    gate, att = grid_attention(p, x, g)
    out = conv2d(gate, p['comb_w'], p['comb_b'], bn=p['comb_bn'], act="relu")
    return out, att


def nonlocal_block(p, x):
    """Embedded-Gaussian non-local block with fused theta/phi/g projection."""
    N, H, W, C = x.shape
    inter = p['inter']
    wq = jnp.concatenate([p['th_w'], p['ph_w'], p['g_w']], axis=0)   # (3*inter, C, 1, 1)
    bq = jnp.concatenate([p['th_b'], p['ph_b'], p['g_b']], axis=0)
    qkv = conv2d(x, wq, bq).reshape(N, H * W, 3 * inter)             # one contiguous stream
    y = nonlocal_attention(qkv, inter).reshape(N, H, W, inter)
    wy = conv2d(y, p['W_w'], p['W_b'], bn=p['W_bn'])
    return wy + x


def unet_dsv(p, x, out_hw):
    y = conv2d(x, p['w'], p['b'], out_dtype=jnp.float32)
    return bilinear_resize(y, out_hw[0], out_hw[1], align_corners=False)


def scale_atten_convblock(p, x):
    # TODO(synk): internals reconstructed from the CA-Net reference (source not given):
    # 3x3 conv (16->4)+BN, channel attention (avg+max shared MLP), spatial attention
    # (7x7 conv on [mean,max] maps), ReLU.
    out = conv2d(x, p['c_w'], p['c_b'], bn=p['c_bn'])
    outf = out.astype(jnp.float32)
    avg = jnp.mean(outf, axis=(1, 2))
    mx = jnp.max(outf, axis=(1, 2))

    def mlp(v):
        h = linear(v, p['fc1_w'], p['fc1_b'], act="relu")
        return linear(h, p['fc2_w'], p['fc2_b'])

    catt = jax.nn.sigmoid(mlp(avg) + mlp(mx))
    outf = outf * catt[:, None, None, :]
    sp = jnp.concatenate([jnp.mean(outf, axis=-1, keepdims=True),
                          jnp.max(outf, axis=-1, keepdims=True)], axis=-1)
    # TODO(synk): tiny reconstructed 7x7 / 2-channel spatial-attention conv kept in XLA.
    rhs = jnp.transpose(p['sp_w'], (2, 3, 1, 0)).astype(jnp.float32)     # (7,7,2,1)
    satt = lax.conv_general_dilated(sp, rhs, (1, 1), 'SAME',
                                    dimension_numbers=('NHWC', 'HWIO', 'NHWC'))
    satt = jax.nn.sigmoid(satt + p['sp_b'].reshape(1, 1, 1, 1))
    outf = outf * satt
    return jnp.maximum(outf, 0.0)


# ----------------------------------------------------------------------------------
# Parameter construction (deterministic, synthetic)
# ----------------------------------------------------------------------------------
class ParamGen:
    def __init__(self, key):
        self._key = key

    def normal(self, shape):
        self._key, sub = jax.random.split(self._key)
        return jax.random.normal(sub, shape, jnp.float32)


def _init_conv(gen, o, i, k):
    fan_in = i * k * k
    w = gen.normal((o, i, k, k)) * np.sqrt(2.0 / fan_in)
    return w, jnp.zeros((o,), jnp.float32)


def _init_deconv(gen, i, o):
    w = gen.normal((i, o, 2, 2)) * np.sqrt(2.0 / (i * 4))
    return w, jnp.zeros((o,), jnp.float32)


def _init_linear(gen, o, i):
    w = gen.normal((o, i)) * np.sqrt(1.0 / i)
    return w, jnp.zeros((o,), jnp.float32)


def _init_bn(gen, c):
    gamma = 1.0 + 0.05 * gen.normal((c,))
    beta = 0.05 * gen.normal((c,))
    mean = 0.05 * gen.normal((c,))
    var = jnp.ones((c,), jnp.float32)
    return (gamma, beta, mean, var)


def build_params(key, in_ch=3, n_classes=2, feature_scale=4):
    gen = ParamGen(key)
    f = [int(x / feature_scale) for x in [64, 128, 256, 512, 1024]]   # [16,32,64,128,256]
    P = {'filters': f, 'n_classes': n_classes}

    def conv_block_p(ci, co):
        w1, b1 = _init_conv(gen, co, ci, 3)
        bn1 = _init_bn(gen, co)
        w2, b2 = _init_conv(gen, co, co, 3)
        bn2 = _init_bn(gen, co)
        return dict(w1=w1, b1=b1, bn1=bn1, w2=w2, b2=b2, bn2=bn2)

    P['conv1'] = conv_block_p(in_ch, f[0])
    P['conv2'] = conv_block_p(f[0], f[1])
    P['conv3'] = conv_block_p(f[1], f[2])
    P['conv4'] = conv_block_p(f[2], f[3])
    P['center'] = conv_block_p(f[3], f[4])

    def multi_att_p(in_size, gate_size, inter):
        theta_w, _ = _init_conv(gen, inter, in_size, 1)
        phi_w, phi_b = _init_conv(gen, inter, gate_size, 1)
        psi_w, psi_b = _init_conv(gen, 1, inter, 1)
        Wc_w, Wc_b = _init_conv(gen, in_size, in_size, 1)
        Wc_bn = _init_bn(gen, in_size)
        comb_w, comb_b = _init_conv(gen, in_size, in_size, 1)
        comb_bn = _init_bn(gen, in_size)
        return dict(theta_w=theta_w, phi_w=phi_w, phi_b=phi_b, psi_w=psi_w, psi_b=psi_b,
                    Wc_w=Wc_w, Wc_b=Wc_b, Wc_bn=Wc_bn,
                    comb_w=comb_w, comb_b=comb_b, comb_bn=comb_bn)

    P['att2'] = multi_att_p(f[1], f[2], f[1])
    P['att3'] = multi_att_p(f[2], f[3], f[2])

    inter4 = f[4] // 4
    g_w, g_b = _init_conv(gen, inter4, f[4], 1)
    th_w, th_b = _init_conv(gen, inter4, f[4], 1)
    ph_w, ph_b = _init_conv(gen, inter4, f[4], 1)
    Wn_w, Wn_b = _init_conv(gen, f[4], inter4, 1)
    Wn_bn = _init_bn(gen, f[4])
    P['nonlocal'] = dict(inter=inter4, g_w=g_w, g_b=g_b, th_w=th_w, th_b=th_b,
                         ph_w=ph_w, ph_b=ph_b, W_w=Wn_w, W_b=Wn_b, W_bn=Wn_bn)

    def upcat_p(i, o):
        w, b = _init_deconv(gen, i, o)
        return dict(w=w, b=b)

    P['up_concat4'] = upcat_p(f[4], f[3])
    P['up_concat3'] = upcat_p(f[3], f[2])
    P['up_concat2'] = upcat_p(f[2], f[1])
    P['up_concat1'] = upcat_p(f[1], f[0])

    def se_p(ci, co):
        w1, b1 = _init_conv(gen, co, ci, 3)
        bn1 = _init_bn(gen, co)
        w2, b2 = _init_conv(gen, co, co, 3)
        bn2 = _init_bn(gen, co)
        fc1_w, fc1_b = _init_linear(gen, co // 2, co)
        fc2_w, fc2_b = _init_linear(gen, co, co // 2)
        return dict(c1_w=w1, c1_b=b1, c1_bn=bn1, c2_w=w2, c2_b=b2, c2_bn=bn2,
                    fc1_w=fc1_w, fc1_b=fc1_b, fc2_w=fc2_w, fc2_b=fc2_b)

    P['up4'] = se_p(f[4], f[3])
    P['up3'] = se_p(f[3], f[2])
    P['up2'] = se_p(f[2], f[1])
    P['up1'] = se_p(f[1], f[0])

    def dsv_p(ci):
        w, b = _init_conv(gen, 4, ci, 1)
        return dict(w=w, b=b)

    P['dsv4'] = dsv_p(f[3])
    P['dsv3'] = dsv_p(f[2])
    P['dsv2'] = dsv_p(f[1])
    P['dsv1'] = dsv_p(f[0])

    c_w, c_b = _init_conv(gen, 4, 16, 3)
    c_bn = _init_bn(gen, 4)
    fc1_w, fc1_b = _init_linear(gen, 2, 4)
    fc2_w, fc2_b = _init_linear(gen, 4, 2)
    sp_w, sp_b = _init_conv(gen, 1, 2, 7)
    P['scale_att'] = dict(c_w=c_w, c_b=c_b, c_bn=c_bn, fc1_w=fc1_w, fc1_b=fc1_b,
                          fc2_w=fc2_w, fc2_b=fc2_b, sp_w=sp_w, sp_b=sp_b)

    fin_w, fin_b = _init_conv(gen, n_classes, 4, 1)
    P['final'] = dict(w=fin_w, b=fin_b)
    return P


# ----------------------------------------------------------------------------------
# Full forward pass
# ----------------------------------------------------------------------------------
def comprehensive_atten_unet_forward(P, x_nchw, rng, out_size=(224, 300), image_size=224):
    x = jnp.transpose(x_nchw, (0, 2, 3, 1)).astype(jnp.float32)   # NCHW -> NHWC

    # inputs = F.interpolate(inputs, size=(224, 300), mode='bilinear', align_corners=True)
    x = bilinear_resize(x, out_size[0], out_size[1], align_corners=True)

    c1 = conv_block(P['conv1'], x)
    p1 = maxpool2x2(c1)
    c2 = conv_block(P['conv2'], p1)
    p2 = maxpool2x2(c2)
    c3 = conv_block(P['conv3'], p2)
    p3 = maxpool2x2(c3)
    c4 = conv_block(P['conv4'], p3)
    p4 = maxpool2x2(c4)
    center = conv_block(P['center'], p4)

    k1, k2, k3, k4 = jax.random.split(rng, 4)

    up4cat = upcat(P['up_concat4'], c4, center, k1)
    g_conv4 = nonlocal_block(P['nonlocal'], up4cat)
    up4, _att4 = se_conv_block(P['up4'], g_conv4)

    g_conv3, _att3 = multi_attention_block(P['att3'], c3, up4)
    up3cat = upcat(P['up_concat3'], g_conv3, up4, k2)
    up3, _aw3 = se_conv_block(P['up3'], up3cat)

    g_conv2, _att2 = multi_attention_block(P['att2'], c2, up3)
    up2cat = upcat(P['up_concat2'], g_conv2, up3, k3)
    up2, _aw2 = se_conv_block(P['up2'], up2cat)

    up1cat = upcat(P['up_concat1'], c1, up2, k4)
    up1, _aw1 = se_conv_block(P['up1'], up1cat)

    dsv4 = unet_dsv(P['dsv4'], up4, out_size)
    dsv3 = unet_dsv(P['dsv3'], up3, out_size)
    dsv2 = unet_dsv(P['dsv2'], up2, out_size)
    dsv1 = conv2d(up1, P['dsv1']['w'], P['dsv1']['b'], out_dtype=jnp.float32)
    dsv_cat = jnp.concatenate([dsv1, dsv2, dsv3, dsv4], axis=-1)      # 16 channels, f32

    out = scale_atten_convblock(P['scale_att'], dsv_cat)              # (N,H,W,4) f32

    # final 1x1 conv (4 -> n_classes) + Softmax2d, fused in XLA (skinny 2-lane output).
    wf = P['final']['w'].reshape(P['n_classes'], 4)
    logits = jnp.einsum('nhwc,oc->nhwo', out, wf) + P['final']['b'].reshape(1, 1, 1, -1)
    probs = jax.nn.softmax(logits, axis=-1)

    # F.interpolate(out, size=[image_size, image_size], align_corners=True)
    probs = bilinear_resize(probs, image_size, image_size, align_corners=True)

    return jnp.transpose(probs, (0, 3, 1, 2))                         # back to NCHW


# ----------------------------------------------------------------------------------
# Main
# ----------------------------------------------------------------------------------
if __name__ == "__main__":
    key = jax.random.PRNGKey(0)
    k_param, k_input, k_fwd = jax.random.split(key, 3)

    params = build_params(k_param, in_ch=3, n_classes=2, feature_scale=4)
    x = jax.random.normal(k_input, (2, 3, 16, 16), jnp.float32)       # small NCHW input

    out = comprehensive_atten_unet_forward(params, x, k_fwd)
    out = jax.block_until_ready(out)

    assert out.shape == (2, 2, 224, 224), out.shape
    assert bool(jnp.all(jnp.isfinite(out)))
    # channel softmax should sum to 1 (bilinear interp of a softmax stays a convex comb.)
    s = jnp.sum(out, axis=1)
    assert bool(jnp.allclose(s, 1.0, atol=1e-3))

    print("KERNEL_OK")
</pallas_src>

<mosaic_0001>
module attributes {stable_mosaic.version = 11 : i64} {
  func.func @_mm_kernel(%arg0: i32, %arg1: memref<4200x288xbf16, #tpu.memory_space<vmem>>, %arg2: memref<288x64xbf16, #tpu.memory_space<vmem>>, %arg3: memref<1x64xf32, #tpu.memory_space<vmem>>, %arg4: memref<1x64xf32, #tpu.memory_space<vmem>>, %arg5: memref<4200x64xbf16, #tpu.memory_space<vmem>>) attributes {dimension_semantics = [#tpu.dimension_semantics<parallel>], iteration_bounds = array<i64: 2>, scalar_prefetch = 0 : i64, scratch_operands = 0 : i64, tpu.core_type = #tpu.core_type<tc>, window_params = [{transform_indices = @transform_0, window_bounds = array<i64: 4200, 288>}, {pipeline_mode = #tpu.pipeline_mode<synchronous>, transform_indices = @transform_1, window_bounds = array<i64: 288, 64>}, {pipeline_mode = #tpu.pipeline_mode<synchronous>, transform_indices = @transform_2, window_bounds = array<i64: 1, 64>}, {pipeline_mode = #tpu.pipeline_mode<synchronous>, transform_indices = @transform_3, window_bounds = array<i64: 1, 64>}, {transform_indices = @transform_4, window_bounds = array<i64: 4200, 64>}]} {
    %c0 = arith.constant 0 : index
    %c0_0 = arith.constant 0 : index
    %0 = vector.load %arg1[%c0, %c0_0] : memref<4200x288xbf16, #tpu.memory_space<vmem>>, vector<4200x288xbf16>
    %c0_1 = arith.constant 0 : index
    %c0_2 = arith.constant 0 : index
    %1 = vector.load %arg2[%c0_1, %c0_2] : memref<288x64xbf16, #tpu.memory_space<vmem>>, vector<288x64xbf16>
    %cst = arith.constant dense<0.000000e+00> : vector<4200x64xf32>
    %2 = tpu.matmul %0, %1, %cst {dimension_numbers = #tpu.dot_dimension_numbers<[1], [0], [0], [1], [0, 0, 1, 1], [], []>} : vector<4200x288xbf16>, vector<288x64xbf16>, vector<4200x64xf32> -> vector<4200x64xf32>
    %c0_3 = arith.constant 0 : index
    %c0_4 = arith.constant 0 : index
    %3 = vector.load %arg3[%c0_3, %c0_4] : memref<1x64xf32, #tpu.memory_space<vmem>>, vector<1x64xf32>
    %4 = vector.broadcast %3 : vector<1x64xf32> to vector<4200x64xf32>
    %5 = arith.mulf %2, %4 : vector<4200x64xf32>
    %c0_5 = arith.constant 0 : index
    %c0_6 = arith.constant 0 : index
    %6 = vector.load %arg4[%c0_5, %c0_6] : memref<1x64xf32, #tpu.memory_space<vmem>>, vector<1x64xf32>
    %7 = vector.broadcast %6 : vector<1x64xf32> to vector<4200x64xf32>
    %8 = arith.addf %5, %7 : vector<4200x64xf32>
    %cst_7 = arith.constant 0.000000e+00 : f32
    %9 = vector.broadcast %cst_7 : f32 to vector<4200x64xf32>
    %10 = arith.maximumf %8, %9 : vector<4200x64xf32>
    %11 = arith.truncf %10 : vector<4200x64xf32> to vector<4200x64xbf16>
    %c0_8 = arith.constant 0 : index
    %c0_9 = arith.constant 0 : index
    %12 = vector.load %arg5[%c0_8, %c0_9] : memref<4200x64xbf16, #tpu.memory_space<vmem>>, vector<4200x64xbf16>
    tpu.vector_store %arg5[%c0_8, %c0_9], %11 {strides = array<i32>} : memref<4200x64xbf16, #tpu.memory_space<vmem>>, vector<4200x64xbf16>,
    return
  }
  func.func @transform_0(%arg0: i32) -> (i32, i32) {
    %c0_i32 = arith.constant 0 : i32
    %c0_i32_0 = arith.constant 0 : i32
    return %arg0, %c0_i32 : i32, i32
  }
  func.func @transform_1(%arg0: i32) -> (i32, i32) {
    %c0_i32 = arith.constant 0 : i32
    %c0_i32_0 = arith.constant 0 : i32
    %c0_i32_1 = arith.constant 0 : i32
    return %c0_i32, %c0_i32_0 : i32, i32
  }
  func.func @transform_2(%arg0: i32) -> (i32, i32) {
    %c0_i32 = arith.constant 0 : i32
    %c0_i32_0 = arith.constant 0 : i32
    %c0_i32_1 = arith.constant 0 : i32
    return %c0_i32, %c0_i32_0 : i32, i32
  }
  func.func @transform_3(%arg0: i32) -> (i32, i32) {
    %c0_i32 = arith.constant 0 : i32
    %c0_i32_0 = arith.constant 0 : i32
    %c0_i32_1 = arith.constant 0 : i32
    return %c0_i32, %c0_i32_0 : i32, i32
  }
  func.func @transform_4(%arg0: i32) -> (i32, i32) {
    %c0_i32 = arith.constant 0 : i32
    %c0_i32_0 = arith.constant 0 : i32
    return %arg0, %c0_i32 : i32, i32
  }
}

</mosaic_0001>

<llo_original>
// kernel: tpu_custom_call.1
$region0: #{tpu_custom_call.1}
  #allocation0 [shape = 'u32[]', space=smem, size = 0x4, offset = 0x4, fixed_abs, tag = 'smem constant byte address 0x4 - core index']
  #allocation1 [shape = 'u32[72,128]{1,0:T(1,128)}', space=vmem, size = 0x9000, scoped, tag = 'internal scratch']
  %s0 = inlined_call_operand.vmem [shape: bf16[8400,288], index: 0, kind: input, shape index: {}]
  %s1 = inlined_call_operand.vmem [shape: bf16[288,64], index: 1, kind: input, shape index: {}]
  %s2 = inlined_call_operand.vmem [shape: f32[1,64], index: 2, kind: input, shape index: {}]
  %s3 = inlined_call_operand.vmem [shape: f32[1,64], index: 3, kind: input, shape index: {}]
  %s4 = inlined_call_operand.vmem [shape: bf16[8400,64], index: 4, kind: output, shape index: {}]
  %s5 = sld [smem:[#allocation0]]
  $region49: #{tpu_custom_call.1} parent=0
    _
  %s7 = ssub.s32 1, %s5
  %s8 = scalar_select 0, %s7, %s5
  loop: start=0, step=1, limit=4
  $region2: #{tpu_custom_call.1} parent=0 // loop_pre_header
    _
  $region3: #{tpu_custom_call.1} parent=0 // loop_header
    %s10 = sphi 0, %s14
    %p11 = scmp.ge.s32.totalorder %s10, 4
    %s20 = sphi 0, %s22
    %s23 = sphi 0, %s20
    %s24 = sphi 0, %s23
    %s40 = sphi 0, %s24
    %s44 = sphi 0, %s44
    %s46 = sphi 0, %s44
    %s47 = sphi 0, %s46
    %s61 = sphi 0, %s47
    %s65 = sphi 0, %s65
    %s67 = sphi 0, %s65
    %s68 = sphi 0, %s67
    %s82 = sphi 0, %s68
    %s86 = sphi 0, %s86
    %s88 = sphi 0, %s86
    %s89 = sphi 0, %s88
    %s103 = sphi 0, %s89
    %s109 = sphi 0, %s111
    %s112 = sphi 0, %s109
    %s113 = sphi 0, %s112
    %s129 = sphi 0, %s113
  $region4: #{tpu_custom_call.1} parent=0 // loop_header_branch
    %13 = sbr.rel (%p11) target = $region8
  $region5: #{tpu_custom_call.1} parent=0 // loop_body
    %s15 = ssub.s32 %s10, 1
    %s16 = ssub.s32 %s10, 2
    %s17 = sadd.s32 %s10, 1
    %s18 = ssub.s32 %s10, %s17
    %p19 = scmp.eq.s32.totalorder %s18, 0
    %s21 = sadd.s32 %s20, 1
    %s22 = scalar_select %p19, %s20, %s21
    %p25 = pneg %p19
    %p26 = scmp.eq.s32.totalorder %s10, 1
    %p27 = por %p25, %p26
    %p28 = scmp.ne.s32.totalorder %s20, %s23
    %p29 = scmp.eq.s32.totalorder %s10, 0
    %p30 = por %p28, %p29
    %p31 = scmp.ne.s32.totalorder %s20, %s23
    %p32 = scmp.eq.s32.totalorder %s15, 1
    %p33 = por %p31, %p32
    %p34 = scmp.ne.s32.totalorder %s23, %s24
    %p35 = scmp.eq.s32.totalorder %s15, 0
    %p36 = por %p34, %p35
    %p37 = scmp.ne.s32.totalorder %s23, %s24
    %p38 = scmp.eq.s32.totalorder %s16, 1
    %p39 = por %p37, %p38
    %p41 = scmp.ne.s32.totalorder %s24, %s40
    %p42 = scmp.eq.s32.totalorder %s16, 0
    %p43 = por %p41, %p42
    %s45 = sadd.s32 %s44, 1
    %p48 = scmp.eq.s32.totalorder %s10, 1
    %p49 = scmp.ne.s32.totalorder %s44, %s46
    %p50 = scmp.eq.s32.totalorder %s10, 0
    %p51 = por %p49, %p50
    %p52 = scmp.ne.s32.totalorder %s44, %s46
    %p53 = scmp.eq.s32.totalorder %s15, 1
    %p54 = por %p52, %p53
    %p55 = scmp.ne.s32.totalorder %s46, %s47
    %p56 = scmp.eq.s32.totalorder %s15, 0
    %p57 = por %p55, %p56
    %p58 = scmp.ne.s32.totalorder %s46, %s47
    %p59 = scmp.eq.s32.totalorder %s16, 1
    %p60 = por %p58, %p59
    %p62 = scmp.ne.s32.totalorder %s47, %s61
    %p63 = scmp.eq.s32.totalorder %s16, 0
    %p64 = por %p62, %p63
    %s66 = sadd.s32 %s65, 1
    %p69 = scmp.eq.s32.totalorder %s10, 1
    %p70 = scmp.ne.s32.totalorder %s65, %s67
    %p71 = scmp.eq.s32.totalorder %s10, 0
    %p72 = por %p70, %p71
    %p73 = scmp.ne.s32.totalorder %s65, %s67
    %p74 = scmp.eq.s32.totalorder %s15, 1
    %p75 = por %p73, %p74
    %p76 = scmp.ne.s32.totalorder %s67, %s68
    %p77 = scmp.eq.s32.totalorder %s15, 0
    %p78 = por %p76, %p77
    %p79 = scmp.ne.s32.totalorder %s67, %s68
    %p80 = scmp.eq.s32.totalorder %s16, 1
    %p81 = por %p79, %p80
    %p83 = scmp.ne.s32.totalorder %s68, %s82
    %p84 = scmp.eq.s32.totalorder %s16, 0
    %p85 = por %p83, %p84
    %s87 = sadd.s32 %s86, 1
    %p90 = scmp.eq.s32.totalorder %s10, 1
    %p91 = scmp.ne.s32.totalorder %s86, %s88
    %p92 = scmp.eq.s32.totalorder %s10, 0
    %p93 = por %p91, %p92
    %p94 = scmp.ne.s32.totalorder %s86, %s88
    %p95 = scmp.eq.s32.totalorder %s15, 1
    %p96 = por %p94, %p95
    %p97 = scmp.ne.s32.totalorder %s88, %s89
    %p98 = scmp.eq.s32.totalorder %s15, 0
    %p99 = por %p97, %p98
    %p100 = scmp.ne.s32.totalorder %s88, %s89
    %p101 = scmp.eq.s32.totalorder %s16, 1
    %p102 = por %p100, %p101
    %p104 = scmp.ne.s32.totalorder %s89, %s103
    %p105 = scmp.eq.s32.totalorder %s16, 0
    %p106 = por %p104, %p105
    %s107 = ssub.s32 %s10, %s17
    %p108 = scmp.eq.s32.totalorder %s107, 0
    %s110 = sadd.s32 %s109, 1
    %s111 = scalar_select %p108, %s109, %s110
    %p114 = pneg %p108
    %p115 = scmp.eq.s32.totalorder %s10, 1
    %p116 = por %p114, %p115
    %p117 = scmp.ne.s32.totalorder %s109, %s112
    %p118 = scmp.eq.s32.totalorder %s10, 0
    %p119 = por %p117, %p118
    %p120 = scmp.ne.s32.totalorder %s109, %s112
    %p121 = scmp.eq.s32.totalorder %s15, 1
    %p122 = por %p120, %p121
    %p123 = scmp.ne.s32.totalorder %s112, %s113
    %p124 = scmp.eq.s32.totalorder %s15, 0
    %p125 = por %p123, %p124
    %p126 = scmp.ne.s32.totalorder %s112, %s113
    %p127 = scmp.eq.s32.totalorder %s16, 1
    %p128 = por %p126, %p127
    %p130 = scmp.ne.s32.totalorder %s113, %s129
    %p131 = scmp.eq.s32.totalorder %s16, 0
    %p132 = por %p130, %p131
    %p133 = scmp.le.s32.totalorder 1, %s10
    %p134 = scmp.lt.s32.totalorder %s10, 3
    %p135 = pnand %p133, %p134
    %p136 = pneg %p135
    // Predicated region
    $region9: #{tpu_custom_call.1} parent=5 // pred_check
      _
    $region10: #{tpu_custom_call.1} parent=5 // pred_check_branch
      %138 = sbr.rel (%p135) target = $region12
    $region11: #{tpu_custom_call.1} parent=5 // pred_region
      %s139 = ssub.s32 %s10, 1
      // Predicated region
      $region13: #{tpu_custom_call.1} parent=11 // pred_check
        %p140 = pneg %p57
      $region14: #{tpu_custom_call.1} parent=11 // pred_check_branch
        %142 = sbr.rel (%p140) target = $region16
      $region15: #{tpu_custom_call.1} parent=11 // pred_region
        _
      $region16: #{tpu_custom_call.1} parent=11 // pred_fallthru
        _
      // Predicated region
      $region17: #{tpu_custom_call.1} parent=11 // pred_check
        %p143 = pneg %p78
      $region18: #{tpu_custom_call.1} parent=11 // pred_check_branch
        %145 = sbr.rel (%p143) target = $region20
      $region19: #{tpu_custom_call.1} parent=11 // pred_region
        _
      $region20: #{tpu_custom_call.1} parent=11 // pred_fallthru
        _
      // Predicated region
      $region21: #{tpu_custom_call.1} parent=11 // pred_check
        %p146 = pneg %p99
      $region22: #{tpu_custom_call.1} parent=11 // pred_check_branch
        %148 = sbr.rel (%p146) target = $region24
      $region23: #{tpu_custom_call.1} parent=11 // pred_region
        _
      $region24: #{tpu_custom_call.1} parent=11 // pred_fallthru
        _
    $region12: #{tpu_custom_call.1} parent=5 // pred_fallthru
      _
    %p149 = scmp.lt.s32.totalorder %s10, 2
    // Predicated region
    $region25: #{tpu_custom_call.1} parent=5 // pred_check
      %p150 = pneg %p149
    $region26: #{tpu_custom_call.1} parent=5 // pred_check_branch
      %152 = sbr.rel (%p150) target = $region28
    $region27: #{tpu_custom_call.1} parent=5 // pred_region
      // Predicated region
      $region29: #{tpu_custom_call.1} parent=27 // pred_check
        %p153 = pneg %p30
      $region30: #{tpu_custom_call.1} parent=27 // pred_check_branch
        %155 = sbr.rel (%p153) target = $region32
      $region31: #{tpu_custom_call.1} parent=27 // pred_region
        %s156 = smul.u32 525, %s10
        %p157 = scmp.lt.s32.totalorder %s156, 1049
        %s158 = scalar_select %p157, %s156, 1049
        %s159 = smul.addr %s158, 3
        %s160 = smul.addr %s159, 4
        %s161 = scalar_lea.vmem %s0, %s160
        %s162 = smul.u32 525, %s10
      $region32: #{tpu_custom_call.1} parent=27 // pred_fallthru
        _
    $region28: #{tpu_custom_call.1} parent=5 // pred_fallthru
      _
    %p163 = scmp.le.s32.totalorder 1, %s10
    %p164 = scmp.lt.s32.totalorder %s10, 3
    %p165 = pnand %p163, %p164
    %p166 = pneg %p165
    // Predicated region
    $region33: #{tpu_custom_call.1} parent=5 // pred_check
      _
    $region34: #{tpu_custom_call.1} parent=5 // pred_check_branch
      %168 = sbr.rel (%p165) target = $region36
    $region35: #{tpu_custom_call.1} parent=5 // pred_region
      %s169 = ssub.s32 %s10, 1
      %s170 = smul.u32 525, %s15
      %p171 = scmp.lt.s32.totalorder %s170, 1049
      %s172 = scalar_select %p171, %s170, 1049
      %s173 = smul.addr %s172, 3
      %s174 = smul.addr %s173, 4
      %s175 = scalar_lea.vmem %s0, %s174
      %p176 = pneg %p36
      %p177 = pneg %p33
      %p178 = pneg %p57
      %p179 = pneg %p54
      %p180 = pneg %p78
      %p181 = pneg %p75
      %p182 = pneg %p99
      %p183 = pneg %p96
      %p184 = pneg %p125
      %p185 = pneg %p122
      %s186 = smul.u32 525, %s15
      %p187 = scmp.lt.s32.totalorder %s186, 1049
      %s188 = scalar_select %p187, %s186, 1049
      %s189 = smul.addr %s188, 4
      %s190 = scalar_lea.vmem %s4, %s189
      %s191 = smul.u32 525, %s15
      %p192 = scmp.lt.s32.totalorder %s191, 1049
      %s193 = scalar_select %p192, %s191, 1049
      %s194 = smul.addr %s193, 3
      %s195 = smul.addr %s194, 4
      %s196 = scalar_lea.vmem %s0, %s195
      %s197 = smul.u32 525, %s15
      %s198 = smul.u32 525, %s15
      %p199 = scmp.lt.s32.totalorder %s198, 1049
      %s200 = scalar_select %p199, %s198, 1049
      %s201 = smul.addr %s200, 4
      %s202 = scalar_lea.vmem %s4, %s201
      %s203 = smul.u32 525, %s15
      %v205 = vld [vmem:[%s196] sm:$0xff]
      %v206 = vld [vmem:[%s196 + $0x8] sm:$0xf]
      %v207 = vld [vmem:[%s196 + $0xc] sm:$0xff]
      %v208 = vld [vmem:[%s196 + $0x14] sm:$0xf]
      %v209 = vld [vmem:[%s196 + $0x18] sm:$0xff]
      %v210 = vld [vmem:[%s196 + $0x20] sm:$0xf]
      %v211 = vld [vmem:[%s196 + $0x24] sm:$0xff]
      %v212 = vld [vmem:[%s196 + $0x2c] sm:$0xf]
      %v213 = vld [vmem:[%s196 + $0x30] sm:$0xff]
      %v214 = vld [vmem:[%s196 + $0x38] sm:$0xf]
      %v215 = vld [vmem:[%s196 + $0x3c] sm:$0xff]
      %v216 = vld [vmem:[%s196 + $0x44] sm:$0xf]
      %v217 = vld [vmem:[%s196 + $0x48] sm:$0xff]
      %v218 = vld [vmem:[%s196 + $0x50] sm:$0xf]
      %v219 = vld [vmem:[%s196 + $0x54] sm:$0xff]
      %v220 = vld [vmem:[%s196 + $0x5c] sm:$0xf]
      %v221 = vld [vmem:[%s196 + $0x60] sm:$0xff]
      %v222 = vld [vmem:[%s196 + $0x68] sm:$0xf]
      %v223 = vld [vmem:[%s196 + $0x6c] sm:$0xff]
      %v224 = vld [vmem:[%s196 + $0x74] sm:$0xf]
      %v225 = vld [vmem:[%s196 + $0x78] sm:$0xff]
      %v226 = vld [vmem:[%s196 + $0x80] sm:$0xf]
      %v227 = vld [vmem:[%s196 + $0x84] sm:$0xff]
      %v228 = vld [vmem:[%s196 + $0x8c] sm:$0xf]
      %v229 = vld [vmem:[%s196 + $0x90] sm:$0xff]
      %v230 = vld [vmem:[%s196 + $0x98] sm:$0xf]
      %v231 = vld [vmem:[%s196 + $0x9c] sm:$0xff]
      %v232 = vld [vmem:[%s196 + $0xa4] sm:$0xf]
      %v233 = vld [vmem:[%s196 + $0xa8] sm:$0xff]
      %v234 = vld [vmem:[%s196 + $0xb0] sm:$0xf]
      %v235 = vld [vmem:[%s196 + $0xb4] sm:$0xff]
      %v236 = vld [vmem:[%s196 + $0xbc] sm:$0xf]
      %v237 = vld [vmem:[%s196 + $0xc0] sm:$0xff]
      %v238 = vld [vmem:[%s196 + $0xc8] sm:$0xf]
      %v239 = vld [vmem:[%s196 + $0xcc] sm:$0xff]
      %v240 = vld [vmem:[%s196 + $0xd4] sm:$0xf]
      %v241 = vld [vmem:[%s196 + $0xd8] sm:$0xff]
      %v242 = vld [vmem:[%s196 + $0xe0] sm:$0xf]
      %v243 = vld [vmem:[%s196 + $0xe4] sm:$0xff]
      %v244 = vld [vmem:[%s196 + $0xec] sm:$0xf]
      %v245 = vld [vmem:[%s196 + $0xf0] sm:$0xff]
      %v246 = vld [vmem:[%s196 + $0xf8] sm:$0xf]
      %v247 = vld [vmem:[%s196 + $0xfc] sm:$0xff]
      %v248 = vld [vmem:[%s196 + $0x104] sm:$0xf]
      %v249 = vld [vmem:[%s196 + $0x108] sm:$0xff]
      %v250 = vld [vmem:[%s196 + $0x110] sm:$0xf]
      %v251 = vld [vmem:[%s196 + $0x114] sm:$0xff]
      %v252 = vld [vmem:[%s196 + $0x11c] sm:$0xf]
      %v253 = vld [vmem:[%s196 + $0x120] sm:$0xff]
      %v254 = vld [vmem:[%s196 + $0x128] sm:$0xf]
      %v255 = vld [vmem:[%s196 + $0x12c] sm:$0xff]
      %v256 = vld [vmem:[%s196 + $0x134] sm:$0xf]
      %v257 = vld [vmem:[%s196 + $0x138] sm:$0xff]
      %v258 = vld [vmem:[%s196 + $0x140] sm:$0xf]
      %v259 = vld [vmem:[%s196 + $0x144] sm:$0xff]
      %v260 = vld [vmem:[%s196 + $0x14c] sm:$0xf]
      %v261 = vld [vmem:[%s196 + $0x150] sm:$0xff]
      %v262 = vld [vmem:[%s196 + $0x158] sm:$0xf]
      %v263 = vld [vmem:[%s196 + $0x15c] sm:$0xff]
      %v264 = vld [vmem:[%s196 + $0x164] sm:$0xf]
      %v265 = vld [vmem:[%s196 + $0x168] sm:$0xff]
      %v266 = vld [vmem:[%s196 + $0x170] sm:$0xf]
      %v267 = vld [vmem:[%s196 + $0x174] sm:$0xff]
      %v268 = vld [vmem:[%s196 + $0x17c] sm:$0xf]
      %v269 = vld [vmem:[%s196 + $0x180] sm:$0xff]
      %v270 = vld [vmem:[%s196 + $0x188] sm:$0xf]
      %v271 = vld [vmem:[%s196 + $0x18c] sm:$0xff]
      %v272 = vld [vmem:[%s196 + $0x194] sm:$0xf]
      %v273 = vld [vmem:[%s196 + $0x198] sm:$0xff]
      %v274 = vld [vmem:[%s196 + $0x1a0] sm:$0xf]
      %v275 = vld [vmem:[%s196 + $0x1a4] sm:$0xff]
      %v276 = vld [vmem:[%s196 + $0x1ac] sm:$0xf]
      %v277 = vld [vmem:[%s196 + $0x1b0] sm:$0xff]
      %v278 = vld [vmem:[%s196 + $0x1b8] sm:$0xf]
      %v279 = vld [vmem:[%s196 + $0x1bc] sm:$0xff]
      %v280 = vld [vmem:[%s196 + $0x1c4] sm:$0xf]
      %v281 = vld [vmem:[%s196 + $0x1c8] sm:$0xff]
      %v282 = vld [vmem:[%s196 + $0x1d0] sm:$0xf]
      %v283 = vld [vmem:[%s196 + $0x1d4] sm:$0xff]
      %v284 = vld [vmem:[%s196 + $0x1dc] sm:$0xf]
      %v285 = vld [vmem:[%s196 + $0x1e0] sm:$0xff]
      %v286 = vld [vmem:[%s196 + $0x1e8] sm:$0xf]
      %v287 = vld [vmem:[%s196 + $0x1ec] sm:$0xff]
      %v288 = vld [vmem:[%s196 + $0x1f4] sm:$0xf]
      %v289 = vld [vmem:[%s196 + $0x1f8] sm:$0xff]
      %v290 = vld [vmem:[%s196 + $0x200] sm:$0xf]
      %v291 = vld [vmem:[%s196 + $0x204] sm:$0xff]
      %v292 = vld [vmem:[%s196 + $0x20c] sm:$0xf]
      %v293 = vld [vmem:[%s196 + $0x210] sm:$0xff]
      %v294 = vld [vmem:[%s196 + $0x218] sm:$0xf]
      %v295 = vld [vmem:[%s196 + $0x21c] sm:$0xff]
      %v296 = vld [vmem:[%s196 + $0x224] sm:$0xf]
      %v297 = vld [vmem:[%s196 + $0x228] sm:$0xff]
      %v298 = vld [vmem:[%s196 + $0x230] sm:$0xf]
      %v299 = vld [vmem:[%s196 + $0x234] sm:$0xff]
      %v300 = vld [vmem:[%s196 + $0x23c] sm:$0xf]
      %v301 = vld [vmem:[%s196 + $0x240] sm:$0xff]
      %v302 = vld [vmem:[%s196 + $0x248] sm:$0xf]
      %v303 = vld [vmem:[%s196 + $0x24c] sm:$0xff]
      %v304 = vld [vmem:[%s196 + $0x254] sm:$0xf]
      %v305 = vld [vmem:[%s196 + $0x258] sm:$0xff]
      %v306 = vld [vmem:[%s196 + $0x260] sm:$0xf]
      %v307 = vld [vmem:[%s196 + $0x264] sm:$0xff]
      %v308 = vld [vmem:[%s196 + $0x26c] sm:$0xf]
      %v309 = vld [vmem:[%s196 + $0x270] sm:$0xff]
      %v310 = vld [vmem:[%s196 + $0x278] sm:$0xf]
      %v311 = vld [vmem:[%s196 + $0x27c] sm:$0xff]
      %v312 = vld [vmem:[%s196 + $0x284] sm:$0xf]
      %v313 = vld [vmem:[%s196 + $0x288] sm:$0xff]
      %v314 = vld [vmem:[%s196 + $0x290] sm:$0xf]
      %v315 = vld [vmem:[%s196 + $0x294] sm:$0xff]
      %v316 = vld [vmem:[%s196 + $0x29c] sm:$0xf]
      %v317 = vld [vmem:[%s196 + $0x2a0] sm:$0xff]
      %v318 = vld [vmem:[%s196 + $0x2a8] sm:$0xf]
      %v319 = vld [vmem:[%s196 + $0x2ac] sm:$0xff]
      %v320 = vld [vmem:[%s196 + $0x2b4] sm:$0xf]
      %v321 = vld [vmem:[%s196 + $0x2b8] sm:$0xff]
      %v322 = vld [vmem:[%s196 + $0x2c0] sm:$0xf]
      %v323 = vld [vmem:[%s196 + $0x2c4] sm:$0xff]
      %v324 = vld [vmem:[%s196 + $0x2cc] sm:$0xf]
      %v325 = vld [vmem:[%s196 + $0x2d0] sm:$0xff]
      %v326 = vld [vmem:[%s196 + $0x2d8] sm:$0xf]
      %v327 = vld [vmem:[%s196 + $0x2dc] sm:$0xff]
      %v328 = vld [vmem:[%s196 + $0x2e4] sm:$0xf]
      %v329 = vld [vmem:[%s196 + $0x2e8] sm:$0xff]
      %v330 = vld [vmem:[%s196 + $0x2f0] sm:$0xf]
      %v331 = vld [vmem:[%s196 + $0x2f4] sm:$0xff]
      %v332 = vld [vmem:[%s196 + $0x2fc] sm:$0xf]
      %v333 = vld [vmem:[%s196 + $0x300] sm:$0xff]
      %v334 = vld [vmem:[%s196 + $0x308] sm:$0xf]
      %v335 = vld [vmem:[%s196 + $0x30c] sm:$0xff]
      %v336 = vld [vmem:[%s196 + $0x314] sm:$0xf]
      %v337 = vld [vmem:[%s196 + $0x318] sm:$0xff]
      %v338 = vld [vmem:[%s196 + $0x320] sm:$0xf]
      %v339 = vld [vmem:[%s196 + $0x324] sm:$0xff]
      %v340 = vld [vmem:[%s196 + $0x32c] sm:$0xf]
      %v341 = vld [vmem:[%s196 + $0x330] sm:$0xff]
      %v342 = vld [vmem:[%s196 + $0x338] sm:$0xf]
      %v343 = vld [vmem:[%s196 + $0x33c] sm:$0xff]
      %v344 = vld [vmem:[%s196 + $0x344] sm:$0xf]
      %v345 = vld [vmem:[%s196 + $0x348] sm:$0xff]
      %v346 = vld [vmem:[%s196 + $0x350] sm:$0xf]
      %v347 = vld [vmem:[%s196 + $0x354] sm:$0xff]
      %v348 = vld [vmem:[%s196 + $0x35c] sm:$0xf]
      %v349 = vld [vmem:[%s196 + $0x360] sm:$0xff]
      %v350 = vld [vmem:[%s196 + $0x368] sm:$0xf]
      %v351 = vld [vmem:[%s196 + $0x36c] sm:$0xff]
      %v352 = vld [vmem:[%s196 + $0x374] sm:$0xf]
      %v353 = vld [vmem:[%s196 + $0x378] sm:$0xff]
      %v354 = vld [vmem:[%s196 + $0x380] sm:$0xf]
      %v355 = vld [vmem:[%s196 + $0x384] sm:$0xff]
      %v356 = vld [vmem:[%s196 + $0x38c] sm:$0xf]
      %v357 = vld [vmem:[%s196 + $0x390] sm:$0xff]
      %v358 = vld [vmem:[%s196 + $0x398] sm:$0xf]
      %v359 = vld [vmem:[%s196 + $0x39c] sm:$0xff]
      %v360 = vld [vmem:[%s196 + $0x3a4] sm:$0xf]
      %v361 = vld [vmem:[%s196 + $0x3a8] sm:$0xff]
      %v362 = vld [vmem:[%s196 + $0x3b0] sm:$0xf]
      %v363 = vld [vmem:[%s196 + $0x3b4] sm:$0xff]
      %v364 = vld [vmem:[%s196 + $0x3bc] sm:$0xf]
      %v365 = vld [vmem:[%s196 + $0x3c0] sm:$0xff]
      %v366 = vld [vmem:[%s196 + $0x3c8] sm:$0xf]
      %v367 = vld [vmem:[%s196 + $0x3cc] sm:$0xff]
      %v368 = vld [vmem:[%s196 + $0x3d4] sm:$0xf]
      %v369 = vld [vmem:[%s196 + $0x3d8] sm:$0xff]
      %v370 = vld [vmem:[%s196 + $0x3e0] sm:$0xf]
      %v371 = vld [vmem:[%s196 + $0x3e4] sm:$0xff]
      %v372 = vld [vmem:[%s196 + $0x3ec] sm:$0xf]
      %v373 = vld [vmem:[%s196 + $0x3f0] sm:$0xff]
      %v374 = vld [vmem:[%s196 + $0x3f8] sm:$0xf]
      %v375 = vld [vmem:[%s196 + $0x3fc] sm:$0xff]
      %v376 = vld [vmem:[%s196 + $0x404] sm:$0xf]
      %v377 = vld [vmem:[%s196 + $0x408] sm:$0xff]
      %v378 = vld [vmem:[%s196 + $0x410] sm:$0xf]
      %v379 = vld [vmem:[%s196 + $0x414] sm:$0xff]
      %v380 = vld [vmem:[%s196 + $0x41c] sm:$0xf]
      %v381 = vld [vmem:[%s196 + $0x420] sm:$0xff]
      %v382 = vld [vmem:[%s196 + $0x428] sm:$0xf]
      %v383 = vld [vmem:[%s196 + $0x42c] sm:$0xff]
      %v384 = vld [vmem:[%s196 + $0x434] sm:$0xf]
      %v385 = vld [vmem:[%s196 + $0x438] sm:$0xff]
      %v386 = vld [vmem:[%s196 + $0x440] sm:$0xf]
      %v387 = vld [vmem:[%s196 + $0x444] sm:$0xff]
      %v388 = vld [vmem:[%s196 + $0x44c] sm:$0xf]
      %v389 = vld [vmem:[%s196 + $0x450] sm:$0xff]
      %v390 = vld [vmem:[%s196 + $0x458] sm:$0xf]
      %v391 = vld [vmem:[%s196 + $0x45c] sm:$0xff]
      %v392 = vld [vmem:[%s196 + $0x464] sm:$0xf]
      %v393 = vld [vmem:[%s196 + $0x468] sm:$0xff]
      %v394 = vld [vmem:[%s196 + $0x470] sm:$0xf]
      %v395 = vld [vmem:[%s196 + $0x474] sm:$0xff]
      %v396 = vld [vmem:[%s196 + $0x47c] sm:$0xf]
      %v397 = vld [vmem:[%s196 + $0x480] sm:$0xff]
      %v398 = vld [vmem:[%s196 + $0x488] sm:$0xf]
      %v399 = vld [vmem:[%s196 + $0x48c] sm:$0xff]
      %v400 = vld [vmem:[%s196 + $0x494] sm:$0xf]
      %v401 = vld [vmem:[%s196 + $0x498] sm:$0xff]
      %v402 = vld [vmem:[%s196 + $0x4a0] sm:$0xf]
      %v403 = vld [vmem:[%s196 + $0x4a4] sm:$0xff]
      %v404 = vld [vmem:[%s196 + $0x4ac] sm:$0xf]
      %v405 = vld [vmem:[%s196 + $0x4b0] sm:$0xff]
      %v406 = vld [vmem:[%s196 + $0x4b8] sm:$0xf]
      %v407 = vld [vmem:[%s196 + $0x4bc] sm:$0xff]
      %v408 = vld [vmem:[%s196 + $0x4c4] sm:$0xf]
      %v409 = vld [vmem:[%s196 + $0x4c8] sm:$0xff]
      %v410 = vld [vmem:[%s196 + $0x4d0] sm:$0xf]
      %v411 = vld [vmem:[%s196 + $0x4d4] sm:$0xff]
      %v412 = vld [vmem:[%s196 + $0x4dc] sm:$0xf]
      %v413 = vld [vmem:[%s196 + $0x4e0] sm:$0xff]
      %v414 = vld [vmem:[%s196 + $0x4e8] sm:$0xf]
      %v415 = vld [vmem:[%s196 + $0x4ec] sm:$0xff]
      %v416 = vld [vmem:[%s196 + $0x4f4] sm:$0xf]
      %v417 = vld [vmem:[%s196 + $0x4f8] sm:$0xff]
      %v418 = vld [vmem:[%s196 + $0x500] sm:$0xf]
      %v419 = vld [vmem:[%s196 + $0x504] sm:$0xff]
      %v420 = vld [vmem:[%s196 + $0x50c] sm:$0xf]
      %v421 = vld [vmem:[%s196 + $0x510] sm:$0xff]
      %v422 = vld [vmem:[%s196 + $0x518] sm:$0xf]
      %v423 = vld [vmem:[%s196 + $0x51c] sm:$0xff]
      %v424 = vld [vmem:[%s196 + $0x524] sm:$0xf]
      %v425 = vld [vmem:[%s196 + $0x528] sm:$0xff]
      %v426 = vld [vmem:[%s196 + $0x530] sm:$0xf]
      %v427 = vld [vmem:[%s196 + $0x534] sm:$0xff]
      %v428 = vld [vmem:[%s196 + $0x53c] sm:$0xf]
      %v429 = vld [vmem:[%s196 + $0x540] sm:$0xff]
      %v430 = vld [vmem:[%s196 + $0x548] sm:$0xf]
      %v431 = vld [vmem:[%s196 + $0x54c] sm:$0xff]
      %v432 = vld [vmem:[%s196 + $0x554] sm:$0xf]
      %v433 = vld [vmem:[%s196 + $0x558] sm:$0xff]
      %v434 = vld [vmem:[%s196 + $0x560] sm:$0xf]
      %v435 = vld [vmem:[%s196 + $0x564] sm:$0xff]
      %v436 = vld [vmem:[%s196 + $0x56c] sm:$0xf]
      %v437 = vld [vmem:[%s196 + $0x570] sm:$0xff]
      %v438 = vld [vmem:[%s196 + $0x578] sm:$0xf]
      %v439 = vld [vmem:[%s196 + $0x57c] sm:$0xff]
      %v440 = vld [vmem:[%s196 + $0x584] sm:$0xf]
      %v441 = vld [vmem:[%s196 + $0x588] sm:$0xff]
      %v442 = vld [vmem:[%s196 + $0x590] sm:$0xf]
      %v443 = vld [vmem:[%s196 + $0x594] sm:$0xff]
      %v444 = vld [vmem:[%s196 + $0x59c] sm:$0xf]
      %v445 = vld [vmem:[%s196 + $0x5a0] sm:$0xff]
      %v446 = vld [vmem:[%s196 + $0x5a8] sm:$0xf]
      %v447 = vld [vmem:[%s196 + $0x5ac] sm:$0xff]
      %v448 = vld [vmem:[%s196 + $0x5b4] sm:$0xf]
      %v449 = vld [vmem:[%s196 + $0x5b8] sm:$0xff]
      %v450 = vld [vmem:[%s196 + $0x5c0] sm:$0xf]
      %v451 = vld [vmem:[%s196 + $0x5c4] sm:$0xff]
      %v452 = vld [vmem:[%s196 + $0x5cc] sm:$0xf]
      %v453 = vld [vmem:[%s196 + $0x5d0] sm:$0xff]
      %v454 = vld [vmem:[%s196 + $0x5d8] sm:$0xf]
      %v455 = vld [vmem:[%s196 + $0x5dc] sm:$0xff]
      %v456 = vld [vmem:[%s196 + $0x5e4] sm:$0xf]
      %v457 = vld [vmem:[%s196 + $0x5e8] sm:$0xff]
      %v458 = vld [vmem:[%s196 + $0x5f0] sm:$0xf]
      %v459 = vld [vmem:[%s196 + $0x5f4] sm:$0xff]
      %v460 = vld [vmem:[%s196 + $0x5fc] sm:$0xf]
      %v461 = vld [vmem:[%s196 + $0x600] sm:$0xff]
      %v462 = vld [vmem:[%s196 + $0x608] sm:$0xf]
      %v463 = vld [vmem:[%s196 + $0x60c] sm:$0xff]
      %v464 = vld [vmem:[%s196 + $0x614] sm:$0xf]
      %v465 = vld [vmem:[%s196 + $0x618] sm:$0xff]
      %v466 = vld [vmem:[%s196 + $0x620] sm:$0xf]
      %v467 = vld [vmem:[%s196 + $0x624] sm:$0xff]
      %v468 = vld [vmem:[%s196 + $0x62c] sm:$0xf]
      %v469 = vld [vmem:[%s196 + $0x630] sm:$0xff]
      %v470 = vld [vmem:[%s196 + $0x638] sm:$0xf]
      %v471 = vld [vmem:[%s196 + $0x63c] sm:$0xff]
      %v472 = vld [vmem:[%s196 + $0x644] sm:$0xf]
      %v473 = vld [vmem:[%s196 + $0x648] sm:$0xff]
      %v474 = vld [vmem:[%s196 + $0x650] sm:$0xf]
      %v475 = vld [vmem:[%s196 + $0x654] sm:$0xff]
      %v476 = vld [vmem:[%s196 + $0x65c] sm:$0xf]
      %v477 = vld [vmem:[%s196 + $0x660] sm:$0xff]
      %v478 = vld [vmem:[%s196 + $0x668] sm:$0xf]
      %v479 = vld [vmem:[%s196 + $0x66c] sm:$0xff]
      %v480 = vld [vmem:[%s196 + $0x674] sm:$0xf]
      %v481 = vld [vmem:[%s196 + $0x678] sm:$0xff]
      %v482 = vld [vmem:[%s196 + $0x680] sm:$0xf]
      %v483 = vld [vmem:[%s196 + $0x684] sm:$0xff]
      %v484 = vld [vmem:[%s196 + $0x68c] sm:$0xf]
      %v485 = vld [vmem:[%s196 + $0x690] sm:$0xff]
      %v486 = vld [vmem:[%s196 + $0x698] sm:$0xf]
      %v487 = vld [vmem:[%s196 + $0x69c] sm:$0xff]
      %v488 = vld [vmem:[%s196 + $0x6a4] sm:$0xf]
      %v489 = vld [vmem:[%s196 + $0x6a8] sm:$0xff]
      %v490 = vld [vmem:[%s196 + $0x6b0] sm:$0xf]
      %v491 = vld [vmem:[%s196 + $0x6b4] sm:$0xff]
      %v492 = vld [vmem:[%s196 + $0x6bc] sm:$0xf]
      %v493 = vld [vmem:[%s196 + $0x6c0] sm:$0xff]
      %v494 = vld [vmem:[%s196 + $0x6c8] sm:$0xf]
      %v495 = vld [vmem:[%s196 + $0x6cc] sm:$0xff]
      %v496 = vld [vmem:[%s196 + $0x6d4] sm:$0xf]
      %v497 = vld [vmem:[%s196 + $0x6d8] sm:$0xff]
      %v498 = vld [vmem:[%s196 + $0x6e0] sm:$0xf]
      %v499 = vld [vmem:[%s196 + $0x6e4] sm:$0xff]
      %v500 = vld [vmem:[%s196 + $0x6ec] sm:$0xf]
      %v501 = vld [vmem:[%s196 + $0x6f0] sm:$0xff]
      %v502 = vld [vmem:[%s196 + $0x6f8] sm:$0xf]
      %v503 = vld [vmem:[%s196 + $0x6fc] sm:$0xff]
      %v504 = vld [vmem:[%s196 + $0x704] sm:$0xf]
      %v505 = vld [vmem:[%s196 + $0x708] sm:$0xff]
      %v506 = vld [vmem:[%s196 + $0x710] sm:$0xf]
      %v507 = vld [vmem:[%s196 + $0x714] sm:$0xff]
      %v508 = vld [vmem:[%s196 + $0x71c] sm:$0xf]
      %v509 = vld [vmem:[%s196 + $0x720] sm:$0xff]
      %v510 = vld [vmem:[%s196 + $0x728] sm:$0xf]
      %v511 = vld [vmem:[%s196 + $0x72c] sm:$0xff]
      %v512 = vld [vmem:[%s196 + $0x734] sm:$0xf]
      %v513 = vld [vmem:[%s196 + $0x738] sm:$0xff]
      %v514 = vld [vmem:[%s196 + $0x740] sm:$0xf]
      %v515 = vld [vmem:[%s196 + $0x744] sm:$0xff]
      %v516 = vld [vmem:[%s196 + $0x74c] sm:$0xf]
      %v517 = vld [vmem:[%s196 + $0x750] sm:$0xff]
      %v518 = vld [vmem:[%s196 + $0x758] sm:$0xf]
      %v519 = vld [vmem:[%s196 + $0x75c] sm:$0xff]
      %v520 = vld [vmem:[%s196 + $0x764] sm:$0xf]
      %v521 = vld [vmem:[%s196 + $0x768] sm:$0xff]
      %v522 = vld [vmem:[%s196 + $0x770] sm:$0xf]
      %v523 = vld [vmem:[%s196 + $0x774] sm:$0xff]
      %v524 = vld [vmem:[%s196 + $0x77c] sm:$0xf]
      %v525 = vld [vmem:[%s196 + $0x780] sm:$0xff]
      %v526 = vld [vmem:[%s196 + $0x788] sm:$0xf]
      %v527 = vld [vmem:[%s196 + $0x78c] sm:$0xff]
      %v528 = vld [vmem:[%s196 + $0x794] sm:$0xf]
      %v529 = vld [vmem:[%s196 + $0x798] sm:$0xff]
      %v530 = vld [vmem:[%s196 + $0x7a0] sm:$0xf]
      %v531 = vld [vmem:[%s196 + $0x7a4] sm:$0xff]
      %v532 = vld [vmem:[%s196 + $0x7ac] sm:$0xf]
      %v533 = vld [vmem:[%s196 + $0x7b0] sm:$0xff]
      %v534 = vld [vmem:[%s196 + $0x7b8] sm:$0xf]
      %v535 = vld [vmem:[%s196 + $0x7bc] sm:$0xff]
      %v536 = vld [vmem:[%s196 + $0x7c4] sm:$0xf]
      %v537 = vld [vmem:[%s196 + $0x7c8] sm:$0xff]
      %v538 = vld [vmem:[%s196 + $0x7d0] sm:$0xf]
      %v539 = vld [vmem:[%s196 + $0x7d4] sm:$0xff]
      %v540 = vld [vmem:[%s196 + $0x7dc] sm:$0xf]
      %v541 = vld [vmem:[%s196 + $0x7e0] sm:$0xff]
      %v542 = vld [vmem:[%s196 + $0x7e8] sm:$0xf]
      %v543 = vld [vmem:[%s196 + $0x7ec] sm:$0xff]
      %v544 = vld [vmem:[%s196 + $0x7f4] sm:$0xf]
      %v545 = vld [vmem:[%s196 + $0x7f8] sm:$0xff]
      %v546 = vld [vmem:[%s196 + $0x800] sm:$0xf]
      %v547 = vld [vmem:[%s196 + $0x804] sm:$0xff]
      %v548 = vld [vmem:[%s196 + $0x80c] sm:$0xf]
      %v549 = vld [vmem:[%s196 + $0x810] sm:$0xff]
      %v550 = vld [vmem:[%s196 + $0x818] sm:$0xf]
      %v551 = vld [vmem:[%s196 + $0x81c] sm:$0xff]
      %v552 = vld [vmem:[%s196 + $0x824] sm:$0xf]
      %v553 = vld [vmem:[%s196 + $0x828] sm:$0xff]
      %v554 = vld [vmem:[%s196 + $0x830] sm:$0xf]
      %v555 = vld [vmem:[%s196 + $0x834] sm:$0xff]
      %v556 = vld [vmem:[%s196 + $0x83c] sm:$0xf]
      %v557 = vld [vmem:[%s196 + $0x840] sm:$0xff]
      %v558 = vld [vmem:[%s196 + $0x848] sm:$0xf]
      %v559 = vld [vmem:[%s196 + $0x84c] sm:$0xff]
      %v560 = vld [vmem:[%s196 + $0x854] sm:$0xf]
      %v561 = vld [vmem:[%s196 + $0x858] sm:$0xff]
      %v562 = vld [vmem:[%s196 + $0x860] sm:$0xf]
      %v563 = vld [vmem:[%s196 + $0x864] sm:$0xff]
      %v564 = vld [vmem:[%s196 + $0x86c] sm:$0xf]
      %v565 = vld [vmem:[%s196 + $0x870] sm:$0xff]
      %v566 = vld [vmem:[%s196 + $0x878] sm:$0xf]
      %v567 = vld [vmem:[%s196 + $0x87c] sm:$0xff]
      %v568 = vld [vmem:[%s196 + $0x884] sm:$0xf]
      %v569 = vld [vmem:[%s196 + $0x888] sm:$0xff]
      %v570 = vld [vmem:[%s196 + $0x890] sm:$0xf]
      %v571 = vld [vmem:[%s196 + $0x894] sm:$0xff]
      %v572 = vld [vmem:[%s196 + $0x89c] sm:$0xf]
      %v573 = vld [vmem:[%s196 + $0x8a0] sm:$0xff]
      %v574 = vld [vmem:[%s196 + $0x8a8] sm:$0xf]
      %v575 = vld [vmem:[%s196 + $0x8ac] sm:$0xff]
      %v576 = vld [vmem:[%s196 + $0x8b4] sm:$0xf]
      %v577 = vld [vmem:[%s196 + $0x8b8] sm:$0xff]
      %v578 = vld [vmem:[%s196 + $0x8c0] sm:$0xf]
      %v579 = vld [vmem:[%s196 + $0x8c4] sm:$0xff]
      %v580 = vld [vmem:[%s196 + $0x8cc] sm:$0xf]
      %v581 = vld [vmem:[%s196 + $0x8d0] sm:$0xff]
      %v582 = vld [vmem:[%s196 + $0x8d8] sm:$0xf]
      %v583 = vld [vmem:[%s196 + $0x8dc] sm:$0xff]
      %v584 = vld [vmem:[%s196 + $0x8e4] sm:$0xf]
      %v585 = vld [vmem:[%s196 + $0x8e8] sm:$0xff]
      %v586 = vld [vmem:[%s196 + $0x8f0] sm:$0xf]
      %v587 = vld [vmem:[%s196 + $0x8f4] sm:$0xff]
      %v588 = vld [vmem:[%s196 + $0x8fc] sm:$0xf]
      %v589 = vld [vmem:[%s196 + $0x900] sm:$0xff]
      %v590 = vld [vmem:[%s196 + $0x908] sm:$0xf]
      %v591 = vld [vmem:[%s196 + $0x90c] sm:$0xff]
      %v592 = vld [vmem:[%s196 + $0x914] sm:$0xf]
      %v593 = vld [vmem:[%s196 + $0x918] sm:$0xff]
      %v594 = vld [vmem:[%s196 + $0x920] sm:$0xf]
      %v595 = vld [vmem:[%s196 + $0x924] sm:$0xff]
      %v596 = vld [vmem:[%s196 + $0x92c] sm:$0xf]
      %v597 = vld [vmem:[%s196 + $0x930] sm:$0xff]
      %v598 = vld [vmem:[%s196 + $0x938] sm:$0xf]
      %v599 = vld [vmem:[%s196 + $0x93c] sm:$0xff]
      %v600 = vld [vmem:[%s196 + $0x944] sm:$0xf]
      %v601 = vld [vmem:[%s196 + $0x948] sm:$0xff]
      %v602 = vld [vmem:[%s196 + $0x950] sm:$0xf]
      %v603 = vld [vmem:[%s196 + $0x954] sm:$0xff]
      %v604 = vld [vmem:[%s196 + $0x95c] sm:$0xf]
      %v605 = vld [vmem:[%s196 + $0x960] sm:$0xff]
      %v606 = vld [vmem:[%s196 + $0x968] sm:$0xf]
      %v607 = vld [vmem:[%s196 + $0x96c] sm:$0xff]
      %v608 = vld [vmem:[%s196 + $0x974] sm:$0xf]
      %v609 = vld [vmem:[%s196 + $0x978] sm:$0xff]
      %v610 = vld [vmem:[%s196 + $0x980] sm:$0xf]
      %v611 = vld [vmem:[%s196 + $0x984] sm:$0xff]
      %v612 = vld [vmem:[%s196 + $0x98c] sm:$0xf]
      %v613 = vld [vmem:[%s196 + $0x990] sm:$0xff]
      %v614 = vld [vmem:[%s196 + $0x998] sm:$0xf]
      %v615 = vld [vmem:[%s196 + $0x99c] sm:$0xff]
      %v616 = vld [vmem:[%s196 + $0x9a4] sm:$0xf]
      %v617 = vld [vmem:[%s196 + $0x9a8] sm:$0xff]
      %v618 = vld [vmem:[%s196 + $0x9b0] sm:$0xf]
      %v619 = vld [vmem:[%s196 + $0x9b4] sm:$0xff]
      %v620 = vld [vmem:[%s196 + $0x9bc] sm:$0xf]
      %v621 = vld [vmem:[%s196 + $0x9c0] sm:$0xff]
      %v622 = vld [vmem:[%s196 + $0x9c8] sm:$0xf]
      %v623 = vld [vmem:[%s196 + $0x9cc] sm:$0xff]
      %v624 = vld [vmem:[%s196 + $0x9d4] sm:$0xf]
      %v625 = vld [vmem:[%s196 + $0x9d8] sm:$0xff]
      %v626 = vld [vmem:[%s196 + $0x9e0] sm:$0xf]
      %v627 = vld [vmem:[%s196 + $0x9e4] sm:$0xff]
      %v628 = vld [vmem:[%s196 + $0x9ec] sm:$0xf]
      %v629 = vld [vmem:[%s196 + $0x9f0] sm:$0xff]
      %v630 = vld [vmem:[%s196 + $0x9f8] sm:$0xf]
      %v631 = vld [vmem:[%s196 + $0x9fc] sm:$0xff]
      %v632 = vld [vmem:[%s196 + $0xa04] sm:$0xf]
      %v633 = vld [vmem:[%s196 + $0xa08] sm:$0xff]
      %v634 = vld [vmem:[%s196 + $0xa10] sm:$0xf]
      %v635 = vld [vmem:[%s196 + $0xa14] sm:$0xff]
      %v636 = vld [vmem:[%s196 + $0xa1c] sm:$0xf]
      %v637 = vld [vmem:[%s196 + $0xa20] sm:$0xff]
      %v638 = vld [vmem:[%s196 + $0xa28] sm:$0xf]
      %v639 = vld [vmem:[%s196 + $0xa2c] sm:$0xff]
      %v640 = vld [vmem:[%s196 + $0xa34] sm:$0xf]
      %v641 = vld [vmem:[%s196 + $0xa38] sm:$0xff]
      %v642 = vld [vmem:[%s196 + $0xa40] sm:$0xf]
      %v643 = vld [vmem:[%s196 + $0xa44] sm:$0xff]
      %v644 = vld [vmem:[%s196 + $0xa4c] sm:$0xf]
      %v645 = vld [vmem:[%s196 + $0xa50] sm:$0xff]
      %v646 = vld [vmem:[%s196 + $0xa58] sm:$0xf]
      %v647 = vld [vmem:[%s196 + $0xa5c] sm:$0xff]
      %v648 = vld [vmem:[%s196 + $0xa64] sm:$0xf]
      %v649 = vld [vmem:[%s196 + $0xa68] sm:$0xff]
      %v650 = vld [vmem:[%s196 + $0xa70] sm:$0xf]
      %v651 = vld [vmem:[%s196 + $0xa74] sm:$0xff]
      %v652 = vld [vmem:[%s196 + $0xa7c] sm:$0xf]
      %v653 = vld [vmem:[%s196 + $0xa80] sm:$0xff]
      %v654 = vld [vmem:[%s196 + $0xa88] sm:$0xf]
      %v655 = vld [vmem:[%s196 + $0xa8c] sm:$0xff]
      %v656 = vld [vmem:[%s196 + $0xa94] sm:$0xf]
      %v657 = vld [vmem:[%s196 + $0xa98] sm:$0xff]
      %v658 = vld [vmem:[%s196 + $0xaa0] sm:$0xf]
      %v659 = vld [vmem:[%s196 + $0xaa4] sm:$0xff]
      %v660 = vld [vmem:[%s196 + $0xaac] sm:$0xf]
      %v661 = vld [vmem:[%s196 + $0xab0] sm:$0xff]
      %v662 = vld [vmem:[%s196 + $0xab8] sm:$0xf]
      %v663 = vld [vmem:[%s196 + $0xabc] sm:$0xff]
      %v664 = vld [vmem:[%s196 + $0xac4] sm:$0xf]
      %v665 = vld [vmem:[%s196 + $0xac8] sm:$0xff]
      %v666 = vld [vmem:[%s196 + $0xad0] sm:$0xf]
      %v667 = vld [vmem:[%s196 + $0xad4] sm:$0xff]
      %v668 = vld [vmem:[%s196 + $0xadc] sm:$0xf]
      %v669 = vld [vmem:[%s196 + $0xae0] sm:$0xff]
      %v670 = vld [vmem:[%s196 + $0xae8] sm:$0xf]
      %v671 = vld [vmem:[%s196 + $0xaec] sm:$0xff]
      %v672 = vld [vmem:[%s196 + $0xaf4] sm:$0xf]
      %v673 = vld [vmem:[%s196 + $0xaf8] sm:$0xff]
      %v674 = vld [vmem:[%s196 + $0xb00] sm:$0xf]
      %v675 = vld [vmem:[%s196 + $0xb04] sm:$0xff]
      %v676 = vld [vmem:[%s196 + $0xb0c] sm:$0xf]
      %v677 = vld [vmem:[%s196 + $0xb10] sm:$0xff]
      %v678 = vld [vmem:[%s196 + $0xb18] sm:$0xf]
      %v679 = vld [vmem:[%s196 + $0xb1c] sm:$0xff]
      %v680 = vld [vmem:[%s196 + $0xb24] sm:$0xf]
      %v681 = vld [vmem:[%s196 + $0xb28] sm:$0xff]
      %v682 = vld [vmem:[%s196 + $0xb30] sm:$0xf]
      %v683 = vld [vmem:[%s196 + $0xb34] sm:$0xff]
      %v684 = vld [vmem:[%s196 + $0xb3c] sm:$0xf]
      %v685 = vld [vmem:[%s196 + $0xb40] sm:$0xff]
      %v686 = vld [vmem:[%s196 + $0xb48] sm:$0xf]
      %v687 = vld [vmem:[%s196 + $0xb4c] sm:$0xff]
      %v688 = vld [vmem:[%s196 + $0xb54] sm:$0xf]
      %v689 = vld [vmem:[%s196 + $0xb58] sm:$0xff]
      %v690 = vld [vmem:[%s196 + $0xb60] sm:$0xf]
      %v691 = vld [vmem:[%s196 + $0xb64] sm:$0xff]
      %v692 = vld [vmem:[%s196 + $0xb6c] sm:$0xf]
      %v693 = vld [vmem:[%s196 + $0xb70] sm:$0xff]
      %v694 = vld [vmem:[%s196 + $0xb78] sm:$0xf]
      %v695 = vld [vmem:[%s196 + $0xb7c] sm:$0xff]
      %v696 = vld [vmem:[%s196 + $0xb84] sm:$0xf]
      %v697 = vld [vmem:[%s196 + $0xb88] sm:$0xff]
      %v698 = vld [vmem:[%s196 + $0xb90] sm:$0xf]
      %v699 = vld [vmem:[%s196 + $0xb94] sm:$0xff]
      %v700 = vld [vmem:[%s196 + $0xb9c] sm:$0xf]
      %v701 = vld [vmem:[%s196 + $0xba0] sm:$0xff]
      %v702 = vld [vmem:[%s196 + $0xba8] sm:$0xf]
      %v703 = vld [vmem:[%s196 + $0xbac] sm:$0xff]
      %v704 = vld [vmem:[%s196 + $0xbb4] sm:$0xf]
      %v705 = vld [vmem:[%s196 + $0xbb8] sm:$0xff]
      %v706 = vld [vmem:[%s196 + $0xbc0] sm:$0xf]
      %v707 = vld [vmem:[%s196 + $0xbc4] sm:$0xff]
      %v708 = vld [vmem:[%s196 + $0xbcc] sm:$0xf]
      %v709 = vld [vmem:[%s196 + $0xbd0] sm:$0xff]
      %v710 = vld [vmem:[%s196 + $0xbd8] sm:$0xf]
      %v711 = vld [vmem:[%s196 + $0xbdc] sm:$0xff]
      %v712 = vld [vmem:[%s196 + $0xbe4] sm:$0xf]
      %v713 = vld [vmem:[%s196 + $0xbe8] sm:$0xff]
      %v714 = vld [vmem:[%s196 + $0xbf0] sm:$0xf]
      %v715 = vld [vmem:[%s196 + $0xbf4] sm:$0xff]
      %v716 = vld [vmem:[%s196 + $0xbfc] sm:$0xf]
      %v717 = vld [vmem:[%s196 + $0xc00] sm:$0xff]
      %v718 = vld [vmem:[%s196 + $0xc08] sm:$0xf]
      %v719 = vld [vmem:[%s196 + $0xc0c] sm:$0xff]
      %v720 = vld [vmem:[%s196 + $0xc14] sm:$0xf]
      %v721 = vld [vmem:[%s196 + $0xc18] sm:$0xff]
      %v722 = vld [vmem:[%s196 + $0xc20] sm:$0xf]
      %v723 = vld [vmem:[%s196 + $0xc24] sm:$0xff]
      %v724 = vld [vmem:[%s196 + $0xc2c] sm:$0xf]
      %v725 = vld [vmem:[%s196 + $0xc30] sm:$0xff]
      %v726 = vld [vmem:[%s196 + $0xc38] sm:$0xf]
      %v727 = vld [vmem:[%s196 + $0xc3c] sm:$0xff]
      %v728 = vld [vmem:[%s196 + $0xc44] sm:$0xf]
      %v729 = vld [vmem:[%s196 + $0xc48] sm:$0xff]
      %v730 = vld [vmem:[%s196 + $0xc50] sm:$0xf]
      %v731 = vld [vmem:[%s196 + $0xc54] sm:$0xff]
      %v732 = vld [vmem:[%s196 + $0xc5c] sm:$0xf]
      %v733 = vld [vmem:[%s196 + $0xc60] sm:$0xff]
      %v734 = vld [vmem:[%s196 + $0xc68] sm:$0xf]
      %v735 = vld [vmem:[%s196 + $0xc6c] sm:$0xff]
      %v736 = vld [vmem:[%s196 + $0xc74] sm:$0xf]
      %v737 = vld [vmem:[%s196 + $0xc78] sm:$0xff]
      %v738 = vld [vmem:[%s196 + $0xc80] sm:$0xf]
      %v739 = vld [vmem:[%s196 + $0xc84] sm:$0xff]
      %v740 = vld [vmem:[%s196 + $0xc8c] sm:$0xf]
      %v741 = vld [vmem:[%s196 + $0xc90] sm:$0xff]
      %v742 = vld [vmem:[%s196 + $0xc98] sm:$0xf]
      %v743 = vld [vmem:[%s196 + $0xc9c] sm:$0xff]
      %v744 = vld [vmem:[%s196 + $0xca4] sm:$0xf]
      %v745 = vld [vmem:[%s196 + $0xca8] sm:$0xff]
      %v746 = vld [vmem:[%s196 + $0xcb0] sm:$0xf]
      %v747 = vld [vmem:[%s196 + $0xcb4] sm:$0xff]
      %v748 = vld [vmem:[%s196 + $0xcbc] sm:$0xf]
      %v749 = vld [vmem:[%s196 + $0xcc0] sm:$0xff]
      %v750 = vld [vmem:[%s196 + $0xcc8] sm:$0xf]
      %v751 = vld [vmem:[%s196 + $0xccc] sm:$0xff]
      %v752 = vld [vmem:[%s196 + $0xcd4] sm:$0xf]
      %v753 = vld [vmem:[%s196 + $0xcd8] sm:$0xff]
      %v754 = vld [vmem:[%s196 + $0xce0] sm:$0xf]
      %v755 = vld [vmem:[%s196 + $0xce4] sm:$0xff]
      %v756 = vld [vmem:[%s196 + $0xcec] sm:$0xf]
      %v757 = vld [vmem:[%s196 + $0xcf0] sm:$0xff]
      %v758 = vld [vmem:[%s196 + $0xcf8] sm:$0xf]
      %v759 = vld [vmem:[%s196 + $0xcfc] sm:$0xff]
      %v760 = vld [vmem:[%s196 + $0xd04] sm:$0xf]
      %v761 = vld [vmem:[%s196 + $0xd08] sm:$0xff]
      %v762 = vld [vmem:[%s196 + $0xd10] sm:$0xf]
      %v763 = vld [vmem:[%s196 + $0xd14] sm:$0xff]
      %v764 = vld [vmem:[%s196 + $0xd1c] sm:$0xf]
      %v765 = vld [vmem:[%s196 + $0xd20] sm:$0xff]
      %v766 = vld [vmem:[%s196 + $0xd28] sm:$0xf]
      %v767 = vld [vmem:[%s196 + $0xd2c] sm:$0xff]
      %v768 = vld [vmem:[%s196 + $0xd34] sm:$0xf]
      %v769 = vld [vmem:[%s196 + $0xd38] sm:$0xff]
      %v770 = vld [vmem:[%s196 + $0xd40] sm:$0xf]
      %v771 = vld [vmem:[%s196 + $0xd44] sm:$0xff]
      %v772 = vld [vmem:[%s196 + $0xd4c] sm:$0xf]
      %v773 = vld [vmem:[%s196 + $0xd50] sm:$0xff]
      %v774 = vld [vmem:[%s196 + $0xd58] sm:$0xf]
      %v775 = vld [vmem:[%s196 + $0xd5c] sm:$0xff]
      %v776 = vld [vmem:[%s196 + $0xd64] sm:$0xf]
      %v777 = vld [vmem:[%s196 + $0xd68] sm:$0xff]
      %v778 = vld [vmem:[%s196 + $0xd70] sm:$0xf]
      %v779 = vld [vmem:[%s196 + $0xd74] sm:$0xff]
      %v780 = vld [vmem:[%s196 + $0xd7c] sm:$0xf]
      %v781 = vld [vmem:[%s196 + $0xd80] sm:$0xff]
      %v782 = vld [vmem:[%s196 + $0xd88] sm:$0xf]
      %v783 = vld [vmem:[%s196 + $0xd8c] sm:$0xff]
      %v784 = vld [vmem:[%s196 + $0xd94] sm:$0xf]
      %v785 = vld [vmem:[%s196 + $0xd98] sm:$0xff]
      %v786 = vld [vmem:[%s196 + $0xda0] sm:$0xf]
      %v787 = vld [vmem:[%s196 + $0xda4] sm:$0xff]
      %v788 = vld [vmem:[%s196 + $0xdac] sm:$0xf]
      %v789 = vld [vmem:[%s196 + $0xdb0] sm:$0xff]
      %v790 = vld [vmem:[%s196 + $0xdb8] sm:$0xf]
      %v791 = vld [vmem:[%s196 + $0xdbc] sm:$0xff]
      %v792 = vld [vmem:[%s196 + $0xdc4] sm:$0xf]
      %v793 = vld [vmem:[%s196 + $0xdc8] sm:$0xff]
      %v794 = vld [vmem:[%s196 + $0xdd0] sm:$0xf]
      %v795 = vld [vmem:[%s196 + $0xdd4] sm:$0xff]
      %v796 = vld [vmem:[%s196 + $0xddc] sm:$0xf]
      %v797 = vld [vmem:[%s196 + $0xde0] sm:$0xff]
      %v798 = vld [vmem:[%s196 + $0xde8] sm:$0xf]
      %v799 = vld [vmem:[%s196 + $0xdec] sm:$0xff]
      %v800 = vld [vmem:[%s196 + $0xdf4] sm:$0xf]
      %v801 = vld [vmem:[%s196 + $0xdf8] sm:$0xff]
      %v802 = vld [vmem:[%s196 + $0xe00] sm:$0xf]
      %v803 = vld [vmem:[%s196 + $0xe04] sm:$0xff]
      %v804 = vld [vmem:[%s196 + $0xe0c] sm:$0xf]
      %v805 = vld [vmem:[%s196 + $0xe10] sm:$0xff]
      %v806 = vld [vmem:[%s196 + $0xe18] sm:$0xf]
      %v807 = vld [vmem:[%s196 + $0xe1c] sm:$0xff]
      %v808 = vld [vmem:[%s196 + $0xe24] sm:$0xf]
      %v809 = vld [vmem:[%s196 + $0xe28] sm:$0xff]
      %v810 = vld [vmem:[%s196 + $0xe30] sm:$0xf]
      %v811 = vld [vmem:[%s196 + $0xe34] sm:$0xff]
      %v812 = vld [vmem:[%s196 + $0xe3c] sm:$0xf]
      %v813 = vld [vmem:[%s196 + $0xe40] sm:$0xff]
      %v814 = vld [vmem:[%s196 + $0xe48] sm:$0xf]
      %v815 = vld [vmem:[%s196 + $0xe4c] sm:$0xff]
      %v816 = vld [vmem:[%s196 + $0xe54] sm:$0xf]
      %v817 = vld [vmem:[%s196 + $0xe58] sm:$0xff]
      %v818 = vld [vmem:[%s196 + $0xe60] sm:$0xf]
      %v819 = vld [vmem:[%s196 + $0xe64] sm:$0xff]
      %v820 = vld [vmem:[%s196 + $0xe6c] sm:$0xf]
      %v821 = vld [vmem:[%s196 + $0xe70] sm:$0xff]
      %v822 = vld [vmem:[%s196 + $0xe78] sm:$0xf]
      %v823 = vld [vmem:[%s196 + $0xe7c] sm:$0xff]
      %v824 = vld [vmem:[%s196 + $0xe84] sm:$0xf]
      %v825 = vld [vmem:[%s196 + $0xe88] sm:$0xff]
      %v826 = vld [vmem:[%s196 + $0xe90] sm:$0xf]
      %v827 = vld [vmem:[%s196 + $0xe94] sm:$0xff]
      %v828 = vld [vmem:[%s196 + $0xe9c] sm:$0xf]
      %v829 = vld [vmem:[%s196 + $0xea0] sm:$0xff]
      %v830 = vld [vmem:[%s196 + $0xea8] sm:$0xf]
      %v831 = vld [vmem:[%s196 + $0xeac] sm:$0xff]
      %v832 = vld [vmem:[%s196 + $0xeb4] sm:$0xf]
      %v833 = vld [vmem:[%s196 + $0xeb8] sm:$0xff]
      %v834 = vld [vmem:[%s196 + $0xec0] sm:$0xf]
      %v835 = vld [vmem:[%s196 + $0xec4] sm:$0xff]
      %v836 = vld [vmem:[%s196 + $0xecc] sm:$0xf]
      %v837 = vld [vmem:[%s196 + $0xed0] sm:$0xff]
      %v838 = vld [vmem:[%s196 + $0xed8] sm:$0xf]
      %v839 = vld [vmem:[%s196 + $0xedc] sm:$0xff]
      %v840 = vld [vmem:[%s196 + $0xee4] sm:$0xf]
      %v841 = vld [vmem:[%s196 + $0xee8] sm:$0xff]
      %v842 = vld [vmem:[%s196 + $0xef0] sm:$0xf]
      %v843 = vld [vmem:[%s196 + $0xef4] sm:$0xff]
      %v844 = vld [vmem:[%s196 + $0xefc] sm:$0xf]
      %v845 = vld [vmem:[%s196 + $0xf00] sm:$0xff]
      %v846 = vld [vmem:[%s196 + $0xf08] sm:$0xf]
      %v847 = vld [vmem:[%s196 + $0xf0c] sm:$0xff]
      %v848 = vld [vmem:[%s196 + $0xf14] sm:$0xf]
      %v849 = vld [vmem:[%s196 + $0xf18] sm:$0xff]
      %v850 = vld [vmem:[%s196 + $0xf20] sm:$0xf]
      %v851 = vld [vmem:[%s196 + $0xf24] sm:$0xff]
      %v852 = vld [vmem:[%s196 + $0xf2c] sm:$0xf]
      %v853 = vld [vmem:[%s196 + $0xf30] sm:$0xff]
      %v854 = vld [vmem:[%s196 + $0xf38] sm:$0xf]
      %v855 = vld [vmem:[%s196 + $0xf3c] sm:$0xff]
      %v856 = vld [vmem:[%s196 + $0xf44] sm:$0xf]
      %v857 = vld [vmem:[%s196 + $0xf48] sm:$0xff]
      %v858 = vld [vmem:[%s196 + $0xf50] sm:$0xf]
      %v859 = vld [vmem:[%s196 + $0xf54] sm:$0xff]
      %v860 = vld [vmem:[%s196 + $0xf5c] sm:$0xf]
      %v861 = vld [vmem:[%s196 + $0xf60] sm:$0xff]
      %v862 = vld [vmem:[%s196 + $0xf68] sm:$0xf]
      %v863 = vld [vmem:[%s196 + $0xf6c] sm:$0xff]
      %v864 = vld [vmem:[%s196 + $0xf74] sm:$0xf]
      %v865 = vld [vmem:[%s196 + $0xf78] sm:$0xff]
      %v866 = vld [vmem:[%s196 + $0xf80] sm:$0xf]
      %v867 = vld [vmem:[%s196 + $0xf84] sm:$0xff]
      %v868 = vld [vmem:[%s196 + $0xf8c] sm:$0xf]
      %v869 = vld [vmem:[%s196 + $0xf90] sm:$0xff]
      %v870 = vld [vmem:[%s196 + $0xf98] sm:$0xf]
      %v871 = vld [vmem:[%s196 + $0xf9c] sm:$0xff]
      %v872 = vld [vmem:[%s196 + $0xfa4] sm:$0xf]
      %v873 = vld [vmem:[%s196 + $0xfa8] sm:$0xff]
      %v874 = vld [vmem:[%s196 + $0xfb0] sm:$0xf]
      %v875 = vld [vmem:[%s196 + $0xfb4] sm:$0xff]
      %v876 = vld [vmem:[%s196 + $0xfbc] sm:$0xf]
      %v877 = vld [vmem:[%s196 + $0xfc0] sm:$0xff]
      %v878 = vld [vmem:[%s196 + $0xfc8] sm:$0xf]
      %v879 = vld [vmem:[%s196 + $0xfcc] sm:$0xff]
      %v880 = vld [vmem:[%s196 + $0xfd4] sm:$0xf]
      %v881 = vld [vmem:[%s196 + $0xfd8] sm:$0xff]
      %v882 = vld [vmem:[%s196 + $0xfe0] sm:$0xf]
      %v883 = vld [vmem:[%s196 + $0xfe4] sm:$0xff]
      %v884 = vld [vmem:[%s196 + $0xfec] sm:$0xf]
      %v885 = vld [vmem:[%s196 + $0xff0] sm:$0xff]
      %v886 = vld [vmem:[%s196 + $0xff8] sm:$0xf]
      %v887 = vld [vmem:[%s196 + $0xffc] sm:$0xff]
      %v888 = vld [vmem:[%s196 + $0x1004] sm:$0xf]
      %v889 = vld [vmem:[%s196 + $0x1008] sm:$0xff]
      %v890 = vld [vmem:[%s196 + $0x1010] sm:$0xf]
      %v891 = vld [vmem:[%s196 + $0x1014] sm:$0xff]
      %v892 = vld [vmem:[%s196 + $0x101c] sm:$0xf]
      %v893 = vld [vmem:[%s196 + $0x1020] sm:$0xff]
      %v894 = vld [vmem:[%s196 + $0x1028] sm:$0xf]
      %v895 = vld [vmem:[%s196 + $0x102c] sm:$0xff]
      %v896 = vld [vmem:[%s196 + $0x1034] sm:$0xf]
      %v897 = vld [vmem:[%s196 + $0x1038] sm:$0xff]
      %v898 = vld [vmem:[%s196 + $0x1040] sm:$0xf]
      %v899 = vld [vmem:[%s196 + $0x1044] sm:$0xff]
      %v900 = vld [vmem:[%s196 + $0x104c] sm:$0xf]
      %v901 = vld [vmem:[%s196 + $0x1050] sm:$0xff]
      %v902 = vld [vmem:[%s196 + $0x1058] sm:$0xf]
      %v903 = vld [vmem:[%s196 + $0x105c] sm:$0xff]
      %v904 = vld [vmem:[%s196 + $0x1064] sm:$0xf]
      %v905 = vld [vmem:[%s196 + $0x1068] sm:$0xff]
      %v906 = vld [vmem:[%s196 + $0x1070] sm:$0xf]
      %v907 = vld [vmem:[%s196 + $0x1074] sm:$0xff]
      %v908 = vld [vmem:[%s196 + $0x107c] sm:$0xf]
      %v909 = vld [vmem:[%s196 + $0x1080] sm:$0xff]
      %v910 = vld [vmem:[%s196 + $0x1088] sm:$0xf]
      %v911 = vld [vmem:[%s196 + $0x108c] sm:$0xff]
      %v912 = vld [vmem:[%s196 + $0x1094] sm:$0xf]
      %v913 = vld [vmem:[%s196 + $0x1098] sm:$0xff]
      %v914 = vld [vmem:[%s196 + $0x10a0] sm:$0xf]
      %v915 = vld [vmem:[%s196 + $0x10a4] sm:$0xff]
      %v916 = vld [vmem:[%s196 + $0x10ac] sm:$0xf]
      %v917 = vld [vmem:[%s196 + $0x10b0] sm:$0xff]
      %v918 = vld [vmem:[%s196 + $0x10b8] sm:$0xf]
      %v919 = vld [vmem:[%s196 + $0x10bc] sm:$0xff]
      %v920 = vld [vmem:[%s196 + $0x10c4] sm:$0xf]
      %v921 = vld [vmem:[%s196 + $0x10c8] sm:$0xff]
      %v922 = vld [vmem:[%s196 + $0x10d0] sm:$0xf]
      %v923 = vld [vmem:[%s196 + $0x10d4] sm:$0xff]
      %v924 = vld [vmem:[%s196 + $0x10dc] sm:$0xf]
      %v925 = vld [vmem:[%s196 + $0x10e0] sm:$0xff]
      %v926 = vld [vmem:[%s196 + $0x10e8] sm:$0xf]
      %v927 = vld [vmem:[%s196 + $0x10ec] sm:$0xff]
      %v928 = vld [vmem:[%s196 + $0x10f4] sm:$0xf]
      %v929 = vld [vmem:[%s196 + $0x10f8] sm:$0xff]
      %v930 = vld [vmem:[%s196 + $0x1100] sm:$0xf]
      %v931 = vld [vmem:[%s196 + $0x1104] sm:$0xff]
      %v932 = vld [vmem:[%s196 + $0x110c] sm:$0xf]
      %v933 = vld [vmem:[%s196 + $0x1110] sm:$0xff]
      %v934 = vld [vmem:[%s196 + $0x1118] sm:$0xf]
      %v935 = vld [vmem:[%s196 + $0x111c] sm:$0xff]
      %v936 = vld [vmem:[%s196 + $0x1124] sm:$0xf]
      %v937 = vld [vmem:[%s196 + $0x1128] sm:$0xff]
      %v938 = vld [vmem:[%s196 + $0x1130] sm:$0xf]
      %v939 = vld [vmem:[%s196 + $0x1134] sm:$0xff]
      %v940 = vld [vmem:[%s196 + $0x113c] sm:$0xf]
      %v941 = vld [vmem:[%s196 + $0x1140] sm:$0xff]
      %v942 = vld [vmem:[%s196 + $0x1148] sm:$0xf]
      %v943 = vld [vmem:[%s196 + $0x114c] sm:$0xff]
      %v944 = vld [vmem:[%s196 + $0x1154] sm:$0xf]
      %v945 = vld [vmem:[%s196 + $0x1158] sm:$0xff]
      %v946 = vld [vmem:[%s196 + $0x1160] sm:$0xf]
      %v947 = vld [vmem:[%s196 + $0x1164] sm:$0xff]
      %v948 = vld [vmem:[%s196 + $0x116c] sm:$0xf]
      %v949 = vld [vmem:[%s196 + $0x1170] sm:$0xff]
      %v950 = vld [vmem:[%s196 + $0x1178] sm:$0xf]
      %v951 = vld [vmem:[%s196 + $0x117c] sm:$0xff]
      %v952 = vld [vmem:[%s196 + $0x1184] sm:$0xf]
      %v953 = vld [vmem:[%s196 + $0x1188] sm:$0xff]
      %v954 = vld [vmem:[%s196 + $0x1190] sm:$0xf]
      %v955 = vld [vmem:[%s196 + $0x1194] sm:$0xff]
      %v956 = vld [vmem:[%s196 + $0x119c] sm:$0xf]
      %v957 = vld [vmem:[%s196 + $0x11a0] sm:$0xff]
      %v958 = vld [vmem:[%s196 + $0x11a8] sm:$0xf]
      %v959 = vld [vmem:[%s196 + $0x11ac] sm:$0xff]
      %v960 = vld [vmem:[%s196 + $0x11b4] sm:$0xf]
      %v961 = vld [vmem:[%s196 + $0x11b8] sm:$0xff]
      %v962 = vld [vmem:[%s196 + $0x11c0] sm:$0xf]
      %v963 = vld [vmem:[%s196 + $0x11c4] sm:$0xff]
      %v964 = vld [vmem:[%s196 + $0x11cc] sm:$0xf]
      %v965 = vld [vmem:[%s196 + $0x11d0] sm:$0xff]
      %v966 = vld [vmem:[%s196 + $0x11d8] sm:$0xf]
      %v967 = vld [vmem:[%s196 + $0x11dc] sm:$0xff]
      %v968 = vld [vmem:[%s196 + $0x11e4] sm:$0xf]
      %v969 = vld [vmem:[%s196 + $0x11e8] sm:$0xff]
      %v970 = vld [vmem:[%s196 + $0x11f0] sm:$0xf]
      %v971 = vld [vmem:[%s196 + $0x11f4] sm:$0xff]
      %v972 = vld [vmem:[%s196 + $0x11fc] sm:$0xf]
      %v973 = vld [vmem:[%s196 + $0x1200] sm:$0xff]
      %v974 = vld [vmem:[%s196 + $0x1208] sm:$0xf]
      %v975 = vld [vmem:[%s196 + $0x120c] sm:$0xff]
      %v976 = vld [vmem:[%s196 + $0x1214] sm:$0xf]
      %v977 = vld [vmem:[%s196 + $0x1218] sm:$0xff]
      %v978 = vld [vmem:[%s196 + $0x1220] sm:$0xf]
      %v979 = vld [vmem:[%s196 + $0x1224] sm:$0xff]
      %v980 = vld [vmem:[%s196 + $0x122c] sm:$0xf]
      %v981 = vld [vmem:[%s196 + $0x1230] sm:$0xff]
      %v982 = vld [vmem:[%s196 + $0x1238] sm:$0xf]
      %v983 = vld [vmem:[%s196 + $0x123c] sm:$0xff]
      %v984 = vld [vmem:[%s196 + $0x1244] sm:$0xf]
      %v985 = vld [vmem:[%s196 + $0x1248] sm:$0xff]
      %v986 = vld [vmem:[%s196 + $0x1250] sm:$0xf]
      %v987 = vld [vmem:[%s196 + $0x1254] sm:$0xff]
      %v988 = vld [vmem:[%s196 + $0x125c] sm:$0xf]
      %v989 = vld [vmem:[%s196 + $0x1260] sm:$0xff]
      %v990 = vld [vmem:[%s196 + $0x1268] sm:$0xf]
      %v991 = vld [vmem:[%s196 + $0x126c] sm:$0xff]
      %v992 = vld [vmem:[%s196 + $0x1274] sm:$0xf]
      %v993 = vld [vmem:[%s196 + $0x1278] sm:$0xff]
      %v994 = vld [vmem:[%s196 + $0x1280] sm:$0xf]
      %v995 = vld [vmem:[%s196 + $0x1284] sm:$0xff]
      %v996 = vld [vmem:[%s196 + $0x128c] sm:$0xf]
      %v997 = vld [vmem:[%s196 + $0x1290] sm:$0xff]
      %v998 = vld [vmem:[%s196 + $0x1298] sm:$0xf]
      %v999 = vld [vmem:[%s196 + $0x129c] sm:$0xff]
      %v1000 = vld [vmem:[%s196 + $0x12a4] sm:$0xf]
      %v1001 = vld [vmem:[%s196 + $0x12a8] sm:$0xff]
      %v1002 = vld [vmem:[%s196 + $0x12b0] sm:$0xf]
      %v1003 = vld [vmem:[%s196 + $0x12b4] sm:$0xff]
      %v1004 = vld [vmem:[%s196 + $0x12bc] sm:$0xf]
      %v1005 = vld [vmem:[%s196 + $0x12c0] sm:$0xff]
      %v1006 = vld [vmem:[%s196 + $0x12c8] sm:$0xf]
      %v1007 = vld [vmem:[%s196 + $0x12cc] sm:$0xff]
      %v1008 = vld [vmem:[%s196 + $0x12d4] sm:$0xf]
      %v1009 = vld [vmem:[%s196 + $0x12d8] sm:$0xff]
      %v1010 = vld [vmem:[%s196 + $0x12e0] sm:$0xf]
      %v1011 = vld [vmem:[%s196 + $0x12e4] sm:$0xff]
      %v1012 = vld [vmem:[%s196 + $0x12ec] sm:$0xf]
      %v1013 = vld [vmem:[%s196 + $0x12f0] sm:$0xff]
      %v1014 = vld [vmem:[%s196 + $0x12f8] sm:$0xf]
      %v1015 = vld [vmem:[%s196 + $0x12fc] sm:$0xff]
      %v1016 = vld [vmem:[%s196 + $0x1304] sm:$0xf]
      %v1017 = vld [vmem:[%s196 + $0x1308] sm:$0xff]
      %v1018 = vld [vmem:[%s196 + $0x1310] sm:$0xf]
      %v1019 = vld [vmem:[%s196 + $0x1314] sm:$0xff]
      %v1020 = vld [vmem:[%s196 + $0x131c] sm:$0xf]
      %v1021 = vld [vmem:[%s196 + $0x1320] sm:$0xff]
      %v1022 = vld [vmem:[%s196 + $0x1328] sm:$0xf]
      %v1023 = vld [vmem:[%s196 + $0x132c] sm:$0xff]
      %v1024 = vld [vmem:[%s196 + $0x1334] sm:$0xf]
      %v1025 = vld [vmem:[%s196 + $0x1338] sm:$0xff]
      %v1026 = vld [vmem:[%s196 + $0x1340] sm:$0xf]
      %v1027 = vld [vmem:[%s196 + $0x1344] sm:$0xff]
      %v1028 = vld [vmem:[%s196 + $0x134c] sm:$0xf]
      %v1029 = vld [vmem:[%s196 + $0x1350] sm:$0xff]
      %v1030 = vld [vmem:[%s196 + $0x1358] sm:$0xf]
      %v1031 = vld [vmem:[%s196 + $0x135c] sm:$0xff]
      %v1032 = vld [vmem:[%s196 + $0x1364] sm:$0xf]
      %v1033 = vld [vmem:[%s196 + $0x1368] sm:$0xff]
      %v1034 = vld [vmem:[%s196 + $0x1370] sm:$0xf]
      %v1035 = vld [vmem:[%s196 + $0x1374] sm:$0xff]
      %v1036 = vld [vmem:[%s196 + $0x137c] sm:$0xf]
      %v1037 = vld [vmem:[%s196 + $0x1380] sm:$0xff]
      %v1038 = vld [vmem:[%s196 + $0x1388] sm:$0xf]
      %v1039 = vld [vmem:[%s196 + $0x138c] sm:$0xff]
      %v1040 = vld [vmem:[%s196 + $0x1394] sm:$0xf]
      %v1041 = vld [vmem:[%s196 + $0x1398] sm:$0xff]
      %v1042 = vld [vmem:[%s196 + $0x13a0] sm:$0xf]
      %v1043 = vld [vmem:[%s196 + $0x13a4] sm:$0xff]
      %v1044 = vld [vmem:[%s196 + $0x13ac] sm:$0xf]
      %v1045 = vld [vmem:[%s196 + $0x13b0] sm:$0xff]
      %v1046 = vld [vmem:[%s196 + $0x13b8] sm:$0xf]
      %v1047 = vld [vmem:[%s196 + $0x13bc] sm:$0xff]
      %v1048 = vld [vmem:[%s196 + $0x13c4] sm:$0xf]
      %v1049 = vld [vmem:[%s196 + $0x13c8] sm:$0xff]
      %v1050 = vld [vmem:[%s196 + $0x13d0] sm:$0xf]
      %v1051 = vld [vmem:[%s196 + $0x13d4] sm:$0xff]
      %v1052 = vld [vmem:[%s196 + $0x13dc] sm:$0xf]
      %v1053 = vld [vmem:[%s196 + $0x13e0] sm:$0xff]
      %v1054 = vld [vmem:[%s196 + $0x13e8] sm:$0xf]
      %v1055 = vld [vmem:[%s196 + $0x13ec] sm:$0xff]
      %v1056 = vld [vmem:[%s196 + $0x13f4] sm:$0xf]
      %v1057 = vld [vmem:[%s196 + $0x13f8] sm:$0xff]
      %v1058 = vld [vmem:[%s196 + $0x1400] sm:$0xf]
      %v1059 = vld [vmem:[%s196 + $0x1404] sm:$0xff]
      %v1060 = vld [vmem:[%s196 + $0x140c] sm:$0xf]
      %v1061 = vld [vmem:[%s196 + $0x1410] sm:$0xff]
      %v1062 = vld [vmem:[%s196 + $0x1418] sm:$0xf]
      %v1063 = vld [vmem:[%s196 + $0x141c] sm:$0xff]
      %v1064 = vld [vmem:[%s196 + $0x1424] sm:$0xf]
      %v1065 = vld [vmem:[%s196 + $0x1428] sm:$0xff]
      %v1066 = vld [vmem:[%s196 + $0x1430] sm:$0xf]
      %v1067 = vld [vmem:[%s196 + $0x1434] sm:$0xff]
      %v1068 = vld [vmem:[%s196 + $0x143c] sm:$0xf]
      %v1069 = vld [vmem:[%s196 + $0x1440] sm:$0xff]
      %v1070 = vld [vmem:[%s196 + $0x1448] sm:$0xf]
      %v1071 = vld [vmem:[%s196 + $0x144c] sm:$0xff]
      %v1072 = vld [vmem:[%s196 + $0x1454] sm:$0xf]
      %v1073 = vld [vmem:[%s196 + $0x1458] sm:$0xff]
      %v1074 = vld [vmem:[%s196 + $0x1460] sm:$0xf]
      %v1075 = vld [vmem:[%s196 + $0x1464] sm:$0xff]
      %v1076 = vld [vmem:[%s196 + $0x146c] sm:$0xf]
      %v1077 = vld [vmem:[%s196 + $0x1470] sm:$0xff]
      %v1078 = vld [vmem:[%s196 + $0x1478] sm:$0xf]
      %v1079 = vld [vmem:[%s196 + $0x147c] sm:$0xff]
      %v1080 = vld [vmem:[%s196 + $0x1484] sm:$0xf]
      %v1081 = vld [vmem:[%s196 + $0x1488] sm:$0xff]
      %v1082 = vld [vmem:[%s196 + $0x1490] sm:$0xf]
      %v1083 = vld [vmem:[%s196 + $0x1494] sm:$0xff]
      %v1084 = vld [vmem:[%s196 + $0x149c] sm:$0xf]
      %v1085 = vld [vmem:[%s196 + $0x14a0] sm:$0xff]
      %v1086 = vld [vmem:[%s196 + $0x14a8] sm:$0xf]
      %v1087 = vld [vmem:[%s196 + $0x14ac] sm:$0xff]
      %v1088 = vld [vmem:[%s196 + $0x14b4] sm:$0xf]
      %v1089 = vld [vmem:[%s196 + $0x14b8] sm:$0xff]
      %v1090 = vld [vmem:[%s196 + $0x14c0] sm:$0xf]
      %v1091 = vld [vmem:[%s196 + $0x14c4] sm:$0xff]
      %v1092 = vld [vmem:[%s196 + $0x14cc] sm:$0xf]
      %v1093 = vld [vmem:[%s196 + $0x14d0] sm:$0xff]
      %v1094 = vld [vmem:[%s196 + $0x14d8] sm:$0xf]
      %v1095 = vld [vmem:[%s196 + $0x14dc] sm:$0xff]
      %v1096 = vld [vmem:[%s196 + $0x14e4] sm:$0xf]
      %v1097 = vld [vmem:[%s196 + $0x14e8] sm:$0xff]
      %v1098 = vld [vmem:[%s196 + $0x14f0] sm:$0xf]
      %v1099 = vld [vmem:[%s196 + $0x14f4] sm:$0xff]
      %v1100 = vld [vmem:[%s196 + $0x14fc] sm:$0xf]
      %v1101 = vld [vmem:[%s196 + $0x1500] sm:$0xff]
      %v1102 = vld [vmem:[%s196 + $0x1508] sm:$0xf]
      %v1103 = vld [vmem:[%s196 + $0x150c] sm:$0xff]
      %v1104 = vld [vmem:[%s196 + $0x1514] sm:$0xf]
      %v1105 = vld [vmem:[%s196 + $0x1518] sm:$0xff]
      %v1106 = vld [vmem:[%s196 + $0x1520] sm:$0xf]
      %v1107 = vld [vmem:[%s196 + $0x1524] sm:$0xff]
      %v1108 = vld [vmem:[%s196 + $0x152c] sm:$0xf]
      %v1109 = vld [vmem:[%s196 + $0x1530] sm:$0xff]
      %v1110 = vld [vmem:[%s196 + $0x1538] sm:$0xf]
      %v1111 = vld [vmem:[%s196 + $0x153c] sm:$0xff]
      %v1112 = vld [vmem:[%s196 + $0x1544] sm:$0xf]
      %v1113 = vld [vmem:[%s196 + $0x1548] sm:$0xff]
      %v1114 = vld [vmem:[%s196 + $0x1550] sm:$0xf]
      %v1115 = vld [vmem:[%s196 + $0x1554] sm:$0xff]
      %v1116 = vld [vmem:[%s196 + $0x155c] sm:$0xf]
      %v1117 = vld [vmem:[%s196 + $0x1560] sm:$0xff]
      %v1118 = vld [vmem:[%s196 + $0x1568] sm:$0xf]
      %v1119 = vld [vmem:[%s196 + $0x156c] sm:$0xff]
      %v1120 = vld [vmem:[%s196 + $0x1574] sm:$0xf]
      %v1121 = vld [vmem:[%s196 + $0x1578] sm:$0xff]
      %v1122 = vld [vmem:[%s196 + $0x1580] sm:$0xf]
      %v1123 = vld [vmem:[%s196 + $0x1584] sm:$0xff]
      %v1124 = vld [vmem:[%s196 + $0x158c] sm:$0xf]
      %v1125 = vld [vmem:[%s196 + $0x1590] sm:$0xff]
      %v1126 = vld [vmem:[%s196 + $0x1598] sm:$0xf]
      %v1127 = vld [vmem:[%s196 + $0x159c] sm:$0xff]
      %v1128 = vld [vmem:[%s196 + $0x15a4] sm:$0xf]
      %v1129 = vld [vmem:[%s196 + $0x15a8] sm:$0xff]
      %v1130 = vld [vmem:[%s196 + $0x15b0] sm:$0xf]
      %v1131 = vld [vmem:[%s196 + $0x15b4] sm:$0xff]
      %v1132 = vld [vmem:[%s196 + $0x15bc] sm:$0xf]
      %v1133 = vld [vmem:[%s196 + $0x15c0] sm:$0xff]
      %v1134 = vld [vmem:[%s196 + $0x15c8] sm:$0xf]
      %v1135 = vld [vmem:[%s196 + $0x15cc] sm:$0xff]
      %v1136 = vld [vmem:[%s196 + $0x15d4] sm:$0xf]
      %v1137 = vld [vmem:[%s196 + $0x15d8] sm:$0xff]
      %v1138 = vld [vmem:[%s196 + $0x15e0] sm:$0xf]
      %v1139 = vld [vmem:[%s196 + $0x15e4] sm:$0xff]
      %v1140 = vld [vmem:[%s196 + $0x15ec] sm:$0xf]
      %v1141 = vld [vmem:[%s196 + $0x15f0] sm:$0xff]
      %v1142 = vld [vmem:[%s196 + $0x15f8] sm:$0xf]
      %v1143 = vld [vmem:[%s196 + $0x15fc] sm:$0xff]
      %v1144 = vld [vmem:[%s196 + $0x1604] sm:$0xf]
      %v1145 = vld [vmem:[%s196 + $0x1608] sm:$0xff]
      %v1146 = vld [vmem:[%s196 + $0x1610] sm:$0xf]
      %v1147 = vld [vmem:[%s196 + $0x1614] sm:$0xff]
      %v1148 = vld [vmem:[%s196 + $0x161c] sm:$0xf]
      %v1149 = vld [vmem:[%s196 + $0x1620] sm:$0xff]
      %v1150 = vld [vmem:[%s196 + $0x1628] sm:$0xf]
      %v1151 = vld [vmem:[%s196 + $0x162c] sm:$0xff]
      %v1152 = vld [vmem:[%s196 + $0x1634] sm:$0xf]
      %v1153 = vld [vmem:[%s196 + $0x1638] sm:$0xff]
      %v1154 = vld [vmem:[%s196 + $0x1640] sm:$0xf]
      %v1155 = vld [vmem:[%s196 + $0x1644] sm:$0xff]
      %v1156 = vld [vmem:[%s196 + $0x164c] sm:$0xf]
      %v1157 = vld [vmem:[%s196 + $0x1650] sm:$0xff]
      %v1158 = vld [vmem:[%s196 + $0x1658] sm:$0xf]
      %v1159 = vld [vmem:[%s196 + $0x165c] sm:$0xff]
      %v1160 = vld [vmem:[%s196 + $0x1664] sm:$0xf]
      %v1161 = vld [vmem:[%s196 + $0x1668] sm:$0xff]
      %v1162 = vld [vmem:[%s196 + $0x1670] sm:$0xf]
      %v1163 = vld [vmem:[%s196 + $0x1674] sm:$0xff]
      %v1164 = vld [vmem:[%s196 + $0x167c] sm:$0xf]
      %v1165 = vld [vmem:[%s196 + $0x1680] sm:$0xff]
      %v1166 = vld [vmem:[%s196 + $0x1688] sm:$0xf]
      %v1167 = vld [vmem:[%s196 + $0x168c] sm:$0xff]
      %v1168 = vld [vmem:[%s196 + $0x1694] sm:$0xf]
      %v1169 = vld [vmem:[%s196 + $0x1698] sm:$0xff]
      %v1170 = vld [vmem:[%s196 + $0x16a0] sm:$0xf]
      %v1171 = vld [vmem:[%s196 + $0x16a4] sm:$0xff]
      %v1172 = vld [vmem:[%s196 + $0x16ac] sm:$0xf]
      %v1173 = vld [vmem:[%s196 + $0x16b0] sm:$0xff]
      %v1174 = vld [vmem:[%s196 + $0x16b8] sm:$0xf]
      %v1175 = vld [vmem:[%s196 + $0x16bc] sm:$0xff]
      %v1176 = vld [vmem:[%s196 + $0x16c4] sm:$0xf]
      %v1177 = vld [vmem:[%s196 + $0x16c8] sm:$0xff]
      %v1178 = vld [vmem:[%s196 + $0x16d0] sm:$0xf]
      %v1179 = vld [vmem:[%s196 + $0x16d4] sm:$0xff]
      %v1180 = vld [vmem:[%s196 + $0x16dc] sm:$0xf]
      %v1181 = vld [vmem:[%s196 + $0x16e0] sm:$0xff]
      %v1182 = vld [vmem:[%s196 + $0x16e8] sm:$0xf]
      %v1183 = vld [vmem:[%s196 + $0x16ec] sm:$0xff]
      %v1184 = vld [vmem:[%s196 + $0x16f4] sm:$0xf]
      %v1185 = vld [vmem:[%s196 + $0x16f8] sm:$0xff]
      %v1186 = vld [vmem:[%s196 + $0x1700] sm:$0xf]
      %v1187 = vld [vmem:[%s196 + $0x1704] sm:$0xff]
      %v1188 = vld [vmem:[%s196 + $0x170c] sm:$0xf]
      %v1189 = vld [vmem:[%s196 + $0x1710] sm:$0xff]
      %v1190 = vld [vmem:[%s196 + $0x1718] sm:$0xf]
      %v1191 = vld [vmem:[%s196 + $0x171c] sm:$0xff]
      %v1192 = vld [vmem:[%s196 + $0x1724] sm:$0xf]
      %v1193 = vld [vmem:[%s196 + $0x1728] sm:$0xff]
      %v1194 = vld [vmem:[%s196 + $0x1730] sm:$0xf]
      %v1195 = vld [vmem:[%s196 + $0x1734] sm:$0xff]
      %v1196 = vld [vmem:[%s196 + $0x173c] sm:$0xf]
      %v1197 = vld [vmem:[%s196 + $0x1740] sm:$0xff]
      %v1198 = vld [vmem:[%s196 + $0x1748] sm:$0xf]
      %v1199 = vld [vmem:[%s196 + $0x174c] sm:$0xff]
      %v1200 = vld [vmem:[%s196 + $0x1754] sm:$0xf]
      %v1201 = vld [vmem:[%s196 + $0x1758] sm:$0xff]
      %v1202 = vld [vmem:[%s196 + $0x1760] sm:$0xf]
      %v1203 = vld [vmem:[%s196 + $0x1764] sm:$0xff]
      %v1204 = vld [vmem:[%s196 + $0x176c] sm:$0xf]
      %v1205 = vld [vmem:[%s196 + $0x1770] sm:$0xff]
      %v1206 = vld [vmem:[%s196 + $0x1778] sm:$0xf]
      %v1207 = vld [vmem:[%s196 + $0x177c] sm:$0xff]
      %v1208 = vld [vmem:[%s196 + $0x1784] sm:$0xf]
      %v1209 = vld [vmem:[%s196 + $0x1788] sm:$0xff]
      %v1210 = vld [vmem:[%s196 + $0x1790] sm:$0xf]
      %v1211 = vld [vmem:[%s196 + $0x1794] sm:$0xff]
      %v1212 = vld [vmem:[%s196 + $0x179c] sm:$0xf]
      %v1213 = vld [vmem:[%s196 + $0x17a0] sm:$0xff]
      %v1214 = vld [vmem:[%s196 + $0x17a8] sm:$0xf]
      %v1215 = vld [vmem:[%s196 + $0x17ac] sm:$0xff]
      %v1216 = vld [vmem:[%s196 + $0x17b4] sm:$0xf]
      %v1217 = vld [vmem:[%s196 + $0x17b8] sm:$0xff]
      %v1218 = vld [vmem:[%s196 + $0x17c0] sm:$0xf]
      %v1219 = vld [vmem:[%s196 + $0x17c4] sm:$0xff]
      %v1220 = vld [vmem:[%s196 + $0x17cc] sm:$0xf]
      %v1221 = vld [vmem:[%s196 + $0x17d0] sm:$0xff]
      %v1222 = vld [vmem:[%s196 + $0x17d8] sm:$0xf]
      %v1223 = vld [vmem:[%s196 + $0x17dc] sm:$0xff]
      %v1224 = vld [vmem:[%s196 + $0x17e4] sm:$0xf]
      %v1225 = vld [vmem:[%s196 + $0x17e8] sm:$0xff]
      %v1226 = vld [vmem:[%s196 + $0x17f0] sm:$0xf]
      %v1227 = vld [vmem:[%s196 + $0x17f4] sm:$0xff]
      %v1228 = vld [vmem:[%s196 + $0x17fc] sm:$0xf]
      %v1229 = vld [vmem:[%s196 + $0x1800] sm:$0xff]
      %v1230 = vld [vmem:[%s196 + $0x1808] sm:$0xf]
      %v1231 = vld [vmem:[%s196 + $0x180c] sm:$0xff]
      %v1232 = vld [vmem:[%s196 + $0x1814] sm:$0xf]
      %v1233 = vld [vmem:[%s196 + $0x1818] sm:$0xff]
      %v1234 = vld [vmem:[%s196 + $0x1820] sm:$0xf]
      %v1235 = vld [vmem:[%s196 + $0x1824] sm:$0xff]
      %v1236 = vld [vmem:[%s196 + $0x182c] sm:$0xf]
      %v1237 = vld [vmem:[%s196 + $0x1830] sm:$0xff]
      %v1238 = vld [vmem:[%s196 + $0x1838] sm:$0xf]
      %v1239 = vld [vmem:[%s196 + $0x183c] sm:$0xff]
      %v1240 = vld [vmem:[%s196 + $0x1844] sm:$0xf]
      %v1241 = vld [vmem:[%s196 + $0x1848] sm:$0xff]
      %v1242 = vld [vmem:[%s196 + $0x1850] sm:$0xf]
      %v1243 = vld [vmem:[%s196 + $0x1854] sm:$0xff]
      %v1244 = vld [vmem:[%s196 + $0x185c] sm:$0xf]
      %v1245 = vld [vmem:[%s196 + $0x1860] sm:$0xff]
      %v1246 = vld [vmem:[%s196 + $0x1868] sm:$0xf]
      %v1247 = vld [vmem:[%s196 + $0x186c] sm:$0xff]
      %v1248 = vld [vmem:[%s196 + $0x1874] sm:$0xf]
      %v1249 = vld [vmem:[%s196 + $0x1878] sm:$0xff]
      %v1250 = vld [vmem:[%s196 + $0x1880] sm:$0xf]
      %v1251 = vld [vmem:[%s196 + $0x1884] sm:$0xff]
      %v1252 = vld [vmem:[%s196 + $0x188c] sm:$0xf]
      %v1253 = vld [vmem:[%s196 + $0x1890] sm:$0xff]
      %v1254 = vld [vmem:[%s196 + $0x1898] sm:$0xf]
      %v1255 = vld [vmem:[%s1] sm:$0xf]
      %v1256 = vld [vmem:[%s1 + $0x4] sm:$0xf]
      %v1257 = vld [vmem:[%s1 + $0x8] sm:$0xf]
      %v1258 = vld [vmem:[%s1 + $0xc] sm:$0xf]
      %v1259 = vld [vmem:[%s1 + $0x10] sm:$0xf]
      %v1260 = vld [vmem:[%s1 + $0x14] sm:$0xf]
      %v1261 = vld [vmem:[%s1 + $0x18] sm:$0xf]
      %v1262 = vld [vmem:[%s1 + $0x1c] sm:$0xf]
      %v1263 = vld [vmem:[%s1 + $0x20] sm:$0xf]
      %v1264 = vld [vmem:[%s1 + $0x24] sm:$0xf]
      %v1265 = vld [vmem:[%s1 + $0x28] sm:$0xf]
      %v1266 = vld [vmem:[%s1 + $0x2c] sm:$0xf]
      %v1267 = vld [vmem:[%s1 + $0x30] sm:$0xf]
      %v1268 = vld [vmem:[%s1 + $0x34] sm:$0xf]
      %v1269 = vld [vmem:[%s1 + $0x38] sm:$0xf]
      %v1270 = vld [vmem:[%s1 + $0x3c] sm:$0xf]
      %v1271 = vld [vmem:[%s1 + $0x40] sm:$0xf]
      %v1272 = vld [vmem:[%s1 + $0x44] sm:$0xf]
      %v1273 = vld [vmem:[%s1 + $0x48] sm:$0xf]
      %v1274 = vld [vmem:[%s1 + $0x4c] sm:$0xf]
      %v1275 = vld [vmem:[%s1 + $0x50] sm:$0xf]
      %v1276 = vld [vmem:[%s1 + $0x54] sm:$0xf]
      %v1277 = vld [vmem:[%s1 + $0x58] sm:$0xf]
      %v1278 = vld [vmem:[%s1 + $0x5c] sm:$0xf]
      %v1279 = vld [vmem:[%s1 + $0x60] sm:$0xf]
      %v1280 = vld [vmem:[%s1 + $0x64] sm:$0xf]
      %v1281 = vld [vmem:[%s1 + $0x68] sm:$0xf]
      %v1282 = vld [vmem:[%s1 + $0x6c] sm:$0xf]
      %v1283 = vld [vmem:[%s1 + $0x70] sm:$0xf]
      %v1284 = vld [vmem:[%s1 + $0x74] sm:$0xf]
      %v1285 = vld [vmem:[%s1 + $0x78] sm:$0xf]
      %v1286 = vld [vmem:[%s1 + $0x7c] sm:$0xf]
      %v1287 = vld [vmem:[%s1 + $0x80] sm:$0xf]
      %v1288 = vld [vmem:[%s1 + $0x84] sm:$0xf]
      %v1289 = vld [vmem:[%s1 + $0x88] sm:$0xf]
      %v1290 = vld [vmem:[%s1 + $0x8c] sm:$0xf]
      %v2341 = vunpack.c.l.b16 %v205
      %v2342 = vunpack.c.h.b16 %v205
      %v2343 = vunpack.c.l.b16 %v206
      %v2344 = vunpack.c.l.b16 %v207
      %v2345 = vunpack.c.h.b16 %v207
      %v2346 = vunpack.c.l.b16 %v208
      %v2347 = vunpack.c.l.b16 %v209
      %v2348 = vunpack.c.h.b16 %v209
      %v2349 = vunpack.c.l.b16 %v210
      %v2350 = vunpack.c.l.b16 %v211
      %v2351 = vunpack.c.h.b16 %v211
      %v2352 = vunpack.c.l.b16 %v212
      %v2353 = vunpack.c.l.b16 %v213
      %v2354 = vunpack.c.h.b16 %v213
      %v2355 = vunpack.c.l.b16 %v214
      %v2356 = vunpack.c.l.b16 %v215
      %v2357 = vunpack.c.h.b16 %v215
      %v2358 = vunpack.c.l.b16 %v216
      %v2359 = vunpack.c.l.b16 %v217
      %v2360 = vunpack.c.h.b16 %v217
      %v2361 = vunpack.c.l.b16 %v218
      %v2362 = vunpack.c.l.b16 %v219
      %v2363 = vunpack.c.h.b16 %v219
      %v2364 = vunpack.c.l.b16 %v220
      %v2365 = vunpack.c.l.b16 %v221
      %v2366 = vunpack.c.h.b16 %v221
      %v2367 = vunpack.c.l.b16 %v222
      %v2368 = vunpack.c.l.b16 %v223
      %v2369 = vunpack.c.h.b16 %v223
      %v2370 = vunpack.c.l.b16 %v224
      %v2371 = vunpack.c.l.b16 %v225
      %v2372 = vunpack.c.h.b16 %v225
      %v2373 = vunpack.c.l.b16 %v226
      %v2374 = vunpack.c.l.b16 %v227
      %v2375 = vunpack.c.h.b16 %v227
      %v2376 = vunpack.c.l.b16 %v228
      %v2377 = vunpack.c.l.b16 %v229
      %v2378 = vunpack.c.h.b16 %v229
      %v2379 = vunpack.c.l.b16 %v230
      %v2380 = vunpack.c.l.b16 %v231
      %v2381 = vunpack.c.h.b16 %v231
      %v2382 = vunpack.c.l.b16 %v232
      %v2383 = vunpack.c.l.b16 %v233
      %v2384 = vunpack.c.h.b16 %v233
      %v2385 = vunpack.c.l.b16 %v234
      %v2386 = vunpack.c.l.b16 %v235
      %v2387 = vunpack.c.h.b16 %v235
      %v2388 = vunpack.c.l.b16 %v236
      %v2389 = vunpack.c.l.b16 %v237
      %v2390 = vunpack.c.h.b16 %v237
      %v2391 = vunpack.c.l.b16 %v238
      %v2392 = vunpack.c.l.b16 %v239
      %v2393 = vunpack.c.h.b16 %v239
      %v2394 = vunpack.c.l.b16 %v240
      %v2395 = vunpack.c.l.b16 %v241
      %v2396 = vunpack.c.h.b16 %v241
      %v2397 = vunpack.c.l.b16 %v242
      %v2398 = vunpack.c.l.b16 %v243
      %v2399 = vunpack.c.h.b16 %v243
      %v2400 = vunpack.c.l.b16 %v244
      %v2401 = vunpack.c.l.b16 %v245
      %v2402 = vunpack.c.h.b16 %v245
      %v2403 = vunpack.c.l.b16 %v246
      %v2404 = vunpack.c.l.b16 %v247
      %v2405 = vunpack.c.h.b16 %v247
      %v2406 = vunpack.c.l.b16 %v248
      %v2407 = vunpack.c.l.b16 %v249
      %v2408 = vunpack.c.h.b16 %v249
      %v2409 = vunpack.c.l.b16 %v250
      %v2410 = vunpack.c.l.b16 %v251
      %v2411 = vunpack.c.h.b16 %v251
      %v2412 = vunpack.c.l.b16 %v252
      %v2413 = vunpack.c.l.b16 %v253
      %v2414 = vunpack.c.h.b16 %v253
      %v2415 = vunpack.c.l.b16 %v254
      %v2416 = vunpack.c.l.b16 %v255
      %v2417 = vunpack.c.h.b16 %v255
      %v2418 = vunpack.c.l.b16 %v256
      %v2419 = vunpack.c.l.b16 %v257
      %v2420 = vunpack.c.h.b16 %v257
      %v2421 = vunpack.c.l.b16 %v258
      %v2422 = vunpack.c.l.b16 %v259
      %v2423 = vunpack.c.h.b16 %v259
      %v2424 = vunpack.c.l.b16 %v260
      %v2425 = vunpack.c.l.b16 %v261
      %v2426 = vunpack.c.h.b16 %v261
      %v2427 = vunpack.c.l.b16 %v262
      %v2428 = vunpack.c.l.b16 %v263
      %v2429 = vunpack.c.h.b16 %v263
      %v2430 = vunpack.c.l.b16 %v264
      %v2431 = vunpack.c.l.b16 %v265
      %v2432 = vunpack.c.h.b16 %v265
      %v2433 = vunpack.c.l.b16 %v266
      %v2434 = vunpack.c.l.b16 %v267
      %v2435 = vunpack.c.h.b16 %v267
      %v2436 = vunpack.c.l.b16 %v268
      %v2437 = vunpack.c.l.b16 %v269
      %v2438 = vunpack.c.h.b16 %v269
      %v2439 = vunpack.c.l.b16 %v270
      %v2440 = vunpack.c.l.b16 %v271
      %v2441 = vunpack.c.h.b16 %v271
      %v2442 = vunpack.c.l.b16 %v272
      %v2443 = vunpack.c.l.b16 %v273
      %v2444 = vunpack.c.h.b16 %v273
      %v2445 = vunpack.c.l.b16 %v274
      %v2446 = vunpack.c.l.b16 %v275
      %v2447 = vunpack.c.h.b16 %v275
      %v2448 = vunpack.c.l.b16 %v276
      %v2449 = vunpack.c.l.b16 %v277
      %v2450 = vunpack.c.h.b16 %v277
      %v2451 = vunpack.c.l.b16 %v278
      %v2452 = vunpack.c.l.b16 %v279
      %v2453 = vunpack.c.h.b16 %v279
      %v2454 = vunpack.c.l.b16 %v280
      %v2455 = vunpack.c.l.b16 %v281
      %v2456 = vunpack.c.h.b16 %v281
      %v2457 = vunpack.c.l.b16 %v282
      %v2458 = vunpack.c.l.b16 %v283
      %v2459 = vunpack.c.h.b16 %v283
      %v2460 = vunpack.c.l.b16 %v284
      %v2461 = vunpack.c.l.b16 %v285
      %v2462 = vunpack.c.h.b16 %v285
      %v2463 = vunpack.c.l.b16 %v286
      %v2464 = vunpack.c.l.b16 %v287
      %v2465 = vunpack.c.h.b16 %v287
      %v2466 = vunpack.c.l.b16 %v288
      %v2467 = vunpack.c.l.b16 %v289
      %v2468 = vunpack.c.h.b16 %v289
      %v2469 = vunpack.c.l.b16 %v290
      %v2470 = vunpack.c.l.b16 %v291
      %v2471 = vunpack.c.h.b16 %v291
      %v2472 = vunpack.c.l.b16 %v292
      %v2473 = vunpack.c.l.b16 %v293
      %v2474 = vunpack.c.h.b16 %v293
      %v2475 = vunpack.c.l.b16 %v294
      %v2476 = vunpack.c.l.b16 %v295
      %v2477 = vunpack.c.h.b16 %v295
      %v2478 = vunpack.c.l.b16 %v296
      %v2479 = vunpack.c.l.b16 %v297
      %v2480 = vunpack.c.h.b16 %v297
      %v2481 = vunpack.c.l.b16 %v298
      %v2482 = vunpack.c.l.b16 %v299
      %v2483 = vunpack.c.h.b16 %v299
      %v2484 = vunpack.c.l.b16 %v300
      %v2485 = vunpack.c.l.b16 %v301
      %v2486 = vunpack.c.h.b16 %v301
      %v2487 = vunpack.c.l.b16 %v302
      %v2488 = vunpack.c.l.b16 %v303
      %v2489 = vunpack.c.h.b16 %v303
      %v2490 = vunpack.c.l.b16 %v304
      %v2491 = vunpack.c.l.b16 %v305
      %v2492 = vunpack.c.h.b16 %v305
      %v2493 = vunpack.c.l.b16 %v306
      %v2494 = vunpack.c.l.b16 %v307
      %v2495 = vunpack.c.h.b16 %v307
      %v2496 = vunpack.c.l.b16 %v308
      %v2497 = vunpack.c.l.b16 %v309
      %v2498 = vunpack.c.h.b16 %v309
      %v2499 = vunpack.c.l.b16 %v310
      %v2500 = vunpack.c.l.b16 %v311
      %v2501 = vunpack.c.h.b16 %v311
      %v2502 = vunpack.c.l.b16 %v312
      %v2503 = vunpack.c.l.b16 %v313
      %v2504 = vunpack.c.h.b16 %v313
      %v2505 = vunpack.c.l.b16 %v314
      %v2506 = vunpack.c.l.b16 %v315
      %v2507 = vunpack.c.h.b16 %v315
      %v2508 = vunpack.c.l.b16 %v316
      %v2509 = vunpack.c.l.b16 %v317
      %v2510 = vunpack.c.h.b16 %v317
      %v2511 = vunpack.c.l.b16 %v318
      %v2512 = vunpack.c.l.b16 %v319
      %v2513 = vunpack.c.h.b16 %v319
      %v2514 = vunpack.c.l.b16 %v320
      %v2515 = vunpack.c.l.b16 %v321
      %v2516 = vunpack.c.h.b16 %v321
      %v2517 = vunpack.c.l.b16 %v322
      %v2518 = vunpack.c.l.b16 %v323
      %v2519 = vunpack.c.h.b16 %v323
      %v2520 = vunpack.c.l.b16 %v324
      %v2521 = vunpack.c.l.b16 %v325
      %v2522 = vunpack.c.h.b16 %v325
      %v2523 = vunpack.c.l.b16 %v326
      %v2524 = vunpack.c.l.b16 %v327
      %v2525 = vunpack.c.h.b16 %v327
      %v2526 = vunpack.c.l.b16 %v328
      %v2527 = vunpack.c.l.b16 %v329
      %v2528 = vunpack.c.h.b16 %v329
      %v2529 = vunpack.c.l.b16 %v330
      %v2530 = vunpack.c.l.b16 %v331
      %v2531 = vunpack.c.h.b16 %v331
      %v2532 = vunpack.c.l.b16 %v332
      %v2533 = vunpack.c.l.b16 %v333
      %v2534 = vunpack.c.h.b16 %v333
      %v2535 = vunpack.c.l.b16 %v334
      %v2536 = vunpack.c.l.b16 %v335
      %v2537 = vunpack.c.h.b16 %v335
      %v2538 = vunpack.c.l.b16 %v336
      %v2539 = vunpack.c.l.b16 %v337
      %v2540 = vunpack.c.h.b16 %v337
      %v2541 = vunpack.c.l.b16 %v338
      %v2542 = vunpack.c.l.b16 %v339
      %v2543 = vunpack.c.h.b16 %v339
      %v2544 = vunpack.c.l.b16 %v340
      %v2545 = vunpack.c.l.b16 %v341
      %v2546 = vunpack.c.h.b16 %v341
      %v2547 = vunpack.c.l.b16 %v342
      %v2548 = vunpack.c.l.b16 %v343
      %v2549 = vunpack.c.h.b16 %v343
      %v2550 = vunpack.c.l.b16 %v344
      %v2551 = vunpack.c.l.b16 %v345
      %v2552 = vunpack.c.h.b16 %v345
      %v2553 = vunpack.c.l.b16 %v346
      %v2554 = vunpack.c.l.b16 %v347
      %v2555 = vunpack.c.h.b16 %v347
      %v2556 = vunpack.c.l.b16 %v348
      %v2557 = vunpack.c.l.b16 %v349
      %v2558 = vunpack.c.h.b16 %v349
      %v2559 = vunpack.c.l.b16 %v350
      %v2560 = vunpack.c.l.b16 %v351
      %v2561 = vunpack.c.h.b16 %v351
      %v2562 = vunpack.c.l.b16 %v352
      %v2563 = vunpack.c.l.b16 %v353
      %v2564 = vunpack.c.h.b16 %v353
      %v2565 = vunpack.c.l.b16 %v354
      %v2566 = vunpack.c.l.b16 %v355
      %v2567 = vunpack.c.h.b16 %v355
      %v2568 = vunpack.c.l.b16 %v356
      %v2569 = vunpack.c.l.b16 %v357
      %v2570 = vunpack.c.h.b16 %v357
      %v2571 = vunpack.c.l.b16 %v358
      %v2572 = vunpack.c.l.b16 %v359
      %v2573 = vunpack.c.h.b16 %v359
      %v2574 = vunpack.c.l.b16 %v360
      %v2575 = vunpack.c.l.b16 %v361
      %v2576 = vunpack.c.h.b16 %v361
      %v2577 = vunpack.c.l.b16 %v362
      %v2578 = vunpack.c.l.b16 %v363
      %v2579 = vunpack.c.h.b16 %v363
      %v2580 = vunpack.c.l.b16 %v364
      %v2581 = vunpack.c.l.b16 %v365
      %v2582 = vunpack.c.h.b16 %v365
      %v2583 = vunpack.c.l.b16 %v366
      %v2584 = vunpack.c.l.b16 %v367
      %v2585 = vunpack.c.h.b16 %v367
      %v2586 = vunpack.c.l.b16 %v368
      %v2587 = vunpack.c.l.b16 %v369
      %v2588 = vunpack.c.h.b16 %v369
      %v2589 = vunpack.c.l.b16 %v370
      %v2590 = vunpack.c.l.b16 %v371
      %v2591 = vunpack.c.h.b16 %v371
      %v2592 = vunpack.c.l.b16 %v372
      %v2593 = vunpack.c.l.b16 %v373
      %v2594 = vunpack.c.h.b16 %v373
      %v2595 = vunpack.c.l.b16 %v374
      %v2596 = vunpack.c.l.b16 %v375
      %v2597 = vunpack.c.h.b16 %v375
      %v2598 = vunpack.c.l.b16 %v376
      %v2599 = vunpack.c.l.b16 %v377
      %v2600 = vunpack.c.h.b16 %v377
      %v2601 = vunpack.c.l.b16 %v378
      %v2602 = vunpack.c.l.b16 %v379
      %v2603 = vunpack.c.h.b16 %v379
      %v2604 = vunpack.c.l.b16 %v380
      %v2605 = vunpack.c.l.b16 %v381
      %v2606 = vunpack.c.h.b16 %v381
      %v2607 = vunpack.c.l.b16 %v382
      %v2608 = vunpack.c.l.b16 %v383
      %v2609 = vunpack.c.h.b16 %v383
      %v2610 = vunpack.c.l.b16 %v384
      %v2611 = vunpack.c.l.b16 %v385
      %v2612 = vunpack.c.h.b16 %v385
      %v2613 = vunpack.c.l.b16 %v386
      %v2614 = vunpack.c.l.b16 %v387
      %v2615 = vunpack.c.h.b16 %v387
      %v2616 = vunpack.c.l.b16 %v388
      %v2617 = vunpack.c.l.b16 %v389
      %v2618 = vunpack.c.h.b16 %v389
      %v2619 = vunpack.c.l.b16 %v390
      %v2620 = vunpack.c.l.b16 %v391
      %v2621 = vunpack.c.h.b16 %v391
      %v2622 = vunpack.c.l.b16 %v392
      %v2623 = vunpack.c.l.b16 %v393
      %v2624 = vunpack.c.h.b16 %v393
      %v2625 = vunpack.c.l.b16 %v394
      %v2626 = vunpack.c.l.b16 %v395
      %v2627 = vunpack.c.h.b16 %v395
      %v2628 = vunpack.c.l.b16 %v396
      %v2629 = vunpack.c.l.b16 %v397
      %v2630 = vunpack.c.h.b16 %v397
      %v2631 = vunpack.c.l.b16 %v398
      %v2632 = vunpack.c.l.b16 %v399
      %v2633 = vunpack.c.h.b16 %v399
      %v2634 = vunpack.c.l.b16 %v400
      %v2635 = vunpack.c.l.b16 %v401
      %v2636 = vunpack.c.h.b16 %v401
      %v2637 = vunpack.c.l.b16 %v402
      %v2638 = vunpack.c.l.b16 %v403
      %v2639 = vunpack.c.h.b16 %v403
      %v2640 = vunpack.c.l.b16 %v404
      %v2641 = vunpack.c.l.b16 %v405
      %v2642 = vunpack.c.h.b16 %v405
      %v2643 = vunpack.c.l.b16 %v406
      %v2644 = vunpack.c.l.b16 %v407
      %v2645 = vunpack.c.h.b16 %v407
      %v2646 = vunpack.c.l.b16 %v408
      %v2647 = vunpack.c.l.b16 %v409
      %v2648 = vunpack.c.h.b16 %v409
      %v2649 = vunpack.c.l.b16 %v410
      %v2650 = vunpack.c.l.b16 %v411
      %v2651 = vunpack.c.h.b16 %v411
      %v2652 = vunpack.c.l.b16 %v412
      %v2653 = vunpack.c.l.b16 %v413
      %v2654 = vunpack.c.h.b16 %v413
      %v2655 = vunpack.c.l.b16 %v414
      %v2656 = vunpack.c.l.b16 %v415
      %v2657 = vunpack.c.h.b16 %v415
      %v2658 = vunpack.c.l.b16 %v416
      %v2659 = vunpack.c.l.b16 %v417
      %v2660 = vunpack.c.h.b16 %v417
      %v2661 = vunpack.c.l.b16 %v418
      %v2662 = vunpack.c.l.b16 %v419
      %v2663 = vunpack.c.h.b16 %v419
      %v2664 = vunpack.c.l.b16 %v420
      %v2665 = vunpack.c.l.b16 %v421
      %v2666 = vunpack.c.h.b16 %v421
      %v2667 = vunpack.c.l.b16 %v422
      %v2668 = vunpack.c.l.b16 %v423
      %v2669 = vunpack.c.h.b16 %v423
      %v2670 = vunpack.c.l.b16 %v424
      %v2671 = vunpack.c.l.b16 %v425
      %v2672 = vunpack.c.h.b16 %v425
      %v2673 = vunpack.c.l.b16 %v426
      %v2674 = vunpack.c.l.b16 %v427
      %v2675 = vunpack.c.h.b16 %v427
      %v2676 = vunpack.c.l.b16 %v428
      %v2677 = vunpack.c.l.b16 %v429
      %v2678 = vunpack.c.h.b16 %v429
      %v2679 = vunpack.c.l.b16 %v430
      %v2680 = vunpack.c.l.b16 %v431
      %v2681 = vunpack.c.h.b16 %v431
      %v2682 = vunpack.c.l.b16 %v432
      %v2683 = vunpack.c.l.b16 %v433
      %v2684 = vunpack.c.h.b16 %v433
      %v2685 = vunpack.c.l.b16 %v434
      %v2686 = vunpack.c.l.b16 %v435
      %v2687 = vunpack.c.h.b16 %v435
      %v2688 = vunpack.c.l.b16 %v436
      %v2689 = vunpack.c.l.b16 %v437
      %v2690 = vunpack.c.h.b16 %v437
      %v2691 = vunpack.c.l.b16 %v438
      %v2692 = vunpack.c.l.b16 %v439
      %v2693 = vunpack.c.h.b16 %v439
      %v2694 = vunpack.c.l.b16 %v440
      %v2695 = vunpack.c.l.b16 %v441
      %v2696 = vunpack.c.h.b16 %v441
      %v2697 = vunpack.c.l.b16 %v442
      %v2698 = vunpack.c.l.b16 %v443
      %v2699 = vunpack.c.h.b16 %v443
      %v2700 = vunpack.c.l.b16 %v444
      %v2701 = vunpack.c.l.b16 %v445
      %v2702 = vunpack.c.h.b16 %v445
      %v2703 = vunpack.c.l.b16 %v446
      %v2704 = vunpack.c.l.b16 %v447
      %v2705 = vunpack.c.h.b16 %v447
      %v2706 = vunpack.c.l.b16 %v448
      %v2707 = vunpack.c.l.b16 %v449
      %v2708 = vunpack.c.h.b16 %v449
      %v2709 = vunpack.c.l.b16 %v450
      %v2710 = vunpack.c.l.b16 %v451
      %v2711 = vunpack.c.h.b16 %v451
      %v2712 = vunpack.c.l.b16 %v452
      %v2713 = vunpack.c.l.b16 %v453
      %v2714 = vunpack.c.h.b16 %v453
      %v2715 = vunpack.c.l.b16 %v454
      %v2716 = vunpack.c.l.b16 %v455
      %v2717 = vunpack.c.h.b16 %v455
      %v2718 = vunpack.c.l.b16 %v456
      %v2719 = vunpack.c.l.b16 %v457
      %v2720 = vunpack.c.h.b16 %v457
      %v2721 = vunpack.c.l.b16 %v458
      %v2722 = vunpack.c.l.b16 %v459
      %v2723 = vunpack.c.h.b16 %v459
      %v2724 = vunpack.c.l.b16 %v460
      %v2725 = vunpack.c.l.b16 %v461
      %v2726 = vunpack.c.h.b16 %v461
      %v2727 = vunpack.c.l.b16 %v462
      %v2728 = vunpack.c.l.b16 %v463
      %v2729 = vunpack.c.h.b16 %v463
      %v2730 = vunpack.c.l.b16 %v464
      %v2731 = vunpack.c.l.b16 %v465
      %v2732 = vunpack.c.h.b16 %v465
      %v2733 = vunpack.c.l.b16 %v466
      %v2734 = vunpack.c.l.b16 %v467
      %v2735 = vunpack.c.h.b16 %v467
      %v2736 = vunpack.c.l.b16 %v468
      %v2737 = vunpack.c.l.b16 %v469
      %v2738 = vunpack.c.h.b16 %v469
      %v2739 = vunpack.c.l.b16 %v470
      %v2740 = vunpack.c.l.b16 %v471
      %v2741 = vunpack.c.h.b16 %v471
      %v2742 = vunpack.c.l.b16 %v472
      %v2743 = vunpack.c.l.b16 %v473
      %v2744 = vunpack.c.h.b16 %v473
      %v2745 = vunpack.c.l.b16 %v474
      %v2746 = vunpack.c.l.b16 %v475
      %v2747 = vunpack.c.h.b16 %v475
      %v2748 = vunpack.c.l.b16 %v476
      %v2749 = vunpack.c.l.b16 %v477
      %v2750 = vunpack.c.h.b16 %v477
      %v2751 = vunpack.c.l.b16 %v478
      %v2752 = vunpack.c.l.b16 %v479
      %v2753 = vunpack.c.h.b16 %v479
      %v2754 = vunpack.c.l.b16 %v480
      %v2755 = vunpack.c.l.b16 %v481
      %v2756 = vunpack.c.h.b16 %v481
      %v2757 = vunpack.c.l.b16 %v482
      %v2758 = vunpack.c.l.b16 %v483
      %v2759 = vunpack.c.h.b16 %v483
      %v2760 = vunpack.c.l.b16 %v484
      %v2761 = vunpack.c.l.b16 %v485
      %v2762 = vunpack.c.h.b16 %v485
      %v2763 = vunpack.c.l.b16 %v486
      %v2764 = vunpack.c.l.b16 %v487
      %v2765 = vunpack.c.h.b16 %v487
      %v2766 = vunpack.c.l.b16 %v488
      %v2767 = vunpack.c.l.b16 %v489
      %v2768 = vunpack.c.h.b16 %v489
      %v2769 = vunpack.c.l.b16 %v490
      %v2770 = vunpack.c.l.b16 %v491
      %v2771 = vunpack.c.h.b16 %v491
      %v2772 = vunpack.c.l.b16 %v492
      %v2773 = vunpack.c.l.b16 %v493
      %v2774 = vunpack.c.h.b16 %v493
      %v2775 = vunpack.c.l.b16 %v494
      %v2776 = vunpack.c.l.b16 %v495
      %v2777 = vunpack.c.h.b16 %v495
      %v2778 = vunpack.c.l.b16 %v496
      %v2779 = vunpack.c.l.b16 %v497
      %v2780 = vunpack.c.h.b16 %v497
      %v2781 = vunpack.c.l.b16 %v498
      %v2782 = vunpack.c.l.b16 %v499
      %v2783 = vunpack.c.h.b16 %v499
      %v2784 = vunpack.c.l.b16 %v500
      %v2785 = vunpack.c.l.b16 %v501
      %v2786 = vunpack.c.h.b16 %v501
      %v2787 = vunpack.c.l.b16 %v502
      %v2788 = vunpack.c.l.b16 %v503
      %v2789 = vunpack.c.h.b16 %v503
      %v2790 = vunpack.c.l.b16 %v504
      %v2791 = vunpack.c.l.b16 %v505
      %v2792 = vunpack.c.h.b16 %v505
      %v2793 = vunpack.c.l.b16 %v506
      %v2794 = vunpack.c.l.b16 %v507
      %v2795 = vunpack.c.h.b16 %v507
      %v2796 = vunpack.c.l.b16 %v508
      %v2797 = vunpack.c.l.b16 %v509
      %v2798 = vunpack.c.h.b16 %v509
      %v2799 = vunpack.c.l.b16 %v510
      %v2800 = vunpack.c.l.b16 %v511
      %v2801 = vunpack.c.h.b16 %v511
      %v2802 = vunpack.c.l.b16 %v512
      %v2803 = vunpack.c.l.b16 %v513
      %v2804 = vunpack.c.h.b16 %v513
      %v2805 = vunpack.c.l.b16 %v514
      %v2806 = vunpack.c.l.b16 %v515
      %v2807 = vunpack.c.h.b16 %v515
      %v2808 = vunpack.c.l.b16 %v516
      %v2809 = vunpack.c.l.b16 %v517
      %v2810 = vunpack.c.h.b16 %v517
      %v2811 = vunpack.c.l.b16 %v518
      %v2812 = vunpack.c.l.b16 %v519
      %v2813 = vunpack.c.h.b16 %v519
      %v2814 = vunpack.c.l.b16 %v520
      %v2815 = vunpack.c.l.b16 %v521
      %v2816 = vunpack.c.h.b16 %v521
      %v2817 = vunpack.c.l.b16 %v522
      %v2818 = vunpack.c.l.b16 %v523
      %v2819 = vunpack.c.h.b16 %v523
      %v2820 = vunpack.c.l.b16 %v524
      %v2821 = vunpack.c.l.b16 %v525
      %v2822 = vunpack.c.h.b16 %v525
      %v2823 = vunpack.c.l.b16 %v526
      %v2824 = vunpack.c.l.b16 %v527
      %v2825 = vunpack.c.h.b16 %v527
      %v2826 = vunpack.c.l.b16 %v528
      %v2827 = vunpack.c.l.b16 %v529
      %v2828 = vunpack.c.h.b16 %v529
      %v2829 = vunpack.c.l.b16 %v530
      %v2830 = vunpack.c.l.b16 %v531
      %v2831 = vunpack.c.h.b16 %v531
      %v2832 = vunpack.c.l.b16 %v532
      %v2833 = vunpack.c.l.b16 %v533
      %v2834 = vunpack.c.h.b16 %v533
      %v2835 = vunpack.c.l.b16 %v534
      %v2836 = vunpack.c.l.b16 %v535
      %v2837 = vunpack.c.h.b16 %v535
      %v2838 = vunpack.c.l.b16 %v536
      %v2839 = vunpack.c.l.b16 %v537
      %v2840 = vunpack.c.h.b16 %v537
      %v2841 = vunpack.c.l.b16 %v538
      %v2842 = vunpack.c.l.b16 %v539
      %v2843 = vunpack.c.h.b16 %v539
      %v2844 = vunpack.c.l.b16 %v540
      %v2845 = vunpack.c.l.b16 %v541
      %v2846 = vunpack.c.h.b16 %v541
      %v2847 = vunpack.c.l.b16 %v542
      %v2848 = vunpack.c.l.b16 %v543
      %v2849 = vunpack.c.h.b16 %v543
      %v2850 = vunpack.c.l.b16 %v544
      %v2851 = vunpack.c.l.b16 %v545
      %v2852 = vunpack.c.h.b16 %v545
      %v2853 = vunpack.c.l.b16 %v546
      %v2854 = vunpack.c.l.b16 %v547
      %v2855 = vunpack.c.h.b16 %v547
      %v2856 = vunpack.c.l.b16 %v548
      %v2857 = vunpack.c.l.b16 %v549
      %v2858 = vunpack.c.h.b16 %v549
      %v2859 = vunpack.c.l.b16 %v550
      %v2860 = vunpack.c.l.b16 %v551
      %v2861 = vunpack.c.h.b16 %v551
      %v2862 = vunpack.c.l.b16 %v552
      %v2863 = vunpack.c.l.b16 %v553
      %v2864 = vunpack.c.h.b16 %v553
      %v2865 = vunpack.c.l.b16 %v554
      %v2866 = vunpack.c.l.b16 %v555
      %v2867 = vunpack.c.h.b16 %v555
      %v2868 = vunpack.c.l.b16 %v556
      %v2869 = vunpack.c.l.b16 %v557
      %v2870 = vunpack.c.h.b16 %v557
      %v2871 = vunpack.c.l.b16 %v558
      %v2872 = vunpack.c.l.b16 %v559
      %v2873 = vunpack.c.h.b16 %v559
      %v2874 = vunpack.c.l.b16 %v560
      %v2875 = vunpack.c.l.b16 %v561
      %v2876 = vunpack.c.h.b16 %v561
      %v2877 = vunpack.c.l.b16 %v562
      %v2878 = vunpack.c.l.b16 %v563
      %v2879 = vunpack.c.h.b16 %v563
      %v2880 = vunpack.c.l.b16 %v564
      %v2881 = vunpack.c.l.b16 %v565
      %v2882 = vunpack.c.h.b16 %v565
      %v2883 = vunpack.c.l.b16 %v566
      %v2884 = vunpack.c.l.b16 %v567
      %v2885 = vunpack.c.h.b16 %v567
      %v2886 = vunpack.c.l.b16 %v568
      %v2887 = vunpack.c.l.b16 %v569
      %v2888 = vunpack.c.h.b16 %v569
      %v2889 = vunpack.c.l.b16 %v570
      %v2890 = vunpack.c.l.b16 %v571
      %v2891 = vunpack.c.h.b16 %v571
      %v2892 = vunpack.c.l.b16 %v572
      %v2893 = vunpack.c.l.b16 %v573
      %v2894 = vunpack.c.h.b16 %v573
      %v2895 = vunpack.c.l.b16 %v574
      %v2896 = vunpack.c.l.b16 %v575
      %v2897 = vunpack.c.h.b16 %v575
      %v2898 = vunpack.c.l.b16 %v576
      %v2899 = vunpack.c.l.b16 %v577
      %v2900 = vunpack.c.h.b16 %v577
      %v2901 = vunpack.c.l.b16 %v578
      %v2902 = vunpack.c.l.b16 %v579
      %v2903 = vunpack.c.h.b16 %v579
      %v2904 = vunpack.c.l.b16 %v580
      %v2905 = vunpack.c.l.b16 %v581
      %v2906 = vunpack.c.h.b16 %v581
      %v2907 = vunpack.c.l.b16 %v582
      %v2908 = vunpack.c.l.b16 %v583
      %v2909 = vunpack.c.h.b16 %v583
      %v2910 = vunpack.c.l.b16 %v584
      %v2911 = vunpack.c.l.b16 %v585
      %v2912 = vunpack.c.h.b16 %v585
      %v2913 = vunpack.c.l.b16 %v586
      %v2914 = vunpack.c.l.b16 %v587
      %v2915 = vunpack.c.h.b16 %v587
      %v2916 = vunpack.c.l.b16 %v588
      %v2917 = vunpack.c.l.b16 %v589
      %v2918 = vunpack.c.h.b16 %v589
      %v2919 = vunpack.c.l.b16 %v590
      %v2920 = vunpack.c.l.b16 %v591
      %v2921 = vunpack.c.h.b16 %v591
      %v2922 = vunpack.c.l.b16 %v592
      %v2923 = vunpack.c.l.b16 %v593
      %v2924 = vunpack.c.h.b16 %v593
      %v2925 = vunpack.c.l.b16 %v594
      %v2926 = vunpack.c.l.b16 %v595
      %v2927 = vunpack.c.h.b16 %v595
      %v2928 = vunpack.c.l.b16 %v596
      %v2929 = vunpack.c.l.b16 %v597
      %v2930 = vunpack.c.h.b16 %v597
      %v2931 = vunpack.c.l.b16 %v598
      %v2932 = vunpack.c.l.b16 %v599
      %v2933 = vunpack.c.h.b16 %v599
      %v2934 = vunpack.c.l.b16 %v600
      %v2935 = vunpack.c.l.b16 %v601
      %v2936 = vunpack.c.h.b16 %v601
      %v2937 = vunpack.c.l.b16 %v602
      %v2938 = vunpack.c.l.b16 %v603
      %v2939 = vunpack.c.h.b16 %v603
      %v2940 = vunpack.c.l.b16 %v604
      %v2941 = vunpack.c.l.b16 %v605
      %v2942 = vunpack.c.h.b16 %v605
      %v2943 = vunpack.c.l.b16 %v606
      %v2944 = vunpack.c.l.b16 %v607
      %v2945 = vunpack.c.h.b16 %v607
      %v2946 = vunpack.c.l.b16 %v608
      %v2947 = vunpack.c.l.b16 %v609
      %v2948 = vunpack.c.h.b16 %v609
      %v2949 = vunpack.c.l.b16 %v610
      %v2950 = vunpack.c.l.b16 %v611
      %v2951 = vunpack.c.h.b16 %v611
      %v2952 = vunpack.c.l.b16 %v612
      %v2953 = vunpack.c.l.b16 %v613
      %v2954 = vunpack.c.h.b16 %v613
      %v2955 = vunpack.c.l.b16 %v614
      %v2956 = vunpack.c.l.b16 %v615
      %v2957 = vunpack.c.h.b16 %v615
      %v2958 = vunpack.c.l.b16 %v616
      %v2959 = vunpack.c.l.b16 %v617
      %v2960 = vunpack.c.h.b16 %v617
      %v2961 = vunpack.c.l.b16 %v618
      %v2962 = vunpack.c.l.b16 %v619
      %v2963 = vunpack.c.h.b16 %v619
      %v2964 = vunpack.c.l.b16 %v620
      %v2965 = vunpack.c.l.b16 %v621
      %v2966 = vunpack.c.h.b16 %v621
      %v2967 = vunpack.c.l.b16 %v622
      %v2968 = vunpack.c.l.b16 %v623
      %v2969 = vunpack.c.h.b16 %v623
      %v2970 = vunpack.c.l.b16 %v624
      %v2971 = vunpack.c.l.b16 %v625
      %v2972 = vunpack.c.h.b16 %v625
      %v2973 = vunpack.c.l.b16 %v626
      %v2974 = vunpack.c.l.b16 %v627
      %v2975 = vunpack.c.h.b16 %v627
      %v2976 = vunpack.c.l.b16 %v628
      %v2977 = vunpack.c.l.b16 %v629
      %v2978 = vunpack.c.h.b16 %v629
      %v2979 = vunpack.c.l.b16 %v630
      %v2980 = vunpack.c.l.b16 %v631
      %v2981 = vunpack.c.h.b16 %v631
      %v2982 = vunpack.c.l.b16 %v632
      %v2983 = vunpack.c.l.b16 %v633
      %v2984 = vunpack.c.h.b16 %v633
      %v2985 = vunpack.c.l.b16 %v634
      %v2986 = vunpack.c.l.b16 %v635
      %v2987 = vunpack.c.h.b16 %v635
      %v2988 = vunpack.c.l.b16 %v636
      %v2989 = vunpack.c.l.b16 %v637
      %v2990 = vunpack.c.h.b16 %v637
      %v2991 = vunpack.c.l.b16 %v638
      %v2992 = vunpack.c.l.b16 %v639
      %v2993 = vunpack.c.h.b16 %v639
      %v2994 = vunpack.c.l.b16 %v640
      %v2995 = vunpack.c.l.b16 %v641
      %v2996 = vunpack.c.h.b16 %v641
      %v2997 = vunpack.c.l.b16 %v642
      %v2998 = vunpack.c.l.b16 %v643
      %v2999 = vunpack.c.h.b16 %v643
      %v3000 = vunpack.c.l.b16 %v644
      %v3001 = vunpack.c.l.b16 %v645
      %v3002 = vunpack.c.h.b16 %v645
      %v3003 = vunpack.c.l.b16 %v646
      %v3004 = vunpack.c.l.b16 %v647
      %v3005 = vunpack.c.h.b16 %v647
      %v3006 = vunpack.c.l.b16 %v648
      %v3007 = vunpack.c.l.b16 %v649
      %v3008 = vunpack.c.h.b16 %v649
      %v3009 = vunpack.c.l.b16 %v650
      %v3010 = vunpack.c.l.b16 %v651
      %v3011 = vunpack.c.h.b16 %v651
      %v3012 = vunpack.c.l.b16 %v652
      %v3013 = vunpack.c.l.b16 %v653
      %v3014 = vunpack.c.h.b16 %v653
      %v3015 = vunpack.c.l.b16 %v654
      %v3016 = vunpack.c.l.b16 %v655
      %v3017 = vunpack.c.h.b16 %v655
      %v3018 = vunpack.c.l.b16 %v656
      %v3019 = vunpack.c.l.b16 %v657
      %v3020 = vunpack.c.h.b16 %v657
      %v3021 = vunpack.c.l.b16 %v658
      %v3022 = vunpack.c.l.b16 %v659
      %v3023 = vunpack.c.h.b16 %v659
      %v3024 = vunpack.c.l.b16 %v660
      %v3025 = vunpack.c.l.b16 %v661
      %v3026 = vunpack.c.h.b16 %v661
      %v3027 = vunpack.c.l.b16 %v662
      %v3028 = vunpack.c.l.b16 %v663
      %v3029 = vunpack.c.h.b16 %v663
      %v3030 = vunpack.c.l.b16 %v664
      %v3031 = vunpack.c.l.b16 %v665
      %v3032 = vunpack.c.h.b16 %v665
      %v3033 = vunpack.c.l.b16 %v666
      %v3034 = vunpack.c.l.b16 %v667
      %v3035 = vunpack.c.h.b16 %v667
      %v3036 = vunpack.c.l.b16 %v668
      %v3037 = vunpack.c.l.b16 %v669
      %v3038 = vunpack.c.h.b16 %v669
      %v3039 = vunpack.c.l.b16 %v670
      %v3040 = vunpack.c.l.b16 %v671
      %v3041 = vunpack.c.h.b16 %v671
      %v3042 = vunpack.c.l.b16 %v672
      %v3043 = vunpack.c.l.b16 %v673
      %v3044 = vunpack.c.h.b16 %v673
      %v3045 = vunpack.c.l.b16 %v674
      %v3046 = vunpack.c.l.b16 %v675
      %v3047 = vunpack.c.h.b16 %v675
      %v3048 = vunpack.c.l.b16 %v676
      %v3049 = vunpack.c.l.b16 %v677
      %v3050 = vunpack.c.h.b16 %v677
      %v3051 = vunpack.c.l.b16 %v678
      %v3052 = vunpack.c.l.b16 %v679
      %v3053 = vunpack.c.h.b16 %v679
      %v3054 = vunpack.c.l.b16 %v680
      %v3055 = vunpack.c.l.b16 %v681
      %v3056 = vunpack.c.h.b16 %v681
      %v3057 = vunpack.c.l.b16 %v682
      %v3058 = vunpack.c.l.b16 %v683
      %v3059 = vunpack.c.h.b16 %v683
      %v3060 = vunpack.c.l.b16 %v684
      %v3061 = vunpack.c.l.b16 %v685
      %v3062 = vunpack.c.h.b16 %v685
      %v3063 = vunpack.c.l.b16 %v686
      %v3064 = vunpack.c.l.b16 %v687
      %v3065 = vunpack.c.h.b16 %v687
      %v3066 = vunpack.c.l.b16 %v688
      %v3067 = vunpack.c.l.b16 %v689
      %v3068 = vunpack.c.h.b16 %v689
      %v3069 = vunpack.c.l.b16 %v690
      %v3070 = vunpack.c.l.b16 %v691
      %v3071 = vunpack.c.h.b16 %v691
      %v3072 = vunpack.c.l.b16 %v692
      %v3073 = vunpack.c.l.b16 %v693
      %v3074 = vunpack.c.h.b16 %v693
      %v3075 = vunpack.c.l.b16 %v694
      %v3076 = vunpack.c.l.b16 %v695
      %v3077 = vunpack.c.h.b16 %v695
      %v3078 = vunpack.c.l.b16 %v696
      %v3079 = vunpack.c.l.b16 %v697
      %v3080 = vunpack.c.h.b16 %v697
      %v3081 = vunpack.c.l.b16 %v698
      %v3082 = vunpack.c.l.b16 %v699
      %v3083 = vunpack.c.h.b16 %v699
      %v3084 = vunpack.c.l.b16 %v700
      %v3085 = vunpack.c.l.b16 %v701
      %v3086 = vunpack.c.h.b16 %v701
      %v3087 = vunpack.c.l.b16 %v702
      %v3088 = vunpack.c.l.b16 %v703
      %v3089 = vunpack.c.h.b16 %v703
      %v3090 = vunpack.c.l.b16 %v704
      %v3091 = vunpack.c.l.b16 %v705
      %v3092 = vunpack.c.h.b16 %v705
      %v3093 = vunpack.c.l.b16 %v706
      %v3094 = vunpack.c.l.b16 %v707
      %v3095 = vunpack.c.h.b16 %v707
      %v3096 = vunpack.c.l.b16 %v708
      %v3097 = vunpack.c.l.b16 %v709
      %v3098 = vunpack.c.h.b16 %v709
      %v3099 = vunpack.c.l.b16 %v710
      %v3100 = vunpack.c.l.b16 %v711
      %v3101 = vunpack.c.h.b16 %v711
      %v3102 = vunpack.c.l.b16 %v712
      %v3103 = vunpack.c.l.b16 %v713
      %v3104 = vunpack.c.h.b16 %v713
      %v3105 = vunpack.c.l.b16 %v714
      %v3106 = vunpack.c.l.b16 %v715
      %v3107 = vunpack.c.h.b16 %v715
      %v3108 = vunpack.c.l.b16 %v716
      %v3109 = vunpack.c.l.b16 %v717
      %v3110 = vunpack.c.h.b16 %v717
      %v3111 = vunpack.c.l.b16 %v718
      %v3112 = vunpack.c.l.b16 %v719
      %v3113 = vunpack.c.h.b16 %v719
      %v3114 = vunpack.c.l.b16 %v720
      %v3115 = vunpack.c.l.b16 %v721
      %v3116 = vunpack.c.h.b16 %v721
      %v3117 = vunpack.c.l.b16 %v722
      %v3118 = vunpack.c.l.b16 %v723
      %v3119 = vunpack.c.h.b16 %v723
      %v3120 = vunpack.c.l.b16 %v724
      %v3121 = vunpack.c.l.b16 %v725
      %v3122 = vunpack.c.h.b16 %v725
      %v3123 = vunpack.c.l.b16 %v726
      %v3124 = vunpack.c.l.b16 %v727
      %v3125 = vunpack.c.h.b16 %v727
      %v3126 = vunpack.c.l.b16 %v728
      %v3127 = vunpack.c.l.b16 %v729
      %v3128 = vunpack.c.h.b16 %v729
      %v3129 = vunpack.c.l.b16 %v730
      %v3130 = vunpack.c.l.b16 %v731
      %v3131 = vunpack.c.h.b16 %v731
      %v3132 = vunpack.c.l.b16 %v732
      %v3133 = vunpack.c.l.b16 %v733
      %v3134 = vunpack.c.h.b16 %v733
      %v3135 = vunpack.c.l.b16 %v734
      %v3136 = vunpack.c.l.b16 %v735
      %v3137 = vunpack.c.h.b16 %v735
      %v3138 = vunpack.c.l.b16 %v736
      %v3139 = vunpack.c.l.b16 %v737
      %v3140 = vunpack.c.h.b16 %v737
      %v3141 = vunpack.c.l.b16 %v738
      %v3142 = vunpack.c.l.b16 %v739
      %v3143 = vunpack.c.h.b16 %v739
      %v3144 = vunpack.c.l.b16 %v740
      %v3145 = vunpack.c.l.b16 %v741
      %v3146 = vunpack.c.h.b16 %v741
      %v3147 = vunpack.c.l.b16 %v742
      %v3148 = vunpack.c.l.b16 %v743
      %v3149 = vunpack.c.h.b16 %v743
      %v3150 = vunpack.c.l.b16 %v744
      %v3151 = vunpack.c.l.b16 %v745
      %v3152 = vunpack.c.h.b16 %v745
      %v3153 = vunpack.c.l.b16 %v746
      %v3154 = vunpack.c.l.b16 %v747
      %v3155 = vunpack.c.h.b16 %v747
      %v3156 = vunpack.c.l.b16 %v748
      %v3157 = vunpack.c.l.b16 %v749
      %v3158 = vunpack.c.h.b16 %v749
      %v3159 = vunpack.c.l.b16 %v750
      %v3160 = vunpack.c.l.b16 %v751
      %v3161 = vunpack.c.h.b16 %v751
      %v3162 = vunpack.c.l.b16 %v752
      %v3163 = vunpack.c.l.b16 %v753
      %v3164 = vunpack.c.h.b16 %v753
      %v3165 = vunpack.c.l.b16 %v754
      %v3166 = vunpack.c.l.b16 %v755
      %v3167 = vunpack.c.h.b16 %v755
      %v3168 = vunpack.c.l.b16 %v756
      %v3169 = vunpack.c.l.b16 %v757
      %v3170 = vunpack.c.h.b16 %v757
      %v3171 = vunpack.c.l.b16 %v758
      %v3172 = vunpack.c.l.b16 %v759
      %v3173 = vunpack.c.h.b16 %v759
      %v3174 = vunpack.c.l.b16 %v760
      %v3175 = vunpack.c.l.b16 %v761
      %v3176 = vunpack.c.h.b16 %v761
      %v3177 = vunpack.c.l.b16 %v762
      %v3178 = vunpack.c.l.b16 %v763
      %v3179 = vunpack.c.h.b16 %v763
      %v3180 = vunpack.c.l.b16 %v764
      %v3181 = vunpack.c.l.b16 %v765
      %v3182 = vunpack.c.h.b16 %v765
      %v3183 = vunpack.c.l.b16 %v766
      %v3184 = vunpack.c.l.b16 %v767
      %v3185 = vunpack.c.h.b16 %v767
      %v3186 = vunpack.c.l.b16 %v768
      %v3187 = vunpack.c.l.b16 %v769
      %v3188 = vunpack.c.h.b16 %v769
      %v3189 = vunpack.c.l.b16 %v770
      %v3190 = vunpack.c.l.b16 %v771
      %v3191 = vunpack.c.h.b16 %v771
      %v3192 = vunpack.c.l.b16 %v772
      %v3193 = vunpack.c.l.b16 %v773
      %v3194 = vunpack.c.h.b16 %v773
      %v3195 = vunpack.c.l.b16 %v774
      %v3196 = vunpack.c.l.b16 %v775
      %v3197 = vunpack.c.h.b16 %v775
      %v3198 = vunpack.c.l.b16 %v776
      %v3199 = vunpack.c.l.b16 %v777
      %v3200 = vunpack.c.h.b16 %v777
      %v3201 = vunpack.c.l.b16 %v778
      %v3202 = vunpack.c.l.b16 %v779
      %v3203 = vunpack.c.h.b16 %v779
      %v3204 = vunpack.c.l.b16 %v780
      %v3205 = vunpack.c.l.b16 %v781
      %v3206 = vunpack.c.h.b16 %v781
      %v3207 = vunpack.c.l.b16 %v782
      %v3208 = vunpack.c.l.b16 %v783
      %v3209 = vunpack.c.h.b16 %v783
      %v3210 = vunpack.c.l.b16 %v784
      %v3211 = vunpack.c.l.b16 %v785
      %v3212 = vunpack.c.h.b16 %v785
      %v3213 = vunpack.c.l.b16 %v786
      %v3214 = vunpack.c.l.b16 %v787
      %v3215 = vunpack.c.h.b16 %v787
      %v3216 = vunpack.c.l.b16 %v788
      %v3217 = vunpack.c.l.b16 %v789
      %v3218 = vunpack.c.h.b16 %v789
      %v3219 = vunpack.c.l.b16 %v790
      %v3220 = vunpack.c.l.b16 %v791
      %v3221 = vunpack.c.h.b16 %v791
      %v3222 = vunpack.c.l.b16 %v792
      %v3223 = vunpack.c.l.b16 %v793
      %v3224 = vunpack.c.h.b16 %v793
      %v3225 = vunpack.c.l.b16 %v794
      %v3226 = vunpack.c.l.b16 %v795
      %v3227 = vunpack.c.h.b16 %v795
      %v3228 = vunpack.c.l.b16 %v796
      %v3229 = vunpack.c.l.b16 %v797
      %v3230 = vunpack.c.h.b16 %v797
      %v3231 = vunpack.c.l.b16 %v798
      %v3232 = vunpack.c.l.b16 %v799
      %v3233 = vunpack.c.h.b16 %v799
      %v3234 = vunpack.c.l.b16 %v800
      %v3235 = vunpack.c.l.b16 %v801
      %v3236 = vunpack.c.h.b16 %v801
      %v3237 = vunpack.c.l.b16 %v802
      %v3238 = vunpack.c.l.b16 %v803
      %v3239 = vunpack.c.h.b16 %v803
      %v3240 = vunpack.c.l.b16 %v804
      %v3241 = vunpack.c.l.b16 %v805
      %v3242 = vunpack.c.h.b16 %v805
      %v3243 = vunpack.c.l.b16 %v806
      %v3244 = vunpack.c.l.b16 %v807
      %v3245 = vunpack.c.h.b16 %v807
      %v3246 = vunpack.c.l.b16 %v808
      %v3247 = vunpack.c.l.b16 %v809
      %v3248 = vunpack.c.h.b16 %v809
      %v3249 = vunpack.c.l.b16 %v810
      %v3250 = vunpack.c.l.b16 %v811
      %v3251 = vunpack.c.h.b16 %v811
      %v3252 = vunpack.c.l.b16 %v812
      %v3253 = vunpack.c.l.b16 %v813
      %v3254 = vunpack.c.h.b16 %v813
      %v3255 = vunpack.c.l.b16 %v814
      %v3256 = vunpack.c.l.b16 %v815
      %v3257 = vunpack.c.h.b16 %v815
      %v3258 = vunpack.c.l.b16 %v816
      %v3259 = vunpack.c.l.b16 %v817
      %v3260 = vunpack.c.h.b16 %v817
      %v3261 = vunpack.c.l.b16 %v818
      %v3262 = vunpack.c.l.b16 %v819
      %v3263 = vunpack.c.h.b16 %v819
      %v3264 = vunpack.c.l.b16 %v820
      %v3265 = vunpack.c.l.b16 %v821
      %v3266 = vunpack.c.h.b16 %v821
      %v3267 = vunpack.c.l.b16 %v822
      %v3268 = vunpack.c.l.b16 %v823
      %v3269 = vunpack.c.h.b16 %v823
      %v3270 = vunpack.c.l.b16 %v824
      %v3271 = vunpack.c.l.b16 %v825
      %v3272 = vunpack.c.h.b16 %v825
      %v3273 = vunpack.c.l.b16 %v826
      %v3274 = vunpack.c.l.b16 %v827
      %v3275 = vunpack.c.h.b16 %v827
      %v3276 = vunpack.c.l.b16 %v828
      %v3277 = vunpack.c.l.b16 %v829
      %v3278 = vunpack.c.h.b16 %v829
      %v3279 = vunpack.c.l.b16 %v830
      %v3280 = vunpack.c.l.b16 %v831
      %v3281 = vunpack.c.h.b16 %v831
      %v3282 = vunpack.c.l.b16 %v832
      %v3283 = vunpack.c.l.b16 %v833
      %v3284 = vunpack.c.h.b16 %v833
      %v3285 = vunpack.c.l.b16 %v834
      %v3286 = vunpack.c.l.b16 %v835
      %v3287 = vunpack.c.h.b16 %v835
      %v3288 = vunpack.c.l.b16 %v836
      %v3289 = vunpack.c.l.b16 %v837
      %v3290 = vunpack.c.h.b16 %v837
      %v3291 = vunpack.c.l.b16 %v838
      %v3292 = vunpack.c.l.b16 %v839
      %v3293 = vunpack.c.h.b16 %v839
      %v3294 = vunpack.c.l.b16 %v840
      %v3295 = vunpack.c.l.b16 %v841
      %v3296 = vunpack.c.h.b16 %v841
      %v3297 = vunpack.c.l.b16 %v842
      %v3298 = vunpack.c.l.b16 %v843
      %v3299 = vunpack.c.h.b16 %v843
      %v3300 = vunpack.c.l.b16 %v844
      %v3301 = vunpack.c.l.b16 %v845
      %v3302 = vunpack.c.h.b16 %v845
      %v3303 = vunpack.c.l.b16 %v846
      %v3304 = vunpack.c.l.b16 %v847
      %v3305 = vunpack.c.h.b16 %v847
      %v3306 = vunpack.c.l.b16 %v848
      %v3307 = vunpack.c.l.b16 %v849
      %v3308 = vunpack.c.h.b16 %v849
      %v3309 = vunpack.c.l.b16 %v850
      %v3310 = vunpack.c.l.b16 %v851
      %v3311 = vunpack.c.h.b16 %v851
      %v3312 = vunpack.c.l.b16 %v852
      %v3313 = vunpack.c.l.b16 %v853
      %v3314 = vunpack.c.h.b16 %v853
      %v3315 = vunpack.c.l.b16 %v854
      %v3316 = vunpack.c.l.b16 %v855
      %v3317 = vunpack.c.h.b16 %v855
      %v3318 = vunpack.c.l.b16 %v856
      %v3319 = vunpack.c.l.b16 %v857
      %v3320 = vunpack.c.h.b16 %v857
      %v3321 = vunpack.c.l.b16 %v858
      %v3322 = vunpack.c.l.b16 %v859
      %v3323 = vunpack.c.h.b16 %v859
      %v3324 = vunpack.c.l.b16 %v860
      %v3325 = vunpack.c.l.b16 %v861
      %v3326 = vunpack.c.h.b16 %v861
      %v3327 = vunpack.c.l.b16 %v862
      %v3328 = vunpack.c.l.b16 %v863
      %v3329 = vunpack.c.h.b16 %v863
      %v3330 = vunpack.c.l.b16 %v864
      %v3331 = vunpack.c.l.b16 %v865
      %v3332 = vunpack.c.h.b16 %v865
      %v3333 = vunpack.c.l.b16 %v866
      %v3334 = vunpack.c.l.b16 %v867
      %v3335 = vunpack.c.h.b16 %v867
      %v3336 = vunpack.c.l.b16 %v868
      %v3337 = vunpack.c.l.b16 %v869
      %v3338 = vunpack.c.h.b16 %v869
      %v3339 = vunpack.c.l.b16 %v870
      %v3340 = vunpack.c.l.b16 %v871
      %v3341 = vunpack.c.h.b16 %v871
      %v3342 = vunpack.c.l.b16 %v872
      %v3343 = vunpack.c.l.b16 %v873
      %v3344 = vunpack.c.h.b16 %v873
      %v3345 = vunpack.c.l.b16 %v874
      %v3346 = vunpack.c.l.b16 %v875
      %v3347 = vunpack.c.h.b16 %v875
      %v3348 = vunpack.c.l.b16 %v876
      %v3349 = vunpack.c.l.b16 %v877
      %v3350 = vunpack.c.h.b16 %v877
      %v3351 = vunpack.c.l.b16 %v878
      %v3352 = vunpack.c.l.b16 %v879
      %v3353 = vunpack.c.h.b16 %v879
      %v3354 = vunpack.c.l.b16 %v880
      %v3355 = vunpack.c.l.b16 %v881
      %v3356 = vunpack.c.h.b16 %v881
      %v3357 = vunpack.c.l.b16 %v882
      %v3358 = vunpack.c.l.b16 %v883
      %v3359 = vunpack.c.h.b16 %v883
      %v3360 = vunpack.c.l.b16 %v884
      %v3361 = vunpack.c.l.b16 %v885
      %v3362 = vunpack.c.h.b16 %v885
      %v3363 = vunpack.c.l.b16 %v886
      %v3364 = vunpack.c.l.b16 %v887
      %v3365 = vunpack.c.h.b16 %v887
      %v3366 = vunpack.c.l.b16 %v888
      %v3367 = vunpack.c.l.b16 %v889
      %v3368 = vunpack.c.h.b16 %v889
      %v3369 = vunpack.c.l.b16 %v890
      %v3370 = vunpack.c.l.b16 %v891
      %v3371 = vunpack.c.h.b16 %v891
      %v3372 = vunpack.c.l.b16 %v892
      %v3373 = vunpack.c.l.b16 %v893
      %v3374 = vunpack.c.h.b16 %v893
      %v3375 = vunpack.c.l.b16 %v894
      %v3376 = vunpack.c.l.b16 %v895
      %v3377 = vunpack.c.h.b16 %v895
      %v3378 = vunpack.c.l.b16 %v896
      %v3379 = vunpack.c.l.b16 %v897
      %v3380 = vunpack.c.h.b16 %v897
      %v3381 = vunpack.c.l.b16 %v898
      %v3382 = vunpack.c.l.b16 %v899
      %v3383 = vunpack.c.h.b16 %v899
      %v3384 = vunpack.c.l.b16 %v900
      %v3385 = vunpack.c.l.b16 %v901
      %v3386 = vunpack.c.h.b16 %v901
      %v3387 = vunpack.c.l.b16 %v902
      %v3388 = vunpack.c.l.b16 %v903
      %v3389 = vunpack.c.h.b16 %v903
      %v3390 = vunpack.c.l.b16 %v904
      %v3391 = vunpack.c.l.b16 %v905
      %v3392 = vunpack.c.h.b16 %v905
      %v3393 = vunpack.c.l.b16 %v906
      %v3394 = vunpack.c.l.b16 %v907
      %v3395 = vunpack.c.h.b16 %v907
      %v3396 = vunpack.c.l.b16 %v908
      %v3397 = vunpack.c.l.b16 %v909
      %v3398 = vunpack.c.h.b16 %v909
      %v3399 = vunpack.c.l.b16 %v910
      %v3400 = vunpack.c.l.b16 %v911
      %v3401 = vunpack.c.h.b16 %v911
      %v3402 = vunpack.c.l.b16 %v912
      %v3403 = vunpack.c.l.b16 %v913
      %v3404 = vunpack.c.h.b16 %v913
      %v3405 = vunpack.c.l.b16 %v914
      %v3406 = vunpack.c.l.b16 %v915
      %v3407 = vunpack.c.h.b16 %v915
      %v3408 = vunpack.c.l.b16 %v916
      %v3409 = vunpack.c.l.b16 %v917
      %v3410 = vunpack.c.h.b16 %v917
      %v3411 = vunpack.c.l.b16 %v918
      %v3412 = vunpack.c.l.b16 %v919
      %v3413 = vunpack.c.h.b16 %v919
      %v3414 = vunpack.c.l.b16 %v920
      %v3415 = vunpack.c.l.b16 %v921
      %v3416 = vunpack.c.h.b16 %v921
      %v3417 = vunpack.c.l.b16 %v922
      %v3418 = vunpack.c.l.b16 %v923
      %v3419 = vunpack.c.h.b16 %v923
      %v3420 = vunpack.c.l.b16 %v924
      %v3421 = vunpack.c.l.b16 %v925
      %v3422 = vunpack.c.h.b16 %v925
      %v3423 = vunpack.c.l.b16 %v926
      %v3424 = vunpack.c.l.b16 %v927
      %v3425 = vunpack.c.h.b16 %v927
      %v3426 = vunpack.c.l.b16 %v928
      %v3427 = vunpack.c.l.b16 %v929
      %v3428 = vunpack.c.h.b16 %v929
      %v3429 = vunpack.c.l.b16 %v930
      %v3430 = vunpack.c.l.b16 %v931
      %v3431 = vunpack.c.h.b16 %v931
      %v3432 = vunpack.c.l.b16 %v932
      %v3433 = vunpack.c.l.b16 %v933
      %v3434 = vunpack.c.h.b16 %v933
      %v3435 = vunpack.c.l.b16 %v934
      %v3436 = vunpack.c.l.b16 %v935
      %v3437 = vunpack.c.h.b16 %v935
      %v3438 = vunpack.c.l.b16 %v936
      %v3439 = vunpack.c.l.b16 %v937
      %v3440 = vunpack.c.h.b16 %v937
      %v3441 = vunpack.c.l.b16 %v938
      %v3442 = vunpack.c.l.b16 %v939
      %v3443 = vunpack.c.h.b16 %v939
      %v3444 = vunpack.c.l.b16 %v940
      %v3445 = vunpack.c.l.b16 %v941
      %v3446 = vunpack.c.h.b16 %v941
      %v3447 = vunpack.c.l.b16 %v942
      %v3448 = vunpack.c.l.b16 %v943
      %v3449 = vunpack.c.h.b16 %v943
      %v3450 = vunpack.c.l.b16 %v944
      %v3451 = vunpack.c.l.b16 %v945
      %v3452 = vunpack.c.h.b16 %v945
      %v3453 = vunpack.c.l.b16 %v946
      %v3454 = vunpack.c.l.b16 %v947
      %v3455 = vunpack.c.h.b16 %v947
      %v3456 = vunpack.c.l.b16 %v948
      %v3457 = vunpack.c.l.b16 %v949
      %v3458 = vunpack.c.h.b16 %v949
      %v3459 = vunpack.c.l.b16 %v950
      %v3460 = vunpack.c.l.b16 %v951
      %v3461 = vunpack.c.h.b16 %v951
      %v3462 = vunpack.c.l.b16 %v952
      %v3463 = vunpack.c.l.b16 %v953
      %v3464 = vunpack.c.h.b16 %v953
      %v3465 = vunpack.c.l.b16 %v954
      %v3466 = vunpack.c.l.b16 %v955
      %v3467 = vunpack.c.h.b16 %v955
      %v3468 = vunpack.c.l.b16 %v956
      %v3469 = vunpack.c.l.b16 %v957
      %v3470 = vunpack.c.h.b16 %v957
      %v3471 = vunpack.c.l.b16 %v958
      %v3472 = vunpack.c.l.b16 %v959
      %v3473 = vunpack.c.h.b16 %v959
      %v3474 = vunpack.c.l.b16 %v960
      %v3475 = vunpack.c.l.b16 %v961
      %v3476 = vunpack.c.h.b16 %v961
      %v3477 = vunpack.c.l.b16 %v962
      %v3478 = vunpack.c.l.b16 %v963
      %v3479 = vunpack.c.h.b16 %v963
      %v3480 = vunpack.c.l.b16 %v964
      %v3481 = vunpack.c.l.b16 %v965
      %v3482 = vunpack.c.h.b16 %v965
      %v3483 = vunpack.c.l.b16 %v966
      %v3484 = vunpack.c.l.b16 %v967
      %v3485 = vunpack.c.h.b16 %v967
      %v3486 = vunpack.c.l.b16 %v968
      %v3487 = vunpack.c.l.b16 %v969
      %v3488 = vunpack.c.h.b16 %v969
      %v3489 = vunpack.c.l.b16 %v970
      %v3490 = vunpack.c.l.b16 %v971
      %v3491 = vunpack.c.h.b16 %v971
      %v3492 = vunpack.c.l.b16 %v972
      %v3493 = vunpack.c.l.b16 %v973
      %v3494 = vunpack.c.h.b16 %v973
      %v3495 = vunpack.c.l.b16 %v974
      %v3496 = vunpack.c.l.b16 %v975
      %v3497 = vunpack.c.h.b16 %v975
      %v3498 = vunpack.c.l.b16 %v976
      %v3499 = vunpack.c.l.b16 %v977
      %v3500 = vunpack.c.h.b16 %v977
      %v3501 = vunpack.c.l.b16 %v978
      %v3502 = vunpack.c.l.b16 %v979
      %v3503 = vunpack.c.h.b16 %v979
      %v3504 = vunpack.c.l.b16 %v980
      %v3505 = vunpack.c.l.b16 %v981
      %v3506 = vunpack.c.h.b16 %v981
      %v3507 = vunpack.c.l.b16 %v982
      %v3508 = vunpack.c.l.b16 %v983
      %v3509 = vunpack.c.h.b16 %v983
      %v3510 = vunpack.c.l.b16 %v984
      %v3511 = vunpack.c.l.b16 %v985
      %v3512 = vunpack.c.h.b16 %v985
      %v3513 = vunpack.c.l.b16 %v986
      %v3514 = vunpack.c.l.b16 %v987
      %v3515 = vunpack.c.h.b16 %v987
      %v3516 = vunpack.c.l.b16 %v988
      %v3517 = vunpack.c.l.b16 %v989
      %v3518 = vunpack.c.h.b16 %v989
      %v3519 = vunpack.c.l.b16 %v990
      %v3520 = vunpack.c.l.b16 %v991
      %v3521 = vunpack.c.h.b16 %v991
      %v3522 = vunpack.c.l.b16 %v992
      %v3523 = vunpack.c.l.b16 %v993
      %v3524 = vunpack.c.h.b16 %v993
      %v3525 = vunpack.c.l.b16 %v994
      %v3526 = vunpack.c.l.b16 %v995
      %v3527 = vunpack.c.h.b16 %v995
      %v3528 = vunpack.c.l.b16 %v996
      %v3529 = vunpack.c.l.b16 %v997
      %v3530 = vunpack.c.h.b16 %v997
      %v3531 = vunpack.c.l.b16 %v998
      %v3532 = vunpack.c.l.b16 %v999
      %v3533 = vunpack.c.h.b16 %v999
      %v3534 = vunpack.c.l.b16 %v1000
      %v3535 = vunpack.c.l.b16 %v1001
      %v3536 = vunpack.c.h.b16 %v1001
      %v3537 = vunpack.c.l.b16 %v1002
      %v3538 = vunpack.c.l.b16 %v1003
      %v3539 = vunpack.c.h.b16 %v1003
      %v3540 = vunpack.c.l.b16 %v1004
      %v3541 = vunpack.c.l.b16 %v1005
      %v3542 = vunpack.c.h.b16 %v1005
      %v3543 = vunpack.c.l.b16 %v1006
      %v3544 = vunpack.c.l.b16 %v1007
      %v3545 = vunpack.c.h.b16 %v1007
      %v3546 = vunpack.c.l.b16 %v1008
      %v3547 = vunpack.c.l.b16 %v1009
      %v3548 = vunpack.c.h.b16 %v1009
      %v3549 = vunpack.c.l.b16 %v1010
      %v3550 = vunpack.c.l.b16 %v1011
      %v3551 = vunpack.c.h.b16 %v1011
      %v3552 = vunpack.c.l.b16 %v1012
      %v3553 = vunpack.c.l.b16 %v1013
      %v3554 = vunpack.c.h.b16 %v1013
      %v3555 = vunpack.c.l.b16 %v1014
      %v3556 = vunpack.c.l.b16 %v1015
      %v3557 = vunpack.c.h.b16 %v1015
      %v3558 = vunpack.c.l.b16 %v1016
      %v3559 = vunpack.c.l.b16 %v1017
      %v3560 = vunpack.c.h.b16 %v1017
      %v3561 = vunpack.c.l.b16 %v1018
      %v3562 = vunpack.c.l.b16 %v1019
      %v3563 = vunpack.c.h.b16 %v1019
      %v3564 = vunpack.c.l.b16 %v1020
      %v3565 = vunpack.c.l.b16 %v1021
      %v3566 = vunpack.c.h.b16 %v1021
      %v3567 = vunpack.c.l.b16 %v1022
      %v3568 = vunpack.c.l.b16 %v1023
      %v3569 = vunpack.c.h.b16 %v1023
      %v3570 = vunpack.c.l.b16 %v1024
      %v3571 = vunpack.c.l.b16 %v1025
      %v3572 = vunpack.c.h.b16 %v1025
      %v3573 = vunpack.c.l.b16 %v1026
      %v3574 = vunpack.c.l.b16 %v1027
      %v3575 = vunpack.c.h.b16 %v1027
      %v3576 = vunpack.c.l.b16 %v1028
      %v3577 = vunpack.c.l.b16 %v1029
      %v3578 = vunpack.c.h.b16 %v1029
      %v3579 = vunpack.c.l.b16 %v1030
      %v3580 = vunpack.c.l.b16 %v1031
      %v3581 = vunpack.c.h.b16 %v1031
      %v3582 = vunpack.c.l.b16 %v1032
      %v3583 = vunpack.c.l.b16 %v1033
      %v3584 = vunpack.c.h.b16 %v1033
      %v3585 = vunpack.c.l.b16 %v1034
      %v3586 = vunpack.c.l.b16 %v1035
      %v3587 = vunpack.c.h.b16 %v1035
      %v3588 = vunpack.c.l.b16 %v1036
      %v3589 = vunpack.c.l.b16 %v1037
      %v3590 = vunpack.c.h.b16 %v1037
      %v3591 = vunpack.c.l.b16 %v1038
      %v3592 = vunpack.c.l.b16 %v1039
      %v3593 = vunpack.c.h.b16 %v1039
      %v3594 = vunpack.c.l.b16 %v1040
      %v3595 = vunpack.c.l.b16 %v1041
      %v3596 = vunpack.c.h.b16 %v1041
      %v3597 = vunpack.c.l.b16 %v1042
      %v3598 = vunpack.c.l.b16 %v1043
      %v3599 = vunpack.c.h.b16 %v1043
      %v3600 = vunpack.c.l.b16 %v1044
      %v3601 = vunpack.c.l.b16 %v1045
      %v3602 = vunpack.c.h.b16 %v1045
      %v3603 = vunpack.c.l.b16 %v1046
      %v3604 = vunpack.c.l.b16 %v1047
      %v3605 = vunpack.c.h.b16 %v1047
      %v3606 = vunpack.c.l.b16 %v1048
      %v3607 = vunpack.c.l.b16 %v1049
      %v3608 = vunpack.c.h.b16 %v1049
      %v3609 = vunpack.c.l.b16 %v1050
      %v3610 = vunpack.c.l.b16 %v1051
      %v3611 = vunpack.c.h.b16 %v1051
      %v3612 = vunpack.c.l.b16 %v1052
      %v3613 = vunpack.c.l.b16 %v1053
      %v3614 = vunpack.c.h.b16 %v1053
      %v3615 = vunpack.c.l.b16 %v1054
      %v3616 = vunpack.c.l.b16 %v1055
      %v3617 = vunpack.c.h.b16 %v1055
      %v3618 = vunpack.c.l.b16 %v1056
      %v3619 = vunpack.c.l.b16 %v1057
      %v3620 = vunpack.c.h.b16 %v1057
      %v3621 = vunpack.c.l.b16 %v1058
      %v3622 = vunpack.c.l.b16 %v1059
      %v3623 = vunpack.c.h.b16 %v1059
      %v3624 = vunpack.c.l.b16 %v1060
      %v3625 = vunpack.c.l.b16 %v1061
      %v3626 = vunpack.c.h.b16 %v1061
      %v3627 = vunpack.c.l.b16 %v1062
      %v3628 = vunpack.c.l.b16 %v1063
      %v3629 = vunpack.c.h.b16 %v1063
      %v3630 = vunpack.c.l.b16 %v1064
      %v3631 = vunpack.c.l.b16 %v1065
      %v3632 = vunpack.c.h.b16 %v1065
      %v3633 = vunpack.c.l.b16 %v1066
      %v3634 = vunpack.c.l.b16 %v1067
      %v3635 = vunpack.c.h.b16 %v1067
      %v3636 = vunpack.c.l.b16 %v1068
      %v3637 = vunpack.c.l.b16 %v1069
      %v3638 = vunpack.c.h.b16 %v1069
      %v3639 = vunpack.c.l.b16 %v1070
      %v3640 = vunpack.c.l.b16 %v1071
      %v3641 = vunpack.c.h.b16 %v1071
      %v3642 = vunpack.c.l.b16 %v1072
      %v3643 = vunpack.c.l.b16 %v1073
      %v3644 = vunpack.c.h.b16 %v1073
      %v3645 = vunpack.c.l.b16 %v1074
      %v3646 = vunpack.c.l.b16 %v1075
      %v3647 = vunpack.c.h.b16 %v1075
      %v3648 = vunpack.c.l.b16 %v1076
      %v3649 = vunpack.c.l.b16 %v1077
      %v3650 = vunpack.c.h.b16 %v1077
      %v3651 = vunpack.c.l.b16 %v1078
      %v3652 = vunpack.c.l.b16 %v1079
      %v3653 = vunpack.c.h.b16 %v1079
      %v3654 = vunpack.c.l.b16 %v1080
      %v3655 = vunpack.c.l.b16 %v1081
      %v3656 = vunpack.c.h.b16 %v1081
      %v3657 = vunpack.c.l.b16 %v1082
      %v3658 = vunpack.c.l.b16 %v1083
      %v3659 = vunpack.c.h.b16 %v1083
      %v3660 = vunpack.c.l.b16 %v1084
      %v3661 = vunpack.c.l.b16 %v1085
      %v3662 = vunpack.c.h.b16 %v1085
      %v3663 = vunpack.c.l.b16 %v1086
      %v3664 = vunpack.c.l.b16 %v1087
      %v3665 = vunpack.c.h.b16 %v1087
      %v3666 = vunpack.c.l.b16 %v1088
      %v3667 = vunpack.c.l.b16 %v1089
      %v3668 = vunpack.c.h.b16 %v1089
      %v3669 = vunpack.c.l.b16 %v1090
      %v3670 = vunpack.c.l.b16 %v1091
      %v3671 = vunpack.c.h.b16 %v1091
      %v3672 = vunpack.c.l.b16 %v1092
      %v3673 = vunpack.c.l.b16 %v1093
      %v3674 = vunpack.c.h.b16 %v1093
      %v3675 = vunpack.c.l.b16 %v1094
      %v3676 = vunpack.c.l.b16 %v1095
      %v3677 = vunpack.c.h.b16 %v1095
      %v3678 = vunpack.c.l.b16 %v1096
      %v3679 = vunpack.c.l.b16 %v1097
      %v3680 = vunpack.c.h.b16 %v1097
      %v3681 = vunpack.c.l.b16 %v1098
      %v3682 = vunpack.c.l.b16 %v1099
      %v3683 = vunpack.c.h.b16 %v1099
      %v3684 = vunpack.c.l.b16 %v1100
      %v3685 = vunpack.c.l.b16 %v1101
      %v3686 = vunpack.c.h.b16 %v1101
      %v3687 = vunpack.c.l.b16 %v1102
      %v3688 = vunpack.c.l.b16 %v1103
      %v3689 = vunpack.c.h.b16 %v1103
      %v3690 = vunpack.c.l.b16 %v1104
      %v3691 = vunpack.c.l.b16 %v1105
      %v3692 = vunpack.c.h.b16 %v1105
      %v3693 = vunpack.c.l.b16 %v1106
      %v3694 = vunpack.c.l.b16 %v1107
      %v3695 = vunpack.c.h.b16 %v1107
      %v3696 = vunpack.c.l.b16 %v1108
      %v3697 = vunpack.c.l.b16 %v1109
      %v3698 = vunpack.c.h.b16 %v1109
      %v3699 = vunpack.c.l.b16 %v1110
      %v3700 = vunpack.c.l.b16 %v1111
      %v3701 = vunpack.c.h.b16 %v1111
      %v3702 = vunpack.c.l.b16 %v1112
      %v3703 = vunpack.c.l.b16 %v1113
      %v3704 = vunpack.c.h.b16 %v1113
      %v3705 = vunpack.c.l.b16 %v1114
      %v3706 = vunpack.c.l.b16 %v1115
      %v3707 = vunpack.c.h.b16 %v1115
      %v3708 = vunpack.c.l.b16 %v1116
      %v3709 = vunpack.c.l.b16 %v1117
      %v3710 = vunpack.c.h.b16 %v1117
      %v3711 = vunpack.c.l.b16 %v1118
      %v3712 = vunpack.c.l.b16 %v1119
      %v3713 = vunpack.c.h.b16 %v1119
      %v3714 = vunpack.c.l.b16 %v1120
      %v3715 = vunpack.c.l.b16 %v1121
      %v3716 = vunpack.c.h.b16 %v1121
      %v3717 = vunpack.c.l.b16 %v1122
      %v3718 = vunpack.c.l.b16 %v1123
      %v3719 = vunpack.c.h.b16 %v1123
      %v3720 = vunpack.c.l.b16 %v1124
      %v3721 = vunpack.c.l.b16 %v1125
      %v3722 = vunpack.c.h.b16 %v1125
      %v3723 = vunpack.c.l.b16 %v1126
      %v3724 = vunpack.c.l.b16 %v1127
      %v3725 = vunpack.c.h.b16 %v1127
      %v3726 = vunpack.c.l.b16 %v1128
      %v3727 = vunpack.c.l.b16 %v1129
      %v3728 = vunpack.c.h.b16 %v1129
      %v3729 = vunpack.c.l.b16 %v1130
      %v3730 = vunpack.c.l.b16 %v1131
      %v3731 = vunpack.c.h.b16 %v1131
      %v3732 = vunpack.c.l.b16 %v1132
      %v3733 = vunpack.c.l.b16 %v1133
      %v3734 = vunpack.c.h.b16 %v1133
      %v3735 = vunpack.c.l.b16 %v1134
      %v3736 = vunpack.c.l.b16 %v1135
      %v3737 = vunpack.c.h.b16 %v1135
      %v3738 = vunpack.c.l.b16 %v1136
      %v3739 = vunpack.c.l.b16 %v1137
      %v3740 = vunpack.c.h.b16 %v1137
      %v3741 = vunpack.c.l.b16 %v1138
      %v3742 = vunpack.c.l.b16 %v1139
      %v3743 = vunpack.c.h.b16 %v1139
      %v3744 = vunpack.c.l.b16 %v1140
      %v3745 = vunpack.c.l.b16 %v1141
      %v3746 = vunpack.c.h.b16 %v1141
      %v3747 = vunpack.c.l.b16 %v1142
      %v3748 = vunpack.c.l.b16 %v1143
      %v3749 = vunpack.c.h.b16 %v1143
      %v3750 = vunpack.c.l.b16 %v1144
      %v3751 = vunpack.c.l.b16 %v1145
      %v3752 = vunpack.c.h.b16 %v1145
      %v3753 = vunpack.c.l.b16 %v1146
      %v3754 = vunpack.c.l.b16 %v1147
      %v3755 = vunpack.c.h.b16 %v1147
      %v3756 = vunpack.c.l.b16 %v1148
      %v3757 = vunpack.c.l.b16 %v1149
      %v3758 = vunpack.c.h.b16 %v1149
      %v3759 = vunpack.c.l.b16 %v1150
      %v3760 = vunpack.c.l.b16 %v1151
      %v3761 = vunpack.c.h.b16 %v1151
      %v3762 = vunpack.c.l.b16 %v1152
      %v3763 = vunpack.c.l.b16 %v1153
      %v3764 = vunpack.c.h.b16 %v1153
      %v3765 = vunpack.c.l.b16 %v1154
      %v3766 = vunpack.c.l.b16 %v1155
      %v3767 = vunpack.c.h.b16 %v1155
      %v3768 = vunpack.c.l.b16 %v1156
      %v3769 = vunpack.c.l.b16 %v1157
      %v3770 = vunpack.c.h.b16 %v1157
      %v3771 = vunpack.c.l.b16 %v1158
      %v3772 = vunpack.c.l.b16 %v1159
      %v3773 = vunpack.c.h.b16 %v1159
      %v3774 = vunpack.c.l.b16 %v1160
      %v3775 = vunpack.c.l.b16 %v1161
      %v3776 = vunpack.c.h.b16 %v1161
      %v3777 = vunpack.c.l.b16 %v1162
      %v3778 = vunpack.c.l.b16 %v1163
      %v3779 = vunpack.c.h.b16 %v1163
      %v3780 = vunpack.c.l.b16 %v1164
      %v3781 = vunpack.c.l.b16 %v1165
      %v3782 = vunpack.c.h.b16 %v1165
      %v3783 = vunpack.c.l.b16 %v1166
      %v3784 = vunpack.c.l.b16 %v1167
      %v3785 = vunpack.c.h.b16 %v1167
      %v3786 = vunpack.c.l.b16 %v1168
      %v3787 = vunpack.c.l.b16 %v1169
      %v3788 = vunpack.c.h.b16 %v1169
      %v3789 = vunpack.c.l.b16 %v1170
      %v3790 = vunpack.c.l.b16 %v1171
      %v3791 = vunpack.c.h.b16 %v1171
      %v3792 = vunpack.c.l.b16 %v1172
      %v3793 = vunpack.c.l.b16 %v1173
      %v3794 = vunpack.c.h.b16 %v1173
      %v3795 = vunpack.c.l.b16 %v1174
      %v3796 = vunpack.c.l.b16 %v1175
      %v3797 = vunpack.c.h.b16 %v1175
      %v3798 = vunpack.c.l.b16 %v1176
      %v3799 = vunpack.c.l.b16 %v1177
      %v3800 = vunpack.c.h.b16 %v1177
      %v3801 = vunpack.c.l.b16 %v1178
      %v3802 = vunpack.c.l.b16 %v1179
      %v3803 = vunpack.c.h.b16 %v1179
      %v3804 = vunpack.c.l.b16 %v1180
      %v3805 = vunpack.c.l.b16 %v1181
      %v3806 = vunpack.c.h.b16 %v1181
      %v3807 = vunpack.c.l.b16 %v1182
      %v3808 = vunpack.c.l.b16 %v1183
      %v3809 = vunpack.c.h.b16 %v1183
      %v3810 = vunpack.c.l.b16 %v1184
      %v3811 = vunpack.c.l.b16 %v1185
      %v3812 = vunpack.c.h.b16 %v1185
      %v3813 = vunpack.c.l.b16 %v1186
      %v3814 = vunpack.c.l.b16 %v1187
      %v3815 = vunpack.c.h.b16 %v1187
      %v3816 = vunpack.c.l.b16 %v1188
      %v3817 = vunpack.c.l.b16 %v1189
      %v3818 = vunpack.c.h.b16 %v1189
      %v3819 = vunpack.c.l.b16 %v1190
      %v3820 = vunpack.c.l.b16 %v1191
      %v3821 = vunpack.c.h.b16 %v1191
      %v3822 = vunpack.c.l.b16 %v1192
      %v3823 = vunpack.c.l.b16 %v1193
      %v3824 = vunpack.c.h.b16 %v1193
      %v3825 = vunpack.c.l.b16 %v1194
      %v3826 = vunpack.c.l.b16 %v1195
      %v3827 = vunpack.c.h.b16 %v1195
      %v3828 = vunpack.c.l.b16 %v1196
      %v3829 = vunpack.c.l.b16 %v1197
      %v3830 = vunpack.c.h.b16 %v1197
      %v3831 = vunpack.c.l.b16 %v1198
      %v3832 = vunpack.c.l.b16 %v1199
      %v3833 = vunpack.c.h.b16 %v1199
      %v3834 = vunpack.c.l.b16 %v1200
      %v3835 = vunpack.c.l.b16 %v1201
      %v3836 = vunpack.c.h.b16 %v1201
      %v3837 = vunpack.c.l.b16 %v1202
      %v3838 = vunpack.c.l.b16 %v1203
      %v3839 = vunpack.c.h.b16 %v1203
      %v3840 = vunpack.c.l.b16 %v1204
      %v3841 = vunpack.c.l.b16 %v1205
      %v3842 = vunpack.c.h.b16 %v1205
      %v3843 = vunpack.c.l.b16 %v1206
      %v3844 = vunpack.c.l.b16 %v1207
      %v3845 = vunpack.c.h.b16 %v1207
      %v3846 = vunpack.c.l.b16 %v1208
      %v3847 = vunpack.c.l.b16 %v1209
      %v3848 = vunpack.c.h.b16 %v1209
      %v3849 = vunpack.c.l.b16 %v1210
      %v3850 = vunpack.c.l.b16 %v1211
      %v3851 = vunpack.c.h.b16 %v1211
      %v3852 = vunpack.c.l.b16 %v1212
      %v3853 = vunpack.c.l.b16 %v1213
      %v3854 = vunpack.c.h.b16 %v1213
      %v3855 = vunpack.c.l.b16 %v1214
      %v3856 = vunpack.c.l.b16 %v1215
      %v3857 = vunpack.c.h.b16 %v1215
      %v3858 = vunpack.c.l.b16 %v1216
      %v3859 = vunpack.c.l.b16 %v1217
      %v3860 = vunpack.c.h.b16 %v1217
      %v3861 = vunpack.c.l.b16 %v1218
      %v3862 = vunpack.c.l.b16 %v1219
      %v3863 = vunpack.c.h.b16 %v1219
      %v3864 = vunpack.c.l.b16 %v1220
      %v3865 = vunpack.c.l.b16 %v1221
      %v3866 = vunpack.c.h.b16 %v1221
      %v3867 = vunpack.c.l.b16 %v1222
      %v3868 = vunpack.c.l.b16 %v1223
      %v3869 = vunpack.c.h.b16 %v1223
      %v3870 = vunpack.c.l.b16 %v1224
      %v3871 = vunpack.c.l.b16 %v1225
      %v3872 = vunpack.c.h.b16 %v1225
      %v3873 = vunpack.c.l.b16 %v1226
      %v3874 = vunpack.c.l.b16 %v1227
      %v3875 = vunpack.c.h.b16 %v1227
      %v3876 = vunpack.c.l.b16 %v1228
      %v3877 = vunpack.c.l.b16 %v1229
      %v3878 = vunpack.c.h.b16 %v1229
      %v3879 = vunpack.c.l.b16 %v1230
      %v3880 = vunpack.c.l.b16 %v1231
      %v3881 = vunpack.c.h.b16 %v1231
      %v3882 = vunpack.c.l.b16 %v1232
      %v3883 = vunpack.c.l.b16 %v1233
      %v3884 = vunpack.c.h.b16 %v1233
      %v3885 = vunpack.c.l.b16 %v1234
      %v3886 = vunpack.c.l.b16 %v1235
      %v3887 = vunpack.c.h.b16 %v1235
      %v3888 = vunpack.c.l.b16 %v1236
      %v3889 = vunpack.c.l.b16 %v1237
      %v3890 = vunpack.c.h.b16 %v1237
      %v3891 = vunpack.c.l.b16 %v1238
      %v3892 = vunpack.c.l.b16 %v1239
      %v3893 = vunpack.c.h.b16 %v1239
      %v3894 = vunpack.c.l.b16 %v1240
      %v3895 = vunpack.c.l.b16 %v1241
      %v3896 = vunpack.c.h.b16 %v1241
      %v3897 = vunpack.c.l.b16 %v1242
      %v3898 = vunpack.c.l.b16 %v1243
      %v3899 = vunpack.c.h.b16 %v1243
      %v3900 = vunpack.c.l.b16 %v1244
      %v3901 = vunpack.c.l.b16 %v1245
      %v3902 = vunpack.c.h.b16 %v1245
      %v3903 = vunpack.c.l.b16 %v1246
      %v3904 = vunpack.c.l.b16 %v1247
      %v3905 = vunpack.c.h.b16 %v1247
      %v3906 = vunpack.c.l.b16 %v1248
      %v3907 = vunpack.c.l.b16 %v1249
      %v3908 = vunpack.c.h.b16 %v1249
      %v3909 = vunpack.c.l.b16 %v1250
      %v3910 = vunpack.c.l.b16 %v1251
      %v3911 = vunpack.c.h.b16 %v1251
      %v3912 = vunpack.c.l.b16 %v1252
      %v3913 = vunpack.c.l.b16 %v1253
      %v3914 = vunpack.c.h.b16 %v1253
      %v3915 = vunpack.c.l.b16 %v1254
      %v3916 = vpack.c.b16 %v2344, %v2341
      %v3917 = vpack.c.b16 %v2345, %v2342
      %v3918 = vpack.c.b16 %v2346, %v2343
      %v3919 = vpack.c.b16 %v2350, %v2347
      %v3920 = vpack.c.b16 %v2351, %v2348
      %v3921 = vpack.c.b16 %v2352, %v2349
      %v3922 = vpack.c.b16 %v2356, %v2353
      %v3923 = vpack.c.b16 %v2357, %v2354
      %v3924 = vpack.c.b16 %v2358, %v2355
      %v3925 = vpack.c.b16 %v2362, %v2359
      %v3926 = vpack.c.b16 %v2363, %v2360
      %v3927 = vpack.c.b16 %v2364, %v2361
      %v3928 = vpack.c.b16 %v2368, %v2365
      %v3929 = vpack.c.b16 %v2369, %v2366
      %v3930 = vpack.c.b16 %v2370, %v2367
      %v3931 = vpack.c.b16 %v2374, %v2371
      %v3932 = vpack.c.b16 %v2375, %v2372
      %v3933 = vpack.c.b16 %v2376, %v2373
      %v3934 = vpack.c.b16 %v2380, %v2377
      %v3935 = vpack.c.b16 %v2381, %v2378
      %v3936 = vpack.c.b16 %v2382, %v2379
      %v3937 = vpack.c.b16 %v2386, %v2383
      %v3938 = vpack.c.b16 %v2387, %v2384
      %v3939 = vpack.c.b16 %v2388, %v2385
      %v3940 = vpack.c.b16 %v2392, %v2389
      %v3941 = vpack.c.b16 %v2393, %v2390
      %v3942 = vpack.c.b16 %v2394, %v2391
      %v3943 = vpack.c.b16 %v2398, %v2395
      %v3944 = vpack.c.b16 %v2399, %v2396
      %v3945 = vpack.c.b16 %v2400, %v2397
      %v3946 = vpack.c.b16 %v2404, %v2401
      %v3947 = vpack.c.b16 %v2405, %v2402
      %v3948 = vpack.c.b16 %v2406, %v2403
      %v3949 = vpack.c.b16 %v2410, %v2407
      %v3950 = vpack.c.b16 %v2411, %v2408
      %v3951 = vpack.c.b16 %v2412, %v2409
      %v3952 = vpack.c.b16 %v2416, %v2413
      %v3953 = vpack.c.b16 %v2417, %v2414
      %v3954 = vpack.c.b16 %v2418, %v2415
      %v3955 = vpack.c.b16 %v2422, %v2419
      %v3956 = vpack.c.b16 %v2423, %v2420
      %v3957 = vpack.c.b16 %v2424, %v2421
      %v3958 = vpack.c.b16 %v2428, %v2425
      %v3959 = vpack.c.b16 %v2429, %v2426
      %v3960 = vpack.c.b16 %v2430, %v2427
      %v3961 = vpack.c.b16 %v2434, %v2431
      %v3962 = vpack.c.b16 %v2435, %v2432
      %v3963 = vpack.c.b16 %v2436, %v2433
      %v3964 = vpack.c.b16 %v2440, %v2437
      %v3965 = vpack.c.b16 %v2441, %v2438
      %v3966 = vpack.c.b16 %v2442, %v2439
      %v3967 = vpack.c.b16 %v2446, %v2443
      %v3968 = vpack.c.b16 %v2447, %v2444
      %v3969 = vpack.c.b16 %v2448, %v2445
      %v3970 = vpack.c.b16 %v2452, %v2449
      %v3971 = vpack.c.b16 %v2453, %v2450
      %v3972 = vpack.c.b16 %v2454, %v2451
      %v3973 = vpack.c.b16 %v2458, %v2455
      %v3974 = vpack.c.b16 %v2459, %v2456
      %v3975 = vpack.c.b16 %v2460, %v2457
      %v3976 = vpack.c.b16 %v2464, %v2461
      %v3977 = vpack.c.b16 %v2465, %v2462
      %v3978 = vpack.c.b16 %v2466, %v2463
      %v3979 = vpack.c.b16 %v2470, %v2467
      %v3980 = vpack.c.b16 %v2471, %v2468
      %v3981 = vpack.c.b16 %v2472, %v2469
      %v3982 = vpack.c.b16 %v2476, %v2473
      %v3983 = vpack.c.b16 %v2477, %v2474
      %v3984 = vpack.c.b16 %v2478, %v2475
      %v3985 = vpack.c.b16 %v2482, %v2479
      %v3986 = vpack.c.b16 %v2483, %v2480
      %v3987 = vpack.c.b16 %v2484, %v2481
      %v3988 = vpack.c.b16 %v2488, %v2485
      %v3989 = vpack.c.b16 %v2489, %v2486
      %v3990 = vpack.c.b16 %v2490, %v2487
      %v3991 = vpack.c.b16 %v2494, %v2491
      %v3992 = vpack.c.b16 %v2495, %v2492
      %v3993 = vpack.c.b16 %v2496, %v2493
      %v3994 = vpack.c.b16 %v2500, %v2497
      %v3995 = vpack.c.b16 %v2501, %v2498
      %v3996 = vpack.c.b16 %v2502, %v2499
      %v3997 = vpack.c.b16 %v2506, %v2503
      %v3998 = vpack.c.b16 %v2507, %v2504
      %v3999 = vpack.c.b16 %v2508, %v2505
      %v4000 = vpack.c.b16 %v2512, %v2509
      %v4001 = vpack.c.b16 %v2513, %v2510
      %v4002 = vpack.c.b16 %v2514, %v2511
      %v4003 = vpack.c.b16 %v2518, %v2515
      %v4004 = vpack.c.b16 %v2519, %v2516
      %v4005 = vpack.c.b16 %v2520, %v2517
      %v4006 = vpack.c.b16 %v2524, %v2521
      %v4007 = vpack.c.b16 %v2525, %v2522
      %v4008 = vpack.c.b16 %v2526, %v2523
      %v4009 = vpack.c.b16 %v2530, %v2527
      %v4010 = vpack.c.b16 %v2531, %v2528
      %v4011 = vpack.c.b16 %v2532, %v2529
      %v4012 = vpack.c.b16 %v2536, %v2533
      %v4013 = vpack.c.b16 %v2537, %v2534
      %v4014 = vpack.c.b16 %v2538, %v2535
      %v4015 = vpack.c.b16 %v2542, %v2539
      %v4016 = vpack.c.b16 %v2543, %v2540
      %v4017 = vpack.c.b16 %v2544, %v2541
      %v4018 = vpack.c.b16 %v2548, %v2545
      %v4019 = vpack.c.b16 %v2549, %v2546
      %v4020 = vpack.c.b16 %v2550, %v2547
      %v4021 = vpack.c.b16 %v2554, %v2551
      %v4022 = vpack.c.b16 %v2555, %v2552
      %v4023 = vpack.c.b16 %v2556, %v2553
      %v4024 = vpack.c.b16 %v2560, %v2557
      %v4025 = vpack.c.b16 %v2561, %v2558
      %v4026 = vpack.c.b16 %v2562, %v2559
      %v4027 = vpack.c.b16 %v2566, %v2563
      %v4028 = vpack.c.b16 %v2567, %v2564
      %v4029 = vpack.c.b16 %v2568, %v2565
      %v4030 = vpack.c.b16 %v2572, %v2569
      %v4031 = vpack.c.b16 %v2573, %v2570
      %v4032 = vpack.c.b16 %v2574, %v2571
      %v4033 = vpack.c.b16 %v2578, %v2575
      %v4034 = vpack.c.b16 %v2579, %v2576
      %v4035 = vpack.c.b16 %v2580, %v2577
      %v4036 = vpack.c.b16 %v2584, %v2581
      %v4037 = vpack.c.b16 %v2585, %v2582
      %v4038 = vpack.c.b16 %v2586, %v2583
      %v4039 = vpack.c.b16 %v2590, %v2587
      %v4040 = vpack.c.b16 %v2591, %v2588
      %v4041 = vpack.c.b16 %v2592, %v2589
      %v4042 = vpack.c.b16 %v2596, %v2593
      %v4043 = vpack.c.b16 %v2597, %v2594
      %v4044 = vpack.c.b16 %v2598, %v2595
      %v4045 = vpack.c.b16 %v2602, %v2599
      %v4046 = vpack.c.b16 %v2603, %v2600
      %v4047 = vpack.c.b16 %v2604, %v2601
      %v4048 = vpack.c.b16 %v2608, %v2605
      %v4049 = vpack.c.b16 %v2609, %v2606
      %v4050 = vpack.c.b16 %v2610, %v2607
      %v4051 = vpack.c.b16 %v2614, %v2611
      %v4052 = vpack.c.b16 %v2615, %v2612
      %v4053 = vpack.c.b16 %v2616, %v2613
      %v4054 = vpack.c.b16 %v2620, %v2617
      %v4055 = vpack.c.b16 %v2621, %v2618
      %v4056 = vpack.c.b16 %v2622, %v2619
      %v4057 = vpack.c.b16 %v2626, %v2623
      %v4058 = vpack.c.b16 %v2627, %v2624
      %v4059 = vpack.c.b16 %v2628, %v2625
      %v4060 = vpack.c.b16 %v2632, %v2629
      %v4061 = vpack.c.b16 %v2633, %v2630
      %v4062 = vpack.c.b16 %v2634, %v2631
      %v4063 = vpack.c.b16 %v2638, %v2635
      %v4064 = vpack.c.b16 %v2639, %v2636
      %v4065 = vpack.c.b16 %v2640, %v2637
      %v4066 = vpack.c.b16 %v2644, %v2641
      %v4067 = vpack.c.b16 %v2645, %v2642
      %v4068 = vpack.c.b16 %v2646, %v2643
      %v4069 = vpack.c.b16 %v2650, %v2647
      %v4070 = vpack.c.b16 %v2651, %v2648
      %v4071 = vpack.c.b16 %v2652, %v2649
      %v4072 = vpack.c.b16 %v2656, %v2653
      %v4073 = vpack.c.b16 %v2657, %v2654
      %v4074 = vpack.c.b16 %v2658, %v2655
      %v4075 = vpack.c.b16 %v2662, %v2659
      %v4076 = vpack.c.b16 %v2663, %v2660
      %v4077 = vpack.c.b16 %v2664, %v2661
      %v4078 = vpack.c.b16 %v2668, %v2665
      %v4079 = vpack.c.b16 %v2669, %v2666
      %v4080 = vpack.c.b16 %v2670, %v2667
      %v4081 = vpack.c.b16 %v2674, %v2671
      %v4082 = vpack.c.b16 %v2675, %v2672
      %v4083 = vpack.c.b16 %v2676, %v2673
      %v4084 = vpack.c.b16 %v2680, %v2677
      %v4085 = vpack.c.b16 %v2681, %v2678
      %v4086 = vpack.c.b16 %v2682, %v2679
      %v4087 = vpack.c.b16 %v2686, %v2683
      %v4088 = vpack.c.b16 %v2687, %v2684
      %v4089 = vpack.c.b16 %v2688, %v2685
      %v4090 = vpack.c.b16 %v2692, %v2689
      %v4091 = vpack.c.b16 %v2693, %v2690
      %v4092 = vpack.c.b16 %v2694, %v2691
      %v4093 = vpack.c.b16 %v2698, %v2695
      %v4094 = vpack.c.b16 %v2699, %v2696
      %v4095 = vpack.c.b16 %v2700, %v2697
      %v4096 = vpack.c.b16 %v2704, %v2701
      %v4097 = vpack.c.b16 %v2705, %v2702
      %v4098 = vpack.c.b16 %v2706, %v2703
      %v4099 = vpack.c.b16 %v2710, %v2707
      %v4100 = vpack.c.b16 %v2711, %v2708
      %v4101 = vpack.c.b16 %v2712, %v2709
      %v4102 = vpack.c.b16 %v2716, %v2713
      %v4103 = vpack.c.b16 %v2717, %v2714
      %v4104 = vpack.c.b16 %v2718, %v2715
      %v4105 = vpack.c.b16 %v2722, %v2719
      %v4106 = vpack.c.b16 %v2723, %v2720
      %v4107 = vpack.c.b16 %v2724, %v2721
      %v4108 = vpack.c.b16 %v2728, %v2725
      %v4109 = vpack.c.b16 %v2729, %v2726
      %v4110 = vpack.c.b16 %v2730, %v2727
      %v4111 = vpack.c.b16 %v2734, %v2731
      %v4112 = vpack.c.b16 %v2735, %v2732
      %v4113 = vpack.c.b16 %v2736, %v2733
      %v4114 = vpack.c.b16 %v2740, %v2737
      %v4115 = vpack.c.b16 %v2741, %v2738
      %v4116 = vpack.c.b16 %v2742, %v2739
      %v4117 = vpack.c.b16 %v2746, %v2743
      %v4118 = vpack.c.b16 %v2747, %v2744
      %v4119 = vpack.c.b16 %v2748, %v2745
      %v4120 = vpack.c.b16 %v2752, %v2749
      %v4121 = vpack.c.b16 %v2753, %v2750
      %v4122 = vpack.c.b16 %v2754, %v2751
      %v4123 = vpack.c.b16 %v2758, %v2755
      %v4124 = vpack.c.b16 %v2759, %v2756
      %v4125 = vpack.c.b16 %v2760, %v2757
      %v4126 = vpack.c.b16 %v2764, %v2761
      %v4127 = vpack.c.b16 %v2765, %v2762
      %v4128 = vpack.c.b16 %v2766, %v2763
      %v4129 = vpack.c.b16 %v2770, %v2767
      %v4130 = vpack.c.b16 %v2771, %v2768
      %v4131 = vpack.c.b16 %v2772, %v2769
      %v4132 = vpack.c.b16 %v2776, %v2773
      %v4133 = vpack.c.b16 %v2777, %v2774
      %v4134 = vpack.c.b16 %v2778, %v2775
      %v4135 = vpack.c.b16 %v2782, %v2779
      %v4136 = vpack.c.b16 %v2783, %v2780
      %v4137 = vpack.c.b16 %v2784, %v2781
      %v4138 = vpack.c.b16 %v2788, %v2785
      %v4139 = vpack.c.b16 %v2789, %v2786
      %v4140 = vpack.c.b16 %v2790, %v2787
      %v4141 = vpack.c.b16 %v2794, %v2791
      %v4142 = vpack.c.b16 %v2795, %v2792
      %v4143 = vpack.c.b16 %v2796, %v2793
      %v4144 = vpack.c.b16 %v2800, %v2797
      %v4145 = vpack.c.b16 %v2801, %v2798
      %v4146 = vpack.c.b16 %v2802, %v2799
      %v4147 = vpack.c.b16 %v2806, %v2803
      %v4148 = vpack.c.b16 %v2807, %v2804
      %v4149 = vpack.c.b16 %v2808, %v2805
      %v4150 = vpack.c.b16 %v2812, %v2809
      %v4151 = vpack.c.b16 %v2813, %v2810
      %v4152 = vpack.c.b16 %v2814, %v2811
      %v4153 = vpack.c.b16 %v2818, %v2815
      %v4154 = vpack.c.b16 %v2819, %v2816
      %v4155 = vpack.c.b16 %v2820, %v2817
      %v4156 = vpack.c.b16 %v2824, %v2821
      %v4157 = vpack.c.b16 %v2825, %v2822
      %v4158 = vpack.c.b16 %v2826, %v2823
      %v4159 = vpack.c.b16 %v2830, %v2827
      %v4160 = vpack.c.b16 %v2831, %v2828
      %v4161 = vpack.c.b16 %v2832, %v2829
      %v4162 = vpack.c.b16 %v2836, %v2833
      %v4163 = vpack.c.b16 %v2837, %v2834
      %v4164 = vpack.c.b16 %v2838, %v2835
      %v4165 = vpack.c.b16 %v2842, %v2839
      %v4166 = vpack.c.b16 %v2843, %v2840
      %v4167 = vpack.c.b16 %v2844, %v2841
      %v4168 = vpack.c.b16 %v2848, %v2845
      %v4169 = vpack.c.b16 %v2849, %v2846
      %v4170 = vpack.c.b16 %v2850, %v2847
      %v4171 = vpack.c.b16 %v2854, %v2851
      %v4172 = vpack.c.b16 %v2855, %v2852
      %v4173 = vpack.c.b16 %v2856, %v2853
      %v4174 = vpack.c.b16 %v2860, %v2857
      %v4175 = vpack.c.b16 %v2861, %v2858
      %v4176 = vpack.c.b16 %v2862, %v2859
      %v4177 = vpack.c.b16 %v2866, %v2863
      %v4178 = vpack.c.b16 %v2867, %v2864
      %v4179 = vpack.c.b16 %v2868, %v2865
      %v4180 = vpack.c.b16 %v2872, %v2869
      %v4181 = vpack.c.b16 %v2873, %v2870
      %v4182 = vpack.c.b16 %v2874, %v2871
      %v4183 = vpack.c.b16 %v2878, %v2875
      %v4184 = vpack.c.b16 %v2879, %v2876
      %v4185 = vpack.c.b16 %v2880, %v2877
      %v4186 = vpack.c.b16 %v2884, %v2881
      %v4187 = vpack.c.b16 %v2885, %v2882
      %v4188 = vpack.c.b16 %v2886, %v2883
      %v4189 = vpack.c.b16 %v2890, %v2887
      %v4190 = vpack.c.b16 %v2891, %v2888
      %v4191 = vpack.c.b16 %v2892, %v2889
      %v4192 = vpack.c.b16 %v2896, %v2893
      %v4193 = vpack.c.b16 %v2897, %v2894
      %v4194 = vpack.c.b16 %v2898, %v2895
      %v4195 = vpack.c.b16 %v2902, %v2899
      %v4196 = vpack.c.b16 %v2903, %v2900
      %v4197 = vpack.c.b16 %v2904, %v2901
      %v4198 = vpack.c.b16 %v2908, %v2905
      %v4199 = vpack.c.b16 %v2909, %v2906
      %v4200 = vpack.c.b16 %v2910, %v2907
      %v4201 = vpack.c.b16 %v2914, %v2911
      %v4202 = vpack.c.b16 %v2915, %v2912
      %v4203 = vpack.c.b16 %v2916, %v2913
      %v4204 = vpack.c.b16 %v2920, %v2917
      %v4205 = vpack.c.b16 %v2921, %v2918
      %v4206 = vpack.c.b16 %v2922, %v2919
      %v4207 = vpack.c.b16 %v2926, %v2923
      %v4208 = vpack.c.b16 %v2927, %v2924
      %v4209 = vpack.c.b16 %v2928, %v2925
      %v4210 = vpack.c.b16 %v2932, %v2929
      %v4211 = vpack.c.b16 %v2933, %v2930
      %v4212 = vpack.c.b16 %v2934, %v2931
      %v4213 = vpack.c.b16 %v2938, %v2935
      %v4214 = vpack.c.b16 %v2939, %v2936
      %v4215 = vpack.c.b16 %v2940, %v2937
      %v4216 = vpack.c.b16 %v2944, %v2941
      %v4217 = vpack.c.b16 %v2945, %v2942
      %v4218 = vpack.c.b16 %v2946, %v2943
      %v4219 = vpack.c.b16 %v2950, %v2947
      %v4220 = vpack.c.b16 %v2951, %v2948
      %v4221 = vpack.c.b16 %v2952, %v2949
      %v4222 = vpack.c.b16 %v2956, %v2953
      %v4223 = vpack.c.b16 %v2957, %v2954
      %v4224 = vpack.c.b16 %v2958, %v2955
      %v4225 = vpack.c.b16 %v2962, %v2959
      %v4226 = vpack.c.b16 %v2963, %v2960
      %v4227 = vpack.c.b16 %v2964, %v2961
      %v4228 = vpack.c.b16 %v2968, %v2965
      %v4229 = vpack.c.b16 %v2969, %v2966
      %v4230 = vpack.c.b16 %v2970, %v2967
      %v4231 = vpack.c.b16 %v2974, %v2971
      %v4232 = vpack.c.b16 %v2975, %v2972
      %v4233 = vpack.c.b16 %v2976, %v2973
      %v4234 = vpack.c.b16 %v2980, %v2977
      %v4235 = vpack.c.b16 %v2981, %v2978
      %v4236 = vpack.c.b16 %v2982, %v2979
      %v4237 = vpack.c.b16 %v2986, %v2983
      %v4238 = vpack.c.b16 %v2987, %v2984
      %v4239 = vpack.c.b16 %v2988, %v2985
      %v4240 = vpack.c.b16 %v2992, %v2989
      %v4241 = vpack.c.b16 %v2993, %v2990
      %v4242 = vpack.c.b16 %v2994, %v2991
      %v4243 = vpack.c.b16 %v2998, %v2995
      %v4244 = vpack.c.b16 %v2999, %v2996
      %v4245 = vpack.c.b16 %v3000, %v2997
      %v4246 = vpack.c.b16 %v3004, %v3001
      %v4247 = vpack.c.b16 %v3005, %v3002
      %v4248 = vpack.c.b16 %v3006, %v3003
      %v4249 = vpack.c.b16 %v3010, %v3007
      %v4250 = vpack.c.b16 %v3011, %v3008
      %v4251 = vpack.c.b16 %v3012, %v3009
      %v4252 = vpack.c.b16 %v3016, %v3013
      %v4253 = vpack.c.b16 %v3017, %v3014
      %v4254 = vpack.c.b16 %v3018, %v3015
      %v4255 = vpack.c.b16 %v3022, %v3019
      %v4256 = vpack.c.b16 %v3023, %v3020
      %v4257 = vpack.c.b16 %v3024, %v3021
      %v4258 = vpack.c.b16 %v3028, %v3025
      %v4259 = vpack.c.b16 %v3029, %v3026
      %v4260 = vpack.c.b16 %v3030, %v3027
      %v4261 = vpack.c.b16 %v3034, %v3031
      %v4262 = vpack.c.b16 %v3035, %v3032
      %v4263 = vpack.c.b16 %v3036, %v3033
      %v4264 = vpack.c.b16 %v3040, %v3037
      %v4265 = vpack.c.b16 %v3041, %v3038
      %v4266 = vpack.c.b16 %v3042, %v3039
      %v4267 = vpack.c.b16 %v3046, %v3043
      %v4268 = vpack.c.b16 %v3047, %v3044
      %v4269 = vpack.c.b16 %v3048, %v3045
      %v4270 = vpack.c.b16 %v3052, %v3049
      %v4271 = vpack.c.b16 %v3053, %v3050
      %v4272 = vpack.c.b16 %v3054, %v3051
      %v4273 = vpack.c.b16 %v3058, %v3055
      %v4274 = vpack.c.b16 %v3059, %v3056
      %v4275 = vpack.c.b16 %v3060, %v3057
      %v4276 = vpack.c.b16 %v3064, %v3061
      %v4277 = vpack.c.b16 %v3065, %v3062
      %v4278 = vpack.c.b16 %v3066, %v3063
      %v4279 = vpack.c.b16 %v3070, %v3067
      %v4280 = vpack.c.b16 %v3071, %v3068
      %v4281 = vpack.c.b16 %v3072, %v3069
      %v4282 = vpack.c.b16 %v3076, %v3073
      %v4283 = vpack.c.b16 %v3077, %v3074
      %v4284 = vpack.c.b16 %v3078, %v3075
      %v4285 = vpack.c.b16 %v3082, %v3079
      %v4286 = vpack.c.b16 %v3083, %v3080
      %v4287 = vpack.c.b16 %v3084, %v3081
      %v4288 = vpack.c.b16 %v3088, %v3085
      %v4289 = vpack.c.b16 %v3089, %v3086
      %v4290 = vpack.c.b16 %v3090, %v3087
      %v4291 = vpack.c.b16 %v3094, %v3091
      %v4292 = vpack.c.b16 %v3095, %v3092
      %v4293 = vpack.c.b16 %v3096, %v3093
      %v4294 = vpack.c.b16 %v3100, %v3097
      %v4295 = vpack.c.b16 %v3101, %v3098
      %v4296 = vpack.c.b16 %v3102, %v3099
      %v4297 = vpack.c.b16 %v3106, %v3103
      %v4298 = vpack.c.b16 %v3107, %v3104
      %v4299 = vpack.c.b16 %v3108, %v3105
      %v4300 = vpack.c.b16 %v3112, %v3109
      %v4301 = vpack.c.b16 %v3113, %v3110
      %v4302 = vpack.c.b16 %v3114, %v3111
      %v4303 = vpack.c.b16 %v3118, %v3115
      %v4304 = vpack.c.b16 %v3119, %v3116
      %v4305 = vpack.c.b16 %v3120, %v3117
      %v4306 = vpack.c.b16 %v3124, %v3121
      %v4307 = vpack.c.b16 %v3125, %v3122
      %v4308 = vpack.c.b16 %v3126, %v3123
      %v4309 = vpack.c.b16 %v3130, %v3127
      %v4310 = vpack.c.b16 %v3131, %v3128
      %v4311 = vpack.c.b16 %v3132, %v3129
      %v4312 = vpack.c.b16 %v3136, %v3133
      %v4313 = vpack.c.b16 %v3137, %v3134
      %v4314 = vpack.c.b16 %v3138, %v3135
      %v4315 = vpack.c.b16 %v3142, %v3139
      %v4316 = vpack.c.b16 %v3143, %v3140
      %v4317 = vpack.c.b16 %v3144, %v3141
      %v4318 = vpack.c.b16 %v3148, %v3145
      %v4319 = vpack.c.b16 %v3149, %v3146
      %v4320 = vpack.c.b16 %v3150, %v3147
      %v4321 = vpack.c.b16 %v3154, %v3151
      %v4322 = vpack.c.b16 %v3155, %v3152
      %v4323 = vpack.c.b16 %v3156, %v3153
      %v4324 = vpack.c.b16 %v3160, %v3157
      %v4325 = vpack.c.b16 %v3161, %v3158
      %v4326 = vpack.c.b16 %v3162, %v3159
      %v4327 = vpack.c.b16 %v3166, %v3163
      %v4328 = vpack.c.b16 %v3167, %v3164
      %v4329 = vpack.c.b16 %v3168, %v3165
      %v4330 = vpack.c.b16 %v3172, %v3169
      %v4331 = vpack.c.b16 %v3173, %v3170
      %v4332 = vpack.c.b16 %v3174, %v3171
      %v4333 = vpack.c.b16 %v3178, %v3175
      %v4334 = vpack.c.b16 %v3179, %v3176
      %v4335 = vpack.c.b16 %v3180, %v3177
      %v4336 = vpack.c.b16 %v3184, %v3181
      %v4337 = vpack.c.b16 %v3185, %v3182
      %v4338 = vpack.c.b16 %v3186, %v3183
      %v4339 = vpack.c.b16 %v3190, %v3187
      %v4340 = vpack.c.b16 %v3191, %v3188
      %v4341 = vpack.c.b16 %v3192, %v3189
      %v4342 = vpack.c.b16 %v3196, %v3193
      %v4343 = vpack.c.b16 %v3197, %v3194
      %v4344 = vpack.c.b16 %v3198, %v3195
      %v4345 = vpack.c.b16 %v3202, %v3199
      %v4346 = vpack.c.b16 %v3203, %v3200
      %v4347 = vpack.c.b16 %v3204, %v3201
      %v4348 = vpack.c.b16 %v3208, %v3205
      %v4349 = vpack.c.b16 %v3209, %v3206
      %v4350 = vpack.c.b16 %v3210, %v3207
      %v4351 = vpack.c.b16 %v3214, %v3211
      %v4352 = vpack.c.b16 %v3215, %v3212
      %v4353 = vpack.c.b16 %v3216, %v3213
      %v4354 = vpack.c.b16 %v3220, %v3217
      %v4355 = vpack.c.b16 %v3221, %v3218
      %v4356 = vpack.c.b16 %v3222, %v3219
      %v4357 = vpack.c.b16 %v3226, %v3223
      %v4358 = vpack.c.b16 %v3227, %v3224
      %v4359 = vpack.c.b16 %v3228, %v3225
      %v4360 = vpack.c.b16 %v3232, %v3229
      %v4361 = vpack.c.b16 %v3233, %v3230
      %v4362 = vpack.c.b16 %v3234, %v3231
      %v4363 = vpack.c.b16 %v3238, %v3235
      %v4364 = vpack.c.b16 %v3239, %v3236
      %v4365 = vpack.c.b16 %v3240, %v3237
      %v4366 = vpack.c.b16 %v3244, %v3241
      %v4367 = vpack.c.b16 %v3245, %v3242
      %v4368 = vpack.c.b16 %v3246, %v3243
      %v4369 = vpack.c.b16 %v3250, %v3247
      %v4370 = vpack.c.b16 %v3251, %v3248
      %v4371 = vpack.c.b16 %v3252, %v3249
      %v4372 = vpack.c.b16 %v3256, %v3253
      %v4373 = vpack.c.b16 %v3257, %v3254
      %v4374 = vpack.c.b16 %v3258, %v3255
      %v4375 = vpack.c.b16 %v3262, %v3259
      %v4376 = vpack.c.b16 %v3263, %v3260
      %v4377 = vpack.c.b16 %v3264, %v3261
      %v4378 = vpack.c.b16 %v3268, %v3265
      %v4379 = vpack.c.b16 %v3269, %v3266
      %v4380 = vpack.c.b16 %v3270, %v3267
      %v4381 = vpack.c.b16 %v3274, %v3271
      %v4382 = vpack.c.b16 %v3275, %v3272
      %v4383 = vpack.c.b16 %v3276, %v3273
      %v4384 = vpack.c.b16 %v3280, %v3277
      %v4385 = vpack.c.b16 %v3281, %v3278
      %v4386 = vpack.c.b16 %v3282, %v3279
      %v4387 = vpack.c.b16 %v3286, %v3283
      %v4388 = vpack.c.b16 %v3287, %v3284
      %v4389 = vpack.c.b16 %v3288, %v3285
      %v4390 = vpack.c.b16 %v3292, %v3289
      %v4391 = vpack.c.b16 %v3293, %v3290
      %v4392 = vpack.c.b16 %v3294, %v3291
      %v4393 = vpack.c.b16 %v3298, %v3295
      %v4394 = vpack.c.b16 %v3299, %v3296
      %v4395 = vpack.c.b16 %v3300, %v3297
      %v4396 = vpack.c.b16 %v3304, %v3301
      %v4397 = vpack.c.b16 %v3305, %v3302
      %v4398 = vpack.c.b16 %v3306, %v3303
      %v4399 = vpack.c.b16 %v3310, %v3307
      %v4400 = vpack.c.b16 %v3311, %v3308
      %v4401 = vpack.c.b16 %v3312, %v3309
      %v4402 = vpack.c.b16 %v3316, %v3313
      %v4403 = vpack.c.b16 %v3317, %v3314
      %v4404 = vpack.c.b16 %v3318, %v3315
      %v4405 = vpack.c.b16 %v3322, %v3319
      %v4406 = vpack.c.b16 %v3323, %v3320
      %v4407 = vpack.c.b16 %v3324, %v3321
      %v4408 = vpack.c.b16 %v3328, %v3325
      %v4409 = vpack.c.b16 %v3329, %v3326
      %v4410 = vpack.c.b16 %v3330, %v3327
      %v4411 = vpack.c.b16 %v3334, %v3331
      %v4412 = vpack.c.b16 %v3335, %v3332
      %v4413 = vpack.c.b16 %v3336, %v3333
      %v4414 = vpack.c.b16 %v3340, %v3337
      %v4415 = vpack.c.b16 %v3341, %v3338
      %v4416 = vpack.c.b16 %v3342, %v3339
      %v4417 = vpack.c.b16 %v3346, %v3343
      %v4418 = vpack.c.b16 %v3347, %v3344
      %v4419 = vpack.c.b16 %v3348, %v3345
      %v4420 = vpack.c.b16 %v3352, %v3349
      %v4421 = vpack.c.b16 %v3353, %v3350
      %v4422 = vpack.c.b16 %v3354, %v3351
      %v4423 = vpack.c.b16 %v3358, %v3355
      %v4424 = vpack.c.b16 %v3359, %v3356
      %v4425 = vpack.c.b16 %v3360, %v3357
      %v4426 = vpack.c.b16 %v3364, %v3361
      %v4427 = vpack.c.b16 %v3365, %v3362
      %v4428 = vpack.c.b16 %v3366, %v3363
      %v4429 = vpack.c.b16 %v3370, %v3367
      %v4430 = vpack.c.b16 %v3371, %v3368
      %v4431 = vpack.c.b16 %v3372, %v3369
      %v4432 = vpack.c.b16 %v3376, %v3373
      %v4433 = vpack.c.b16 %v3377, %v3374
      %v4434 = vpack.c.b16 %v3378, %v3375
      %v4435 = vpack.c.b16 %v3382, %v3379
      %v4436 = vpack.c.b16 %v3383, %v3380
      %v4437 = vpack.c.b16 %v3384, %v3381
      %v4438 = vpack.c.b16 %v3388, %v3385
      %v4439 = vpack.c.b16 %v3389, %v3386
      %v4440 = vpack.c.b16 %v3390, %v3387
      %v4441 = vpack.c.b16 %v3394, %v3391
      %v4442 = vpack.c.b16 %v3395, %v3392
      %v4443 = vpack.c.b16 %v3396, %v3393
      %v4444 = vpack.c.b16 %v3400, %v3397
      %v4445 = vpack.c.b16 %v3401, %v3398
      %v4446 = vpack.c.b16 %v3402, %v3399
      %v4447 = vpack.c.b16 %v3406, %v3403
      %v4448 = vpack.c.b16 %v3407, %v3404
      %v4449 = vpack.c.b16 %v3408, %v3405
      %v4450 = vpack.c.b16 %v3412, %v3409
      %v4451 = vpack.c.b16 %v3413, %v3410
      %v4452 = vpack.c.b16 %v3414, %v3411
      %v4453 = vpack.c.b16 %v3418, %v3415
      %v4454 = vpack.c.b16 %v3419, %v3416
      %v4455 = vpack.c.b16 %v3420, %v3417
      %v4456 = vpack.c.b16 %v3424, %v3421
      %v4457 = vpack.c.b16 %v3425, %v3422
      %v4458 = vpack.c.b16 %v3426, %v3423
      %v4459 = vpack.c.b16 %v3430, %v3427
      %v4460 = vpack.c.b16 %v3431, %v3428
      %v4461 = vpack.c.b16 %v3432, %v3429
      %v4462 = vpack.c.b16 %v3436, %v3433
      %v4463 = vpack.c.b16 %v3437, %v3434
      %v4464 = vpack.c.b16 %v3438, %v3435
      %v4465 = vpack.c.b16 %v3442, %v3439
      %v4466 = vpack.c.b16 %v3443, %v3440
      %v4467 = vpack.c.b16 %v3444, %v3441
      %v4468 = vpack.c.b16 %v3448, %v3445
      %v4469 = vpack.c.b16 %v3449, %v3446
      %v4470 = vpack.c.b16 %v3450, %v3447
      %v4471 = vpack.c.b16 %v3454, %v3451
      %v4472 = vpack.c.b16 %v3455, %v3452
      %v4473 = vpack.c.b16 %v3456, %v3453
      %v4474 = vpack.c.b16 %v3460, %v3457
      %v4475 = vpack.c.b16 %v3461, %v3458
      %v4476 = vpack.c.b16 %v3462, %v3459
      %v4477 = vpack.c.b16 %v3466, %v3463
      %v4478 = vpack.c.b16 %v3467, %v3464
      %v4479 = vpack.c.b16 %v3468, %v3465
      %v4480 = vpack.c.b16 %v3472, %v3469
      %v4481 = vpack.c.b16 %v3473, %v3470
      %v4482 = vpack.c.b16 %v3474, %v3471
      %v4483 = vpack.c.b16 %v3478, %v3475
      %v4484 = vpack.c.b16 %v3479, %v3476
      %v4485 = vpack.c.b16 %v3480, %v3477
      %v4486 = vpack.c.b16 %v3484, %v3481
      %v4487 = vpack.c.b16 %v3485, %v3482
      %v4488 = vpack.c.b16 %v3486, %v3483
      %v4489 = vpack.c.b16 %v3490, %v3487
      %v4490 = vpack.c.b16 %v3491, %v3488
      %v4491 = vpack.c.b16 %v3492, %v3489
      %v4492 = vpack.c.b16 %v3496, %v3493
      %v4493 = vpack.c.b16 %v3497, %v3494
      %v4494 = vpack.c.b16 %v3498, %v3495
      %v4495 = vpack.c.b16 %v3502, %v3499
      %v4496 = vpack.c.b16 %v3503, %v3500
      %v4497 = vpack.c.b16 %v3504, %v3501
      %v4498 = vpack.c.b16 %v3508, %v3505
      %v4499 = vpack.c.b16 %v3509, %v3506
      %v4500 = vpack.c.b16 %v3510, %v3507
      %v4501 = vpack.c.b16 %v3514, %v3511
      %v4502 = vpack.c.b16 %v3515, %v3512
      %v4503 = vpack.c.b16 %v3516, %v3513
      %v4504 = vpack.c.b16 %v3520, %v3517
      %v4505 = vpack.c.b16 %v3521, %v3518
      %v4506 = vpack.c.b16 %v3522, %v3519
      %v4507 = vpack.c.b16 %v3526, %v3523
      %v4508 = vpack.c.b16 %v3527, %v3524
      %v4509 = vpack.c.b16 %v3528, %v3525
      %v4510 = vpack.c.b16 %v3532, %v3529
      %v4511 = vpack.c.b16 %v3533, %v3530
      %v4512 = vpack.c.b16 %v3534, %v3531
      %v4513 = vpack.c.b16 %v3538, %v3535
      %v4514 = vpack.c.b16 %v3539, %v3536
      %v4515 = vpack.c.b16 %v3540, %v3537
      %v4516 = vpack.c.b16 %v3544, %v3541
      %v4517 = vpack.c.b16 %v3545, %v3542
      %v4518 = vpack.c.b16 %v3546, %v3543
      %v4519 = vpack.c.b16 %v3550, %v3547
      %v4520 = vpack.c.b16 %v3551, %v3548
      %v4521 = vpack.c.b16 %v3552, %v3549
      %v4522 = vpack.c.b16 %v3556, %v3553
      %v4523 = vpack.c.b16 %v3557, %v3554
      %v4524 = vpack.c.b16 %v3558, %v3555
      %v4525 = vpack.c.b16 %v3562, %v3559
      %v4526 = vpack.c.b16 %v3563, %v3560
      %v4527 = vpack.c.b16 %v3564, %v3561
      %v4528 = vpack.c.b16 %v3568, %v3565
      %v4529 = vpack.c.b16 %v3569, %v3566
      %v4530 = vpack.c.b16 %v3570, %v3567
      %v4531 = vpack.c.b16 %v3574, %v3571
      %v4532 = vpack.c.b16 %v3575, %v3572
      %v4533 = vpack.c.b16 %v3576, %v3573
      %v4534 = vpack.c.b16 %v3580, %v3577
      %v4535 = vpack.c.b16 %v3581, %v3578
      %v4536 = vpack.c.b16 %v3582, %v3579
      %v4537 = vpack.c.b16 %v3586, %v3583
      %v4538 = vpack.c.b16 %v3587, %v3584
      %v4539 = vpack.c.b16 %v3588, %v3585
      %v4540 = vpack.c.b16 %v3592, %v3589
      %v4541 = vpack.c.b16 %v3593, %v3590
      %v4542 = vpack.c.b16 %v3594, %v3591
      %v4543 = vpack.c.b16 %v3598, %v3595
      %v4544 = vpack.c.b16 %v3599, %v3596
      %v4545 = vpack.c.b16 %v3600, %v3597
      %v4546 = vpack.c.b16 %v3604, %v3601
      %v4547 = vpack.c.b16 %v3605, %v3602
      %v4548 = vpack.c.b16 %v3606, %v3603
      %v4549 = vpack.c.b16 %v3610, %v3607
      %v4550 = vpack.c.b16 %v3611, %v3608
      %v4551 = vpack.c.b16 %v3612, %v3609
      %v4552 = vpack.c.b16 %v3616, %v3613
      %v4553 = vpack.c.b16 %v3617, %v3614
      %v4554 = vpack.c.b16 %v3618, %v3615
      %v4555 = vpack.c.b16 %v3622, %v3619
      %v4556 = vpack.c.b16 %v3623, %v3620
      %v4557 = vpack.c.b16 %v3624, %v3621
      %v4558 = vpack.c.b16 %v3628, %v3625
      %v4559 = vpack.c.b16 %v3629, %v3626
      %v4560 = vpack.c.b16 %v3630, %v3627
      %v4561 = vpack.c.b16 %v3634, %v3631
      %v4562 = vpack.c.b16 %v3635, %v3632
      %v4563 = vpack.c.b16 %v3636, %v3633
      %v4564 = vpack.c.b16 %v3640, %v3637
      %v4565 = vpack.c.b16 %v3641, %v3638
      %v4566 = vpack.c.b16 %v3642, %v3639
      %v4567 = vpack.c.b16 %v3646, %v3643
      %v4568 = vpack.c.b16 %v3647, %v3644
      %v4569 = vpack.c.b16 %v3648, %v3645
      %v4570 = vpack.c.b16 %v3652, %v3649
      %v4571 = vpack.c.b16 %v3653, %v3650
      %v4572 = vpack.c.b16 %v3654, %v3651
      %v4573 = vpack.c.b16 %v3658, %v3655
      %v4574 = vpack.c.b16 %v3659, %v3656
      %v4575 = vpack.c.b16 %v3660, %v3657
      %v4576 = vpack.c.b16 %v3664, %v3661
      %v4577 = vpack.c.b16 %v3665, %v3662
      %v4578 = vpack.c.b16 %v3666, %v3663
      %v4579 = vpack.c.b16 %v3670, %v3667
      %v4580 = vpack.c.b16 %v3671, %v3668
      %v4581 = vpack.c.b16 %v3672, %v3669
      %v4582 = vpack.c.b16 %v3676, %v3673
      %v4583 = vpack.c.b16 %v3677, %v3674
      %v4584 = vpack.c.b16 %v3678, %v3675
      %v4585 = vpack.c.b16 %v3682, %v3679
      %v4586 = vpack.c.b16 %v3683, %v3680
      %v4587 = vpack.c.b16 %v3684, %v3681
      %v4588 = vpack.c.b16 %v3688, %v3685
      %v4589 = vpack.c.b16 %v3689, %v3686
      %v4590 = vpack.c.b16 %v3690, %v3687
      %v4591 = vpack.c.b16 %v3694, %v3691
      %v4592 = vpack.c.b16 %v3695, %v3692
      %v4593 = vpack.c.b16 %v3696, %v3693
      %v4594 = vpack.c.b16 %v3700, %v3697
      %v4595 = vpack.c.b16 %v3701, %v3698
      %v4596 = vpack.c.b16 %v3702, %v3699
      %v4597 = vpack.c.b16 %v3706, %v3703
      %v4598 = vpack.c.b16 %v3707, %v3704
      %v4599 = vpack.c.b16 %v3708, %v3705
      %v4600 = vpack.c.b16 %v3712, %v3709
      %v4601 = vpack.c.b16 %v3713, %v3710
      %v4602 = vpack.c.b16 %v3714, %v3711
      %v4603 = vpack.c.b16 %v3718, %v3715
      %v4604 = vpack.c.b16 %v3719, %v3716
      %v4605 = vpack.c.b16 %v3720, %v3717
      %v4606 = vpack.c.b16 %v3724, %v3721
      %v4607 = vpack.c.b16 %v3725, %v3722
      %v4608 = vpack.c.b16 %v3726, %v3723
      %v4609 = vpack.c.b16 %v3730, %v3727
      %v4610 = vpack.c.b16 %v3731, %v3728
      %v4611 = vpack.c.b16 %v3732, %v3729
      %v4612 = vpack.c.b16 %v3736, %v3733
      %v4613 = vpack.c.b16 %v3737, %v3734
      %v4614 = vpack.c.b16 %v3738, %v3735
      %v4615 = vpack.c.b16 %v3742, %v3739
      %v4616 = vpack.c.b16 %v3743, %v3740
      %v4617 = vpack.c.b16 %v3744, %v3741
      %v4618 = vpack.c.b16 %v3748, %v3745
      %v4619 = vpack.c.b16 %v3749, %v3746
      %v4620 = vpack.c.b16 %v3750, %v3747
      %v4621 = vpack.c.b16 %v3754, %v3751
      %v4622 = vpack.c.b16 %v3755, %v3752
      %v4623 = vpack.c.b16 %v3756, %v3753
      %v4624 = vpack.c.b16 %v3760, %v3757
      %v4625 = vpack.c.b16 %v3761, %v3758
      %v4626 = vpack.c.b16 %v3762, %v3759
      %v4627 = vpack.c.b16 %v3766, %v3763
      %v4628 = vpack.c.b16 %v3767, %v3764
      %v4629 = vpack.c.b16 %v3768, %v3765
      %v4630 = vpack.c.b16 %v3772, %v3769
      %v4631 = vpack.c.b16 %v3773, %v3770
      %v4632 = vpack.c.b16 %v3774, %v3771
      %v4633 = vpack.c.b16 %v3778, %v3775
      %v4634 = vpack.c.b16 %v3779, %v3776
      %v4635 = vpack.c.b16 %v3780, %v3777
      %v4636 = vpack.c.b16 %v3784, %v3781
      %v4637 = vpack.c.b16 %v3785, %v3782
      %v4638 = vpack.c.b16 %v3786, %v3783
      %v4639 = vpack.c.b16 %v3790, %v3787
      %v4640 = vpack.c.b16 %v3791, %v3788
      %v4641 = vpack.c.b16 %v3792, %v3789
      %v4642 = vpack.c.b16 %v3796, %v3793
      %v4643 = vpack.c.b16 %v3797, %v3794
      %v4644 = vpack.c.b16 %v3798, %v3795
      %v4645 = vpack.c.b16 %v3802, %v3799
      %v4646 = vpack.c.b16 %v3803, %v3800
      %v4647 = vpack.c.b16 %v3804, %v3801
      %v4648 = vpack.c.b16 %v3808, %v3805
      %v4649 = vpack.c.b16 %v3809, %v3806
      %v4650 = vpack.c.b16 %v3810, %v3807
      %v4651 = vpack.c.b16 %v3814, %v3811
      %v4652 = vpack.c.b16 %v3815, %v3812
      %v4653 = vpack.c.b16 %v3816, %v3813
      %v4654 = vpack.c.b16 %v3820, %v3817
      %v4655 = vpack.c.b16 %v3821, %v3818
      %v4656 = vpack.c.b16 %v3822, %v3819
      %v4657 = vpack.c.b16 %v3826, %v3823
      %v4658 = vpack.c.b16 %v3827, %v3824
      %v4659 = vpack.c.b16 %v3828, %v3825
      %v4660 = vpack.c.b16 %v3832, %v3829
      %v4661 = vpack.c.b16 %v3833, %v3830
      %v4662 = vpack.c.b16 %v3834, %v3831
      %v4663 = vpack.c.b16 %v3838, %v3835
      %v4664 = vpack.c.b16 %v3839, %v3836
      %v4665 = vpack.c.b16 %v3840, %v3837
      %v4666 = vpack.c.b16 %v3844, %v3841
      %v4667 = vpack.c.b16 %v3845, %v3842
      %v4668 = vpack.c.b16 %v3846, %v3843
      %v4669 = vpack.c.b16 %v3850, %v3847
      %v4670 = vpack.c.b16 %v3851, %v3848
      %v4671 = vpack.c.b16 %v3852, %v3849
      %v4672 = vpack.c.b16 %v3856, %v3853
      %v4673 = vpack.c.b16 %v3857, %v3854
      %v4674 = vpack.c.b16 %v3858, %v3855
      %v4675 = vpack.c.b16 %v3862, %v3859
      %v4676 = vpack.c.b16 %v3863, %v3860
      %v4677 = vpack.c.b16 %v3864, %v3861
      %v4678 = vpack.c.b16 %v3868, %v3865
      %v4679 = vpack.c.b16 %v3869, %v3866
      %v4680 = vpack.c.b16 %v3870, %v3867
      %v4681 = vpack.c.b16 %v3874, %v3871
      %v4682 = vpack.c.b16 %v3875, %v3872
      %v4683 = vpack.c.b16 %v3876, %v3873
      %v4684 = vpack.c.b16 %v3880, %v3877
      %v4685 = vpack.c.b16 %v3881, %v3878
      %v4686 = vpack.c.b16 %v3882, %v3879
      %v4687 = vpack.c.b16 %v3886, %v3883
      %v4688 = vpack.c.b16 %v3887, %v3884
      %v4689 = vpack.c.b16 %v3888, %v3885
      %v4690 = vpack.c.b16 %v3892, %v3889
      %v4691 = vpack.c.b16 %v3893, %v3890
      %v4692 = vpack.c.b16 %v3894, %v3891
      %v4693 = vpack.c.b16 %v3898, %v3895
      %v4694 = vpack.c.b16 %v3899, %v3896
      %v4695 = vpack.c.b16 %v3900, %v3897
      %v4696 = vpack.c.b16 %v3904, %v3901
      %v4697 = vpack.c.b16 %v3905, %v3902
      %v4698 = vpack.c.b16 %v3906, %v3903
      %v4699 = vpack.c.b16 %v3910, %v3907
      %v4700 = vpack.c.b16 %v3911, %v3908
      %v4701 = vpack.c.b16 %v3912, %v3909
      %v4702 = vpack.c.b16 %v3913, %v3913
      %v4703 = vpack.c.b16 %v3914, %v3914
      %v4704 = vpack.c.b16 %v3915, %v3915
      %v5267 = vunpack.c.l.b16 %v1255
      %v5268 = vunpack.c.l.b16 %v1256
      %v5269 = vunpack.c.l.b16 %v1257
      %v5270 = vunpack.c.l.b16 %v1258
      %v5271 = vunpack.c.l.b16 %v1259
      %v5272 = vunpack.c.l.b16 %v1260
      %v5273 = vunpack.c.l.b16 %v1261
      %v5274 = vunpack.c.l.b16 %v1262
      %v5275 = vunpack.c.l.b16 %v1263
      %v5276 = vunpack.c.l.b16 %v1264
      %v5277 = vunpack.c.l.b16 %v1265
      %v5278 = vunpack.c.l.b16 %v1266
      %v5279 = vunpack.c.l.b16 %v1267
      %v5280 = vunpack.c.l.b16 %v1268
      %v5281 = vunpack.c.l.b16 %v1269
      %v5282 = vunpack.c.l.b16 %v1270
      %v5283 = vunpack.c.l.b16 %v1271
      %v5284 = vunpack.c.l.b16 %v1272
      %v5285 = vunpack.c.l.b16 %v1273
      %v5286 = vunpack.c.l.b16 %v1274
      %v5287 = vunpack.c.l.b16 %v1275
      %v5288 = vunpack.c.l.b16 %v1276
      %v5289 = vunpack.c.l.b16 %v1277
      %v5290 = vunpack.c.l.b16 %v1278
      %v5291 = vunpack.c.l.b16 %v1279
      %v5292 = vunpack.c.l.b16 %v1280
      %v5293 = vunpack.c.l.b16 %v1281
      %v5294 = vunpack.c.l.b16 %v1282
      %v5295 = vunpack.c.l.b16 %v1283
      %v5296 = vunpack.c.l.b16 %v1284
      %v5297 = vunpack.c.l.b16 %v1285
      %v5298 = vunpack.c.l.b16 %v1286
      %v5299 = vunpack.c.l.b16 %v1287
      %v5300 = vunpack.c.l.b16 %v1288
      %v5301 = vunpack.c.l.b16 %v1289
      %v5302 = vunpack.c.l.b16 %v1290
      %v5303 = vpack.c.b16 %v5268, %v5267
      %v5304 = vpack.c.b16 %v5270, %v5269
      %v5305 = vpack.c.b16 %v5272, %v5271
      %v5306 = vpack.c.b16 %v5274, %v5273
      %v5307 = vpack.c.b16 %v5276, %v5275
      %v5308 = vpack.c.b16 %v5278, %v5277
      %v5309 = vpack.c.b16 %v5280, %v5279
      %v5310 = vpack.c.b16 %v5282, %v5281
      %v5311 = vpack.c.b16 %v5284, %v5283
      %v5312 = vpack.c.b16 %v5286, %v5285
      %v5313 = vpack.c.b16 %v5288, %v5287
      %v5314 = vpack.c.b16 %v5290, %v5289
      %v5315 = vpack.c.b16 %v5292, %v5291
      %v5316 = vpack.c.b16 %v5294, %v5293
      %v5317 = vpack.c.b16 %v5296, %v5295
      %v5318 = vpack.c.b16 %v5298, %v5297
      %v5319 = vpack.c.b16 %v5300, %v5299
      %v5320 = vpack.c.b16 %v5302, %v5301
      %vm5339 = vcmask 261120
      %v5341 = vsel %vm5339, %v3918, 0
      %v5344 = vsel %vm5339, %v3921, 0
      %v5347 = vsel %vm5339, %v3924, 0
      %v5350 = vsel %vm5339, %v3927, 0
      %v5353 = vsel %vm5339, %v3930, 0
      %v5356 = vsel %vm5339, %v3933, 0
      %v5359 = vsel %vm5339, %v3936, 0
      %v5362 = vsel %vm5339, %v3939, 0
      %v5365 = vsel %vm5339, %v3942, 0
      %v5368 = vsel %vm5339, %v3945, 0
      %v5371 = vsel %vm5339, %v3948, 0
      %v5374 = vsel %vm5339, %v3951, 0
      %v5377 = vsel %vm5339, %v3954, 0
      %v5380 = vsel %vm5339, %v3957, 0
      %v5383 = vsel %vm5339, %v3960, 0
      %v5386 = vsel %vm5339, %v3963, 0
      %v5389 = vsel %vm5339, %v3966, 0
      %v5392 = vsel %vm5339, %v3969, 0
      %v5395 = vsel %vm5339, %v3972, 0
      %v5398 = vsel %vm5339, %v3975, 0
      %v5401 = vsel %vm5339, %v3978, 0
      %v5404 = vsel %vm5339, %v3981, 0
      %v5407 = vsel %vm5339, %v3984, 0
      %v5410 = vsel %vm5339, %v3987, 0
      %v5413 = vsel %vm5339, %v3990, 0
      %v5416 = vsel %vm5339, %v3993, 0
      %v5419 = vsel %vm5339, %v3996, 0
      %v5422 = vsel %vm5339, %v3999, 0
      %v5425 = vsel %vm5339, %v4002, 0
      %v5428 = vsel %vm5339, %v4005, 0
      %v5431 = vsel %vm5339, %v4008, 0
      %v5434 = vsel %vm5339, %v4011, 0
      %v5437 = vsel %vm5339, %v4014, 0
      %v5440 = vsel %vm5339, %v4017, 0
      %v5443 = vsel %vm5339, %v4020, 0
      %v5446 = vsel %vm5339, %v4023, 0
      %v5449 = vsel %vm5339, %v4026, 0
      %v5452 = vsel %vm5339, %v4029, 0
      %v5455 = vsel %vm5339, %v4032, 0
      %v5458 = vsel %vm5339, %v4035, 0
      %v5461 = vsel %vm5339, %v4038, 0
      %v5464 = vsel %vm5339, %v4041, 0
      %v5467 = vsel %vm5339, %v4044, 0
      %v5470 = vsel %vm5339, %v4047, 0
      %v5473 = vsel %vm5339, %v4050, 0
      %v5476 = vsel %vm5339, %v4053, 0
      %v5479 = vsel %vm5339, %v4056, 0
      %v5482 = vsel %vm5339, %v4059, 0
      %v5485 = vsel %vm5339, %v4062, 0
      %v5488 = vsel %vm5339, %v4065, 0
      %v5491 = vsel %vm5339, %v4068, 0
      %v5494 = vsel %vm5339, %v4071, 0
      %v5497 = vsel %vm5339, %v4074, 0
      %v5500 = vsel %vm5339, %v4077, 0
      %v5503 = vsel %vm5339, %v4080, 0
      %v5506 = vsel %vm5339, %v4083, 0
      %v5509 = vsel %vm5339, %v4086, 0
      %v5512 = vsel %vm5339, %v4089, 0
      %v5515 = vsel %vm5339, %v4092, 0
      %v5518 = vsel %vm5339, %v4095, 0
      %v5521 = vsel %vm5339, %v4098, 0
      %v5524 = vsel %vm5339, %v4101, 0
      %v5527 = vsel %vm5339, %v4104, 0
      %v5530 = vsel %vm5339, %v4107, 0
      %v5533 = vsel %vm5339, %v4110, 0
      %v5536 = vsel %vm5339, %v4113, 0
      %v5539 = vsel %vm5339, %v4116, 0
      %v5542 = vsel %vm5339, %v4119, 0
      %v5545 = vsel %vm5339, %v4122, 0
      %v5548 = vsel %vm5339, %v4125, 0
      %v5551 = vsel %vm5339, %v4128, 0
      %v5554 = vsel %vm5339, %v4131, 0
      %v5557 = vsel %vm5339, %v4134, 0
      %v5560 = vsel %vm5339, %v4137, 0
      %v5563 = vsel %vm5339, %v4140, 0
      %v5566 = vsel %vm5339, %v4143, 0
      %v5569 = vsel %vm5339, %v4146, 0
      %v5572 = vsel %vm5339, %v4149, 0
      %v5575 = vsel %vm5339, %v4152, 0
      %v5578 = vsel %vm5339, %v4155, 0
      %v5581 = vsel %vm5339, %v4158, 0
      %v5584 = vsel %vm5339, %v4161, 0
      %v5587 = vsel %vm5339, %v4164, 0
      %v5590 = vsel %vm5339, %v4167, 0
      %v5593 = vsel %vm5339, %v4170, 0
      %v5596 = vsel %vm5339, %v4173, 0
      %v5599 = vsel %vm5339, %v4176, 0
      %v5602 = vsel %vm5339, %v4179, 0
      %v5605 = vsel %vm5339, %v4182, 0
      %v5608 = vsel %vm5339, %v4185, 0
      %v5611 = vsel %vm5339, %v4188, 0
      %v5614 = vsel %vm5339, %v4191, 0
      %v5617 = vsel %vm5339, %v4194, 0
      %v5620 = vsel %vm5339, %v4197, 0
      %v5623 = vsel %vm5339, %v4200, 0
      %v5626 = vsel %vm5339, %v4203, 0
      %v5629 = vsel %vm5339, %v4206, 0
      %v5632 = vsel %vm5339, %v4209, 0
      %v5635 = vsel %vm5339, %v4212, 0
      %v5638 = vsel %vm5339, %v4215, 0
      %v5641 = vsel %vm5339, %v4218, 0
      %v5644 = vsel %vm5339, %v4221, 0
      %v5647 = vsel %vm5339, %v4224, 0
      %v5650 = vsel %vm5339, %v4227, 0
      %v5653 = vsel %vm5339, %v4230, 0
      %v5656 = vsel %vm5339, %v4233, 0
      %v5659 = vsel %vm5339, %v4236, 0
      %v5662 = vsel %vm5339, %v4239, 0
      %v5665 = vsel %vm5339, %v4242, 0
      %v5668 = vsel %vm5339, %v4245, 0
      %v5671 = vsel %vm5339, %v4248, 0
      %v5674 = vsel %vm5339, %v4251, 0
      %v5677 = vsel %vm5339, %v4254, 0
      %v5680 = vsel %vm5339, %v4257, 0
      %v5683 = vsel %vm5339, %v4260, 0
      %v5686 = vsel %vm5339, %v4263, 0
      %v5689 = vsel %vm5339, %v4266, 0
      %v5692 = vsel %vm5339, %v4269, 0
      %v5695 = vsel %vm5339, %v4272, 0
      %v5698 = vsel %vm5339, %v4275, 0
      %v5701 = vsel %vm5339, %v4278, 0
      %v5704 = vsel %vm5339, %v4281, 0
      %v5707 = vsel %vm5339, %v4284, 0
      %v5710 = vsel %vm5339, %v4287, 0
      %v5713 = vsel %vm5339, %v4290, 0
      %v5716 = vsel %vm5339, %v4293, 0
      %v5719 = vsel %vm5339, %v4296, 0
      %v5722 = vsel %vm5339, %v4299, 0
      %v5725 = vsel %vm5339, %v4302, 0
      %v5728 = vsel %vm5339, %v4305, 0
      %v5731 = vsel %vm5339, %v4308, 0
      %v5734 = vsel %vm5339, %v4311, 0
      %v5737 = vsel %vm5339, %v4314, 0
      %v5740 = vsel %vm5339, %v4317, 0
      %v5743 = vsel %vm5339, %v4320, 0
      %v5746 = vsel %vm5339, %v4323, 0
      %v5749 = vsel %vm5339, %v4326, 0
      %v5752 = vsel %vm5339, %v4329, 0
      %v5755 = vsel %vm5339, %v4332, 0
      %v5758 = vsel %vm5339, %v4335, 0
      %v5761 = vsel %vm5339, %v4338, 0
      %v5764 = vsel %vm5339, %v4341, 0
      %v5767 = vsel %vm5339, %v4344, 0
      %v5770 = vsel %vm5339, %v4347, 0
      %v5773 = vsel %vm5339, %v4350, 0
      %v5776 = vsel %vm5339, %v4353, 0
      %v5779 = vsel %vm5339, %v4356, 0
      %v5782 = vsel %vm5339, %v4359, 0
      %v5785 = vsel %vm5339, %v4362, 0
      %v5788 = vsel %vm5339, %v4365, 0
      %v5791 = vsel %vm5339, %v4368, 0
      %v5794 = vsel %vm5339, %v4371, 0
      %v5797 = vsel %vm5339, %v4374, 0
      %v5800 = vsel %vm5339, %v4377, 0
      %v5803 = vsel %vm5339, %v4380, 0
      %v5806 = vsel %vm5339, %v4383, 0
      %v5809 = vsel %vm5339, %v4386, 0
      %v5812 = vsel %vm5339, %v4389, 0
      %v5815 = vsel %vm5339, %v4392, 0
      %v5818 = vsel %vm5339, %v4395, 0
      %v5821 = vsel %vm5339, %v4398, 0
      %v5824 = vsel %vm5339, %v4401, 0
      %v5827 = vsel %vm5339, %v4404, 0
      %v5830 = vsel %vm5339, %v4407, 0
      %v5833 = vsel %vm5339, %v4410, 0
      %v5836 = vsel %vm5339, %v4413, 0
      %v5839 = vsel %vm5339, %v4416, 0
      %v5842 = vsel %vm5339, %v4419, 0
      %v5845 = vsel %vm5339, %v4422, 0
      %v5848 = vsel %vm5339, %v4425, 0
      %v5851 = vsel %vm5339, %v4428, 0
      %v5854 = vsel %vm5339, %v4431, 0
      %v5857 = vsel %vm5339, %v4434, 0
      %v5860 = vsel %vm5339, %v4437, 0
      %v5863 = vsel %vm5339, %v4440, 0
      %v5866 = vsel %vm5339, %v4443, 0
      %v5869 = vsel %vm5339, %v4446, 0
      %v5872 = vsel %vm5339, %v4449, 0
      %v5875 = vsel %vm5339, %v4452, 0
      %v5878 = vsel %vm5339, %v4455, 0
      %v5881 = vsel %vm5339, %v4458, 0
      %v5884 = vsel %vm5339, %v4461, 0
      %v5887 = vsel %vm5339, %v4464, 0
      %v5890 = vsel %vm5339, %v4467, 0
      %v5893 = vsel %vm5339, %v4470, 0
      %v5896 = vsel %vm5339, %v4473, 0
      %v5899 = vsel %vm5339, %v4476, 0
      %v5902 = vsel %vm5339, %v4479, 0
      %v5905 = vsel %vm5339, %v4482, 0
      %v5908 = vsel %vm5339, %v4485, 0
      %v5911 = vsel %vm5339, %v4488, 0
      %v5914 = vsel %vm5339, %v4491, 0
      %v5917 = vsel %vm5339, %v4494, 0
      %v5920 = vsel %vm5339, %v4497, 0
      %v5923 = vsel %vm5339, %v4500, 0
      %v5926 = vsel %vm5339, %v4503, 0
      %v5929 = vsel %vm5339, %v4506, 0
      %v5932 = vsel %vm5339, %v4509, 0
      %v5935 = vsel %vm5339, %v4512, 0
      %v5938 = vsel %vm5339, %v4515, 0
      %v5941 = vsel %vm5339, %v4518, 0
      %v5944 = vsel %vm5339, %v4521, 0
      %v5947 = vsel %vm5339, %v4524, 0
      %v5950 = vsel %vm5339, %v4527, 0
      %v5953 = vsel %vm5339, %v4530, 0
      %v5956 = vsel %vm5339, %v4533, 0
      %v5959 = vsel %vm5339, %v4536, 0
      %v5962 = vsel %vm5339, %v4539, 0
      %v5965 = vsel %vm5339, %v4542, 0
      %v5968 = vsel %vm5339, %v4545, 0
      %v5971 = vsel %vm5339, %v4548, 0
      %v5974 = vsel %vm5339, %v4551, 0
      %v5977 = vsel %vm5339, %v4554, 0
      %v5980 = vsel %vm5339, %v4557, 0
      %v5983 = vsel %vm5339, %v4560, 0
      %v5986 = vsel %vm5339, %v4563, 0
      %v5989 = vsel %vm5339, %v4566, 0
      %v5992 = vsel %vm5339, %v4569, 0
      %v5995 = vsel %vm5339, %v4572, 0
      %v5998 = vsel %vm5339, %v4575, 0
      %v6001 = vsel %vm5339, %v4578, 0
      %v6004 = vsel %vm5339, %v4581, 0
      %v6007 = vsel %vm5339, %v4584, 0
      %v6010 = vsel %vm5339, %v4587, 0
      %v6013 = vsel %vm5339, %v4590, 0
      %v6016 = vsel %vm5339, %v4593, 0
      %v6019 = vsel %vm5339, %v4596, 0
      %v6022 = vsel %vm5339, %v4599, 0
      %v6025 = vsel %vm5339, %v4602, 0
      %v6028 = vsel %vm5339, %v4605, 0
      %v6031 = vsel %vm5339, %v4608, 0
      %v6034 = vsel %vm5339, %v4611, 0
      %v6037 = vsel %vm5339, %v4614, 0
      %v6040 = vsel %vm5339, %v4617, 0
      %v6043 = vsel %vm5339, %v4620, 0
      %v6046 = vsel %vm5339, %v4623, 0
      %v6049 = vsel %vm5339, %v4626, 0
      %v6052 = vsel %vm5339, %v4629, 0
      %v6055 = vsel %vm5339, %v4632, 0
      %v6058 = vsel %vm5339, %v4635, 0
      %v6061 = vsel %vm5339, %v4638, 0
      %v6064 = vsel %vm5339, %v4641, 0
      %v6067 = vsel %vm5339, %v4644, 0
      %v6070 = vsel %vm5339, %v4647, 0
      %v6073 = vsel %vm5339, %v4650, 0
      %v6076 = vsel %vm5339, %v4653, 0
      %v6079 = vsel %vm5339, %v4656, 0
      %v6082 = vsel %vm5339, %v4659, 0
      %v6085 = vsel %vm5339, %v4662, 0
      %v6088 = vsel %vm5339, %v4665, 0
      %v6091 = vsel %vm5339, %v4668, 0
      %v6094 = vsel %vm5339, %v4671, 0
      %v6097 = vsel %vm5339, %v4674, 0
      %v6100 = vsel %vm5339, %v4677, 0
      %v6103 = vsel %vm5339, %v4680, 0
      %v6106 = vsel %vm5339, %v4683, 0
      %v6109 = vsel %vm5339, %v4686, 0
      %v6112 = vsel %vm5339, %v4689, 0
      %v6115 = vsel %vm5339, %v4692, 0
      %v6118 = vsel %vm5339, %v4695, 0
      %v6121 = vsel %vm5339, %v4698, 0
      %v6124 = vsel %vm5339, %v4701, 0
      %v6127 = vsel %vm5339, %v4704, 0
      %6129 = vmatpush.bf16.msra.mxu0 %v5310
      %6130 = vmatpush.bf16.msra.mxu0 %v5309
      %6131 = vmatpush.bf16.msra.mxu0 %v5308
      %6132 = vmatpush.bf16.msra.mxu0 %v5307
      %6133 = vmatpush.bf16.msra.mxu0 %v5306
      %6134 = vmatpush.bf16.msra.mxu0 %v5305
      %6135 = vmatpush.bf16.msra.mxu0 %v5304
      %6136 = vmatpush.bf16.msra.mxu0 %v5303
      %6137 = vmatmul.bf16.gmra.mxu0 %v3916
      %v6138 = vpop.f32.mrf.mxu0
      %v6139 = vadd.f32 0.0, %v6138
      %v6140 = vpop.f32.mrf.mxu0
      %v6141 = vadd.f32 0.0, %v6140
      %6142 = vmatmul.bf16.gmra.mxu0 %v3919
      %v6143 = vpop.f32.mrf.mxu0
      %v6144 = vadd.f32 0.0, %v6143
      %v6145 = vpop.f32.mrf.mxu0
      %v6146 = vadd.f32 0.0, %v6145
      %6147 = vmatmul.bf16.gmra.mxu0 %v3922
      %v6148 = vpop.f32.mrf.mxu0
      %v6149 = vadd.f32 0.0, %v6148
      %v6150 = vpop.f32.mrf.mxu0
      %v6151 = vadd.f32 0.0, %v6150
      %6152 = vmatmul.bf16.gmra.mxu0 %v3925
      %v6153 = vpop.f32.mrf.mxu0
      %v6154 = vadd.f32 0.0, %v6153
      %v6155 = vpop.f32.mrf.mxu0
      %v6156 = vadd.f32 0.0, %v6155
      %6157 = vmatmul.bf16.gmra.mxu0 %v3928
      %v6158 = vpop.f32.mrf.mxu0
      %v6159 = vadd.f32 0.0, %v6158
      %v6160 = vpop.f32.mrf.mxu0
      %v6161 = vadd.f32 0.0, %v6160
      %6162 = vmatmul.bf16.gmra.mxu0 %v3931
      %v6163 = vpop.f32.mrf.mxu0
      %v6164 = vadd.f32 0.0, %v6163
      %v6165 = vpop.f32.mrf.mxu0
      %v6166 = vadd.f32 0.0, %v6165
      %6167 = vmatmul.bf16.gmra.mxu0 %v3934
      %v6168 = vpop.f32.mrf.mxu0
      %v6169 = vadd.f32 0.0, %v6168
      %v6170 = vpop.f32.mrf.mxu0
      %v6171 = vadd.f32 0.0, %v6170
      %6172 = vmatmul.bf16.gmra.mxu0 %v3937
      %v6173 = vpop.f32.mrf.mxu0
      %v6174 = vadd.f32 0.0, %v6173
      %v6175 = vpop.f32.mrf.mxu0
      %v6176 = vadd.f32 0.0, %v6175
      %6177 = vmatmul.bf16.gmra.mxu0 %v3940
      %v6178 = vpop.f32.mrf.mxu0
      %v6179 = vadd.f32 0.0, %v6178
      %v6180 = vpop.f32.mrf.mxu0
      %v6181 = vadd.f32 0.0, %v6180
      %6182 = vmatmul.bf16.gmra.mxu0 %v3943
      %v6183 = vpop.f32.mrf.mxu0
      %v6184 = vadd.f32 0.0, %v6183
      %v6185 = vpop.f32.mrf.mxu0
      %v6186 = vadd.f32 0.0, %v6185
      %6187 = vmatmul.bf16.gmra.mxu0 %v3946
      %v6188 = vpop.f32.mrf.mxu0
      %v6189 = vadd.f32 0.0, %v6188
      %v6190 = vpop.f32.mrf.mxu0
      %v6191 = vadd.f32 0.0, %v6190
      %6192 = vmatmul.bf16.gmra.mxu0 %v3949
      %v6193 = vpop.f32.mrf.mxu0
      %v6194 = vadd.f32 0.0, %v6193
      %v6195 = vpop.f32.mrf.mxu0
      %v6196 = vadd.f32 0.0, %v6195
      %6197 = vmatmul.bf16.gmra.mxu0 %v3952
      %v6198 = vpop.f32.mrf.mxu0
      %v6199 = vadd.f32 0.0, %v6198
      %v6200 = vpop.f32.mrf.mxu0
      %v6201 = vadd.f32 0.0, %v6200
      %6202 = vmatmul.bf16.gmra.mxu0 %v3955
      %v6203 = vpop.f32.mrf.mxu0
      %v6204 = vadd.f32 0.0, %v6203
      %v6205 = vpop.f32.mrf.mxu0
      %v6206 = vadd.f32 0.0, %v6205
      %6207 = vmatmul.bf16.gmra.mxu0 %v3958
      %v6208 = vpop.f32.mrf.mxu0
      %v6209 = vadd.f32 0.0, %v6208
      %v6210 = vpop.f32.mrf.mxu0
      %v6211 = vadd.f32 0.0, %v6210
      %6212 = vmatmul.bf16.gmra.mxu0 %v3961
      %v6213 = vpop.f32.mrf.mxu0
      %v6214 = vadd.f32 0.0, %v6213
      %v6215 = vpop.f32.mrf.mxu0
      %v6216 = vadd.f32 0.0, %v6215
      %6217 = vmatmul.bf16.gmra.mxu0 %v3964
      %v6218 = vpop.f32.mrf.mxu0
      %v6219 = vadd.f32 0.0, %v6218
      %v6220 = vpop.f32.mrf.mxu0
      %v6221 = vadd.f32 0.0, %v6220
      %6222 = vmatmul.bf16.gmra.mxu0 %v3967
      %v6223 = vpop.f32.mrf.mxu0
      %v6224 = vadd.f32 0.0, %v6223
      %v6225 = vpop.f32.mrf.mxu0
      %v6226 = vadd.f32 0.0, %v6225
      %6227 = vmatmul.bf16.gmra.mxu0 %v3970
      %v6228 = vpop.f32.mrf.mxu0
      %v6229 = vadd.f32 0.0, %v6228
      %v6230 = vpop.f32.mrf.mxu0
      %v6231 = vadd.f32 0.0, %v6230
      %6232 = vmatmul.bf16.gmra.mxu0 %v3973
      %v6233 = vpop.f32.mrf.mxu0
      %v6234 = vadd.f32 0.0, %v6233
      %v6235 = vpop.f32.mrf.mxu0
      %v6236 = vadd.f32 0.0, %v6235
      %6237 = vmatmul.bf16.gmra.mxu0 %v3976
      %v6238 = vpop.f32.mrf.mxu0
      %v6239 = vadd.f32 0.0, %v6238
      %v6240 = vpop.f32.mrf.mxu0
      %v6241 = vadd.f32 0.0, %v6240
      %6242 = vmatmul.bf16.gmra.mxu0 %v3979
      %v6243 = vpop.f32.mrf.mxu0
      %v6244 = vadd.f32 0.0, %v6243
      %v6245 = vpop.f32.mrf.mxu0
      %v6246 = vadd.f32 0.0, %v6245
      %6247 = vmatmul.bf16.gmra.mxu0 %v3982
      %v6248 = vpop.f32.mrf.mxu0
      %v6249 = vadd.f32 0.0, %v6248
      %v6250 = vpop.f32.mrf.mxu0
      %v6251 = vadd.f32 0.0, %v6250
      %6252 = vmatmul.bf16.gmra.mxu0 %v3985
      %v6253 = vpop.f32.mrf.mxu0
      %v6254 = vadd.f32 0.0, %v6253
      %v6255 = vpop.f32.mrf.mxu0
      %v6256 = vadd.f32 0.0, %v6255
      %6257 = vmatmul.bf16.gmra.mxu0 %v3988
      %v6258 = vpop.f32.mrf.mxu0
      %v6259 = vadd.f32 0.0, %v6258
      %v6260 = vpop.f32.mrf.mxu0
      %v6261 = vadd.f32 0.0, %v6260
      %6262 = vmatmul.bf16.gmra.mxu0 %v3991
      %v6263 = vpop.f32.mrf.mxu0
      %v6264 = vadd.f32 0.0, %v6263
      %v6265 = vpop.f32.mrf.mxu0
      %v6266 = vadd.f32 0.0, %v6265
      %6267 = vmatmul.bf16.gmra.mxu0 %v3994
      %v6268 = vpop.f32.mrf.mxu0
      %v6269 = vadd.f32 0.0, %v6268
      %v6270 = vpop.f32.mrf.mxu0
      %v6271 = vadd.f32 0.0, %v6270
      %6272 = vmatmul.bf16.gmra.mxu0 %v3997
      %v6273 = vpop.f32.mrf.mxu0
      %v6274 = vadd.f32 0.0, %v6273
      %v6275 = vpop.f32.mrf.mxu0
      %v6276 = vadd.f32 0.0, %v6275
      %6277 = vmatmul.bf16.gmra.mxu0 %v4000
      %v6278 = vpop.f32.mrf.mxu0
      %v6279 = vadd.f32 0.0, %v6278
      %v6280 = vpop.f32.mrf.mxu0
      %v6281 = vadd.f32 0.0, %v6280
      %6282 = vmatmul.bf16.gmra.mxu0 %v4003
      %v6283 = vpop.f32.mrf.mxu0
      %v6284 = vadd.f32 0.0, %v6283
      %v6285 = vpop.f32.mrf.mxu0
      %v6286 = vadd.f32 0.0, %v6285
      %6287 = vmatmul.bf16.gmra.mxu0 %v4006
      %v6288 = vpop.f32.mrf.mxu0
      %v6289 = vadd.f32 0.0, %v6288
      %v6290 = vpop.f32.mrf.mxu0
      %v6291 = vadd.f32 0.0, %v6290
      %6292 = vmatmul.bf16.gmra.mxu0 %v4009
      %v6293 = vpop.f32.mrf.mxu0
      %v6294 = vadd.f32 0.0, %v6293
      %v6295 = vpop.f32.mrf.mxu0
      %v6296 = vadd.f32 0.0, %v6295
      %6297 = vmatmul.bf16.gmra.mxu0 %v4012
      %v6298 = vpop.f32.mrf.mxu0
      %v6299 = vadd.f32 0.0, %v6298
      %v6300 = vpop.f32.mrf.mxu0
      %v6301 = vadd.f32 0.0, %v6300
      %6302 = vmatmul.bf16.gmra.mxu0 %v4015
      %v6303 = vpop.f32.mrf.mxu0
      %v6304 = vadd.f32 0.0, %v6303
      %v6305 = vpop.f32.mrf.mxu0
      %v6306 = vadd.f32 0.0, %v6305
      %6307 = vmatmul.bf16.gmra.mxu0 %v4018
      %v6308 = vpop.f32.mrf.mxu0
      %v6309 = vadd.f32 0.0, %v6308
      %v6310 = vpop.f32.mrf.mxu0
      %v6311 = vadd.f32 0.0, %v6310
      %6312 = vmatmul.bf16.gmra.mxu0 %v4021
      %v6313 = vpop.f32.mrf.mxu0
      %v6314 = vadd.f32 0.0, %v6313
      %v6315 = vpop.f32.mrf.mxu0
      %v6316 = vadd.f32 0.0, %v6315
      %6317 = vmatmul.bf16.gmra.mxu0 %v4024
      %v6318 = vpop.f32.mrf.mxu0
      %v6319 = vadd.f32 0.0, %v6318
      %v6320 = vpop.f32.mrf.mxu0
      %v6321 = vadd.f32 0.0, %v6320
      %6322 = vmatmul.bf16.gmra.mxu0 %v4027
      %v6323 = vpop.f32.mrf.mxu0
      %v6324 = vadd.f32 0.0, %v6323
      %v6325 = vpop.f32.mrf.mxu0
      %v6326 = vadd.f32 0.0, %v6325
      %6327 = vmatmul.bf16.gmra.mxu0 %v4030
      %v6328 = vpop.f32.mrf.mxu0
      %v6329 = vadd.f32 0.0, %v6328
      %v6330 = vpop.f32.mrf.mxu0
      %v6331 = vadd.f32 0.0, %v6330
      %6332 = vmatmul.bf16.gmra.mxu0 %v4033
      %v6333 = vpop.f32.mrf.mxu0
      %v6334 = vadd.f32 0.0, %v6333
      %v6335 = vpop.f32.mrf.mxu0
      %v6336 = vadd.f32 0.0, %v6335
      %6337 = vmatmul.bf16.gmra.mxu0 %v4036
      %v6338 = vpop.f32.mrf.mxu0
      %v6339 = vadd.f32 0.0, %v6338
      %v6340 = vpop.f32.mrf.mxu0
      %v6341 = vadd.f32 0.0, %v6340
      %6342 = vmatmul.bf16.gmra.mxu0 %v4039
      %v6343 = vpop.f32.mrf.mxu0
      %v6344 = vadd.f32 0.0, %v6343
      %v6345 = vpop.f32.mrf.mxu0
      %v6346 = vadd.f32 0.0, %v6345
      %6347 = vmatmul.bf16.gmra.mxu0 %v4042
      %v6348 = vpop.f32.mrf.mxu0
      %v6349 = vadd.f32 0.0, %v6348
      %v6350 = vpop.f32.mrf.mxu0
      %v6351 = vadd.f32 0.0, %v6350
      %6352 = vmatmul.bf16.gmra.mxu0 %v4045
      %v6353 = vpop.f32.mrf.mxu0
      %v6354 = vadd.f32 0.0, %v6353
      %v6355 = vpop.f32.mrf.mxu0
      %v6356 = vadd.f32 0.0, %v6355
      %6357 = vmatmul.bf16.gmra.mxu0 %v4048
      %v6358 = vpop.f32.mrf.mxu0
      %v6359 = vadd.f32 0.0, %v6358
      %v6360 = vpop.f32.mrf.mxu0
      %v6361 = vadd.f32 0.0, %v6360
      %6362 = vmatmul.bf16.gmra.mxu0 %v4051
      %v6363 = vpop.f32.mrf.mxu0
      %v6364 = vadd.f32 0.0, %v6363
      %v6365 = vpop.f32.mrf.mxu0
      %v6366 = vadd.f32 0.0, %v6365
      %6367 = vmatmul.bf16.gmra.mxu0 %v4054
      %v6368 = vpop.f32.mrf.mxu0
      %v6369 = vadd.f32 0.0, %v6368
      %v6370 = vpop.f32.mrf.mxu0
      %v6371 = vadd.f32 0.0, %v6370
      %6372 = vmatmul.bf16.gmra.mxu0 %v4057
      %v6373 = vpop.f32.mrf.mxu0
      %v6374 = vadd.f32 0.0, %v6373
      %v6375 = vpop.f32.mrf.mxu0
      %v6376 = vadd.f32 0.0, %v6375
      %6377 = vmatmul.bf16.gmra.mxu0 %v4060
      %v6378 = vpop.f32.mrf.mxu0
      %v6379 = vadd.f32 0.0, %v6378
      %v6380 = vpop.f32.mrf.mxu0
      %v6381 = vadd.f32 0.0, %v6380
      %6382 = vmatmul.bf16.gmra.mxu0 %v4063
      %v6383 = vpop.f32.mrf.mxu0
      %v6384 = vadd.f32 0.0, %v6383
      %v6385 = vpop.f32.mrf.mxu0
      %v6386 = vadd.f32 0.0, %v6385
      %6387 = vmatmul.bf16.gmra.mxu0 %v4066
      %v6388 = vpop.f32.mrf.mxu0
      %v6389 = vadd.f32 0.0, %v6388
      %v6390 = vpop.f32.mrf.mxu0
      %v6391 = vadd.f32 0.0, %v6390
      %6392 = vmatmul.bf16.gmra.mxu0 %v4069
      %v6393 = vpop.f32.mrf.mxu0
      %v6394 = vadd.f32 0.0, %v6393
      %v6395 = vpop.f32.mrf.mxu0
      %v6396 = vadd.f32 0.0, %v6395
      %6397 = vmatmul.bf16.gmra.mxu0 %v4072
      %v6398 = vpop.f32.mrf.mxu0
      %v6399 = vadd.f32 0.0, %v6398
      %v6400 = vpop.f32.mrf.mxu0
      %v6401 = vadd.f32 0.0, %v6400
      %6402 = vmatmul.bf16.gmra.mxu0 %v4075
      %v6403 = vpop.f32.mrf.mxu0
      %v6404 = vadd.f32 0.0, %v6403
      %v6405 = vpop.f32.mrf.mxu0
      %v6406 = vadd.f32 0.0, %v6405
      %6407 = vmatmul.bf16.gmra.mxu0 %v4078
      %v6408 = vpop.f32.mrf.mxu0
      %v6409 = vadd.f32 0.0, %v6408
      %v6410 = vpop.f32.mrf.mxu0
      %v6411 = vadd.f32 0.0, %v6410
      %6412 = vmatmul.bf16.gmra.mxu0 %v4081
      %v6413 = vpop.f32.mrf.mxu0
      %v6414 = vadd.f32 0.0, %v6413
      %v6415 = vpop.f32.mrf.mxu0
      %v6416 = vadd.f32 0.0, %v6415
      %6417 = vmatmul.bf16.gmra.mxu0 %v4084
      %v6418 = vpop.f32.mrf.mxu0
      %v6419 = vadd.f32 0.0, %v6418
      %v6420 = vpop.f32.mrf.mxu0
      %v6421 = vadd.f32 0.0, %v6420
      %6422 = vmatmul.bf16.gmra.mxu0 %v4087
      %v6423 = vpop.f32.mrf.mxu0
      %v6424 = vadd.f32 0.0, %v6423
      %v6425 = vpop.f32.mrf.mxu0
      %v6426 = vadd.f32 0.0, %v6425
      %6427 = vmatmul.bf16.gmra.mxu0 %v4090
      %v6428 = vpop.f32.mrf.mxu0
      %v6429 = vadd.f32 0.0, %v6428
      %v6430 = vpop.f32.mrf.mxu0
      %v6431 = vadd.f32 0.0, %v6430
      %6432 = vmatmul.bf16.gmra.mxu0 %v4093
      %v6433 = vpop.f32.mrf.mxu0
      %v6434 = vadd.f32 0.0, %v6433
      %v6435 = vpop.f32.mrf.mxu0
      %v6436 = vadd.f32 0.0, %v6435
      %6437 = vmatmul.bf16.gmra.mxu0 %v4096
      %v6438 = vpop.f32.mrf.mxu0
      %v6439 = vadd.f32 0.0, %v6438
      %v6440 = vpop.f32.mrf.mxu0
      %v6441 = vadd.f32 0.0, %v6440
      %6442 = vmatmul.bf16.gmra.mxu0 %v4099
      %v6443 = vpop.f32.mrf.mxu0
      %v6444 = vadd.f32 0.0, %v6443
      %v6445 = vpop.f32.mrf.mxu0
      %v6446 = vadd.f32 0.0, %v6445
      %6447 = vmatmul.bf16.gmra.mxu0 %v4102
      %v6448 = vpop.f32.mrf.mxu0
      %v6449 = vadd.f32 0.0, %v6448
      %v6450 = vpop.f32.mrf.mxu0
      %v6451 = vadd.f32 0.0, %v6450
      %6452 = vmatmul.bf16.gmra.mxu0 %v4105
      %v6453 = vpop.f32.mrf.mxu0
      %v6454 = vadd.f32 0.0, %v6453
      %v6455 = vpop.f32.mrf.mxu0
      %v6456 = vadd.f32 0.0, %v6455
      %6457 = vmatmul.bf16.gmra.mxu0 %v4108
      %v6458 = vpop.f32.mrf.mxu0
      %v6459 = vadd.f32 0.0, %v6458
      %v6460 = vpop.f32.mrf.mxu0
      %v6461 = vadd.f32 0.0, %v6460
      %6462 = vmatmul.bf16.gmra.mxu0 %v4111
      %v6463 = vpop.f32.mrf.mxu0
      %v6464 = vadd.f32 0.0, %v6463
      %v6465 = vpop.f32.mrf.mxu0
      %v6466 = vadd.f32 0.0, %v6465
      %6467 = vmatmul.bf16.gmra.mxu0 %v4114
      %v6468 = vpop.f32.mrf.mxu0
      %v6469 = vadd.f32 0.0, %v6468
      %v6470 = vpop.f32.mrf.mxu0
      %v6471 = vadd.f32 0.0, %v6470
      %6472 = vmatmul.bf16.gmra.mxu0 %v4117
      %v6473 = vpop.f32.mrf.mxu0
      %v6474 = vadd.f32 0.0, %v6473
      %v6475 = vpop.f32.mrf.mxu0
      %v6476 = vadd.f32 0.0, %v6475
      %6477 = vmatmul.bf16.gmra.mxu0 %v4120
      %v6478 = vpop.f32.mrf.mxu0
      %v6479 = vadd.f32 0.0, %v6478
      %v6480 = vpop.f32.mrf.mxu0
      %v6481 = vadd.f32 0.0, %v6480
      %6482 = vmatmul.bf16.gmra.mxu0 %v4123
      %v6483 = vpop.f32.mrf.mxu0
      %v6484 = vadd.f32 0.0, %v6483
      %v6485 = vpop.f32.mrf.mxu0
      %v6486 = vadd.f32 0.0, %v6485
      %6487 = vmatmul.bf16.gmra.mxu0 %v4126
      %v6488 = vpop.f32.mrf.mxu0
      %v6489 = vadd.f32 0.0, %v6488
      %v6490 = vpop.f32.mrf.mxu0
      %v6491 = vadd.f32 0.0, %v6490
      %6492 = vmatmul.bf16.gmra.mxu0 %v4129
      %v6493 = vpop.f32.mrf.mxu0
      %v6494 = vadd.f32 0.0, %v6493
      %v6495 = vpop.f32.mrf.mxu0
      %v6496 = vadd.f32 0.0, %v6495
      %6497 = vmatmul.bf16.gmra.mxu0 %v4132
      %v6498 = vpop.f32.mrf.mxu0
      %v6499 = vadd.f32 0.0, %v6498
      %v6500 = vpop.f32.mrf.mxu0
      %v6501 = vadd.f32 0.0, %v6500
      %6502 = vmatmul.bf16.gmra.mxu0 %v4135
      %v6503 = vpop.f32.mrf.mxu0
      %v6504 = vadd.f32 0.0, %v6503
      %v6505 = vpop.f32.mrf.mxu0
      %v6506 = vadd.f32 0.0, %v6505
      %6507 = vmatmul.bf16.gmra.mxu0 %v4138
      %v6508 = vpop.f32.mrf.mxu0
      %v6509 = vadd.f32 0.0, %v6508
      %v6510 = vpop.f32.mrf.mxu0
      %v6511 = vadd.f32 0.0, %v6510
      %6512 = vmatmul.bf16.gmra.mxu0 %v4141
      %v6513 = vpop.f32.mrf.mxu0
      %v6514 = vadd.f32 0.0, %v6513
      %v6515 = vpop.f32.mrf.mxu0
      %v6516 = vadd.f32 0.0, %v6515
      %6517 = vmatmul.bf16.gmra.mxu0 %v4144
      %v6518 = vpop.f32.mrf.mxu0
      %v6519 = vadd.f32 0.0, %v6518
      %v6520 = vpop.f32.mrf.mxu0
      %v6521 = vadd.f32 0.0, %v6520
      %6522 = vmatmul.bf16.gmra.mxu0 %v4147
      %v6523 = vpop.f32.mrf.mxu0
      %v6524 = vadd.f32 0.0, %v6523
      %v6525 = vpop.f32.mrf.mxu0
      %v6526 = vadd.f32 0.0, %v6525
      %6527 = vmatmul.bf16.gmra.mxu0 %v4150
      %v6528 = vpop.f32.mrf.mxu0
      %v6529 = vadd.f32 0.0, %v6528
      %v6530 = vpop.f32.mrf.mxu0
      %v6531 = vadd.f32 0.0, %v6530
      %6532 = vmatmul.bf16.gmra.mxu0 %v4153
      %v6533 = vpop.f32.mrf.mxu0
      %v6534 = vadd.f32 0.0, %v6533
      %v6535 = vpop.f32.mrf.mxu0
      %v6536 = vadd.f32 0.0, %v6535
      %6537 = vmatmul.bf16.gmra.mxu0 %v4156
      %v6538 = vpop.f32.mrf.mxu0
      %v6539 = vadd.f32 0.0, %v6538
      %v6540 = vpop.f32.mrf.mxu0
      %v6541 = vadd.f32 0.0, %v6540
      %6542 = vmatmul.bf16.gmra.mxu0 %v4159
      %v6543 = vpop.f32.mrf.mxu0
      %v6544 = vadd.f32 0.0, %v6543
      %v6545 = vpop.f32.mrf.mxu0
      %v6546 = vadd.f32 0.0, %v6545
      %6547 = vmatmul.bf16.gmra.mxu0 %v4162
      %v6548 = vpop.f32.mrf.mxu0
      %v6549 = vadd.f32 0.0, %v6548
      %v6550 = vpop.f32.mrf.mxu0
      %v6551 = vadd.f32 0.0, %v6550
      %6552 = vmatmul.bf16.gmra.mxu0 %v4165
      %v6553 = vpop.f32.mrf.mxu0
      %v6554 = vadd.f32 0.0, %v6553
      %v6555 = vpop.f32.mrf.mxu0
      %v6556 = vadd.f32 0.0, %v6555
      %6557 = vmatmul.bf16.gmra.mxu0 %v4168
      %v6558 = vpop.f32.mrf.mxu0
      %v6559 = vadd.f32 0.0, %v6558
      %v6560 = vpop.f32.mrf.mxu0
      %v6561 = vadd.f32 0.0, %v6560
      %6562 = vmatmul.bf16.gmra.mxu0 %v4171
      %v6563 = vpop.f32.mrf.mxu0
      %v6564 = vadd.f32 0.0, %v6563
      %v6565 = vpop.f32.mrf.mxu0
      %v6566 = vadd.f32 0.0, %v6565
      %6567 = vmatmul.bf16.gmra.mxu0 %v4174
      %v6568 = vpop.f32.mrf.mxu0
      %v6569 = vadd.f32 0.0, %v6568
      %v6570 = vpop.f32.mrf.mxu0
      %v6571 = vadd.f32 0.0, %v6570
      %6572 = vmatmul.bf16.gmra.mxu0 %v4177
      %v6573 = vpop.f32.mrf.mxu0
      %v6574 = vadd.f32 0.0, %v6573
      %v6575 = vpop.f32.mrf.mxu0
      %v6576 = vadd.f32 0.0, %v6575
      %6577 = vmatmul.bf16.gmra.mxu0 %v4180
      %v6578 = vpop.f32.mrf.mxu0
      %v6579 = vadd.f32 0.0, %v6578
      %v6580 = vpop.f32.mrf.mxu0
      %v6581 = vadd.f32 0.0, %v6580
      %6582 = vmatmul.bf16.gmra.mxu0 %v4183
      %v6583 = vpop.f32.mrf.mxu0
      %v6584 = vadd.f32 0.0, %v6583
      %v6585 = vpop.f32.mrf.mxu0
      %v6586 = vadd.f32 0.0, %v6585
      %6587 = vmatmul.bf16.gmra.mxu0 %v4186
      %v6588 = vpop.f32.mrf.mxu0
      %v6589 = vadd.f32 0.0, %v6588
      %v6590 = vpop.f32.mrf.mxu0
      %v6591 = vadd.f32 0.0, %v6590
      %6592 = vmatmul.bf16.gmra.mxu0 %v4189
      %v6593 = vpop.f32.mrf.mxu0
      %v6594 = vadd.f32 0.0, %v6593
      %v6595 = vpop.f32.mrf.mxu0
      %v6596 = vadd.f32 0.0, %v6595
      %6597 = vmatmul.bf16.gmra.mxu0 %v4192
      %v6598 = vpop.f32.mrf.mxu0
      %v6599 = vadd.f32 0.0, %v6598
      %v6600 = vpop.f32.mrf.mxu0
      %v6601 = vadd.f32 0.0, %v6600
      %6602 = vmatmul.bf16.gmra.mxu0 %v4195
      %v6603 = vpop.f32.mrf.mxu0
      %v6604 = vadd.f32 0.0, %v6603
      %v6605 = vpop.f32.mrf.mxu0
      %v6606 = vadd.f32 0.0, %v6605
      %6607 = vmatmul.bf16.gmra.mxu0 %v4198
      %v6608 = vpop.f32.mrf.mxu0
      %v6609 = vadd.f32 0.0, %v6608
      %v6610 = vpop.f32.mrf.mxu0
      %v6611 = vadd.f32 0.0, %v6610
      %6612 = vmatmul.bf16.gmra.mxu0 %v4201
      %v6613 = vpop.f32.mrf.mxu0
      %v6614 = vadd.f32 0.0, %v6613
      %v6615 = vpop.f32.mrf.mxu0
      %v6616 = vadd.f32 0.0, %v6615
      %6617 = vmatmul.bf16.gmra.mxu0 %v4204
      %v6618 = vpop.f32.mrf.mxu0
      %v6619 = vadd.f32 0.0, %v6618
      %v6620 = vpop.f32.mrf.mxu0
      %v6621 = vadd.f32 0.0, %v6620
      %6622 = vmatmul.bf16.gmra.mxu0 %v4207
      %v6623 = vpop.f32.mrf.mxu0
      %v6624 = vadd.f32 0.0, %v6623
      %v6625 = vpop.f32.mrf.mxu0
      %v6626 = vadd.f32 0.0, %v6625
      %6627 = vmatmul.bf16.gmra.mxu0 %v4210
      %v6628 = vpop.f32.mrf.mxu0
      %v6629 = vadd.f32 0.0, %v6628
      %v6630 = vpop.f32.mrf.mxu0
      %v6631 = vadd.f32 0.0, %v6630
      %6632 = vmatmul.bf16.gmra.mxu0 %v4213
      %v6633 = vpop.f32.mrf.mxu0
      %v6634 = vadd.f32 0.0, %v6633
      %v6635 = vpop.f32.mrf.mxu0
      %v6636 = vadd.f32 0.0, %v6635
      %6637 = vmatmul.bf16.gmra.mxu0 %v4216
      %v6638 = vpop.f32.mrf.mxu0
      %v6639 = vadd.f32 0.0, %v6638
      %v6640 = vpop.f32.mrf.mxu0
      %v6641 = vadd.f32 0.0, %v6640
      %6642 = vmatmul.bf16.gmra.mxu0 %v4219
      %v6643 = vpop.f32.mrf.mxu0
      %v6644 = vadd.f32 0.0, %v6643
      %v6645 = vpop.f32.mrf.mxu0
      %v6646 = vadd.f32 0.0, %v6645
      %6647 = vmatmul.bf16.gmra.mxu0 %v4222
      %v6648 = vpop.f32.mrf.mxu0
      %v6649 = vadd.f32 0.0, %v6648
      %v6650 = vpop.f32.mrf.mxu0
      %v6651 = vadd.f32 0.0, %v6650
      %6652 = vmatmul.bf16.gmra.mxu0 %v4225
      %v6653 = vpop.f32.mrf.mxu0
      %v6654 = vadd.f32 0.0, %v6653
      %v6655 = vpop.f32.mrf.mxu0
      %v6656 = vadd.f32 0.0, %v6655
      %6657 = vmatmul.bf16.gmra.mxu0 %v4228
      %v6658 = vpop.f32.mrf.mxu0
      %v6659 = vadd.f32 0.0, %v6658
      %v6660 = vpop.f32.mrf.mxu0
      %v6661 = vadd.f32 0.0, %v6660
      %6662 = vmatmul.bf16.gmra.mxu0 %v4231
      %v6663 = vpop.f32.mrf.mxu0
      %v6664 = vadd.f32 0.0, %v6663
      %v6665 = vpop.f32.mrf.mxu0
      %v6666 = vadd.f32 0.0, %v6665
      %6667 = vmatmul.bf16.gmra.mxu0 %v4234
      %v6668 = vpop.f32.mrf.mxu0
      %v6669 = vadd.f32 0.0, %v6668
      %v6670 = vpop.f32.mrf.mxu0
      %v6671 = vadd.f32 0.0, %v6670
      %6672 = vmatmul.bf16.gmra.mxu0 %v4237
      %v6673 = vpop.f32.mrf.mxu0
      %v6674 = vadd.f32 0.0, %v6673
      %v6675 = vpop.f32.mrf.mxu0
      %v6676 = vadd.f32 0.0, %v6675
      %6677 = vmatmul.bf16.gmra.mxu0 %v4240
      %v6678 = vpop.f32.mrf.mxu0
      %v6679 = vadd.f32 0.0, %v6678
      %v6680 = vpop.f32.mrf.mxu0
      %v6681 = vadd.f32 0.0, %v6680
      %6682 = vmatmul.bf16.gmra.mxu0 %v4243
      %v6683 = vpop.f32.mrf.mxu0
      %v6684 = vadd.f32 0.0, %v6683
      %v6685 = vpop.f32.mrf.mxu0
      %v6686 = vadd.f32 0.0, %v6685
      %6687 = vmatmul.bf16.gmra.mxu0 %v4246
      %v6688 = vpop.f32.mrf.mxu0
      %v6689 = vadd.f32 0.0, %v6688
      %v6690 = vpop.f32.mrf.mxu0
      %v6691 = vadd.f32 0.0, %v6690
      %6692 = vmatmul.bf16.gmra.mxu0 %v4249
      %v6693 = vpop.f32.mrf.mxu0
      %v6694 = vadd.f32 0.0, %v6693
      %v6695 = vpop.f32.mrf.mxu0
      %v6696 = vadd.f32 0.0, %v6695
      %6697 = vmatmul.bf16.gmra.mxu0 %v4252
      %v6698 = vpop.f32.mrf.mxu0
      %v6699 = vadd.f32 0.0, %v6698
      %v6700 = vpop.f32.mrf.mxu0
      %v6701 = vadd.f32 0.0, %v6700
      %6702 = vmatmul.bf16.gmra.mxu0 %v4255
      %v6703 = vpop.f32.mrf.mxu0
      %v6704 = vadd.f32 0.0, %v6703
      %v6705 = vpop.f32.mrf.mxu0
      %v6706 = vadd.f32 0.0, %v6705
      %6707 = vmatmul.bf16.gmra.mxu0 %v4258
      %v6708 = vpop.f32.mrf.mxu0
      %v6709 = vadd.f32 0.0, %v6708
      %v6710 = vpop.f32.mrf.mxu0
      %v6711 = vadd.f32 0.0, %v6710
      %6712 = vmatmul.bf16.gmra.mxu0 %v4261
      %v6713 = vpop.f32.mrf.mxu0
      %v6714 = vadd.f32 0.0, %v6713
      %v6715 = vpop.f32.mrf.mxu0
      %v6716 = vadd.f32 0.0, %v6715
      %6717 = vmatmul.bf16.gmra.mxu0 %v4264
      %v6718 = vpop.f32.mrf.mxu0
      %v6719 = vadd.f32 0.0, %v6718
      %v6720 = vpop.f32.mrf.mxu0
      %v6721 = vadd.f32 0.0, %v6720
      %6722 = vmatmul.bf16.gmra.mxu0 %v4267
      %v6723 = vpop.f32.mrf.mxu0
      %v6724 = vadd.f32 0.0, %v6723
      %v6725 = vpop.f32.mrf.mxu0
      %v6726 = vadd.f32 0.0, %v6725
      %6727 = vmatmul.bf16.gmra.mxu0 %v4270
      %v6728 = vpop.f32.mrf.mxu0
      %v6729 = vadd.f32 0.0, %v6728
      %v6730 = vpop.f32.mrf.mxu0
      %v6731 = vadd.f32 0.0, %v6730
      %6732 = vmatmul.bf16.gmra.mxu0 %v4273
      %v6733 = vpop.f32.mrf.mxu0
      %v6734 = vadd.f32 0.0, %v6733
      %v6735 = vpop.f32.mrf.mxu0
      %v6736 = vadd.f32 0.0, %v6735
      %6737 = vmatmul.bf16.gmra.mxu0 %v4276
      %v6738 = vpop.f32.mrf.mxu0
      %v6739 = vadd.f32 0.0, %v6738
      %v6740 = vpop.f32.mrf.mxu0
      %v6741 = vadd.f32 0.0, %v6740
      %6742 = vmatmul.bf16.gmra.mxu0 %v4279
      %v6743 = vpop.f32.mrf.mxu0
      %v6744 = vadd.f32 0.0, %v6743
      %v6745 = vpop.f32.mrf.mxu0
      %v6746 = vadd.f32 0.0, %v6745
      %6747 = vmatmul.bf16.gmra.mxu0 %v4282
      %v6748 = vpop.f32.mrf.mxu0
      %v6749 = vadd.f32 0.0, %v6748
      %v6750 = vpop.f32.mrf.mxu0
      %v6751 = vadd.f32 0.0, %v6750
      %6752 = vmatmul.bf16.gmra.mxu0 %v4285
      %v6753 = vpop.f32.mrf.mxu0
      %v6754 = vadd.f32 0.0, %v6753
      %v6755 = vpop.f32.mrf.mxu0
      %v6756 = vadd.f32 0.0, %v6755
      %6757 = vmatmul.bf16.gmra.mxu0 %v4288
      %v6758 = vpop.f32.mrf.mxu0
      %v6759 = vadd.f32 0.0, %v6758
      %v6760 = vpop.f32.mrf.mxu0
      %v6761 = vadd.f32 0.0, %v6760
      %6762 = vmatmul.bf16.gmra.mxu0 %v4291
      %v6763 = vpop.f32.mrf.mxu0
      %v6764 = vadd.f32 0.0, %v6763
      %v6765 = vpop.f32.mrf.mxu0
      %v6766 = vadd.f32 0.0, %v6765
      %6767 = vmatmul.bf16.gmra.mxu0 %v4294
      %v6768 = vpop.f32.mrf.mxu0
      %v6769 = vadd.f32 0.0, %v6768
      %v6770 = vpop.f32.mrf.mxu0
      %v6771 = vadd.f32 0.0, %v6770
      %6772 = vmatmul.bf16.gmra.mxu0 %v4297
      %v6773 = vpop.f32.mrf.mxu0
      %v6774 = vadd.f32 0.0, %v6773
      %v6775 = vpop.f32.mrf.mxu0
      %v6776 = vadd.f32 0.0, %v6775
      %6777 = vmatmul.bf16.gmra.mxu0 %v4300
      %v6778 = vpop.f32.mrf.mxu0
      %v6779 = vadd.f32 0.0, %v6778
      %v6780 = vpop.f32.mrf.mxu0
      %v6781 = vadd.f32 0.0, %v6780
      %6782 = vmatmul.bf16.gmra.mxu0 %v4303
      %v6783 = vpop.f32.mrf.mxu0
      %v6784 = vadd.f32 0.0, %v6783
      %v6785 = vpop.f32.mrf.mxu0
      %v6786 = vadd.f32 0.0, %v6785
      %6787 = vmatmul.bf16.gmra.mxu0 %v4306
      %v6788 = vpop.f32.mrf.mxu0
      %v6789 = vadd.f32 0.0, %v6788
      %v6790 = vpop.f32.mrf.mxu0
      %v6791 = vadd.f32 0.0, %v6790
      %6792 = vmatmul.bf16.gmra.mxu0 %v4309
      %v6793 = vpop.f32.mrf.mxu0
      %v6794 = vadd.f32 0.0, %v6793
      %v6795 = vpop.f32.mrf.mxu0
      %v6796 = vadd.f32 0.0, %v6795
      %6797 = vmatmul.bf16.gmra.mxu0 %v4312
      %v6798 = vpop.f32.mrf.mxu0
      %v6799 = vadd.f32 0.0, %v6798
      %v6800 = vpop.f32.mrf.mxu0
      %v6801 = vadd.f32 0.0, %v6800
      %6802 = vmatmul.bf16.gmra.mxu0 %v4315
      %v6803 = vpop.f32.mrf.mxu0
      %v6804 = vadd.f32 0.0, %v6803
      %v6805 = vpop.f32.mrf.mxu0
      %v6806 = vadd.f32 0.0, %v6805
      %6807 = vmatmul.bf16.gmra.mxu0 %v4318
      %v6808 = vpop.f32.mrf.mxu0
      %v6809 = vadd.f32 0.0, %v6808
      %v6810 = vpop.f32.mrf.mxu0
      %v6811 = vadd.f32 0.0, %v6810
      %6812 = vmatmul.bf16.gmra.mxu0 %v4321
      %v6813 = vpop.f32.mrf.mxu0
      %v6814 = vadd.f32 0.0, %v6813
      %v6815 = vpop.f32.mrf.mxu0
      %v6816 = vadd.f32 0.0, %v6815
      %6817 = vmatmul.bf16.gmra.mxu0 %v4324
      %v6818 = vpop.f32.mrf.mxu0
      %v6819 = vadd.f32 0.0, %v6818
      %v6820 = vpop.f32.mrf.mxu0
      %v6821 = vadd.f32 0.0, %v6820
      %6822 = vmatmul.bf16.gmra.mxu0 %v4327
      %v6823 = vpop.f32.mrf.mxu0
      %v6824 = vadd.f32 0.0, %v6823
      %v6825 = vpop.f32.mrf.mxu0
      %v6826 = vadd.f32 0.0, %v6825
      %6827 = vmatmul.bf16.gmra.mxu0 %v4330
      %v6828 = vpop.f32.mrf.mxu0
      %v6829 = vadd.f32 0.0, %v6828
      %v6830 = vpop.f32.mrf.mxu0
      %v6831 = vadd.f32 0.0, %v6830
      %6832 = vmatmul.bf16.gmra.mxu0 %v4333
      %v6833 = vpop.f32.mrf.mxu0
      %v6834 = vadd.f32 0.0, %v6833
      %v6835 = vpop.f32.mrf.mxu0
      %v6836 = vadd.f32 0.0, %v6835
      %6837 = vmatmul.bf16.gmra.mxu0 %v4336
      %v6838 = vpop.f32.mrf.mxu0
      %v6839 = vadd.f32 0.0, %v6838
      %v6840 = vpop.f32.mrf.mxu0
      %v6841 = vadd.f32 0.0, %v6840
      %6842 = vmatmul.bf16.gmra.mxu0 %v4339
      %v6843 = vpop.f32.mrf.mxu0
      %v6844 = vadd.f32 0.0, %v6843
      %v6845 = vpop.f32.mrf.mxu0
      %v6846 = vadd.f32 0.0, %v6845
      %6847 = vmatmul.bf16.gmra.mxu0 %v4342
      %v6848 = vpop.f32.mrf.mxu0
      %v6849 = vadd.f32 0.0, %v6848
      %v6850 = vpop.f32.mrf.mxu0
      %v6851 = vadd.f32 0.0, %v6850
      %6852 = vmatmul.bf16.gmra.mxu0 %v4345
      %v6853 = vpop.f32.mrf.mxu0
      %v6854 = vadd.f32 0.0, %v6853
      %v6855 = vpop.f32.mrf.mxu0
      %v6856 = vadd.f32 0.0, %v6855
      %6857 = vmatmul.bf16.gmra.mxu0 %v4348
      %v6858 = vpop.f32.mrf.mxu0
      %v6859 = vadd.f32 0.0, %v6858
      %v6860 = vpop.f32.mrf.mxu0
      %v6861 = vadd.f32 0.0, %v6860
      %6862 = vmatmul.bf16.gmra.mxu0 %v4351
      %v6863 = vpop.f32.mrf.mxu0
      %v6864 = vadd.f32 0.0, %v6863
      %v6865 = vpop.f32.mrf.mxu0
      %v6866 = vadd.f32 0.0, %v6865
      %6867 = vmatmul.bf16.gmra.mxu0 %v4354
      %v6868 = vpop.f32.mrf.mxu0
      %v6869 = vadd.f32 0.0, %v6868
      %v6870 = vpop.f32.mrf.mxu0
      %v6871 = vadd.f32 0.0, %v6870
      %6872 = vmatmul.bf16.gmra.mxu0 %v4357
      %v6873 = vpop.f32.mrf.mxu0
      %v6874 = vadd.f32 0.0, %v6873
      %v6875 = vpop.f32.mrf.mxu0
      %v6876 = vadd.f32 0.0, %v6875
      %6877 = vmatmul.bf16.gmra.mxu0 %v4360
      %v6878 = vpop.f32.mrf.mxu0
      %v6879 = vadd.f32 0.0, %v6878
      %v6880 = vpop.f32.mrf.mxu0
      %v6881 = vadd.f32 0.0, %v6880
      %6882 = vmatmul.bf16.gmra.mxu0 %v4363
      %v6883 = vpop.f32.mrf.mxu0
      %v6884 = vadd.f32 0.0, %v6883
      %v6885 = vpop.f32.mrf.mxu0
      %v6886 = vadd.f32 0.0, %v6885
      %6887 = vmatmul.bf16.gmra.mxu0 %v4366
      %v6888 = vpop.f32.mrf.mxu0
      %v6889 = vadd.f32 0.0, %v6888
      %v6890 = vpop.f32.mrf.mxu0
      %v6891 = vadd.f32 0.0, %v6890
      %6892 = vmatmul.bf16.gmra.mxu0 %v4369
      %v6893 = vpop.f32.mrf.mxu0
      %v6894 = vadd.f32 0.0, %v6893
      %v6895 = vpop.f32.mrf.mxu0
      %v6896 = vadd.f32 0.0, %v6895
      %6897 = vmatmul.bf16.gmra.mxu0 %v4372
      %v6898 = vpop.f32.mrf.mxu0
      %v6899 = vadd.f32 0.0, %v6898
      %v6900 = vpop.f32.mrf.mxu0
      %v6901 = vadd.f32 0.0, %v6900
      %6902 = vmatmul.bf16.gmra.mxu0 %v4375
      %v6903 = vpop.f32.mrf.mxu0
      %v6904 = vadd.f32 0.0, %v6903
      %v6905 = vpop.f32.mrf.mxu0
      %v6906 = vadd.f32 0.0, %v6905
      %6907 = vmatmul.bf16.gmra.mxu0 %v4378
      %v6908 = vpop.f32.mrf.mxu0
      %v6909 = vadd.f32 0.0, %v6908
      %v6910 = vpop.f32.mrf.mxu0
      %v6911 = vadd.f32 0.0, %v6910
      %6912 = vmatmul.bf16.gmra.mxu0 %v4381
      %v6913 = vpop.f32.mrf.mxu0
      %v6914 = vadd.f32 0.0, %v6913
      %v6915 = vpop.f32.mrf.mxu0
      %v6916 = vadd.f32 0.0, %v6915
      %6917 = vmatmul.bf16.gmra.mxu0 %v4384
      %v6918 = vpop.f32.mrf.mxu0
      %v6919 = vadd.f32 0.0, %v6918
      %v6920 = vpop.f32.mrf.mxu0
      %v6921 = vadd.f32 0.0, %v6920
      %6922 = vmatmul.bf16.gmra.mxu0 %v4387
      %v6923 = vpop.f32.mrf.mxu0
      %v6924 = vadd.f32 0.0, %v6923
      %v6925 = vpop.f32.mrf.mxu0
      %v6926 = vadd.f32 0.0, %v6925
      %6927 = vmatmul.bf16.gmra.mxu0 %v4390
      %v6928 = vpop.f32.mrf.mxu0
      %v6929 = vadd.f32 0.0, %v6928
      %v6930 = vpop.f32.mrf.mxu0
      %v6931 = vadd.f32 0.0, %v6930
      %6932 = vmatmul.bf16.gmra.mxu0 %v4393
      %v6933 = vpop.f32.mrf.mxu0
      %v6934 = vadd.f32 0.0, %v6933
      %v6935 = vpop.f32.mrf.mxu0
      %v6936 = vadd.f32 0.0, %v6935
      %6937 = vmatmul.bf16.gmra.mxu0 %v4396
      %v6938 = vpop.f32.mrf.mxu0
      %v6939 = vadd.f32 0.0, %v6938
      %v6940 = vpop.f32.mrf.mxu0
      %v6941 = vadd.f32 0.0, %v6940
      %6942 = vmatmul.bf16.gmra.mxu0 %v4399
      %v6943 = vpop.f32.mrf.mxu0
      %v6944 = vadd.f32 0.0, %v6943
      %v6945 = vpop.f32.mrf.mxu0
      %v6946 = vadd.f32 0.0, %v6945
      %6947 = vmatmul.bf16.gmra.mxu0 %v4402
      %v6948 = vpop.f32.mrf.mxu0
      %v6949 = vadd.f32 0.0, %v6948
      %v6950 = vpop.f32.mrf.mxu0
      %v6951 = vadd.f32 0.0, %v6950
      %6952 = vmatmul.bf16.gmra.mxu0 %v4405
      %v6953 = vpop.f32.mrf.mxu0
      %v6954 = vadd.f32 0.0, %v6953
      %v6955 = vpop.f32.mrf.mxu0
      %v6956 = vadd.f32 0.0, %v6955
      %6957 = vmatmul.bf16.gmra.mxu0 %v4408
      %v6958 = vpop.f32.mrf.mxu0
      %v6959 = vadd.f32 0.0, %v6958
      %v6960 = vpop.f32.mrf.mxu0
      %v6961 = vadd.f32 0.0, %v6960
      %6962 = vmatmul.bf16.gmra.mxu0 %v4411
      %v6963 = vpop.f32.mrf.mxu0
      %v6964 = vadd.f32 0.0, %v6963
      %v6965 = vpop.f32.mrf.mxu0
      %v6966 = vadd.f32 0.0, %v6965
      %6967 = vmatmul.bf16.gmra.mxu0 %v4414
      %v6968 = vpop.f32.mrf.mxu0
      %v6969 = vadd.f32 0.0, %v6968
      %v6970 = vpop.f32.mrf.mxu0
      %v6971 = vadd.f32 0.0, %v6970
      %6972 = vmatmul.bf16.gmra.mxu0 %v4417
      %v6973 = vpop.f32.mrf.mxu0
      %v6974 = vadd.f32 0.0, %v6973
      %v6975 = vpop.f32.mrf.mxu0
      %v6976 = vadd.f32 0.0, %v6975
      %6977 = vmatmul.bf16.gmra.mxu0 %v4420
      %v6978 = vpop.f32.mrf.mxu0
      %v6979 = vadd.f32 0.0, %v6978
      %v6980 = vpop.f32.mrf.mxu0
      %v6981 = vadd.f32 0.0, %v6980
      %6982 = vmatmul.bf16.gmra.mxu0 %v4423
      %v6983 = vpop.f32.mrf.mxu0
      %v6984 = vadd.f32 0.0, %v6983
      %v6985 = vpop.f32.mrf.mxu0
      %v6986 = vadd.f32 0.0, %v6985
      %6987 = vmatmul.bf16.gmra.mxu0 %v4426
      %v6988 = vpop.f32.mrf.mxu0
      %v6989 = vadd.f32 0.0, %v6988
      %v6990 = vpop.f32.mrf.mxu0
      %v6991 = vadd.f32 0.0, %v6990
      %6992 = vmatmul.bf16.gmra.mxu0 %v4429
      %v6993 = vpop.f32.mrf.mxu0
      %v6994 = vadd.f32 0.0, %v6993
      %v6995 = vpop.f32.mrf.mxu0
      %v6996 = vadd.f32 0.0, %v6995
      %6997 = vmatmul.bf16.gmra.mxu0 %v4432
      %v6998 = vpop.f32.mrf.mxu0
      %v6999 = vadd.f32 0.0, %v6998
      %v7000 = vpop.f32.mrf.mxu0
      %v7001 = vadd.f32 0.0, %v7000
      %7002 = vmatmul.bf16.gmra.mxu0 %v4435
      %v7003 = vpop.f32.mrf.mxu0
      %v7004 = vadd.f32 0.0, %v7003
      %v7005 = vpop.f32.mrf.mxu0
      %v7006 = vadd.f32 0.0, %v7005
      %7007 = vmatmul.bf16.gmra.mxu0 %v4438
      %v7008 = vpop.f32.mrf.mxu0
      %v7009 = vadd.f32 0.0, %v7008
      %v7010 = vpop.f32.mrf.mxu0
      %v7011 = vadd.f32 0.0, %v7010
      %7012 = vmatmul.bf16.gmra.mxu0 %v4441
      %v7013 = vpop.f32.mrf.mxu0
      %v7014 = vadd.f32 0.0, %v7013
      %v7015 = vpop.f32.mrf.mxu0
      %v7016 = vadd.f32 0.0, %v7015
      %7017 = vmatmul.bf16.gmra.mxu0 %v4444
      %v7018 = vpop.f32.mrf.mxu0
      %v7019 = vadd.f32 0.0, %v7018
      %v7020 = vpop.f32.mrf.mxu0
      %v7021 = vadd.f32 0.0, %v7020
      %7022 = vmatmul.bf16.gmra.mxu0 %v4447
      %v7023 = vpop.f32.mrf.mxu0
      %v7024 = vadd.f32 0.0, %v7023
      %v7025 = vpop.f32.mrf.mxu0
      %v7026 = vadd.f32 0.0, %v7025
      %7027 = vmatmul.bf16.gmra.mxu0 %v4450
      %v7028 = vpop.f32.mrf.mxu0
      %v7029 = vadd.f32 0.0, %v7028
      %v7030 = vpop.f32.mrf.mxu0
      %v7031 = vadd.f32 0.0, %v7030
      %7032 = vmatmul.bf16.gmra.mxu0 %v4453
      %v7033 = vpop.f32.mrf.mxu0
      %v7034 = vadd.f32 0.0, %v7033
      %v7035 = vpop.f32.mrf.mxu0
      %v7036 = vadd.f32 0.0, %v7035
      %7037 = vmatmul.bf16.gmra.mxu0 %v4456
      %v7038 = vpop.f32.mrf.mxu0
      %v7039 = vadd.f32 0.0, %v7038
      %v7040 = vpop.f32.mrf.mxu0
      %v7041 = vadd.f32 0.0, %v7040
      %7042 = vmatmul.bf16.gmra.mxu0 %v4459
      %v7043 = vpop.f32.mrf.mxu0
      %v7044 = vadd.f32 0.0, %v7043
      %v7045 = vpop.f32.mrf.mxu0
      %v7046 = vadd.f32 0.0, %v7045
      %7047 = vmatmul.bf16.gmra.mxu0 %v4462
      %v7048 = vpop.f32.mrf.mxu0
      %v7049 = vadd.f32 0.0, %v7048
      %v7050 = vpop.f32.mrf.mxu0
      %v7051 = vadd.f32 0.0, %v7050
      %7052 = vmatmul.bf16.gmra.mxu0 %v4465
      %v7053 = vpop.f32.mrf.mxu0
      %v7054 = vadd.f32 0.0, %v7053
      %v7055 = vpop.f32.mrf.mxu0
      %v7056 = vadd.f32 0.0, %v7055
      %7057 = vmatmul.bf16.gmra.mxu0 %v4468
      %v7058 = vpop.f32.mrf.mxu0
      %v7059 = vadd.f32 0.0, %v7058
      %v7060 = vpop.f32.mrf.mxu0
      %v7061 = vadd.f32 0.0, %v7060
      %7062 = vmatmul.bf16.gmra.mxu0 %v4471
      %v7063 = vpop.f32.mrf.mxu0
      %v7064 = vadd.f32 0.0, %v7063
      %v7065 = vpop.f32.mrf.mxu0
      %v7066 = vadd.f32 0.0, %v7065
      %7067 = vmatmul.bf16.gmra.mxu0 %v4474
      %v7068 = vpop.f32.mrf.mxu0
      %v7069 = vadd.f32 0.0, %v7068
      %v7070 = vpop.f32.mrf.mxu0
      %v7071 = vadd.f32 0.0, %v7070
      %7072 = vmatmul.bf16.gmra.mxu0 %v4477
      %v7073 = vpop.f32.mrf.mxu0
      %v7074 = vadd.f32 0.0, %v7073
      %v7075 = vpop.f32.mrf.mxu0
      %v7076 = vadd.f32 0.0, %v7075
      %7077 = vmatmul.bf16.gmra.mxu0 %v4480
      %v7078 = vpop.f32.mrf.mxu0
      %v7079 = vadd.f32 0.0, %v7078
      %v7080 = vpop.f32.mrf.mxu0
      %v7081 = vadd.f32 0.0, %v7080
      %7082 = vmatmul.bf16.gmra.mxu0 %v4483
      %v7083 = vpop.f32.mrf.mxu0
      %v7084 = vadd.f32 0.0, %v7083
      %v7085 = vpop.f32.mrf.mxu0
      %v7086 = vadd.f32 0.0, %v7085
      %7087 = vmatmul.bf16.gmra.mxu0 %v4486
      %v7088 = vpop.f32.mrf.mxu0
      %v7089 = vadd.f32 0.0, %v7088
      %v7090 = vpop.f32.mrf.mxu0
      %v7091 = vadd.f32 0.0, %v7090
      %7092 = vmatmul.bf16.gmra.mxu0 %v4489
      %v7093 = vpop.f32.mrf.mxu0
      %v7094 = vadd.f32 0.0, %v7093
      %v7095 = vpop.f32.mrf.mxu0
      %v7096 = vadd.f32 0.0, %v7095
      %7097 = vmatmul.bf16.gmra.mxu0 %v4492
      %v7098 = vpop.f32.mrf.mxu0
      %v7099 = vadd.f32 0.0, %v7098
      %v7100 = vpop.f32.mrf.mxu0
      %v7101 = vadd.f32 0.0, %v7100
      %7102 = vmatmul.bf16.gmra.mxu0 %v4495
      %v7103 = vpop.f32.mrf.mxu0
      %v7104 = vadd.f32 0.0, %v7103
      %v7105 = vpop.f32.mrf.mxu0
      %v7106 = vadd.f32 0.0, %v7105
      %7107 = vmatmul.bf16.gmra.mxu0 %v4498
      %v7108 = vpop.f32.mrf.mxu0
      %v7109 = vadd.f32 0.0, %v7108
      %v7110 = vpop.f32.mrf.mxu0
      %v7111 = vadd.f32 0.0, %v7110
      %7112 = vmatmul.bf16.gmra.mxu0 %v4501
      %v7113 = vpop.f32.mrf.mxu0
      %v7114 = vadd.f32 0.0, %v7113
      %v7115 = vpop.f32.mrf.mxu0
      %v7116 = vadd.f32 0.0, %v7115
      %7117 = vmatmul.bf16.gmra.mxu0 %v4504
      %v7118 = vpop.f32.mrf.mxu0
      %v7119 = vadd.f32 0.0, %v7118
      %v7120 = vpop.f32.mrf.mxu0
      %v7121 = vadd.f32 0.0, %v7120
      %7122 = vmatmul.bf16.gmra.mxu0 %v4507
      %v7123 = vpop.f32.mrf.mxu0
      %v7124 = vadd.f32 0.0, %v7123
      %v7125 = vpop.f32.mrf.mxu0
      %v7126 = vadd.f32 0.0, %v7125
      %7127 = vmatmul.bf16.gmra.mxu0 %v4510
      %v7128 = vpop.f32.mrf.mxu0
      %v7129 = vadd.f32 0.0, %v7128
      %v7130 = vpop.f32.mrf.mxu0
      %v7131 = vadd.f32 0.0, %v7130
      %7132 = vmatmul.bf16.gmra.mxu0 %v4513
      %v7133 = vpop.f32.mrf.mxu0
      %v7134 = vadd.f32 0.0, %v7133
      %v7135 = vpop.f32.mrf.mxu0
      %v7136 = vadd.f32 0.0, %v7135
      %7137 = vmatmul.bf16.gmra.mxu0 %v4516
      %v7138 = vpop.f32.mrf.mxu0
      %v7139 = vadd.f32 0.0, %v7138
      %v7140 = vpop.f32.mrf.mxu0
      %v7141 = vadd.f32 0.0, %v7140
      %7142 = vmatmul.bf16.gmra.mxu0 %v4519
      %v7143 = vpop.f32.mrf.mxu0
      %v7144 = vadd.f32 0.0, %v7143
      %v7145 = vpop.f32.mrf.mxu0
      %v7146 = vadd.f32 0.0, %v7145
      %7147 = vmatmul.bf16.gmra.mxu0 %v4522
      %v7148 = vpop.f32.mrf.mxu0
      %v7149 = vadd.f32 0.0, %v7148
      %v7150 = vpop.f32.mrf.mxu0
      %v7151 = vadd.f32 0.0, %v7150
      %7152 = vmatmul.bf16.gmra.mxu0 %v4525
      %v7153 = vpop.f32.mrf.mxu0
      %v7154 = vadd.f32 0.0, %v7153
      %v7155 = vpop.f32.mrf.mxu0
      %v7156 = vadd.f32 0.0, %v7155
      %7157 = vmatmul.bf16.gmra.mxu0 %v4528
      %v7158 = vpop.f32.mrf.mxu0
      %v7159 = vadd.f32 0.0, %v7158
      %v7160 = vpop.f32.mrf.mxu0
      %v7161 = vadd.f32 0.0, %v7160
      %7162 = vmatmul.bf16.gmra.mxu0 %v4531
      %v7163 = vpop.f32.mrf.mxu0
      %v7164 = vadd.f32 0.0, %v7163
      %v7165 = vpop.f32.mrf.mxu0
      %v7166 = vadd.f32 0.0, %v7165
      %7167 = vmatmul.bf16.gmra.mxu0 %v4534
      %v7168 = vpop.f32.mrf.mxu0
      %v7169 = vadd.f32 0.0, %v7168
      %v7170 = vpop.f32.mrf.mxu0
      %v7171 = vadd.f32 0.0, %v7170
      %7172 = vmatmul.bf16.gmra.mxu0 %v4537
      %v7173 = vpop.f32.mrf.mxu0
      %v7174 = vadd.f32 0.0, %v7173
      %v7175 = vpop.f32.mrf.mxu0
      %v7176 = vadd.f32 0.0, %v7175
      %7177 = vmatmul.bf16.gmra.mxu0 %v4540
      %v7178 = vpop.f32.mrf.mxu0
      %v7179 = vadd.f32 0.0, %v7178
      %v7180 = vpop.f32.mrf.mxu0
      %v7181 = vadd.f32 0.0, %v7180
      %7182 = vmatmul.bf16.gmra.mxu0 %v4543
      %v7183 = vpop.f32.mrf.mxu0
      %v7184 = vadd.f32 0.0, %v7183
      %v7185 = vpop.f32.mrf.mxu0
      %v7186 = vadd.f32 0.0, %v7185
      %7187 = vmatmul.bf16.gmra.mxu0 %v4546
      %v7188 = vpop.f32.mrf.mxu0
      %v7189 = vadd.f32 0.0, %v7188
      %v7190 = vpop.f32.mrf.mxu0
      %v7191 = vadd.f32 0.0, %v7190
      %7192 = vmatmul.bf16.gmra.mxu0 %v4549
      %v7193 = vpop.f32.mrf.mxu0
      %v7194 = vadd.f32 0.0, %v7193
      %v7195 = vpop.f32.mrf.mxu0
      %v7196 = vadd.f32 0.0, %v7195
      %7197 = vmatmul.bf16.gmra.mxu0 %v4552
      %v7198 = vpop.f32.mrf.mxu0
      %v7199 = vadd.f32 0.0, %v7198
      %v7200 = vpop.f32.mrf.mxu0
      %v7201 = vadd.f32 0.0, %v7200
      %7202 = vmatmul.bf16.gmra.mxu0 %v4555
      %v7203 = vpop.f32.mrf.mxu0
      %v7204 = vadd.f32 0.0, %v7203
      %v7205 = vpop.f32.mrf.mxu0
      %v7206 = vadd.f32 0.0, %v7205
      %7207 = vmatmul.bf16.gmra.mxu0 %v4558
      %v7208 = vpop.f32.mrf.mxu0
      %v7209 = vadd.f32 0.0, %v7208
      %v7210 = vpop.f32.mrf.mxu0
      %v7211 = vadd.f32 0.0, %v7210
      %7212 = vmatmul.bf16.gmra.mxu0 %v4561
      %v7213 = vpop.f32.mrf.mxu0
      %v7214 = vadd.f32 0.0, %v7213
      %v7215 = vpop.f32.mrf.mxu0
      %v7216 = vadd.f32 0.0, %v7215
      %7217 = vmatmul.bf16.gmra.mxu0 %v4564
      %v7218 = vpop.f32.mrf.mxu0
      %v7219 = vadd.f32 0.0, %v7218
      %v7220 = vpop.f32.mrf.mxu0
      %v7221 = vadd.f32 0.0, %v7220
      %7222 = vmatmul.bf16.gmra.mxu0 %v4567
      %v7223 = vpop.f32.mrf.mxu0
      %v7224 = vadd.f32 0.0, %v7223
      %v7225 = vpop.f32.mrf.mxu0
      %v7226 = vadd.f32 0.0, %v7225
      %7227 = vmatmul.bf16.gmra.mxu0 %v4570
      %v7228 = vpop.f32.mrf.mxu0
      %v7229 = vadd.f32 0.0, %v7228
      %v7230 = vpop.f32.mrf.mxu0
      %v7231 = vadd.f32 0.0, %v7230
      %7232 = vmatmul.bf16.gmra.mxu0 %v4573
      %v7233 = vpop.f32.mrf.mxu0
      %v7234 = vadd.f32 0.0, %v7233
      %v7235 = vpop.f32.mrf.mxu0
      %v7236 = vadd.f32 0.0, %v7235
      %7237 = vmatmul.bf16.gmra.mxu0 %v4576
      %v7238 = vpop.f32.mrf.mxu0
      %v7239 = vadd.f32 0.0, %v7238
      %v7240 = vpop.f32.mrf.mxu0
      %v7241 = vadd.f32 0.0, %v7240
      %7242 = vmatmul.bf16.gmra.mxu0 %v4579
      %v7243 = vpop.f32.mrf.mxu0
      %v7244 = vadd.f32 0.0, %v7243
      %v7245 = vpop.f32.mrf.mxu0
      %v7246 = vadd.f32 0.0, %v7245
      %7247 = vmatmul.bf16.gmra.mxu0 %v4582
      %v7248 = vpop.f32.mrf.mxu0
      %v7249 = vadd.f32 0.0, %v7248
      %v7250 = vpop.f32.mrf.mxu0
      %v7251 = vadd.f32 0.0, %v7250
      %7252 = vmatmul.bf16.gmra.mxu0 %v4585
      %v7253 = vpop.f32.mrf.mxu0
      %v7254 = vadd.f32 0.0, %v7253
      %v7255 = vpop.f32.mrf.mxu0
      %v7256 = vadd.f32 0.0, %v7255
      %7257 = vmatmul.bf16.gmra.mxu0 %v4588
      %v7258 = vpop.f32.mrf.mxu0
      %v7259 = vadd.f32 0.0, %v7258
      %v7260 = vpop.f32.mrf.mxu0
      %v7261 = vadd.f32 0.0, %v7260
      %7262 = vmatmul.bf16.gmra.mxu0 %v4591
      %v7263 = vpop.f32.mrf.mxu0
      %v7264 = vadd.f32 0.0, %v7263
      %v7265 = vpop.f32.mrf.mxu0
      %v7266 = vadd.f32 0.0, %v7265
      %7267 = vmatmul.bf16.gmra.mxu0 %v4594
      %v7268 = vpop.f32.mrf.mxu0
      %v7269 = vadd.f32 0.0, %v7268
      %v7270 = vpop.f32.mrf.mxu0
      %v7271 = vadd.f32 0.0, %v7270
      %7272 = vmatmul.bf16.gmra.mxu0 %v4597
      %v7273 = vpop.f32.mrf.mxu0
      %v7274 = vadd.f32 0.0, %v7273
      %v7275 = vpop.f32.mrf.mxu0
      %v7276 = vadd.f32 0.0, %v7275
      %7277 = vmatmul.bf16.gmra.mxu0 %v4600
      %v7278 = vpop.f32.mrf.mxu0
      %v7279 = vadd.f32 0.0, %v7278
      %v7280 = vpop.f32.mrf.mxu0
      %v7281 = vadd.f32 0.0, %v7280
      %7282 = vmatmul.bf16.gmra.mxu0 %v4603
      %v7283 = vpop.f32.mrf.mxu0
      %v7284 = vadd.f32 0.0, %v7283
      %v7285 = vpop.f32.mrf.mxu0
      %v7286 = vadd.f32 0.0, %v7285
      %7287 = vmatmul.bf16.gmra.mxu0 %v4606
      %v7288 = vpop.f32.mrf.mxu0
      %v7289 = vadd.f32 0.0, %v7288
      %v7290 = vpop.f32.mrf.mxu0
      %v7291 = vadd.f32 0.0, %v7290
      %7292 = vmatmul.bf16.gmra.mxu0 %v4609
      %v7293 = vpop.f32.mrf.mxu0
      %v7294 = vadd.f32 0.0, %v7293
      %v7295 = vpop.f32.mrf.mxu0
      %v7296 = vadd.f32 0.0, %v7295
      %7297 = vmatmul.bf16.gmra.mxu0 %v4612
      %v7298 = vpop.f32.mrf.mxu0
      %v7299 = vadd.f32 0.0, %v7298
      %v7300 = vpop.f32.mrf.mxu0
      %v7301 = vadd.f32 0.0, %v7300
      %7302 = vmatmul.bf16.gmra.mxu0 %v4615
      %v7303 = vpop.f32.mrf.mxu0
      %v7304 = vadd.f32 0.0, %v7303
      %v7305 = vpop.f32.mrf.mxu0
      %v7306 = vadd.f32 0.0, %v7305
      %7307 = vmatmul.bf16.gmra.mxu0 %v4618
      %v7308 = vpop.f32.mrf.mxu0
      %v7309 = vadd.f32 0.0, %v7308
      %v7310 = vpop.f32.mrf.mxu0
      %v7311 = vadd.f32 0.0, %v7310
      %7312 = vmatmul.bf16.gmra.mxu0 %v4621
      %v7313 = vpop.f32.mrf.mxu0
      %v7314 = vadd.f32 0.0, %v7313
      %v7315 = vpop.f32.mrf.mxu0
      %v7316 = vadd.f32 0.0, %v7315
      %7317 = vmatmul.bf16.gmra.mxu0 %v4624
      %v7318 = vpop.f32.mrf.mxu0
      %v7319 = vadd.f32 0.0, %v7318
      %v7320 = vpop.f32.mrf.mxu0
      %v7321 = vadd.f32 0.0, %v7320
      %7322 = vmatmul.bf16.gmra.mxu0 %v4627
      %v7323 = vpop.f32.mrf.mxu0
      %v7324 = vadd.f32 0.0, %v7323
      %v7325 = vpop.f32.mrf.mxu0
      %v7326 = vadd.f32 0.0, %v7325
      %7327 = vmatmul.bf16.gmra.mxu0 %v4630
      %v7328 = vpop.f32.mrf.mxu0
      %v7329 = vadd.f32 0.0, %v7328
      %v7330 = vpop.f32.mrf.mxu0
      %v7331 = vadd.f32 0.0, %v7330
      %7332 = vmatmul.bf16.gmra.mxu0 %v4633
      %v7333 = vpop.f32.mrf.mxu0
      %v7334 = vadd.f32 0.0, %v7333
      %v7335 = vpop.f32.mrf.mxu0
      %v7336 = vadd.f32 0.0, %v7335
      %7337 = vmatmul.bf16.gmra.mxu0 %v4636
      %v7338 = vpop.f32.mrf.mxu0
      %v7339 = vadd.f32 0.0, %v7338
      %v7340 = vpop.f32.mrf.mxu0
      %v7341 = vadd.f32 0.0, %v7340
      %7342 = vmatmul.bf16.gmra.mxu0 %v4639
      %v7343 = vpop.f32.mrf.mxu0
      %v7344 = vadd.f32 0.0, %v7343
      %v7345 = vpop.f32.mrf.mxu0
      %v7346 = vadd.f32 0.0, %v7345
      %7347 = vmatmul.bf16.gmra.mxu0 %v4642
      %v7348 = vpop.f32.mrf.mxu0
      %v7349 = vadd.f32 0.0, %v7348
      %v7350 = vpop.f32.mrf.mxu0
      %v7351 = vadd.f32 0.0, %v7350
      %7352 = vmatmul.bf16.gmra.mxu0 %v4645
      %v7353 = vpop.f32.mrf.mxu0
      %v7354 = vadd.f32 0.0, %v7353
      %v7355 = vpop.f32.mrf.mxu0
      %v7356 = vadd.f32 0.0, %v7355
      %7357 = vmatmul.bf16.gmra.mxu0 %v4648
      %v7358 = vpop.f32.mrf.mxu0
      %v7359 = vadd.f32 0.0, %v7358
      %v7360 = vpop.f32.mrf.mxu0
      %v7361 = vadd.f32 0.0, %v7360
      %7362 = vmatmul.bf16.gmra.mxu0 %v4651
      %v7363 = vpop.f32.mrf.mxu0
      %v7364 = vadd.f32 0.0, %v7363
      %v7365 = vpop.f32.mrf.mxu0
      %v7366 = vadd.f32 0.0, %v7365
      %7367 = vmatmul.bf16.gmra.mxu0 %v4654
      %v7368 = vpop.f32.mrf.mxu0
      %v7369 = vadd.f32 0.0, %v7368
      %v7370 = vpop.f32.mrf.mxu0
      %v7371 = vadd.f32 0.0, %v7370
      %7372 = vmatmul.bf16.gmra.mxu0 %v4657
      %v7373 = vpop.f32.mrf.mxu0
      %v7374 = vadd.f32 0.0, %v7373
      %v7375 = vpop.f32.mrf.mxu0
      %v7376 = vadd.f32 0.0, %v7375
      %7377 = vmatmul.bf16.gmra.mxu0 %v4660
      %v7378 = vpop.f32.mrf.mxu0
      %v7379 = vadd.f32 0.0, %v7378
      %v7380 = vpop.f32.mrf.mxu0
      %v7381 = vadd.f32 0.0, %v7380
      %7382 = vmatmul.bf16.gmra.mxu0 %v4663
      %v7383 = vpop.f32.mrf.mxu0
      %v7384 = vadd.f32 0.0, %v7383
      %v7385 = vpop.f32.mrf.mxu0
      %v7386 = vadd.f32 0.0, %v7385
      %7387 = vmatmul.bf16.gmra.mxu0 %v4666
      %v7388 = vpop.f32.mrf.mxu0
      %v7389 = vadd.f32 0.0, %v7388
      %v7390 = vpop.f32.mrf.mxu0
      %v7391 = vadd.f32 0.0, %v7390
      %7392 = vmatmul.bf16.gmra.mxu0 %v4669
      %v7393 = vpop.f32.mrf.mxu0
      %v7394 = vadd.f32 0.0, %v7393
      %v7395 = vpop.f32.mrf.mxu0
      %v7396 = vadd.f32 0.0, %v7395
      %7397 = vmatmul.bf16.gmra.mxu0 %v4672
      %v7398 = vpop.f32.mrf.mxu0
      %v7399 = vadd.f32 0.0, %v7398
      %v7400 = vpop.f32.mrf.mxu0
      %v7401 = vadd.f32 0.0, %v7400
      %7402 = vmatmul.bf16.gmra.mxu0 %v4675
      %v7403 = vpop.f32.mrf.mxu0
      %v7404 = vadd.f32 0.0, %v7403
      %v7405 = vpop.f32.mrf.mxu0
      %v7406 = vadd.f32 0.0, %v7405
      %7407 = vmatmul.bf16.gmra.mxu0 %v4678
      %v7408 = vpop.f32.mrf.mxu0
      %v7409 = vadd.f32 0.0, %v7408
      %v7410 = vpop.f32.mrf.mxu0
      %v7411 = vadd.f32 0.0, %v7410
      %7412 = vmatmul.bf16.gmra.mxu0 %v4681
      %v7413 = vpop.f32.mrf.mxu0
      %v7414 = vadd.f32 0.0, %v7413
      %v7415 = vpop.f32.mrf.mxu0
      %v7416 = vadd.f32 0.0, %v7415
      %7417 = vmatmul.bf16.gmra.mxu0 %v4684
      %v7418 = vpop.f32.mrf.mxu0
      %v7419 = vadd.f32 0.0, %v7418
      %v7420 = vpop.f32.mrf.mxu0
      %v7421 = vadd.f32 0.0, %v7420
      %7422 = vmatmul.bf16.gmra.mxu0 %v4687
      %v7423 = vpop.f32.mrf.mxu0
      %v7424 = vadd.f32 0.0, %v7423
      %v7425 = vpop.f32.mrf.mxu0
      %v7426 = vadd.f32 0.0, %v7425
      %7427 = vmatmul.bf16.gmra.mxu0 %v4690
      %v7428 = vpop.f32.mrf.mxu0
      %v7429 = vadd.f32 0.0, %v7428
      %v7430 = vpop.f32.mrf.mxu0
      %v7431 = vadd.f32 0.0, %v7430
      %7432 = vmatmul.bf16.gmra.mxu0 %v4693
      %v7433 = vpop.f32.mrf.mxu0
      %v7434 = vadd.f32 0.0, %v7433
      %v7435 = vpop.f32.mrf.mxu0
      %v7436 = vadd.f32 0.0, %v7435
      %7437 = vmatmul.bf16.gmra.mxu0 %v4696
      %v7438 = vpop.f32.mrf.mxu0
      %v7439 = vadd.f32 0.0, %v7438
      %v7440 = vpop.f32.mrf.mxu0
      %v7441 = vadd.f32 0.0, %v7440
      %7442 = vmatmul.bf16.gmra.mxu0 %v4699
      %v7443 = vpop.f32.mrf.mxu0
      %v7444 = vadd.f32 0.0, %v7443
      %v7445 = vpop.f32.mrf.mxu0
      %v7446 = vadd.f32 0.0, %v7445
      %7447 = vmatmul.bf16.gmra.mxu0 %v4702
      %v7448 = vpop.f32.mrf.mxu0
      %v7449 = vadd.f32 0.0, %v7448
      %v7450 = vpop.f32.mrf.mxu0
      %7451 = vdwg.mxu0
      %7452 = vmatpush.bf16.msra.mxu0 %v5318
      %7453 = vmatpush.bf16.msra.mxu0 %v5317
      %7454 = vmatpush.bf16.msra.mxu0 %v5316
      %7455 = vmatpush.bf16.msra.mxu0 %v5315
      %7456 = vmatpush.bf16.msra.mxu0 %v5314
      %7457 = vmatpush.bf16.msra.mxu0 %v5313
      %7458 = vmatpush.bf16.msra.mxu0 %v5312
      %7459 = vmatpush.bf16.msra.mxu0 %v5311
      %7460 = vmatmul.bf16.gmra.mxu0 %v3917
      %v7461 = vpop.f32.mrf.mxu0
      %v7462 = vadd.f32 %v6139, %v7461
      %v7463 = vpop.f32.mrf.mxu0
      %v7464 = vadd.f32 %v6141, %v7463
      %7465 = vmatmul.bf16.gmra.mxu0 %v3920
      %v7466 = vpop.f32.mrf.mxu0
      %v7467 = vadd.f32 %v6144, %v7466
      %v7468 = vpop.f32.mrf.mxu0
      %v7469 = vadd.f32 %v6146, %v7468
      %7470 = vmatmul.bf16.gmra.mxu0 %v3923
      %v7471 = vpop.f32.mrf.mxu0
      %v7472 = vadd.f32 %v6149, %v7471
      %v7473 = vpop.f32.mrf.mxu0
      %v7474 = vadd.f32 %v6151, %v7473
      %7475 = vmatmul.bf16.gmra.mxu0 %v3926
      %v7476 = vpop.f32.mrf.mxu0
      %v7477 = vadd.f32 %v6154, %v7476
      %v7478 = vpop.f32.mrf.mxu0
      %v7479 = vadd.f32 %v6156, %v7478
      %7480 = vmatmul.bf16.gmra.mxu0 %v3929
      %v7481 = vpop.f32.mrf.mxu0
      %v7482 = vadd.f32 %v6159, %v7481
      %v7483 = vpop.f32.mrf.mxu0
      %v7484 = vadd.f32 %v6161, %v7483
      %7485 = vmatmul.bf16.gmra.mxu0 %v3932
      %v7486 = vpop.f32.mrf.mxu0
      %v7487 = vadd.f32 %v6164, %v7486
      %v7488 = vpop.f32.mrf.mxu0
      %v7489 = vadd.f32 %v6166, %v7488
      %7490 = vmatmul.bf16.gmra.mxu0 %v3935
      %v7491 = vpop.f32.mrf.mxu0
      %v7492 = vadd.f32 %v6169, %v7491
      %v7493 = vpop.f32.mrf.mxu0
      %v7494 = vadd.f32 %v6171, %v7493
      %7495 = vmatmul.bf16.gmra.mxu0 %v3938
      %v7496 = vpop.f32.mrf.mxu0
      %v7497 = vadd.f32 %v6174, %v7496
      %v7498 = vpop.f32.mrf.mxu0
      %v7499 = vadd.f32 %v6176, %v7498
      %7500 = vmatmul.bf16.gmra.mxu0 %v3941
      %v7501 = vpop.f32.mrf.mxu0
      %v7502 = vadd.f32 %v6179, %v7501
      %v7503 = vpop.f32.mrf.mxu0
      %v7504 = vadd.f32 %v6181, %v7503
      %7505 = vmatmul.bf16.gmra.mxu0 %v3944
      %v7506 = vpop.f32.mrf.mxu0
      %v7507 = vadd.f32 %v6184, %v7506
      %v7508 = vpop.f32.mrf.mxu0
      %v7509 = vadd.f32 %v6186, %v7508
      %7510 = vmatmul.bf16.gmra.mxu0 %v3947
      %v7511 = vpop.f32.mrf.mxu0
      %v7512 = vadd.f32 %v6189, %v7511
      %v7513 = vpop.f32.mrf.mxu0
      %v7514 = vadd.f32 %v6191, %v7513
      %7515 = vmatmul.bf16.gmra.mxu0 %v3950
      %v7516 = vpop.f32.mrf.mxu0
      %v7517 = vadd.f32 %v6194, %v7516
      %v7518 = vpop.f32.mrf.mxu0
      %v7519 = vadd.f32 %v6196, %v7518
      %7520 = vmatmul.bf16.gmra.mxu0 %v3953
      %v7521 = vpop.f32.mrf.mxu0
      %v7522 = vadd.f32 %v6199, %v7521
      %v7523 = vpop.f32.mrf.mxu0
      %v7524 = vadd.f32 %v6201, %v7523
      %7525 = vmatmul.bf16.gmra.mxu0 %v3956
      %v7526 = vpop.f32.mrf.mxu0
      %v7527 = vadd.f32 %v6204, %v7526
      %v7528 = vpop.f32.mrf.mxu0
      %v7529 = vadd.f32 %v6206, %v7528
      %7530 = vmatmul.bf16.gmra.mxu0 %v3959
      %v7531 = vpop.f32.mrf.mxu0
      %v7532 = vadd.f32 %v6209, %v7531
      %v7533 = vpop.f32.mrf.mxu0
      %v7534 = vadd.f32 %v6211, %v7533
      %7535 = vmatmul.bf16.gmra.mxu0 %v3962
      %v7536 = vpop.f32.mrf.mxu0
      %v7537 = vadd.f32 %v6214, %v7536
      %v7538 = vpop.f32.mrf.mxu0
      %v7539 = vadd.f32 %v6216, %v7538
      %7540 = vmatmul.bf16.gmra.mxu0 %v3965
      %v7541 = vpop.f32.mrf.mxu0
      %v7542 = vadd.f32 %v6219, %v7541
      %v7543 = vpop.f32.mrf.mxu0
      %v7544 = vadd.f32 %v6221, %v7543
      %7545 = vmatmul.bf16.gmra.mxu0 %v3968
      %v7546 = vpop.f32.mrf.mxu0
      %v7547 = vadd.f32 %v6224, %v7546
      %v7548 = vpop.f32.mrf.mxu0
      %v7549 = vadd.f32 %v6226, %v7548
      %7550 = vmatmul.bf16.gmra.mxu0 %v3971
      %v7551 = vpop.f32.mrf.mxu0
      %v7552 = vadd.f32 %v6229, %v7551
      %v7553 = vpop.f32.mrf.mxu0
      %v7554 = vadd.f32 %v6231, %v7553
      %7555 = vmatmul.bf16.gmra.mxu0 %v3974
      %v7556 = vpop.f32.mrf.mxu0
      %v7557 = vadd.f32 %v6234, %v7556
      %v7558 = vpop.f32.mrf.mxu0
      %v7559 = vadd.f32 %v6236, %v7558
      %7560 = vmatmul.bf16.gmra.mxu0 %v3977
      %v7561 = vpop.f32.mrf.mxu0
      %v7562 = vadd.f32 %v6239, %v7561
      %v7563 = vpop.f32.mrf.mxu0
      %v7564 = vadd.f32 %v6241, %v7563
      %7565 = vmatmul.bf16.gmra.mxu0 %v3980
      %v7566 = vpop.f32.mrf.mxu0
      %v7567 = vadd.f32 %v6244, %v7566
      %v7568 = vpop.f32.mrf.mxu0
      %v7569 = vadd.f32 %v6246, %v7568
      %7570 = vmatmul.bf16.gmra.mxu0 %v3983
      %v7571 = vpop.f32.mrf.mxu0
      %v7572 = vadd.f32 %v6249, %v7571
      %v7573 = vpop.f32.mrf.mxu0
      %v7574 = vadd.f32 %v6251, %v7573
      %7575 = vmatmul.bf16.gmra.mxu0 %v3986
      %v7576 = vpop.f32.mrf.mxu0
      %v7577 = vadd.f32 %v6254, %v7576
      %v7578 = vpop.f32.mrf.mxu0
      %v7579 = vadd.f32 %v6256, %v7578
      %7580 = vmatmul.bf16.gmra.mxu0 %v3989
      %v7581 = vpop.f32.mrf.mxu0
      %v7582 = vadd.f32 %v6259, %v7581
      %v7583 = vpop.f32.mrf.mxu0
      %v7584 = vadd.f32 %v6261, %v7583
      %7585 = vmatmul.bf16.gmra.mxu0 %v3992
      %v7586 = vpop.f32.mrf.mxu0
      %v7587 = vadd.f32 %v6264, %v7586
      %v7588 = vpop.f32.mrf.mxu0
      %v7589 = vadd.f32 %v6266, %v7588
      %7590 = vmatmul.bf16.gmra.mxu0 %v3995
      %v7591 = vpop.f32.mrf.mxu0
      %v7592 = vadd.f32 %v6269, %v7591
      %v7593 = vpop.f32.mrf.mxu0
      %v7594 = vadd.f32 %v6271, %v7593
      %7595 = vmatmul.bf16.gmra.mxu0 %v3998
      %v7596 = vpop.f32.mrf.mxu0
      %v7597 = vadd.f32 %v6274, %v7596
      %v7598 = vpop.f32.mrf.mxu0
      %v7599 = vadd.f32 %v6276, %v7598
      %7600 = vmatmul.bf16.gmra.mxu0 %v4001
      %v7601 = vpop.f32.mrf.mxu0
      %v7602 = vadd.f32 %v6279, %v7601
      %v7603 = vpop.f32.mrf.mxu0
      %v7604 = vadd.f32 %v6281, %v7603
      %7605 = vmatmul.bf16.gmra.mxu0 %v4004
      %v7606 = vpop.f32.mrf.mxu0
      %v7607 = vadd.f32 %v6284, %v7606
      %v7608 = vpop.f32.mrf.mxu0
      %v7609 = vadd.f32 %v6286, %v7608
      %7610 = vmatmul.bf16.gmra.mxu0 %v4007
      %v7611 = vpop.f32.mrf.mxu0
      %v7612 = vadd.f32 %v6289, %v7611
      %v7613 = vpop.f32.mrf.mxu0
      %v7614 = vadd.f32 %v6291, %v7613
      %7615 = vmatmul.bf16.gmra.mxu0 %v4010
      %v7616 = vpop.f32.mrf.mxu0
      %v7617 = vadd.f32 %v6294, %v7616
      %v7618 = vpop.f32.mrf.mxu0
      %v7619 = vadd.f32 %v6296, %v7618
      %7620 = vmatmul.bf16.gmra.mxu0 %v4013
      %v7621 = vpop.f32.mrf.mxu0
      %v7622 = vadd.f32 %v6299, %v7621
      %v7623 = vpop.f32.mrf.mxu0
      %v7624 = vadd.f32 %v6301, %v7623
      %7625 = vmatmul.bf16.gmra.mxu0 %v4016
      %v7626 = vpop.f32.mrf.mxu0
      %v7627 = vadd.f32 %v6304, %v7626
      %v7628 = vpop.f32.mrf.mxu0
      %v7629 = vadd.f32 %v6306, %v7628
      %7630 = vmatmul.bf16.gmra.mxu0 %v4019
      %v7631 = vpop.f32.mrf.mxu0
      %v7632 = vadd.f32 %v6309, %v7631
      %v7633 = vpop.f32.mrf.mxu0
      %v7634 = vadd.f32 %v6311, %v7633
      %7635 = vmatmul.bf16.gmra.mxu0 %v4022
      %v7636 = vpop.f32.mrf.mxu0
      %v7637 = vadd.f32 %v6314, %v7636
      %v7638 = vpop.f32.mrf.mxu0
      %v7639 = vadd.f32 %v6316, %v7638
      %7640 = vmatmul.bf16.gmra.mxu0 %v4025
      %v7641 = vpop.f32.mrf.mxu0
      %v7642 = vadd.f32 %v6319, %v7641
      %v7643 = vpop.f32.mrf.mxu0
      %v7644 = vadd.f32 %v6321, %v7643
      %7645 = vmatmul.bf16.gmra.mxu0 %v4028
      %v7646 = vpop.f32.mrf.mxu0
      %v7647 = vadd.f32 %v6324, %v7646
      %v7648 = vpop.f32.mrf.mxu0
      %v7649 = vadd.f32 %v6326, %v7648
      %7650 = vmatmul.bf16.gmra.mxu0 %v4031
      %v7651 = vpop.f32.mrf.mxu0
      %v7652 = vadd.f32 %v6329, %v7651
      %v7653 = vpop.f32.mrf.mxu0
      %v7654 = vadd.f32 %v6331, %v7653
      %7655 = vmatmul.bf16.gmra.mxu0 %v4034
      %v7656 = vpop.f32.mrf.mxu0
      %v7657 = vadd.f32 %v6334, %v7656
      %v7658 = vpop.f32.mrf.mxu0
      %v7659 = vadd.f32 %v6336, %v7658
      %7660 = vmatmul.bf16.gmra.mxu0 %v4037
      %v7661 = vpop.f32.mrf.mxu0
      %v7662 = vadd.f32 %v6339, %v7661
      %v7663 = vpop.f32.mrf.mxu0
      %v7664 = vadd.f32 %v6341, %v7663
      %7665 = vmatmul.bf16.gmra.mxu0 %v4040
      %v7666 = vpop.f32.mrf.mxu0
      %v7667 = vadd.f32 %v6344, %v7666
      %v7668 = vpop.f32.mrf.mxu0
      %v7669 = vadd.f32 %v6346, %v7668
      %7670 = vmatmul.bf16.gmra.mxu0 %v4043
      %v7671 = vpop.f32.mrf.mxu0
      %v7672 = vadd.f32 %v6349, %v7671
      %v7673 = vpop.f32.mrf.mxu0
      %v7674 = vadd.f32 %v6351, %v7673
      %7675 = vmatmul.bf16.gmra.mxu0 %v4046
      %v7676 = vpop.f32.mrf.mxu0
      %v7677 = vadd.f32 %v6354, %v7676
      %v7678 = vpop.f32.mrf.mxu0
      %v7679 = vadd.f32 %v6356, %v7678
      %7680 = vmatmul.bf16.gmra.mxu0 %v4049
      %v7681 = vpop.f32.mrf.mxu0
      %v7682 = vadd.f32 %v6359, %v7681
      %v7683 = vpop.f32.mrf.mxu0
      %v7684 = vadd.f32 %v6361, %v7683
      %7685 = vmatmul.bf16.gmra.mxu0 %v4052
      %v7686 = vpop.f32.mrf.mxu0
      %v7687 = vadd.f32 %v6364, %v7686
      %v7688 = vpop.f32.mrf.mxu0
      %v7689 = vadd.f32 %v6366, %v7688
      %7690 = vmatmul.bf16.gmra.mxu0 %v4055
      %v7691 = vpop.f32.mrf.mxu0
      %v7692 = vadd.f32 %v6369, %v7691
      %v7693 = vpop.f32.mrf.mxu0
      %v7694 = vadd.f32 %v6371, %v7693
      %7695 = vmatmul.bf16.gmra.mxu0 %v4058
      %v7696 = vpop.f32.mrf.mxu0
      %v7697 = vadd.f32 %v6374, %v7696
      %v7698 = vpop.f32.mrf.mxu0
      %v7699 = vadd.f32 %v6376, %v7698
      %7700 = vmatmul.bf16.gmra.mxu0 %v4061
      %v7701 = vpop.f32.mrf.mxu0
      %v7702 = vadd.f32 %v6379, %v7701
      %v7703 = vpop.f32.mrf.mxu0
      %v7704 = vadd.f32 %v6381, %v7703
      %7705 = vmatmul.bf16.gmra.mxu0 %v4064
      %v7706 = vpop.f32.mrf.mxu0
      %v7707 = vadd.f32 %v6384, %v7706
      %v7708 = vpop.f32.mrf.mxu0
      %v7709 = vadd.f32 %v6386, %v7708
      %7710 = vmatmul.bf16.gmra.mxu0 %v4067
      %v7711 = vpop.f32.mrf.mxu0
      %v7712 = vadd.f32 %v6389, %v7711
      %v7713 = vpop.f32.mrf.mxu0
      %v7714 = vadd.f32 %v6391, %v7713
      %7715 = vmatmul.bf16.gmra.mxu0 %v4070
      %v7716 = vpop.f32.mrf.mxu0
      %v7717 = vadd.f32 %v6394, %v7716
      %v7718 = vpop.f32.mrf.mxu0
      %v7719 = vadd.f32 %v6396, %v7718
      %7720 = vmatmul.bf16.gmra.mxu0 %v4073
      %v7721 = vpop.f32.mrf.mxu0
      %v7722 = vadd.f32 %v6399, %v7721
      %v7723 = vpop.f32.mrf.mxu0
      %v7724 = vadd.f32 %v6401, %v7723
      %7725 = vmatmul.bf16.gmra.mxu0 %v4076
      %v7726 = vpop.f32.mrf.mxu0
      %v7727 = vadd.f32 %v6404, %v7726
      %v7728 = vpop.f32.mrf.mxu0
      %v7729 = vadd.f32 %v6406, %v7728
      %7730 = vmatmul.bf16.gmra.mxu0 %v4079
      %v7731 = vpop.f32.mrf.mxu0
      %v7732 = vadd.f32 %v6409, %v7731
      %v7733 = vpop.f32.mrf.mxu0
      %v7734 = vadd.f32 %v6411, %v7733
      %7735 = vmatmul.bf16.gmra.mxu0 %v4082
      %v7736 = vpop.f32.mrf.mxu0
      %v7737 = vadd.f32 %v6414, %v7736
      %v7738 = vpop.f32.mrf.mxu0
      %v7739 = vadd.f32 %v6416, %v7738
      %7740 = vmatmul.bf16.gmra.mxu0 %v4085
      %v7741 = vpop.f32.mrf.mxu0
      %v7742 = vadd.f32 %v6419, %v7741
      %v7743 = vpop.f32.mrf.mxu0
      %v7744 = vadd.f32 %v6421, %v7743
      %7745 = vmatmul.bf16.gmra.mxu0 %v4088
      %v7746 = vpop.f32.mrf.mxu0
      %v7747 = vadd.f32 %v6424, %v7746
      %v7748 = vpop.f32.mrf.mxu0
      %v7749 = vadd.f32 %v6426, %v7748
      %7750 = vmatmul.bf16.gmra.mxu0 %v4091
      %v7751 = vpop.f32.mrf.mxu0
      %v7752 = vadd.f32 %v6429, %v7751
      %v7753 = vpop.f32.mrf.mxu0
      %v7754 = vadd.f32 %v6431, %v7753
      %7755 = vmatmul.bf16.gmra.mxu0 %v4094
      %v7756 = vpop.f32.mrf.mxu0
      %v7757 = vadd.f32 %v6434, %v7756
      %v7758 = vpop.f32.mrf.mxu0
      %v7759 = vadd.f32 %v6436, %v7758
      %7760 = vmatmul.bf16.gmra.mxu0 %v4097
      %v7761 = vpop.f32.mrf.mxu0
      %v7762 = vadd.f32 %v6439, %v7761
      %v7763 = vpop.f32.mrf.mxu0
      %v7764 = vadd.f32 %v6441, %v7763
      %7765 = vmatmul.bf16.gmra.mxu0 %v4100
      %v7766 = vpop.f32.mrf.mxu0
      %v7767 = vadd.f32 %v6444, %v7766
      %v7768 = vpop.f32.mrf.mxu0
      %v7769 = vadd.f32 %v6446, %v7768
      %7770 = vmatmul.bf16.gmra.mxu0 %v4103
      %v7771 = vpop.f32.mrf.mxu0
      %v7772 = vadd.f32 %v6449, %v7771
      %v7773 = vpop.f32.mrf.mxu0
      %v7774 = vadd.f32 %v6451, %v7773
      %7775 = vmatmul.bf16.gmra.mxu0 %v4106
      %v7776 = vpop.f32.mrf.mxu0
      %v7777 = vadd.f32 %v6454, %v7776
      %v7778 = vpop.f32.mrf.mxu0
      %v7779 = vadd.f32 %v6456, %v7778
      %7780 = vmatmul.bf16.gmra.mxu0 %v4109
      %v7781 = vpop.f32.mrf.mxu0
      %v7782 = vadd.f32 %v6459, %v7781
      %v7783 = vpop.f32.mrf.mxu0
      %v7784 = vadd.f32 %v6461, %v7783
      %7785 = vmatmul.bf16.gmra.mxu0 %v4112
      %v7786 = vpop.f32.mrf.mxu0
      %v7787 = vadd.f32 %v6464, %v7786
      %v7788 = vpop.f32.mrf.mxu0
      %v7789 = vadd.f32 %v6466, %v7788
      %7790 = vmatmul.bf16.gmra.mxu0 %v4115
      %v7791 = vpop.f32.mrf.mxu0
      %v7792 = vadd.f32 %v6469, %v7791
      %v7793 = vpop.f32.mrf.mxu0
      %v7794 = vadd.f32 %v6471, %v7793
      %7795 = vmatmul.bf16.gmra.mxu0 %v4118
      %v7796 = vpop.f32.mrf.mxu0
      %v7797 = vadd.f32 %v6474, %v7796
      %v7798 = vpop.f32.mrf.mxu0
      %v7799 = vadd.f32 %v6476, %v7798
      %7800 = vmatmul.bf16.gmra.mxu0 %v4121
      %v7801 = vpop.f32.mrf.mxu0
      %v7802 = vadd.f32 %v6479, %v7801
      %v7803 = vpop.f32.mrf.mxu0
      %v7804 = vadd.f32 %v6481, %v7803
      %7805 = vmatmul.bf16.gmra.mxu0 %v4124
      %v7806 = vpop.f32.mrf.mxu0
      %v7807 = vadd.f32 %v6484, %v7806
      %v7808 = vpop.f32.mrf.mxu0
      %v7809 = vadd.f32 %v6486, %v7808
      %7810 = vmatmul.bf16.gmra.mxu0 %v4127
      %v7811 = vpop.f32.mrf.mxu0
      %v7812 = vadd.f32 %v6489, %v7811
      %v7813 = vpop.f32.mrf.mxu0
      %v7814 = vadd.f32 %v6491, %v7813
      %7815 = vmatmul.bf16.gmra.mxu0 %v4130
      %v7816 = vpop.f32.mrf.mxu0
      %v7817 = vadd.f32 %v6494, %v7816
      %v7818 = vpop.f32.mrf.mxu0
      %v7819 = vadd.f32 %v6496, %v7818
      %7820 = vmatmul.bf16.gmra.mxu0 %v4133
      %v7821 = vpop.f32.mrf.mxu0
      %v7822 = vadd.f32 %v6499, %v7821
      %v7823 = vpop.f32.mrf.mxu0
      %v7824 = vadd.f32 %v6501, %v7823
      %7825 = vmatmul.bf16.gmra.mxu0 %v4136
      %v7826 = vpop.f32.mrf.mxu0
      %v7827 = vadd.f32 %v6504, %v7826
      %v7828 = vpop.f32.mrf.mxu0
      %v7829 = vadd.f32 %v6506, %v7828
      %7830 = vmatmul.bf16.gmra.mxu0 %v4139
      %v7831 = vpop.f32.mrf.mxu0
      %v7832 = vadd.f32 %v6509, %v7831
      %v7833 = vpop.f32.mrf.mxu0
      %v7834 = vadd.f32 %v6511, %v7833
      %7835 = vmatmul.bf16.gmra.mxu0 %v4142
      %v7836 = vpop.f32.mrf.mxu0
      %v7837 = vadd.f32 %v6514, %v7836
      %v7838 = vpop.f32.mrf.mxu0
      %v7839 = vadd.f32 %v6516, %v7838
      %7840 = vmatmul.bf16.gmra.mxu0 %v4145
      %v7841 = vpop.f32.mrf.mxu0
      %v7842 = vadd.f32 %v6519, %v7841
      %v7843 = vpop.f32.mrf.mxu0
      %v7844 = vadd.f32 %v6521, %v7843
      %7845 = vmatmul.bf16.gmra.mxu0 %v4148
      %v7846 = vpop.f32.mrf.mxu0
      %v7847 = vadd.f32 %v6524, %v7846
      %v7848 = vpop.f32.mrf.mxu0
      %v7849 = vadd.f32 %v6526, %v7848
      %7850 = vmatmul.bf16.gmra.mxu0 %v4151
      %v7851 = vpop.f32.mrf.mxu0
      %v7852 = vadd.f32 %v6529, %v7851
      %v7853 = vpop.f32.mrf.mxu0
      %v7854 = vadd.f32 %v6531, %v7853
      %7855 = vmatmul.bf16.gmra.mxu0 %v4154
      %v7856 = vpop.f32.mrf.mxu0
      %v7857 = vadd.f32 %v6534, %v7856
      %v7858 = vpop.f32.mrf.mxu0
      %v7859 = vadd.f32 %v6536, %v7858
      %7860 = vmatmul.bf16.gmra.mxu0 %v4157
      %v7861 = vpop.f32.mrf.mxu0
      %v7862 = vadd.f32 %v6539, %v7861
      %v7863 = vpop.f32.mrf.mxu0
      %v7864 = vadd.f32 %v6541, %v7863
      %7865 = vmatmul.bf16.gmra.mxu0 %v4160
      %v7866 = vpop.f32.mrf.mxu0
      %v7867 = vadd.f32 %v6544, %v7866
      %v7868 = vpop.f32.mrf.mxu0
      %v7869 = vadd.f32 %v6546, %v7868
      %7870 = vmatmul.bf16.gmra.mxu0 %v4163
      %v7871 = vpop.f32.mrf.mxu0
      %v7872 = vadd.f32 %v6549, %v7871
      %v7873 = vpop.f32.mrf.mxu0
      %v7874 = vadd.f32 %v6551, %v7873
      %7875 = vmatmul.bf16.gmra.mxu0 %v4166
      %v7876 = vpop.f32.mrf.mxu0
      %v7877 = vadd.f32 %v6554, %v7876
      %v7878 = vpop.f32.mrf.mxu0
      %v7879 = vadd.f32 %v6556, %v7878
      %7880 = vmatmul.bf16.gmra.mxu0 %v4169
      %v7881 = vpop.f32.mrf.mxu0
      %v7882 = vadd.f32 %v6559, %v7881
      %v7883 = vpop.f32.mrf.mxu0
      %v7884 = vadd.f32 %v6561, %v7883
      %7885 = vmatmul.bf16.gmra.mxu0 %v4172
      %v7886 = vpop.f32.mrf.mxu0
      %v7887 = vadd.f32 %v6564, %v7886
      %v7888 = vpop.f32.mrf.mxu0
      %v7889 = vadd.f32 %v6566, %v7888
      %7890 = vmatmul.bf16.gmra.mxu0 %v4175
      %v7891 = vpop.f32.mrf.mxu0
      %v7892 = vadd.f32 %v6569, %v7891
      %v7893 = vpop.f32.mrf.mxu0
      %v7894 = vadd.f32 %v6571, %v7893
      %7895 = vmatmul.bf16.gmra.mxu0 %v4178
      %v7896 = vpop.f32.mrf.mxu0
      %v7897 = vadd.f32 %v6574, %v7896
      %v7898 = vpop.f32.mrf.mxu0
      %v7899 = vadd.f32 %v6576, %v7898
      %7900 = vmatmul.bf16.gmra.mxu0 %v4181
      %v7901 = vpop.f32.mrf.mxu0
      %v7902 = vadd.f32 %v6579, %v7901
      %v7903 = vpop.f32.mrf.mxu0
      %v7904 = vadd.f32 %v6581, %v7903
      %7905 = vmatmul.bf16.gmra.mxu0 %v4184
      %v7906 = vpop.f32.mrf.mxu0
      %v7907 = vadd.f32 %v6584, %v7906
      %v7908 = vpop.f32.mrf.mxu0
      %v7909 = vadd.f32 %v6586, %v7908
      %7910 = vmatmul.bf16.gmra.mxu0 %v4187
      %v7911 = vpop.f32.mrf.mxu0
      %v7912 = vadd.f32 %v6589, %v7911
      %v7913 = vpop.f32.mrf.mxu0
      %v7914 = vadd.f32 %v6591, %v7913
      %7915 = vmatmul.bf16.gmra.mxu0 %v4190
      %v7916 = vpop.f32.mrf.mxu0
      %v7917 = vadd.f32 %v6594, %v7916
      %v7918 = vpop.f32.mrf.mxu0
      %v7919 = vadd.f32 %v6596, %v7918
      %7920 = vmatmul.bf16.gmra.mxu0 %v4193
      %v7921 = vpop.f32.mrf.mxu0
      %v7922 = vadd.f32 %v6599, %v7921
      %v7923 = vpop.f32.mrf.mxu0
      %v7924 = vadd.f32 %v6601, %v7923
      %7925 = vmatmul.bf16.gmra.mxu0 %v4196
      %v7926 = vpop.f32.mrf.mxu0
      %v7927 = vadd.f32 %v6604, %v7926
      %v7928 = vpop.f32.mrf.mxu0
      %v7929 = vadd.f32 %v6606, %v7928
      %7930 = vmatmul.bf16.gmra.mxu0 %v4199
      %v7931 = vpop.f32.mrf.mxu0
      %v7932 = vadd.f32 %v6609, %v7931
      %v7933 = vpop.f32.mrf.mxu0
      %v7934 = vadd.f32 %v6611, %v7933
      %7935 = vmatmul.bf16.gmra.mxu0 %v4202
      %v7936 = vpop.f32.mrf.mxu0
      %v7937 = vadd.f32 %v6614, %v7936
      %v7938 = vpop.f32.mrf.mxu0
      %v7939 = vadd.f32 %v6616, %v7938
      %7940 = vmatmul.bf16.gmra.mxu0 %v4205
      %v7941 = vpop.f32.mrf.mxu0
      %v7942 = vadd.f32 %v6619, %v7941
      %v7943 = vpop.f32.mrf.mxu0
      %v7944 = vadd.f32 %v6621, %v7943
      %7945 = vmatmul.bf16.gmra.mxu0 %v4208
      %v7946 = vpop.f32.mrf.mxu0
      %v7947 = vadd.f32 %v6624, %v7946
      %v7948 = vpop.f32.mrf.mxu0
      %v7949 = vadd.f32 %v6626, %v7948
      %7950 = vmatmul.bf16.gmra.mxu0 %v4211
      %v7951 = vpop.f32.mrf.mxu0
      %v7952 = vadd.f32 %v6629, %v7951
      %v7953 = vpop.f32.mrf.mxu0
      %v7954 = vadd.f32 %v6631, %v7953
      %7955 = vmatmul.bf16.gmra.mxu0 %v4214
      %v7956 = vpop.f32.mrf.mxu0
      %v7957 = vadd.f32 %v6634, %v7956
      %v7958 = vpop.f32.mrf.mxu0
      %v7959 = vadd.f32 %v6636, %v7958
      %7960 = vmatmul.bf16.gmra.mxu0 %v4217
      %v7961 = vpop.f32.mrf.mxu0
      %v7962 = vadd.f32 %v6639, %v7961
      %v7963 = vpop.f32.mrf.mxu0
      %v7964 = vadd.f32 %v6641, %v7963
      %7965 = vmatmul.bf16.gmra.mxu0 %v4220
      %v7966 = vpop.f32.mrf.mxu0
      %v7967 = vadd.f32 %v6644, %v7966
      %v7968 = vpop.f32.mrf.mxu0
      %v7969 = vadd.f32 %v6646, %v7968
      %7970 = vmatmul.bf16.gmra.mxu0 %v4223
      %v7971 = vpop.f32.mrf.mxu0
      %v7972 = vadd.f32 %v6649, %v7971
      %v7973 = vpop.f32.mrf.mxu0
      %v7974 = vadd.f32 %v6651, %v7973
      %7975 = vmatmul.bf16.gmra.mxu0 %v4226
      %v7976 = vpop.f32.mrf.mxu0
      %v7977 = vadd.f32 %v6654, %v7976
      %v7978 = vpop.f32.mrf.mxu0
      %v7979 = vadd.f32 %v6656, %v7978
      %7980 = vmatmul.bf16.gmra.mxu0 %v4229
      %v7981 = vpop.f32.mrf.mxu0
      %v7982 = vadd.f32 %v6659, %v7981
      %v7983 = vpop.f32.mrf.mxu0
      %v7984 = vadd.f32 %v6661, %v7983
      %7985 = vmatmul.bf16.gmra.mxu0 %v4232
      %v7986 = vpop.f32.mrf.mxu0
      %v7987 = vadd.f32 %v6664, %v7986
      %v7988 = vpop.f32.mrf.mxu0
      %v7989 = vadd.f32 %v6666, %v7988
      %7990 = vmatmul.bf16.gmra.mxu0 %v4235
      %v7991 = vpop.f32.mrf.mxu0
      %v7992 = vadd.f32 %v6669, %v7991
      %v7993 = vpop.f32.mrf.mxu0
      %v7994 = vadd.f32 %v6671, %v7993
      %7995 = vmatmul.bf16.gmra.mxu0 %v4238
      %v7996 = vpop.f32.mrf.mxu0
      %v7997 = vadd.f32 %v6674, %v7996
      %v7998 = vpop.f32.mrf.mxu0
      %v7999 = vadd.f32 %v6676, %v7998
      %8000 = vmatmul.bf16.gmra.mxu0 %v4241
      %v8001 = vpop.f32.mrf.mxu0
      %v8002 = vadd.f32 %v6679, %v8001
      %v8003 = vpop.f32.mrf.mxu0
      %v8004 = vadd.f32 %v6681, %v8003
      %8005 = vmatmul.bf16.gmra.mxu0 %v4244
      %v8006 = vpop.f32.mrf.mxu0
      %v8007 = vadd.f32 %v6684, %v8006
      %v8008 = vpop.f32.mrf.mxu0
      %v8009 = vadd.f32 %v6686, %v8008
      %8010 = vmatmul.bf16.gmra.mxu0 %v4247
      %v8011 = vpop.f32.mrf.mxu0
      %v8012 = vadd.f32 %v6689, %v8011
      %v8013 = vpop.f32.mrf.mxu0
      %v8014 = vadd.f32 %v6691, %v8013
      %8015 = vmatmul.bf16.gmra.mxu0 %v4250
      %v8016 = vpop.f32.mrf.mxu0
      %v8017 = vadd.f32 %v6694, %v8016
      %v8018 = vpop.f32.mrf.mxu0
      %v8019 = vadd.f32 %v6696, %v8018
      %8020 = vmatmul.bf16.gmra.mxu0 %v4253
      %v8021 = vpop.f32.mrf.mxu0
      %v8022 = vadd.f32 %v6699, %v8021
      %v8023 = vpop.f32.mrf.mxu0
      %v8024 = vadd.f32 %v6701, %v8023
      %8025 = vmatmul.bf16.gmra.mxu0 %v4256
      %v8026 = vpop.f32.mrf.mxu0
      %v8027 = vadd.f32 %v6704, %v8026
      %v8028 = vpop.f32.mrf.mxu0
      %v8029 = vadd.f32 %v6706, %v8028
      %8030 = vmatmul.bf16.gmra.mxu0 %v4259
      %v8031 = vpop.f32.mrf.mxu0
      %v8032 = vadd.f32 %v6709, %v8031
      %v8033 = vpop.f32.mrf.mxu0
      %v8034 = vadd.f32 %v6711, %v8033
      %8035 = vmatmul.bf16.gmra.mxu0 %v4262
      %v8036 = vpop.f32.mrf.mxu0
      %v8037 = vadd.f32 %v6714, %v8036
      %v8038 = vpop.f32.mrf.mxu0
      %v8039 = vadd.f32 %v6716, %v8038
      %8040 = vmatmul.bf16.gmra.mxu0 %v4265
      %v8041 = vpop.f32.mrf.mxu0
      %v8042 = vadd.f32 %v6719, %v8041
      %v8043 = vpop.f32.mrf.mxu0
      %v8044 = vadd.f32 %v6721, %v8043
      %8045 = vmatmul.bf16.gmra.mxu0 %v4268
      %v8046 = vpop.f32.mrf.mxu0
      %v8047 = vadd.f32 %v6724, %v8046
      %v8048 = vpop.f32.mrf.mxu0
      %v8049 = vadd.f32 %v6726, %v8048
      %8050 = vmatmul.bf16.gmra.mxu0 %v4271
      %v8051 = vpop.f32.mrf.mxu0
      %v8052 = vadd.f32 %v6729, %v8051
      %v8053 = vpop.f32.mrf.mxu0
      %v8054 = vadd.f32 %v6731, %v8053
      %8055 = vmatmul.bf16.gmra.mxu0 %v4274
      %v8056 = vpop.f32.mrf.mxu0
      %v8057 = vadd.f32 %v6734, %v8056
      %v8058 = vpop.f32.mrf.mxu0
      %v8059 = vadd.f32 %v6736, %v8058
      %8060 = vmatmul.bf16.gmra.mxu0 %v4277
      %v8061 = vpop.f32.mrf.mxu0
      %v8062 = vadd.f32 %v6739, %v8061
      %v8063 = vpop.f32.mrf.mxu0
      %v8064 = vadd.f32 %v6741, %v8063
      %8065 = vmatmul.bf16.gmra.mxu0 %v4280
      %v8066 = vpop.f32.mrf.mxu0
      %v8067 = vadd.f32 %v6744, %v8066
      %v8068 = vpop.f32.mrf.mxu0
      %v8069 = vadd.f32 %v6746, %v8068
      %8070 = vmatmul.bf16.gmra.mxu0 %v4283
      %v8071 = vpop.f32.mrf.mxu0
      %v8072 = vadd.f32 %v6749, %v8071
      %v8073 = vpop.f32.mrf.mxu0
      %v8074 = vadd.f32 %v6751, %v8073
      %8075 = vmatmul.bf16.gmra.mxu0 %v4286
      %v8076 = vpop.f32.mrf.mxu0
      %v8077 = vadd.f32 %v6754, %v8076
      %v8078 = vpop.f32.mrf.mxu0
      %v8079 = vadd.f32 %v6756, %v8078
      %8080 = vmatmul.bf16.gmra.mxu0 %v4289
      %v8081 = vpop.f32.mrf.mxu0
      %v8082 = vadd.f32 %v6759, %v8081
      %v8083 = vpop.f32.mrf.mxu0
      %v8084 = vadd.f32 %v6761, %v8083
      %8085 = vmatmul.bf16.gmra.mxu0 %v4292
      %v8086 = vpop.f32.mrf.mxu0
      %v8087 = vadd.f32 %v6764, %v8086
      %v8088 = vpop.f32.mrf.mxu0
      %v8089 = vadd.f32 %v6766, %v8088
      %8090 = vmatmul.bf16.gmra.mxu0 %v4295
      %v8091 = vpop.f32.mrf.mxu0
      %v8092 = vadd.f32 %v6769, %v8091
      %v8093 = vpop.f32.mrf.mxu0
      %v8094 = vadd.f32 %v6771, %v8093
      %8095 = vmatmul.bf16.gmra.mxu0 %v4298
      %v8096 = vpop.f32.mrf.mxu0
      %v8097 = vadd.f32 %v6774, %v8096
      %v8098 = vpop.f32.mrf.mxu0
      %v8099 = vadd.f32 %v6776, %v8098
      %8100 = vmatmul.bf16.gmra.mxu0 %v4301
      %v8101 = vpop.f32.mrf.mxu0
      %v8102 = vadd.f32 %v6779, %v8101
      %v8103 = vpop.f32.mrf.mxu0
      %v8104 = vadd.f32 %v6781, %v8103
      %8105 = vmatmul.bf16.gmra.mxu0 %v4304
      %v8106 = vpop.f32.mrf.mxu0
      %v8107 = vadd.f32 %v6784, %v8106
      %v8108 = vpop.f32.mrf.mxu0
      %v8109 = vadd.f32 %v6786, %v8108
      %8110 = vmatmul.bf16.gmra.mxu0 %v4307
      %v8111 = vpop.f32.mrf.mxu0
      %v8112 = vadd.f32 %v6789, %v8111
      %v8113 = vpop.f32.mrf.mxu0
      %v8114 = vadd.f32 %v6791, %v8113
      %8115 = vmatmul.bf16.gmra.mxu0 %v4310
      %v8116 = vpop.f32.mrf.mxu0
      %v8117 = vadd.f32 %v6794, %v8116
      %v8118 = vpop.f32.mrf.mxu0
      %v8119 = vadd.f32 %v6796, %v8118
      %8120 = vmatmul.bf16.gmra.mxu0 %v4313
      %v8121 = vpop.f32.mrf.mxu0
      %v8122 = vadd.f32 %v6799, %v8121
      %v8123 = vpop.f32.mrf.mxu0
      %v8124 = vadd.f32 %v6801, %v8123
      %8125 = vmatmul.bf16.gmra.mxu0 %v4316
      %v8126 = vpop.f32.mrf.mxu0
      %v8127 = vadd.f32 %v6804, %v8126
      %v8128 = vpop.f32.mrf.mxu0
      %v8129 = vadd.f32 %v6806, %v8128
      %8130 = vmatmul.bf16.gmra.mxu0 %v4319
      %v8131 = vpop.f32.mrf.mxu0
      %v8132 = vadd.f32 %v6809, %v8131
      %v8133 = vpop.f32.mrf.mxu0
      %v8134 = vadd.f32 %v6811, %v8133
      %8135 = vmatmul.bf16.gmra.mxu0 %v4322
      %v8136 = vpop.f32.mrf.mxu0
      %v8137 = vadd.f32 %v6814, %v8136
      %v8138 = vpop.f32.mrf.mxu0
      %v8139 = vadd.f32 %v6816, %v8138
      %8140 = vmatmul.bf16.gmra.mxu0 %v4325
      %v8141 = vpop.f32.mrf.mxu0
      %v8142 = vadd.f32 %v6819, %v8141
      %v8143 = vpop.f32.mrf.mxu0
      %v8144 = vadd.f32 %v6821, %v8143
      %8145 = vmatmul.bf16.gmra.mxu0 %v4328
      %v8146 = vpop.f32.mrf.mxu0
      %v8147 = vadd.f32 %v6824, %v8146
      %v8148 = vpop.f32.mrf.mxu0
      %v8149 = vadd.f32 %v6826, %v8148
      %8150 = vmatmul.bf16.gmra.mxu0 %v4331
      %v8151 = vpop.f32.mrf.mxu0
      %v8152 = vadd.f32 %v6829, %v8151
      %v8153 = vpop.f32.mrf.mxu0
      %v8154 = vadd.f32 %v6831, %v8153
      %8155 = vmatmul.bf16.gmra.mxu0 %v4334
      %v8156 = vpop.f32.mrf.mxu0
      %v8157 = vadd.f32 %v6834, %v8156
      %v8158 = vpop.f32.mrf.mxu0
      %v8159 = vadd.f32 %v6836, %v8158
      %8160 = vmatmul.bf16.gmra.mxu0 %v4337
      %v8161 = vpop.f32.mrf.mxu0
      %v8162 = vadd.f32 %v6839, %v8161
      %v8163 = vpop.f32.mrf.mxu0
      %v8164 = vadd.f32 %v6841, %v8163
      %8165 = vmatmul.bf16.gmra.mxu0 %v4340
      %v8166 = vpop.f32.mrf.mxu0
      %v8167 = vadd.f32 %v6844, %v8166
      %v8168 = vpop.f32.mrf.mxu0
      %v8169 = vadd.f32 %v6846, %v8168
      %8170 = vmatmul.bf16.gmra.mxu0 %v4343
      %v8171 = vpop.f32.mrf.mxu0
      %v8172 = vadd.f32 %v6849, %v8171
      %v8173 = vpop.f32.mrf.mxu0
      %v8174 = vadd.f32 %v6851, %v8173
      %8175 = vmatmul.bf16.gmra.mxu0 %v4346
      %v8176 = vpop.f32.mrf.mxu0
      %v8177 = vadd.f32 %v6854, %v8176
      %v8178 = vpop.f32.mrf.mxu0
      %v8179 = vadd.f32 %v6856, %v8178
      %8180 = vmatmul.bf16.gmra.mxu0 %v4349
      %v8181 = vpop.f32.mrf.mxu0
      %v8182 = vadd.f32 %v6859, %v8181
      %v8183 = vpop.f32.mrf.mxu0
      %v8184 = vadd.f32 %v6861, %v8183
      %8185 = vmatmul.bf16.gmra.mxu0 %v4352
      %v8186 = vpop.f32.mrf.mxu0
      %v8187 = vadd.f32 %v6864, %v8186
      %v8188 = vpop.f32.mrf.mxu0
      %v8189 = vadd.f32 %v6866, %v8188
      %8190 = vmatmul.bf16.gmra.mxu0 %v4355
      %v8191 = vpop.f32.mrf.mxu0
      %v8192 = vadd.f32 %v6869, %v8191
      %v8193 = vpop.f32.mrf.mxu0
      %v8194 = vadd.f32 %v6871, %v8193
      %8195 = vmatmul.bf16.gmra.mxu0 %v4358
      %v8196 = vpop.f32.mrf.mxu0
      %v8197 = vadd.f32 %v6874, %v8196
      %v8198 = vpop.f32.mrf.mxu0
      %v8199 = vadd.f32 %v6876, %v8198
      %8200 = vmatmul.bf16.gmra.mxu0 %v4361
      %v8201 = vpop.f32.mrf.mxu0
      %v8202 = vadd.f32 %v6879, %v8201
      %v8203 = vpop.f32.mrf.mxu0
      %v8204 = vadd.f32 %v6881, %v8203
      %8205 = vmatmul.bf16.gmra.mxu0 %v4364
      %v8206 = vpop.f32.mrf.mxu0
      %v8207 = vadd.f32 %v6884, %v8206
      %v8208 = vpop.f32.mrf.mxu0
      %v8209 = vadd.f32 %v6886, %v8208
      %8210 = vmatmul.bf16.gmra.mxu0 %v4367
      %v8211 = vpop.f32.mrf.mxu0
      %v8212 = vadd.f32 %v6889, %v8211
      %v8213 = vpop.f32.mrf.mxu0
      %v8214 = vadd.f32 %v6891, %v8213
      %8215 = vmatmul.bf16.gmra.mxu0 %v4370
      %v8216 = vpop.f32.mrf.mxu0
      %v8217 = vadd.f32 %v6894, %v8216
      %v8218 = vpop.f32.mrf.mxu0
      %v8219 = vadd.f32 %v6896, %v8218
      %8220 = vmatmul.bf16.gmra.mxu0 %v4373
      %v8221 = vpop.f32.mrf.mxu0
      %v8222 = vadd.f32 %v6899, %v8221
      %v8223 = vpop.f32.mrf.mxu0
      %v8224 = vadd.f32 %v6901, %v8223
      %8225 = vmatmul.bf16.gmra.mxu0 %v4376
      %v8226 = vpop.f32.mrf.mxu0
      %v8227 = vadd.f32 %v6904, %v8226
      %v8228 = vpop.f32.mrf.mxu0
      %v8229 = vadd.f32 %v6906, %v8228
      %8230 = vmatmul.bf16.gmra.mxu0 %v4379
      %v8231 = vpop.f32.mrf.mxu0
      %v8232 = vadd.f32 %v6909, %v8231
      %v8233 = vpop.f32.mrf.mxu0
      %v8234 = vadd.f32 %v6911, %v8233
      %8235 = vmatmul.bf16.gmra.mxu0 %v4382
      %v8236 = vpop.f32.mrf.mxu0
      %v8237 = vadd.f32 %v6914, %v8236
      %v8238 = vpop.f32.mrf.mxu0
      %v8239 = vadd.f32 %v6916, %v8238
      %8240 = vmatmul.bf16.gmra.mxu0 %v4385
      %v8241 = vpop.f32.mrf.mxu0
      %v8242 = vadd.f32 %v6919, %v8241
      %v8243 = vpop.f32.mrf.mxu0
      %v8244 = vadd.f32 %v6921, %v8243
      %8245 = vmatmul.bf16.gmra.mxu0 %v4388
      %v8246 = vpop.f32.mrf.mxu0
      %v8247 = vadd.f32 %v6924, %v8246
      %v8248 = vpop.f32.mrf.mxu0
      %v8249 = vadd.f32 %v6926, %v8248
      %8250 = vmatmul.bf16.gmra.mxu0 %v4391
      %v8251 = vpop.f32.mrf.mxu0
      %v8252 = vadd.f32 %v6929, %v8251
      %v8253 = vpop.f32.mrf.mxu0
      %v8254 = vadd.f32 %v6931, %v8253
      %8255 = vmatmul.bf16.gmra.mxu0 %v4394
      %v8256 = vpop.f32.mrf.mxu0
      %v8257 = vadd.f32 %v6934, %v8256
      %v8258 = vpop.f32.mrf.mxu0
      %v8259 = vadd.f32 %v6936, %v8258
      %8260 = vmatmul.bf16.gmra.mxu0 %v4397
      %v8261 = vpop.f32.mrf.mxu0
      %v8262 = vadd.f32 %v6939, %v8261
      %v8263 = vpop.f32.mrf.mxu0
      %v8264 = vadd.f32 %v6941, %v8263
      %8265 = vmatmul.bf16.gmra.mxu0 %v4400
      %v8266 = vpop.f32.mrf.mxu0
      %v8267 = vadd.f32 %v6944, %v8266
      %v8268 = vpop.f32.mrf.mxu0
      %v8269 = vadd.f32 %v6946, %v8268
      %8270 = vmatmul.bf16.gmra.mxu0 %v4403
      %v8271 = vpop.f32.mrf.mxu0
      %v8272 = vadd.f32 %v6949, %v8271
      %v8273 = vpop.f32.mrf.mxu0
      %v8274 = vadd.f32 %v6951, %v8273
      %8275 = vmatmul.bf16.gmra.mxu0 %v4406
      %v8276 = vpop.f32.mrf.mxu0
      %v8277 = vadd.f32 %v6954, %v8276
      %v8278 = vpop.f32.mrf.mxu0
      %v8279 = vadd.f32 %v6956, %v8278
      %8280 = vmatmul.bf16.gmra.mxu0 %v4409
      %v8281 = vpop.f32.mrf.mxu0
      %v8282 = vadd.f32 %v6959, %v8281
      %v8283 = vpop.f32.mrf.mxu0
      %v8284 = vadd.f32 %v6961, %v8283
      %8285 = vmatmul.bf16.gmra.mxu0 %v4412
      %v8286 = vpop.f32.mrf.mxu0
      %v8287 = vadd.f32 %v6964, %v8286
      %v8288 = vpop.f32.mrf.mxu0
      %v8289 = vadd.f32 %v6966, %v8288
      %8290 = vmatmul.bf16.gmra.mxu0 %v4415
      %v8291 = vpop.f32.mrf.mxu0
      %v8292 = vadd.f32 %v6969, %v8291
      %v8293 = vpop.f32.mrf.mxu0
      %v8294 = vadd.f32 %v6971, %v8293
      %8295 = vmatmul.bf16.gmra.mxu0 %v4418
      %v8296 = vpop.f32.mrf.mxu0
      %v8297 = vadd.f32 %v6974, %v8296
      %v8298 = vpop.f32.mrf.mxu0
      %v8299 = vadd.f32 %v6976, %v8298
      %8300 = vmatmul.bf16.gmra.mxu0 %v4421
      %v8301 = vpop.f32.mrf.mxu0
      %v8302 = vadd.f32 %v6979, %v8301
      %v8303 = vpop.f32.mrf.mxu0
      %v8304 = vadd.f32 %v6981, %v8303
      %8305 = vmatmul.bf16.gmra.mxu0 %v4424
      %v8306 = vpop.f32.mrf.mxu0
      %v8307 = vadd.f32 %v6984, %v8306
      %v8308 = vpop.f32.mrf.mxu0
      %v8309 = vadd.f32 %v6986, %v8308
      %8310 = vmatmul.bf16.gmra.mxu0 %v4427
      %v8311 = vpop.f32.mrf.mxu0
      %v8312 = vadd.f32 %v6989, %v8311
      %v8313 = vpop.f32.mrf.mxu0
      %v8314 = vadd.f32 %v6991, %v8313
      %8315 = vmatmul.bf16.gmra.mxu0 %v4430
      %v8316 = vpop.f32.mrf.mxu0
      %v8317 = vadd.f32 %v6994, %v8316
      %v8318 = vpop.f32.mrf.mxu0
      %v8319 = vadd.f32 %v6996, %v8318
      %8320 = vmatmul.bf16.gmra.mxu0 %v4433
      %v8321 = vpop.f32.mrf.mxu0
      %v8322 = vadd.f32 %v6999, %v8321
      %v8323 = vpop.f32.mrf.mxu0
      %v8324 = vadd.f32 %v7001, %v8323
      %8325 = vmatmul.bf16.gmra.mxu0 %v4436
      %v8326 = vpop.f32.mrf.mxu0
      %v8327 = vadd.f32 %v7004, %v8326
      %v8328 = vpop.f32.mrf.mxu0
      %v8329 = vadd.f32 %v7006, %v8328
      %8330 = vmatmul.bf16.gmra.mxu0 %v4439
      %v8331 = vpop.f32.mrf.mxu0
      %v8332 = vadd.f32 %v7009, %v8331
      %v8333 = vpop.f32.mrf.mxu0
      %v8334 = vadd.f32 %v7011, %v8333
      %8335 = vmatmul.bf16.gmra.mxu0 %v4442
      %v8336 = vpop.f32.mrf.mxu0
      %v8337 = vadd.f32 %v7014, %v8336
      %v8338 = vpop.f32.mrf.mxu0
      %v8339 = vadd.f32 %v7016, %v8338
      %8340 = vmatmul.bf16.gmra.mxu0 %v4445
      %v8341 = vpop.f32.mrf.mxu0
      %v8342 = vadd.f32 %v7019, %v8341
      %v8343 = vpop.f32.mrf.mxu0
      %v8344 = vadd.f32 %v7021, %v8343
      %8345 = vmatmul.bf16.gmra.mxu0 %v4448
      %v8346 = vpop.f32.mrf.mxu0
      %v8347 = vadd.f32 %v7024, %v8346
      %v8348 = vpop.f32.mrf.mxu0
      %v8349 = vadd.f32 %v7026, %v8348
      %8350 = vmatmul.bf16.gmra.mxu0 %v4451
      %v8351 = vpop.f32.mrf.mxu0
      %v8352 = vadd.f32 %v7029, %v8351
      %v8353 = vpop.f32.mrf.mxu0
      %v8354 = vadd.f32 %v7031, %v8353
      %8355 = vmatmul.bf16.gmra.mxu0 %v4454
      %v8356 = vpop.f32.mrf.mxu0
      %v8357 = vadd.f32 %v7034, %v8356
      %v8358 = vpop.f32.mrf.mxu0
      %v8359 = vadd.f32 %v7036, %v8358
      %8360 = vmatmul.bf16.gmra.mxu0 %v4457
      %v8361 = vpop.f32.mrf.mxu0
      %v8362 = vadd.f32 %v7039, %v8361
      %v8363 = vpop.f32.mrf.mxu0
      %v8364 = vadd.f32 %v7041, %v8363
      %8365 = vmatmul.bf16.gmra.mxu0 %v4460
      %v8366 = vpop.f32.mrf.mxu0
      %v8367 = vadd.f32 %v7044, %v8366
      %v8368 = vpop.f32.mrf.mxu0
      %v8369 = vadd.f32 %v7046, %v8368
      %8370 = vmatmul.bf16.gmra.mxu0 %v4463
      %v8371 = vpop.f32.mrf.mxu0
      %v8372 = vadd.f32 %v7049, %v8371
      %v8373 = vpop.f32.mrf.mxu0
      %v8374 = vadd.f32 %v7051, %v8373
      %8375 = vmatmul.bf16.gmra.mxu0 %v4466
      %v8376 = vpop.f32.mrf.mxu0
      %v8377 = vadd.f32 %v7054, %v8376
      %v8378 = vpop.f32.mrf.mxu0
      %v8379 = vadd.f32 %v7056, %v8378
      %8380 = vmatmul.bf16.gmra.mxu0 %v4469
      %v8381 = vpop.f32.mrf.mxu0
      %v8382 = vadd.f32 %v7059, %v8381
      %v8383 = vpop.f32.mrf.mxu0
      %v8384 = vadd.f32 %v7061, %v8383
      %8385 = vmatmul.bf16.gmra.mxu0 %v4472
      %v8386 = vpop.f32.mrf.mxu0
      %v8387 = vadd.f32 %v7064, %v8386
      %v8388 = vpop.f32.mrf.mxu0
      %v8389 = vadd.f32 %v7066, %v8388
      %8390 = vmatmul.bf16.gmra.mxu0 %v4475
      %v8391 = vpop.f32.mrf.mxu0
      %v8392 = vadd.f32 %v7069, %v8391
      %v8393 = vpop.f32.mrf.mxu0
      %v8394 = vadd.f32 %v7071, %v8393
      %8395 = vmatmul.bf16.gmra.mxu0 %v4478
      %v8396 = vpop.f32.mrf.mxu0
      %v8397 = vadd.f32 %v7074, %v8396
      %v8398 = vpop.f32.mrf.mxu0
      %v8399 = vadd.f32 %v7076, %v8398
      %8400 = vmatmul.bf16.gmra.mxu0 %v4481
      %v8401 = vpop.f32.mrf.mxu0
      %v8402 = vadd.f32 %v7079, %v8401
      %v8403 = vpop.f32.mrf.mxu0
      %v8404 = vadd.f32 %v7081, %v8403
      %8405 = vmatmul.bf16.gmra.mxu0 %v4484
      %v8406 = vpop.f32.mrf.mxu0
      %v8407 = vadd.f32 %v7084, %v8406
      %v8408 = vpop.f32.mrf.mxu0
      %v8409 = vadd.f32 %v7086, %v8408
      %8410 = vmatmul.bf16.gmra.mxu0 %v4487
      %v8411 = vpop.f32.mrf.mxu0
      %v8412 = vadd.f32 %v7089, %v8411
      %v8413 = vpop.f32.mrf.mxu0
      %v8414 = vadd.f32 %v7091, %v8413
      %8415 = vmatmul.bf16.gmra.mxu0 %v4490
      %v8416 = vpop.f32.mrf.mxu0
      %v8417 = vadd.f32 %v7094, %v8416
      %v8418 = vpop.f32.mrf.mxu0
      %v8419 = vadd.f32 %v7096, %v8418
      %8420 = vmatmul.bf16.gmra.mxu0 %v4493
      %v8421 = vpop.f32.mrf.mxu0
      %v8422 = vadd.f32 %v7099, %v8421
      %v8423 = vpop.f32.mrf.mxu0
      %v8424 = vadd.f32 %v7101, %v8423
      %8425 = vmatmul.bf16.gmra.mxu0 %v4496
      %v8426 = vpop.f32.mrf.mxu0
      %v8427 = vadd.f32 %v7104, %v8426
      %v8428 = vpop.f32.mrf.mxu0
      %v8429 = vadd.f32 %v7106, %v8428
      %8430 = vmatmul.bf16.gmra.mxu0 %v4499
      %v8431 = vpop.f32.mrf.mxu0
      %v8432 = vadd.f32 %v7109, %v8431
      %v8433 = vpop.f32.mrf.mxu0
      %v8434 = vadd.f32 %v7111, %v8433
      %8435 = vmatmul.bf16.gmra.mxu0 %v4502
      %v8436 = vpop.f32.mrf.mxu0
      %v8437 = vadd.f32 %v7114, %v8436
      %v8438 = vpop.f32.mrf.mxu0
      %v8439 = vadd.f32 %v7116, %v8438
      %8440 = vmatmul.bf16.gmra.mxu0 %v4505
      %v8441 = vpop.f32.mrf.mxu0
      %v8442 = vadd.f32 %v7119, %v8441
      %v8443 = vpop.f32.mrf.mxu0
      %v8444 = vadd.f32 %v7121, %v8443
      %8445 = vmatmul.bf16.gmra.mxu0 %v4508
      %v8446 = vpop.f32.mrf.mxu0
      %v8447 = vadd.f32 %v7124, %v8446
      %v8448 = vpop.f32.mrf.mxu0
      %v8449 = vadd.f32 %v7126, %v8448
      %8450 = vmatmul.bf16.gmra.mxu0 %v4511
      %v8451 = vpop.f32.mrf.mxu0
      %v8452 = vadd.f32 %v7129, %v8451
      %v8453 = vpop.f32.mrf.mxu0
      %v8454 = vadd.f32 %v7131, %v8453
      %8455 = vmatmul.bf16.gmra.mxu0 %v4514
      %v8456 = vpop.f32.mrf.mxu0
      %v8457 = vadd.f32 %v7134, %v8456
      %v8458 = vpop.f32.mrf.mxu0
      %v8459 = vadd.f32 %v7136, %v8458
      %8460 = vmatmul.bf16.gmra.mxu0 %v4517
      %v8461 = vpop.f32.mrf.mxu0
      %v8462 = vadd.f32 %v7139, %v8461
      %v8463 = vpop.f32.mrf.mxu0
      %v8464 = vadd.f32 %v7141, %v8463
      %8465 = vmatmul.bf16.gmra.mxu0 %v4520
      %v8466 = vpop.f32.mrf.mxu0
      %v8467 = vadd.f32 %v7144, %v8466
      %v8468 = vpop.f32.mrf.mxu0
      %v8469 = vadd.f32 %v7146, %v8468
      %8470 = vmatmul.bf16.gmra.mxu0 %v4523
      %v8471 = vpop.f32.mrf.mxu0
      %v8472 = vadd.f32 %v7149, %v8471
      %v8473 = vpop.f32.mrf.mxu0
      %v8474 = vadd.f32 %v7151, %v8473
      %8475 = vmatmul.bf16.gmra.mxu0 %v4526
      %v8476 = vpop.f32.mrf.mxu0
      %v8477 = vadd.f32 %v7154, %v8476
      %v8478 = vpop.f32.mrf.mxu0
      %v8479 = vadd.f32 %v7156, %v8478
      %8480 = vmatmul.bf16.gmra.mxu0 %v4529
      %v8481 = vpop.f32.mrf.mxu0
      %v8482 = vadd.f32 %v7159, %v8481
      %v8483 = vpop.f32.mrf.mxu0
      %v8484 = vadd.f32 %v7161, %v8483
      %8485 = vmatmul.bf16.gmra.mxu0 %v4532
      %v8486 = vpop.f32.mrf.mxu0
      %v8487 = vadd.f32 %v7164, %v8486
      %v8488 = vpop.f32.mrf.mxu0
      %v8489 = vadd.f32 %v7166, %v8488
      %8490 = vmatmul.bf16.gmra.mxu0 %v4535
      %v8491 = vpop.f32.mrf.mxu0
      %v8492 = vadd.f32 %v7169, %v8491
      %v8493 = vpop.f32.mrf.mxu0
      %v8494 = vadd.f32 %v7171, %v8493
      %8495 = vmatmul.bf16.gmra.mxu0 %v4538
      %v8496 = vpop.f32.mrf.mxu0
      %v8497 = vadd.f32 %v7174, %v8496
      %v8498 = vpop.f32.mrf.mxu0
      %v8499 = vadd.f32 %v7176, %v8498
      %8500 = vmatmul.bf16.gmra.mxu0 %v4541
      %v8501 = vpop.f32.mrf.mxu0
      %v8502 = vadd.f32 %v7179, %v8501
      %v8503 = vpop.f32.mrf.mxu0
      %v8504 = vadd.f32 %v7181, %v8503
      %8505 = vmatmul.bf16.gmra.mxu0 %v4544
      %v8506 = vpop.f32.mrf.mxu0
      %v8507 = vadd.f32 %v7184, %v8506
      %v8508 = vpop.f32.mrf.mxu0
      %v8509 = vadd.f32 %v7186, %v8508
      %8510 = vmatmul.bf16.gmra.mxu0 %v4547
      %v8511 = vpop.f32.mrf.mxu0
      %v8512 = vadd.f32 %v7189, %v8511
      %v8513 = vpop.f32.mrf.mxu0
      %v8514 = vadd.f32 %v7191, %v8513
      %8515 = vmatmul.bf16.gmra.mxu0 %v4550
      %v8516 = vpop.f32.mrf.mxu0
      %v8517 = vadd.f32 %v7194, %v8516
      %v8518 = vpop.f32.mrf.mxu0
      %v8519 = vadd.f32 %v7196, %v8518
      %8520 = vmatmul.bf16.gmra.mxu0 %v4553
      %v8521 = vpop.f32.mrf.mxu0
      %v8522 = vadd.f32 %v7199, %v8521
      %v8523 = vpop.f32.mrf.mxu0
      %v8524 = vadd.f32 %v7201, %v8523
      %8525 = vmatmul.bf16.gmra.mxu0 %v4556
      %v8526 = vpop.f32.mrf.mxu0
      %v8527 = vadd.f32 %v7204, %v8526
      %v8528 = vpop.f32.mrf.mxu0
      %v8529 = vadd.f32 %v7206, %v8528
      %8530 = vmatmul.bf16.gmra.mxu0 %v4559
      %v8531 = vpop.f32.mrf.mxu0
      %v8532 = vadd.f32 %v7209, %v8531
      %v8533 = vpop.f32.mrf.mxu0
      %v8534 = vadd.f32 %v7211, %v8533
      %8535 = vmatmul.bf16.gmra.mxu0 %v4562
      %v8536 = vpop.f32.mrf.mxu0
      %v8537 = vadd.f32 %v7214, %v8536
      %v8538 = vpop.f32.mrf.mxu0
      %v8539 = vadd.f32 %v7216, %v8538
      %8540 = vmatmul.bf16.gmra.mxu0 %v4565
      %v8541 = vpop.f32.mrf.mxu0
      %v8542 = vadd.f32 %v7219, %v8541
      %v8543 = vpop.f32.mrf.mxu0
      %v8544 = vadd.f32 %v7221, %v8543
      %8545 = vmatmul.bf16.gmra.mxu0 %v4568
      %v8546 = vpop.f32.mrf.mxu0
      %v8547 = vadd.f32 %v7224, %v8546
      %v8548 = vpop.f32.mrf.mxu0
      %v8549 = vadd.f32 %v7226, %v8548
      %8550 = vmatmul.bf16.gmra.mxu0 %v4571
      %v8551 = vpop.f32.mrf.mxu0
      %v8552 = vadd.f32 %v7229, %v8551
      %v8553 = vpop.f32.mrf.mxu0
      %v8554 = vadd.f32 %v7231, %v8553
      %8555 = vmatmul.bf16.gmra.mxu0 %v4574
      %v8556 = vpop.f32.mrf.mxu0
      %v8557 = vadd.f32 %v7234, %v8556
      %v8558 = vpop.f32.mrf.mxu0
      %v8559 = vadd.f32 %v7236, %v8558
      %8560 = vmatmul.bf16.gmra.mxu0 %v4577
      %v8561 = vpop.f32.mrf.mxu0
      %v8562 = vadd.f32 %v7239, %v8561
      %v8563 = vpop.f32.mrf.mxu0
      %v8564 = vadd.f32 %v7241, %v8563
      %8565 = vmatmul.bf16.gmra.mxu0 %v4580
      %v8566 = vpop.f32.mrf.mxu0
      %v8567 = vadd.f32 %v7244, %v8566
      %v8568 = vpop.f32.mrf.mxu0
      %v8569 = vadd.f32 %v7246, %v8568
      %8570 = vmatmul.bf16.gmra.mxu0 %v4583
      %v8571 = vpop.f32.mrf.mxu0
      %v8572 = vadd.f32 %v7249, %v8571
      %v8573 = vpop.f32.mrf.mxu0
      %v8574 = vadd.f32 %v7251, %v8573
      %8575 = vmatmul.bf16.gmra.mxu0 %v4586
      %v8576 = vpop.f32.mrf.mxu0
      %v8577 = vadd.f32 %v7254, %v8576
      %v8578 = vpop.f32.mrf.mxu0
      %v8579 = vadd.f32 %v7256, %v8578
      %8580 = vmatmul.bf16.gmra.mxu0 %v4589
      %v8581 = vpop.f32.mrf.mxu0
      %v8582 = vadd.f32 %v7259, %v8581
      %v8583 = vpop.f32.mrf.mxu0
      %v8584 = vadd.f32 %v7261, %v8583
      %8585 = vmatmul.bf16.gmra.mxu0 %v4592
      %v8586 = vpop.f32.mrf.mxu0
      %v8587 = vadd.f32 %v7264, %v8586
      %v8588 = vpop.f32.mrf.mxu0
      %v8589 = vadd.f32 %v7266, %v8588
      %8590 = vmatmul.bf16.gmra.mxu0 %v4595
      %v8591 = vpop.f32.mrf.mxu0
      %v8592 = vadd.f32 %v7269, %v8591
      %v8593 = vpop.f32.mrf.mxu0
      %v8594 = vadd.f32 %v7271, %v8593
      %8595 = vmatmul.bf16.gmra.mxu0 %v4598
      %v8596 = vpop.f32.mrf.mxu0
      %v8597 = vadd.f32 %v7274, %v8596
      %v8598 = vpop.f32.mrf.mxu0
      %v8599 = vadd.f32 %v7276, %v8598
      %8600 = vmatmul.bf16.gmra.mxu0 %v4601
      %v8601 = vpop.f32.mrf.mxu0
      %v8602 = vadd.f32 %v7279, %v8601
      %v8603 = vpop.f32.mrf.mxu0
      %v8604 = vadd.f32 %v7281, %v8603
      %8605 = vmatmul.bf16.gmra.mxu0 %v4604
      %v8606 = vpop.f32.mrf.mxu0
      %v8607 = vadd.f32 %v7284, %v8606
      %v8608 = vpop.f32.mrf.mxu0
      %v8609 = vadd.f32 %v7286, %v8608
      %8610 = vmatmul.bf16.gmra.mxu0 %v4607
      %v8611 = vpop.f32.mrf.mxu0
      %v8612 = vadd.f32 %v7289, %v8611
      %v8613 = vpop.f32.mrf.mxu0
      %v8614 = vadd.f32 %v7291, %v8613
      %8615 = vmatmul.bf16.gmra.mxu0 %v4610
      %v8616 = vpop.f32.mrf.mxu0
      %v8617 = vadd.f32 %v7294, %v8616
      %v8618 = vpop.f32.mrf.mxu0
      %v8619 = vadd.f32 %v7296, %v8618
      %8620 = vmatmul.bf16.gmra.mxu0 %v4613
      %v8621 = vpop.f32.mrf.mxu0
      %v8622 = vadd.f32 %v7299, %v8621
      %v8623 = vpop.f32.mrf.mxu0
      %v8624 = vadd.f32 %v7301, %v8623
      %8625 = vmatmul.bf16.gmra.mxu0 %v4616
      %v8626 = vpop.f32.mrf.mxu0
      %v8627 = vadd.f32 %v7304, %v8626
      %v8628 = vpop.f32.mrf.mxu0
      %v8629 = vadd.f32 %v7306, %v8628
      %8630 = vmatmul.bf16.gmra.mxu0 %v4619
      %v8631 = vpop.f32.mrf.mxu0
      %v8632 = vadd.f32 %v7309, %v8631
      %v8633 = vpop.f32.mrf.mxu0
      %v8634 = vadd.f32 %v7311, %v8633
      %8635 = vmatmul.bf16.gmra.mxu0 %v4622
      %v8636 = vpop.f32.mrf.mxu0
      %v8637 = vadd.f32 %v7314, %v8636
      %v8638 = vpop.f32.mrf.mxu0
      %v8639 = vadd.f32 %v7316, %v8638
      %8640 = vmatmul.bf16.gmra.mxu0 %v4625
      %v8641 = vpop.f32.mrf.mxu0
      %v8642 = vadd.f32 %v7319, %v8641
      %v8643 = vpop.f32.mrf.mxu0
      %v8644 = vadd.f32 %v7321, %v8643
      %8645 = vmatmul.bf16.gmra.mxu0 %v4628
      %v8646 = vpop.f32.mrf.mxu0
      %v8647 = vadd.f32 %v7324, %v8646
      %v8648 = vpop.f32.mrf.mxu0
      %v8649 = vadd.f32 %v7326, %v8648
      %8650 = vmatmul.bf16.gmra.mxu0 %v4631
      %v8651 = vpop.f32.mrf.mxu0
      %v8652 = vadd.f32 %v7329, %v8651
      %v8653 = vpop.f32.mrf.mxu0
      %v8654 = vadd.f32 %v7331, %v8653
      %8655 = vmatmul.bf16.gmra.mxu0 %v4634
      %v8656 = vpop.f32.mrf.mxu0
      %v8657 = vadd.f32 %v7334, %v8656
      %v8658 = vpop.f32.mrf.mxu0
      %v8659 = vadd.f32 %v7336, %v8658
      %8660 = vmatmul.bf16.gmra.mxu0 %v4637
      %v8661 = vpop.f32.mrf.mxu0
      %v8662 = vadd.f32 %v7339, %v8661
      %v8663 = vpop.f32.mrf.mxu0
      %v8664 = vadd.f32 %v7341, %v8663
      %8665 = vmatmul.bf16.gmra.mxu0 %v4640
      %v8666 = vpop.f32.mrf.mxu0
      %v8667 = vadd.f32 %v7344, %v8666
      %v8668 = vpop.f32.mrf.mxu0
      %v8669 = vadd.f32 %v7346, %v8668
      %8670 = vmatmul.bf16.gmra.mxu0 %v4643
      %v8671 = vpop.f32.mrf.mxu0
      %v8672 = vadd.f32 %v7349, %v8671
      %v8673 = vpop.f32.mrf.mxu0
      %v8674 = vadd.f32 %v7351, %v8673
      %8675 = vmatmul.bf16.gmra.mxu0 %v4646
      %v8676 = vpop.f32.mrf.mxu0
      %v8677 = vadd.f32 %v7354, %v8676
      %v8678 = vpop.f32.mrf.mxu0
      %v8679 = vadd.f32 %v7356, %v8678
      %8680 = vmatmul.bf16.gmra.mxu0 %v4649
      %v8681 = vpop.f32.mrf.mxu0
      %v8682 = vadd.f32 %v7359, %v8681
      %v8683 = vpop.f32.mrf.mxu0
      %v8684 = vadd.f32 %v7361, %v8683
      %8685 = vmatmul.bf16.gmra.mxu0 %v4652
      %v8686 = vpop.f32.mrf.mxu0
      %v8687 = vadd.f32 %v7364, %v8686
      %v8688 = vpop.f32.mrf.mxu0
      %v8689 = vadd.f32 %v7366, %v8688
      %8690 = vmatmul.bf16.gmra.mxu0 %v4655
      %v8691 = vpop.f32.mrf.mxu0
      %v8692 = vadd.f32 %v7369, %v8691
      %v8693 = vpop.f32.mrf.mxu0
      %v8694 = vadd.f32 %v7371, %v8693
      %8695 = vmatmul.bf16.gmra.mxu0 %v4658
      %v8696 = vpop.f32.mrf.mxu0
      %v8697 = vadd.f32 %v7374, %v8696
      %v8698 = vpop.f32.mrf.mxu0
      %v8699 = vadd.f32 %v7376, %v8698
      %8700 = vmatmul.bf16.gmra.mxu0 %v4661
      %v8701 = vpop.f32.mrf.mxu0
      %v8702 = vadd.f32 %v7379, %v8701
      %v8703 = vpop.f32.mrf.mxu0
      %v8704 = vadd.f32 %v7381, %v8703
      %8705 = vmatmul.bf16.gmra.mxu0 %v4664
      %v8706 = vpop.f32.mrf.mxu0
      %v8707 = vadd.f32 %v7384, %v8706
      %v8708 = vpop.f32.mrf.mxu0
      %v8709 = vadd.f32 %v7386, %v8708
      %8710 = vmatmul.bf16.gmra.mxu0 %v4667
      %v8711 = vpop.f32.mrf.mxu0
      %v8712 = vadd.f32 %v7389, %v8711
      %v8713 = vpop.f32.mrf.mxu0
      %v8714 = vadd.f32 %v7391, %v8713
      %8715 = vmatmul.bf16.gmra.mxu0 %v4670
      %v8716 = vpop.f32.mrf.mxu0
      %v8717 = vadd.f32 %v7394, %v8716
      %v8718 = vpop.f32.mrf.mxu0
      %v8719 = vadd.f32 %v7396, %v8718
      %8720 = vmatmul.bf16.gmra.mxu0 %v4673
      %v8721 = vpop.f32.mrf.mxu0
      %v8722 = vadd.f32 %v7399, %v8721
      %v8723 = vpop.f32.mrf.mxu0
      %v8724 = vadd.f32 %v7401, %v8723
      %8725 = vmatmul.bf16.gmra.mxu0 %v4676
      %v8726 = vpop.f32.mrf.mxu0
      %v8727 = vadd.f32 %v7404, %v8726
      %v8728 = vpop.f32.mrf.mxu0
      %v8729 = vadd.f32 %v7406, %v8728
      %8730 = vmatmul.bf16.gmra.mxu0 %v4679
      %v8731 = vpop.f32.mrf.mxu0
      %v8732 = vadd.f32 %v7409, %v8731
      %v8733 = vpop.f32.mrf.mxu0
      %v8734 = vadd.f32 %v7411, %v8733
      %8735 = vmatmul.bf16.gmra.mxu0 %v4682
      %v8736 = vpop.f32.mrf.mxu0
      %v8737 = vadd.f32 %v7414, %v8736
      %v8738 = vpop.f32.mrf.mxu0
      %v8739 = vadd.f32 %v7416, %v8738
      %8740 = vmatmul.bf16.gmra.mxu0 %v4685
      %v8741 = vpop.f32.mrf.mxu0
      %v8742 = vadd.f32 %v7419, %v8741
      %v8743 = vpop.f32.mrf.mxu0
      %v8744 = vadd.f32 %v7421, %v8743
      %8745 = vmatmul.bf16.gmra.mxu0 %v4688
      %v8746 = vpop.f32.mrf.mxu0
      %v8747 = vadd.f32 %v7424, %v8746
      %v8748 = vpop.f32.mrf.mxu0
      %v8749 = vadd.f32 %v7426, %v8748
      %8750 = vmatmul.bf16.gmra.mxu0 %v4691
      %v8751 = vpop.f32.mrf.mxu0
      %v8752 = vadd.f32 %v7429, %v8751
      %v8753 = vpop.f32.mrf.mxu0
      %v8754 = vadd.f32 %v7431, %v8753
      %8755 = vmatmul.bf16.gmra.mxu0 %v4694
      %v8756 = vpop.f32.mrf.mxu0
      %v8757 = vadd.f32 %v7434, %v8756
      %v8758 = vpop.f32.mrf.mxu0
      %v8759 = vadd.f32 %v7436, %v8758
      %8760 = vmatmul.bf16.gmra.mxu0 %v4697
      %v8761 = vpop.f32.mrf.mxu0
      %v8762 = vadd.f32 %v7439, %v8761
      %v8763 = vpop.f32.mrf.mxu0
      %v8764 = vadd.f32 %v7441, %v8763
      %8765 = vmatmul.bf16.gmra.mxu0 %v4700
      %v8766 = vpop.f32.mrf.mxu0
      %v8767 = vadd.f32 %v7444, %v8766
      %v8768 = vpop.f32.mrf.mxu0
      %v8769 = vadd.f32 %v7446, %v8768
      %8770 = vmatmul.bf16.gmra.mxu0 %v4703
      %v8771 = vpop.f32.mrf.mxu0
      %v8772 = vadd.f32 %v7449, %v8771
      %v8773 = vpop.f32.mrf.mxu0
      %8774 = vdwg.mxu0
      %8775 = vmatpush.bf16.msra.mxu0 0
      %8776 = vmatpush.bf16.msra.mxu0 0
      %8777 = vmatpush.bf16.msra.mxu0 0
      %8778 = vmatpush.bf16.msra.mxu0 0
      %8779 = vmatpush.bf16.msra.mxu0 0
      %8780 = vmatpush.bf16.msra.mxu0 0
      %8781 = vmatpush.bf16.msra.mxu0 %v5320
      %8782 = vmatpush.bf16.msra.mxu0 %v5319
      %8783 = vmatmul.bf16.gmra.mxu0 %v5341
      %v8784 = vpop.f32.mrf.mxu0
      %v8785 = vadd.f32 %v7462, %v8784
      %v8786 = vpop.f32.mrf.mxu0
      %v8787 = vadd.f32 %v7464, %v8786
      %8788 = vmatmul.bf16.gmra.mxu0 %v5344
      %v8789 = vpop.f32.mrf.mxu0
      %v8790 = vadd.f32 %v7467, %v8789
      %v8791 = vpop.f32.mrf.mxu0
      %v8792 = vadd.f32 %v7469, %v8791
      %8793 = vmatmul.bf16.gmra.mxu0 %v5347
      %v8794 = vpop.f32.mrf.mxu0
      %v8795 = vadd.f32 %v7472, %v8794
      %v8796 = vpop.f32.mrf.mxu0
      %v8797 = vadd.f32 %v7474, %v8796
      %8798 = vmatmul.bf16.gmra.mxu0 %v5350
      %v8799 = vpop.f32.mrf.mxu0
      %v8800 = vadd.f32 %v7477, %v8799
      %v8801 = vpop.f32.mrf.mxu0
      %v8802 = vadd.f32 %v7479, %v8801
      %8803 = vmatmul.bf16.gmra.mxu0 %v5353
      %v8804 = vpop.f32.mrf.mxu0
      %v8805 = vadd.f32 %v7482, %v8804
      %v8806 = vpop.f32.mrf.mxu0
      %v8807 = vadd.f32 %v7484, %v8806
      %8808 = vmatmul.bf16.gmra.mxu0 %v5356
      %v8809 = vpop.f32.mrf.mxu0
      %v8810 = vadd.f32 %v7487, %v8809
      %v8811 = vpop.f32.mrf.mxu0
      %v8812 = vadd.f32 %v7489, %v8811
      %8813 = vmatmul.bf16.gmra.mxu0 %v5359
      %v8814 = vpop.f32.mrf.mxu0
      %v8815 = vadd.f32 %v7492, %v8814
      %v8816 = vpop.f32.mrf.mxu0
      %v8817 = vadd.f32 %v7494, %v8816
      %8818 = vmatmul.bf16.gmra.mxu0 %v5362
      %v8819 = vpop.f32.mrf.mxu0
      %v8820 = vadd.f32 %v7497, %v8819
      %v8821 = vpop.f32.mrf.mxu0
      %v8822 = vadd.f32 %v7499, %v8821
      %8823 = vmatmul.bf16.gmra.mxu0 %v5365
      %v8824 = vpop.f32.mrf.mxu0
      %v8825 = vadd.f32 %v7502, %v8824
      %v8826 = vpop.f32.mrf.mxu0
      %v8827 = vadd.f32 %v7504, %v8826
      %8828 = vmatmul.bf16.gmra.mxu0 %v5368
      %v8829 = vpop.f32.mrf.mxu0
      %v8830 = vadd.f32 %v7507, %v8829
      %v8831 = vpop.f32.mrf.mxu0
      %v8832 = vadd.f32 %v7509, %v8831
      %8833 = vmatmul.bf16.gmra.mxu0 %v5371
      %v8834 = vpop.f32.mrf.mxu0
      %v8835 = vadd.f32 %v7512, %v8834
      %v8836 = vpop.f32.mrf.mxu0
      %v8837 = vadd.f32 %v7514, %v8836
      %8838 = vmatmul.bf16.gmra.mxu0 %v5374
      %v8839 = vpop.f32.mrf.mxu0
      %v8840 = vadd.f32 %v7517, %v8839
      %v8841 = vpop.f32.mrf.mxu0
      %v8842 = vadd.f32 %v7519, %v8841
      %8843 = vmatmul.bf16.gmra.mxu0 %v5377
      %v8844 = vpop.f32.mrf.mxu0
      %v8845 = vadd.f32 %v7522, %v8844
      %v8846 = vpop.f32.mrf.mxu0
      %v8847 = vadd.f32 %v7524, %v8846
      %8848 = vmatmul.bf16.gmra.mxu0 %v5380
      %v8849 = vpop.f32.mrf.mxu0
      %v8850 = vadd.f32 %v7527, %v8849
      %v8851 = vpop.f32.mrf.mxu0
      %v8852 = vadd.f32 %v7529, %v8851
      %8853 = vmatmul.bf16.gmra.mxu0 %v5383
      %v8854 = vpop.f32.mrf.mxu0
      %v8855 = vadd.f32 %v7532, %v8854
      %v8856 = vpop.f32.mrf.mxu0
      %v8857 = vadd.f32 %v7534, %v8856
      %8858 = vmatmul.bf16.gmra.mxu0 %v5386
      %v8859 = vpop.f32.mrf.mxu0
      %v8860 = vadd.f32 %v7537, %v8859
      %v8861 = vpop.f32.mrf.mxu0
      %v8862 = vadd.f32 %v7539, %v8861
      %8863 = vmatmul.bf16.gmra.mxu0 %v5389
      %v8864 = vpop.f32.mrf.mxu0
      %v8865 = vadd.f32 %v7542, %v8864
      %v8866 = vpop.f32.mrf.mxu0
      %v8867 = vadd.f32 %v7544, %v8866
      %8868 = vmatmul.bf16.gmra.mxu0 %v5392
      %v8869 = vpop.f32.mrf.mxu0
      %v8870 = vadd.f32 %v7547, %v8869
      %v8871 = vpop.f32.mrf.mxu0
      %v8872 = vadd.f32 %v7549, %v8871
      %8873 = vmatmul.bf16.gmra.mxu0 %v5395
      %v8874 = vpop.f32.mrf.mxu0
      %v8875 = vadd.f32 %v7552, %v8874
      %v8876 = vpop.f32.mrf.mxu0
      %v8877 = vadd.f32 %v7554, %v8876
      %8878 = vmatmul.bf16.gmra.mxu0 %v5398
      %v8879 = vpop.f32.mrf.mxu0
      %v8880 = vadd.f32 %v7557, %v8879
      %v8881 = vpop.f32.mrf.mxu0
      %v8882 = vadd.f32 %v7559, %v8881
      %8883 = vmatmul.bf16.gmra.mxu0 %v5401
      %v8884 = vpop.f32.mrf.mxu0
      %v8885 = vadd.f32 %v7562, %v8884
      %v8886 = vpop.f32.mrf.mxu0
      %v8887 = vadd.f32 %v7564, %v8886
      %8888 = vmatmul.bf16.gmra.mxu0 %v5404
      %v8889 = vpop.f32.mrf.mxu0
      %v8890 = vadd.f32 %v7567, %v8889
      %v8891 = vpop.f32.mrf.mxu0
      %v8892 = vadd.f32 %v7569, %v8891
      %8893 = vmatmul.bf16.gmra.mxu0 %v5407
      %v8894 = vpop.f32.mrf.mxu0
      %v8895 = vadd.f32 %v7572, %v8894
      %v8896 = vpop.f32.mrf.mxu0
      %v8897 = vadd.f32 %v7574, %v8896
      %8898 = vmatmul.bf16.gmra.mxu0 %v5410
      %v8899 = vpop.f32.mrf.mxu0
      %v8900 = vadd.f32 %v7577, %v8899
      %v8901 = vpop.f32.mrf.mxu0
      %v8902 = vadd.f32 %v7579, %v8901
      %8903 = vmatmul.bf16.gmra.mxu0 %v5413
      %v8904 = vpop.f32.mrf.mxu0
      %v8905 = vadd.f32 %v7582, %v8904
      %v8906 = vpop.f32.mrf.mxu0
      %v8907 = vadd.f32 %v7584, %v8906
      %8908 = vmatmul.bf16.gmra.mxu0 %v5416
      %v8909 = vpop.f32.mrf.mxu0
      %v8910 = vadd.f32 %v7587, %v8909
      %v8911 = vpop.f32.mrf.mxu0
      %v8912 = vadd.f32 %v7589, %v8911
      %8913 = vmatmul.bf16.gmra.mxu0 %v5419
      %v8914 = vpop.f32.mrf.mxu0
      %v8915 = vadd.f32 %v7592, %v8914
      %v8916 = vpop.f32.mrf.mxu0
      %v8917 = vadd.f32 %v7594, %v8916
      %8918 = vmatmul.bf16.gmra.mxu0 %v5422
      %v8919 = vpop.f32.mrf.mxu0
      %v8920 = vadd.f32 %v7597, %v8919
      %v8921 = vpop.f32.mrf.mxu0
      %v8922 = vadd.f32 %v7599, %v8921
      %8923 = vmatmul.bf16.gmra.mxu0 %v5425
      %v8924 = vpop.f32.mrf.mxu0
      %v8925 = vadd.f32 %v7602, %v8924
      %v8926 = vpop.f32.mrf.mxu0
      %v8927 = vadd.f32 %v7604, %v8926
      %8928 = vmatmul.bf16.gmra.mxu0 %v5428
      %v8929 = vpop.f32.mrf.mxu0
      %v8930 = vadd.f32 %v7607, %v8929
      %v8931 = vpop.f32.mrf.mxu0
      %v8932 = vadd.f32 %v7609, %v8931
      %8933 = vmatmul.bf16.gmra.mxu0 %v5431
      %v8934 = vpop.f32.mrf.mxu0
      %v8935 = vadd.f32 %v7612, %v8934
      %v8936 = vpop.f32.mrf.mxu0
      %v8937 = vadd.f32 %v7614, %v8936
      %8938 = vmatmul.bf16.gmra.mxu0 %v5434
      %v8939 = vpop.f32.mrf.mxu0
      %v8940 = vadd.f32 %v7617, %v8939
      %v8941 = vpop.f32.mrf.mxu0
      %v8942 = vadd.f32 %v7619, %v8941
      %8943 = vmatmul.bf16.gmra.mxu0 %v5437
      %v8944 = vpop.f32.mrf.mxu0
      %v8945 = vadd.f32 %v7622, %v8944
      %v8946 = vpop.f32.mrf.mxu0
      %v8947 = vadd.f32 %v7624, %v8946
      %8948 = vmatmul.bf16.gmra.mxu0 %v5440
      %v8949 = vpop.f32.mrf.mxu0
      %v8950 = vadd.f32 %v7627, %v8949
      %v8951 = vpop.f32.mrf.mxu0
      %v8952 = vadd.f32 %v7629, %v8951
      %8953 = vmatmul.bf16.gmra.mxu0 %v5443
      %v8954 = vpop.f32.mrf.mxu0
      %v8955 = vadd.f32 %v7632, %v8954
      %v8956 = vpop.f32.mrf.mxu0
      %v8957 = vadd.f32 %v7634, %v8956
      %8958 = vmatmul.bf16.gmra.mxu0 %v5446
      %v8959 = vpop.f32.mrf.mxu0
      %v8960 = vadd.f32 %v7637, %v8959
      %v8961 = vpop.f32.mrf.mxu0
      %v8962 = vadd.f32 %v7639, %v8961
      %8963 = vmatmul.bf16.gmra.mxu0 %v5449
      %v8964 = vpop.f32.mrf.mxu0
      %v8965 = vadd.f32 %v7642, %v8964
      %v8966 = vpop.f32.mrf.mxu0
      %v8967 = vadd.f32 %v7644, %v8966
      %8968 = vmatmul.bf16.gmra.mxu0 %v5452
      %v8969 = vpop.f32.mrf.mxu0
      %v8970 = vadd.f32 %v7647, %v8969
      %v8971 = vpop.f32.mrf.mxu0
      %v8972 = vadd.f32 %v7649, %v8971
      %8973 = vmatmul.bf16.gmra.mxu0 %v5455
      %v8974 = vpop.f32.mrf.mxu0
      %v8975 = vadd.f32 %v7652, %v8974
      %v8976 = vpop.f32.mrf.mxu0
      %v8977 = vadd.f32 %v7654, %v8976
      %8978 = vmatmul.bf16.gmra.mxu0 %v5458
      %v8979 = vpop.f32.mrf.mxu0
      %v8980 = vadd.f32 %v7657, %v8979
      %v8981 = vpop.f32.mrf.mxu0
      %v8982 = vadd.f32 %v7659, %v8981
      %8983 = vmatmul.bf16.gmra.mxu0 %v5461
      %v8984 = vpop.f32.mrf.mxu0
      %v8985 = vadd.f32 %v7662, %v8984
      %v8986 = vpop.f32.mrf.mxu0
      %v8987 = vadd.f32 %v7664, %v8986
      %8988 = vmatmul.bf16.gmra.mxu0 %v5464
      %v8989 = vpop.f32.mrf.mxu0
      %v8990 = vadd.f32 %v7667, %v8989
      %v8991 = vpop.f32.mrf.mxu0
      %v8992 = vadd.f32 %v7669, %v8991
      %8993 = vmatmul.bf16.gmra.mxu0 %v5467
      %v8994 = vpop.f32.mrf.mxu0
      %v8995 = vadd.f32 %v7672, %v8994
      %v8996 = vpop.f32.mrf.mxu0
      %v8997 = vadd.f32 %v7674, %v8996
      %8998 = vmatmul.bf16.gmra.mxu0 %v5470
      %v8999 = vpop.f32.mrf.mxu0
      %v9000 = vadd.f32 %v7677, %v8999
      %v9001 = vpop.f32.mrf.mxu0
      %v9002 = vadd.f32 %v7679, %v9001
      %9003 = vmatmul.bf16.gmra.mxu0 %v5473
      %v9004 = vpop.f32.mrf.mxu0
      %v9005 = vadd.f32 %v7682, %v9004
      %v9006 = vpop.f32.mrf.mxu0
      %v9007 = vadd.f32 %v7684, %v9006
      %9008 = vmatmul.bf16.gmra.mxu0 %v5476
      %v9009 = vpop.f32.mrf.mxu0
      %v9010 = vadd.f32 %v7687, %v9009
      %v9011 = vpop.f32.mrf.mxu0
      %v9012 = vadd.f32 %v7689, %v9011
      %9013 = vmatmul.bf16.gmra.mxu0 %v5479
      %v9014 = vpop.f32.mrf.mxu0
      %v9015 = vadd.f32 %v7692, %v9014
      %v9016 = vpop.f32.mrf.mxu0
      %v9017 = vadd.f32 %v7694, %v9016
      %9018 = vmatmul.bf16.gmra.mxu0 %v5482
      %v9019 = vpop.f32.mrf.mxu0
      %v9020 = vadd.f32 %v7697, %v9019
      %v9021 = vpop.f32.mrf.mxu0
      %v9022 = vadd.f32 %v7699, %v9021
      %9023 = vmatmul.bf16.gmra.mxu0 %v5485
      %v9024 = vpop.f32.mrf.mxu0
      %v9025 = vadd.f32 %v7702, %v9024
      %v9026 = vpop.f32.mrf.mxu0
      %v9027 = vadd.f32 %v7704, %v9026
      %9028 = vmatmul.bf16.gmra.mxu0 %v5488
      %v9029 = vpop.f32.mrf.mxu0
      %v9030 = vadd.f32 %v7707, %v9029
      %v9031 = vpop.f32.mrf.mxu0
      %v9032 = vadd.f32 %v7709, %v9031
      %9033 = vmatmul.bf16.gmra.mxu0 %v5491
      %v9034 = vpop.f32.mrf.mxu0
      %v9035 = vadd.f32 %v7712, %v9034
      %v9036 = vpop.f32.mrf.mxu0
      %v9037 = vadd.f32 %v7714, %v9036
      %9038 = vmatmul.bf16.gmra.mxu0 %v5494
      %v9039 = vpop.f32.mrf.mxu0
      %v9040 = vadd.f32 %v7717, %v9039
      %v9041 = vpop.f32.mrf.mxu0
      %v9042 = vadd.f32 %v7719, %v9041
      %9043 = vmatmul.bf16.gmra.mxu0 %v5497
      %v9044 = vpop.f32.mrf.mxu0
      %v9045 = vadd.f32 %v7722, %v9044
      %v9046 = vpop.f32.mrf.mxu0
      %v9047 = vadd.f32 %v7724, %v9046
      %9048 = vmatmul.bf16.gmra.mxu0 %v5500
      %v9049 = vpop.f32.mrf.mxu0
      %v9050 = vadd.f32 %v7727, %v9049
      %v9051 = vpop.f32.mrf.mxu0
      %v9052 = vadd.f32 %v7729, %v9051
      %9053 = vmatmul.bf16.gmra.mxu0 %v5503
      %v9054 = vpop.f32.mrf.mxu0
      %v9055 = vadd.f32 %v7732, %v9054
      %v9056 = vpop.f32.mrf.mxu0
      %v9057 = vadd.f32 %v7734, %v9056
      %9058 = vmatmul.bf16.gmra.mxu0 %v5506
      %v9059 = vpop.f32.mrf.mxu0
      %v9060 = vadd.f32 %v7737, %v9059
      %v9061 = vpop.f32.mrf.mxu0
      %v9062 = vadd.f32 %v7739, %v9061
      %9063 = vmatmul.bf16.gmra.mxu0 %v5509
      %v9064 = vpop.f32.mrf.mxu0
      %v9065 = vadd.f32 %v7742, %v9064
      %v9066 = vpop.f32.mrf.mxu0
      %v9067 = vadd.f32 %v7744, %v9066
      %9068 = vmatmul.bf16.gmra.mxu0 %v5512
      %v9069 = vpop.f32.mrf.mxu0
      %v9070 = vadd.f32 %v7747, %v9069
      %v9071 = vpop.f32.mrf.mxu0
      %v9072 = vadd.f32 %v7749, %v9071
      %9073 = vmatmul.bf16.gmra.mxu0 %v5515
      %v9074 = vpop.f32.mrf.mxu0
      %v9075 = vadd.f32 %v7752, %v9074
      %v9076 = vpop.f32.mrf.mxu0
      %v9077 = vadd.f32 %v7754, %v9076
      %9078 = vmatmul.bf16.gmra.mxu0 %v5518
      %v9079 = vpop.f32.mrf.mxu0
      %v9080 = vadd.f32 %v7757, %v9079
      %v9081 = vpop.f32.mrf.mxu0
      %v9082 = vadd.f32 %v7759, %v9081
      %9083 = vmatmul.bf16.gmra.mxu0 %v5521
      %v9084 = vpop.f32.mrf.mxu0
      %v9085 = vadd.f32 %v7762, %v9084
      %v9086 = vpop.f32.mrf.mxu0
      %v9087 = vadd.f32 %v7764, %v9086
      %9088 = vmatmul.bf16.gmra.mxu0 %v5524
      %v9089 = vpop.f32.mrf.mxu0
      %v9090 = vadd.f32 %v7767, %v9089
      %v9091 = vpop.f32.mrf.mxu0
      %v9092 = vadd.f32 %v7769, %v9091
      %9093 = vmatmul.bf16.gmra.mxu0 %v5527
      %v9094 = vpop.f32.mrf.mxu0
      %v9095 = vadd.f32 %v7772, %v9094
      %v9096 = vpop.f32.mrf.mxu0
      %v9097 = vadd.f32 %v7774, %v9096
      %9098 = vmatmul.bf16.gmra.mxu0 %v5530
      %v9099 = vpop.f32.mrf.mxu0
      %v9100 = vadd.f32 %v7777, %v9099
      %v9101 = vpop.f32.mrf.mxu0
      %v9102 = vadd.f32 %v7779, %v9101
      %9103 = vmatmul.bf16.gmra.mxu0 %v5533
      %v9104 = vpop.f32.mrf.mxu0
      %v9105 = vadd.f32 %v7782, %v9104
      %v9106 = vpop.f32.mrf.mxu0
      %v9107 = vadd.f32 %v7784, %v9106
      %9108 = vmatmul.bf16.gmra.mxu0 %v5536
      %v9109 = vpop.f32.mrf.mxu0
      %v9110 = vadd.f32 %v7787, %v9109
      %v9111 = vpop.f32.mrf.mxu0
      %v9112 = vadd.f32 %v7789, %v9111
      %9113 = vmatmul.bf16.gmra.mxu0 %v5539
      %v9114 = vpop.f32.mrf.mxu0
      %v9115 = vadd.f32 %v7792, %v9114
      %v9116 = vpop.f32.mrf.mxu0
      %v9117 = vadd.f32 %v7794, %v9116
      %9118 = vmatmul.bf16.gmra.mxu0 %v5542
      %v9119 = vpop.f32.mrf.mxu0
      %v9120 = vadd.f32 %v7797, %v9119
      %v9121 = vpop.f32.mrf.mxu0
      %v9122 = vadd.f32 %v7799, %v9121
      %9123 = vmatmul.bf16.gmra.mxu0 %v5545
      %v9124 = vpop.f32.mrf.mxu0
      %v9125 = vadd.f32 %v7802, %v9124
      %v9126 = vpop.f32.mrf.mxu0
      %v9127 = vadd.f32 %v7804, %v9126
      %9128 = vmatmul.bf16.gmra.mxu0 %v5548
      %v9129 = vpop.f32.mrf.mxu0
      %v9130 = vadd.f32 %v7807, %v9129
      %v9131 = vpop.f32.mrf.mxu0
      %v9132 = vadd.f32 %v7809, %v9131
      %9133 = vmatmul.bf16.gmra.mxu0 %v5551
      %v9134 = vpop.f32.mrf.mxu0
      %v9135 = vadd.f32 %v7812, %v9134
      %v9136 = vpop.f32.mrf.mxu0
      %v9137 = vadd.f32 %v7814, %v9136
      %9138 = vmatmul.bf16.gmra.mxu0 %v5554
      %v9139 = vpop.f32.mrf.mxu0
      %v9140 = vadd.f32 %v7817, %v9139
      %v9141 = vpop.f32.mrf.mxu0
      %v9142 = vadd.f32 %v7819, %v9141
      %9143 = vmatmul.bf16.gmra.mxu0 %v5557
      %v9144 = vpop.f32.mrf.mxu0
      %v9145 = vadd.f32 %v7822, %v9144
      %v9146 = vpop.f32.mrf.mxu0
      %v9147 = vadd.f32 %v7824, %v9146
      %9148 = vmatmul.bf16.gmra.mxu0 %v5560
      %v9149 = vpop.f32.mrf.mxu0
      %v9150 = vadd.f32 %v7827, %v9149
      %v9151 = vpop.f32.mrf.mxu0
      %v9152 = vadd.f32 %v7829, %v9151
      %9153 = vmatmul.bf16.gmra.mxu0 %v5563
      %v9154 = vpop.f32.mrf.mxu0
      %v9155 = vadd.f32 %v7832, %v9154
      %v9156 = vpop.f32.mrf.mxu0
      %v9157 = vadd.f32 %v7834, %v9156
      %9158 = vmatmul.bf16.gmra.mxu0 %v5566
      %v9159 = vpop.f32.mrf.mxu0
      %v9160 = vadd.f32 %v7837, %v9159
      %v9161 = vpop.f32.mrf.mxu0
      %v9162 = vadd.f32 %v7839, %v9161
      %9163 = vmatmul.bf16.gmra.mxu0 %v5569
      %v9164 = vpop.f32.mrf.mxu0
      %v9165 = vadd.f32 %v7842, %v9164
      %v9166 = vpop.f32.mrf.mxu0
      %v9167 = vadd.f32 %v7844, %v9166
      %9168 = vmatmul.bf16.gmra.mxu0 %v5572
      %v9169 = vpop.f32.mrf.mxu0
      %v9170 = vadd.f32 %v7847, %v9169
      %v9171 = vpop.f32.mrf.mxu0
      %v9172 = vadd.f32 %v7849, %v9171
      %9173 = vmatmul.bf16.gmra.mxu0 %v5575
      %v9174 = vpop.f32.mrf.mxu0
      %v9175 = vadd.f32 %v7852, %v9174
      %v9176 = vpop.f32.mrf.mxu0
      %v9177 = vadd.f32 %v7854, %v9176
      %9178 = vmatmul.bf16.gmra.mxu0 %v5578
      %v9179 = vpop.f32.mrf.mxu0
      %v9180 = vadd.f32 %v7857, %v9179
      %v9181 = vpop.f32.mrf.mxu0
      %v9182 = vadd.f32 %v7859, %v9181
      %9183 = vmatmul.bf16.gmra.mxu0 %v5581
      %v9184 = vpop.f32.mrf.mxu0
      %v9185 = vadd.f32 %v7862, %v9184
      %v9186 = vpop.f32.mrf.mxu0
      %v9187 = vadd.f32 %v7864, %v9186
      %9188 = vmatmul.bf16.gmra.mxu0 %v5584
      %v9189 = vpop.f32.mrf.mxu0
      %v9190 = vadd.f32 %v7867, %v9189
      %v9191 = vpop.f32.mrf.mxu0
      %v9192 = vadd.f32 %v7869, %v9191
      %9193 = vmatmul.bf16.gmra.mxu0 %v5587
      %v9194 = vpop.f32.mrf.mxu0
      %v9195 = vadd.f32 %v7872, %v9194
      %v9196 = vpop.f32.mrf.mxu0
      %v9197 = vadd.f32 %v7874, %v9196
      %9198 = vmatmul.bf16.gmra.mxu0 %v5590
      %v9199 = vpop.f32.mrf.mxu0
      %v9200 = vadd.f32 %v7877, %v9199
      %v9201 = vpop.f32.mrf.mxu0
      %v9202 = vadd.f32 %v7879, %v9201
      %9203 = vmatmul.bf16.gmra.mxu0 %v5593
      %v9204 = vpop.f32.mrf.mxu0
      %v9205 = vadd.f32 %v7882, %v9204
      %v9206 = vpop.f32.mrf.mxu0
      %v9207 = vadd.f32 %v7884, %v9206
      %9208 = vmatmul.bf16.gmra.mxu0 %v5596
      %v9209 = vpop.f32.mrf.mxu0
      %v9210 = vadd.f32 %v7887, %v9209
      %v9211 = vpop.f32.mrf.mxu0
      %v9212 = vadd.f32 %v7889, %v9211
      %9213 = vmatmul.bf16.gmra.mxu0 %v5599
      %v9214 = vpop.f32.mrf.mxu0
      %v9215 = vadd.f32 %v7892, %v9214
      %v9216 = vpop.f32.mrf.mxu0
      %v9217 = vadd.f32 %v7894, %v9216
      %9218 = vmatmul.bf16.gmra.mxu0 %v5602
      %v9219 = vpop.f32.mrf.mxu0
      %v9220 = vadd.f32 %v7897, %v9219
      %v9221 = vpop.f32.mrf.mxu0
      %v9222 = vadd.f32 %v7899, %v9221
      %9223 = vmatmul.bf16.gmra.mxu0 %v5605
      %v9224 = vpop.f32.mrf.mxu0
      %v9225 = vadd.f32 %v7902, %v9224
      %v9226 = vpop.f32.mrf.mxu0
      %v9227 = vadd.f32 %v7904, %v9226
      %9228 = vmatmul.bf16.gmra.mxu0 %v5608
      %v9229 = vpop.f32.mrf.mxu0
      %v9230 = vadd.f32 %v7907, %v9229
      %v9231 = vpop.f32.mrf.mxu0
      %v9232 = vadd.f32 %v7909, %v9231
      %9233 = vmatmul.bf16.gmra.mxu0 %v5611
      %v9234 = vpop.f32.mrf.mxu0
      %v9235 = vadd.f32 %v7912, %v9234
      %v9236 = vpop.f32.mrf.mxu0
      %v9237 = vadd.f32 %v7914, %v9236
      %9238 = vmatmul.bf16.gmra.mxu0 %v5614
      %v9239 = vpop.f32.mrf.mxu0
      %v9240 = vadd.f32 %v7917, %v9239
      %v9241 = vpop.f32.mrf.mxu0
      %v9242 = vadd.f32 %v7919, %v9241
      %9243 = vmatmul.bf16.gmra.mxu0 %v5617
      %v9244 = vpop.f32.mrf.mxu0
      %v9245 = vadd.f32 %v7922, %v9244
      %v9246 = vpop.f32.mrf.mxu0
      %v9247 = vadd.f32 %v7924, %v9246
      %9248 = vmatmul.bf16.gmra.mxu0 %v5620
      %v9249 = vpop.f32.mrf.mxu0
      %v9250 = vadd.f32 %v7927, %v9249
      %v9251 = vpop.f32.mrf.mxu0
      %v9252 = vadd.f32 %v7929, %v9251
      %9253 = vmatmul.bf16.gmra.mxu0 %v5623
      %v9254 = vpop.f32.mrf.mxu0
      %v9255 = vadd.f32 %v7932, %v9254
      %v9256 = vpop.f32.mrf.mxu0
      %v9257 = vadd.f32 %v7934, %v9256
      %9258 = vmatmul.bf16.gmra.mxu0 %v5626
      %v9259 = vpop.f32.mrf.mxu0
      %v9260 = vadd.f32 %v7937, %v9259
      %v9261 = vpop.f32.mrf.mxu0
      %v9262 = vadd.f32 %v7939, %v9261
      %9263 = vmatmul.bf16.gmra.mxu0 %v5629
      %v9264 = vpop.f32.mrf.mxu0
      %v9265 = vadd.f32 %v7942, %v9264
      %v9266 = vpop.f32.mrf.mxu0
      %v9267 = vadd.f32 %v7944, %v9266
      %9268 = vmatmul.bf16.gmra.mxu0 %v5632
      %v9269 = vpop.f32.mrf.mxu0
      %v9270 = vadd.f32 %v7947, %v9269
      %v9271 = vpop.f32.mrf.mxu0
      %v9272 = vadd.f32 %v7949, %v9271
      %9273 = vmatmul.bf16.gmra.mxu0 %v5635
      %v9274 = vpop.f32.mrf.mxu0
      %v9275 = vadd.f32 %v7952, %v9274
      %v9276 = vpop.f32.mrf.mxu0
      %v9277 = vadd.f32 %v7954, %v9276
      %9278 = vmatmul.bf16.gmra.mxu0 %v5638
      %v9279 = vpop.f32.mrf.mxu0
      %v9280 = vadd.f32 %v7957, %v9279
      %v9281 = vpop.f32.mrf.mxu0
      %v9282 = vadd.f32 %v7959, %v9281
      %9283 = vmatmul.bf16.gmra.mxu0 %v5641
      %v9284 = vpop.f32.mrf.mxu0
      %v9285 = vadd.f32 %v7962, %v9284
      %v9286 = vpop.f32.mrf.mxu0
      %v9287 = vadd.f32 %v7964, %v9286
      %9288 = vmatmul.bf16.gmra.mxu0 %v5644
      %v9289 = vpop.f32.mrf.mxu0
      %v9290 = vadd.f32 %v7967, %v9289
      %v9291 = vpop.f32.mrf.mxu0
      %v9292 = vadd.f32 %v7969, %v9291
      %9293 = vmatmul.bf16.gmra.mxu0 %v5647
      %v9294 = vpop.f32.mrf.mxu0
      %v9295 = vadd.f32 %v7972, %v9294
      %v9296 = vpop.f32.mrf.mxu0
      %v9297 = vadd.f32 %v7974, %v9296
      %9298 = vmatmul.bf16.gmra.mxu0 %v5650
      %v9299 = vpop.f32.mrf.mxu0
      %v9300 = vadd.f32 %v7977, %v9299
      %v9301 = vpop.f32.mrf.mxu0
      %v9302 = vadd.f32 %v7979, %v9301
      %9303 = vmatmul.bf16.gmra.mxu0 %v5653
      %v9304 = vpop.f32.mrf.mxu0
      %v9305 = vadd.f32 %v7982, %v9304
      %v9306 = vpop.f32.mrf.mxu0
      %v9307 = vadd.f32 %v7984, %v9306
      %9308 = vmatmul.bf16.gmra.mxu0 %v5656
      %v9309 = vpop.f32.mrf.mxu0
      %v9310 = vadd.f32 %v7987, %v9309
      %v9311 = vpop.f32.mrf.mxu0
      %v9312 = vadd.f32 %v7989, %v9311
      %9313 = vmatmul.bf16.gmra.mxu0 %v5659
      %v9314 = vpop.f32.mrf.mxu0
      %v9315 = vadd.f32 %v7992, %v9314
      %v9316 = vpop.f32.mrf.mxu0
      %v9317 = vadd.f32 %v7994, %v9316
      %9318 = vmatmul.bf16.gmra.mxu0 %v5662
      %v9319 = vpop.f32.mrf.mxu0
      %v9320 = vadd.f32 %v7997, %v9319
      %v9321 = vpop.f32.mrf.mxu0
      %v9322 = vadd.f32 %v7999, %v9321
      %9323 = vmatmul.bf16.gmra.mxu0 %v5665
      %v9324 = vpop.f32.mrf.mxu0
      %v9325 = vadd.f32 %v8002, %v9324
      %v9326 = vpop.f32.mrf.mxu0
      %v9327 = vadd.f32 %v8004, %v9326
      %9328 = vmatmul.bf16.gmra.mxu0 %v5668
      %v9329 = vpop.f32.mrf.mxu0
      %v9330 = vadd.f32 %v8007, %v9329
      %v9331 = vpop.f32.mrf.mxu0
      %v9332 = vadd.f32 %v8009, %v9331
      %9333 = vmatmul.bf16.gmra.mxu0 %v5671
      %v9334 = vpop.f32.mrf.mxu0
      %v9335 = vadd.f32 %v8012, %v9334
      %v9336 = vpop.f32.mrf.mxu0
      %v9337 = vadd.f32 %v8014, %v9336
      %9338 = vmatmul.bf16.gmra.mxu0 %v5674
      %v9339 = vpop.f32.mrf.mxu0
      %v9340 = vadd.f32 %v8017, %v9339
      %v9341 = vpop.f32.mrf.mxu0
      %v9342 = vadd.f32 %v8019, %v9341
      %9343 = vmatmul.bf16.gmra.mxu0 %v5677
      %v9344 = vpop.f32.mrf.mxu0
      %v9345 = vadd.f32 %v8022, %v9344
      %v9346 = vpop.f32.mrf.mxu0
      %v9347 = vadd.f32 %v8024, %v9346
      %9348 = vmatmul.bf16.gmra.mxu0 %v5680
      %v9349 = vpop.f32.mrf.mxu0
      %v9350 = vadd.f32 %v8027, %v9349
      %v9351 = vpop.f32.mrf.mxu0
      %v9352 = vadd.f32 %v8029, %v9351
      %9353 = vmatmul.bf16.gmra.mxu0 %v5683
      %v9354 = vpop.f32.mrf.mxu0
      %v9355 = vadd.f32 %v8032, %v9354
      %v9356 = vpop.f32.mrf.mxu0
      %v9357 = vadd.f32 %v8034, %v9356
      %9358 = vmatmul.bf16.gmra.mxu0 %v5686
      %v9359 = vpop.f32.mrf.mxu0
      %v9360 = vadd.f32 %v8037, %v9359
      %v9361 = vpop.f32.mrf.mxu0
      %v9362 = vadd.f32 %v8039, %v9361
      %9363 = vmatmul.bf16.gmra.mxu0 %v5689
      %v9364 = vpop.f32.mrf.mxu0
      %v9365 = vadd.f32 %v8042, %v9364
      %v9366 = vpop.f32.mrf.mxu0
      %v9367 = vadd.f32 %v8044, %v9366
      %9368 = vmatmul.bf16.gmra.mxu0 %v5692
      %v9369 = vpop.f32.mrf.mxu0
      %v9370 = vadd.f32 %v8047, %v9369
      %v9371 = vpop.f32.mrf.mxu0
      %v9372 = vadd.f32 %v8049, %v9371
      %9373 = vmatmul.bf16.gmra.mxu0 %v5695
      %v9374 = vpop.f32.mrf.mxu0
      %v9375 = vadd.f32 %v8052, %v9374
      %v9376 = vpop.f32.mrf.mxu0
      %v9377 = vadd.f32 %v8054, %v9376
      %9378 = vmatmul.bf16.gmra.mxu0 %v5698
      %v9379 = vpop.f32.mrf.mxu0
      %v9380 = vadd.f32 %v8057, %v9379
      %v9381 = vpop.f32.mrf.mxu0
      %v9382 = vadd.f32 %v8059, %v9381
      %9383 = vmatmul.bf16.gmra.mxu0 %v5701
      %v9384 = vpop.f32.mrf.mxu0
      %v9385 = vadd.f32 %v8062, %v9384
      %v9386 = vpop.f32.mrf.mxu0
      %v9387 = vadd.f32 %v8064, %v9386
      %9388 = vmatmul.bf16.gmra.mxu0 %v5704
      %v9389 = vpop.f32.mrf.mxu0
      %v9390 = vadd.f32 %v8067, %v9389
      %v9391 = vpop.f32.mrf.mxu0
      %v9392 = vadd.f32 %v8069, %v9391
      %9393 = vmatmul.bf16.gmra.mxu0 %v5707
      %v9394 = vpop.f32.mrf.mxu0
      %v9395 = vadd.f32 %v8072, %v9394
      %v9396 = vpop.f32.mrf.mxu0
      %v9397 = vadd.f32 %v8074, %v9396
      %9398 = vmatmul.bf16.gmra.mxu0 %v5710
      %v9399 = vpop.f32.mrf.mxu0
      %v9400 = vadd.f32 %v8077, %v9399
      %v9401 = vpop.f32.mrf.mxu0
      %v9402 = vadd.f32 %v8079, %v9401
      %9403 = vmatmul.bf16.gmra.mxu0 %v5713
      %v9404 = vpop.f32.mrf.mxu0
      %v9405 = vadd.f32 %v8082, %v9404
      %v9406 = vpop.f32.mrf.mxu0
      %v9407 = vadd.f32 %v8084, %v9406
      %9408 = vmatmul.bf16.gmra.mxu0 %v5716
      %v9409 = vpop.f32.mrf.mxu0
      %v9410 = vadd.f32 %v8087, %v9409
      %v9411 = vpop.f32.mrf.mxu0
      %v9412 = vadd.f32 %v8089, %v9411
      %9413 = vmatmul.bf16.gmra.mxu0 %v5719
      %v9414 = vpop.f32.mrf.mxu0
      %v9415 = vadd.f32 %v8092, %v9414
      %v9416 = vpop.f32.mrf.mxu0
      %v9417 = vadd.f32 %v8094, %v9416
      %9418 = vmatmul.bf16.gmra.mxu0 %v5722
      %v9419 = vpop.f32.mrf.mxu0
      %v9420 = vadd.f32 %v8097, %v9419
      %v9421 = vpop.f32.mrf.mxu0
      %v9422 = vadd.f32 %v8099, %v9421
      %9423 = vmatmul.bf16.gmra.mxu0 %v5725
      %v9424 = vpop.f32.mrf.mxu0
      %v9425 = vadd.f32 %v8102, %v9424
      %v9426 = vpop.f32.mrf.mxu0
      %v9427 = vadd.f32 %v8104, %v9426
      %9428 = vmatmul.bf16.gmra.mxu0 %v5728
      %v9429 = vpop.f32.mrf.mxu0
      %v9430 = vadd.f32 %v8107, %v9429
      %v9431 = vpop.f32.mrf.mxu0
      %v9432 = vadd.f32 %v8109, %v9431
      %9433 = vmatmul.bf16.gmra.mxu0 %v5731
      %v9434 = vpop.f32.mrf.mxu0
      %v9435 = vadd.f32 %v8112, %v9434
      %v9436 = vpop.f32.mrf.mxu0
      %v9437 = vadd.f32 %v8114, %v9436
      %9438 = vmatmul.bf16.gmra.mxu0 %v5734
      %v9439 = vpop.f32.mrf.mxu0
      %v9440 = vadd.f32 %v8117, %v9439
      %v9441 = vpop.f32.mrf.mxu0
      %v9442 = vadd.f32 %v8119, %v9441
      %9443 = vmatmul.bf16.gmra.mxu0 %v5737
      %v9444 = vpop.f32.mrf.mxu0
      %v9445 = vadd.f32 %v8122, %v9444
      %v9446 = vpop.f32.mrf.mxu0
      %v9447 = vadd.f32 %v8124, %v9446
      %9448 = vmatmul.bf16.gmra.mxu0 %v5740
      %v9449 = vpop.f32.mrf.mxu0
      %v9450 = vadd.f32 %v8127, %v9449
      %v9451 = vpop.f32.mrf.mxu0
      %v9452 = vadd.f32 %v8129, %v9451
      %9453 = vmatmul.bf16.gmra.mxu0 %v5743
      %v9454 = vpop.f32.mrf.mxu0
      %v9455 = vadd.f32 %v8132, %v9454
      %v9456 = vpop.f32.mrf.mxu0
      %v9457 = vadd.f32 %v8134, %v9456
      %9458 = vmatmul.bf16.gmra.mxu0 %v5746
      %v9459 = vpop.f32.mrf.mxu0
      %v9460 = vadd.f32 %v8137, %v9459
      %v9461 = vpop.f32.mrf.mxu0
      %v9462 = vadd.f32 %v8139, %v9461
      %9463 = vmatmul.bf16.gmra.mxu0 %v5749
      %v9464 = vpop.f32.mrf.mxu0
      %v9465 = vadd.f32 %v8142, %v9464
      %v9466 = vpop.f32.mrf.mxu0
      %v9467 = vadd.f32 %v8144, %v9466
      %9468 = vmatmul.bf16.gmra.mxu0 %v5752
      %v9469 = vpop.f32.mrf.mxu0
      %v9470 = vadd.f32 %v8147, %v9469
      %v9471 = vpop.f32.mrf.mxu0
      %v9472 = vadd.f32 %v8149, %v9471
      %9473 = vmatmul.bf16.gmra.mxu0 %v5755
      %v9474 = vpop.f32.mrf.mxu0
      %v9475 = vadd.f32 %v8152, %v9474
      %v9476 = vpop.f32.mrf.mxu0
      %v9477 = vadd.f32 %v8154, %v9476
      %9478 = vmatmul.bf16.gmra.mxu0 %v5758
      %v9479 = vpop.f32.mrf.mxu0
      %v9480 = vadd.f32 %v8157, %v9479
      %v9481 = vpop.f32.mrf.mxu0
      %v9482 = vadd.f32 %v8159, %v9481
      %9483 = vmatmul.bf16.gmra.mxu0 %v5761
      %v9484 = vpop.f32.mrf.mxu0
      %v9485 = vadd.f32 %v8162, %v9484
      %v9486 = vpop.f32.mrf.mxu0
      %v9487 = vadd.f32 %v8164, %v9486
      %9488 = vmatmul.bf16.gmra.mxu0 %v5764
      %v9489 = vpop.f32.mrf.mxu0
      %v9490 = vadd.f32 %v8167, %v9489
      %v9491 = vpop.f32.mrf.mxu0
      %v9492 = vadd.f32 %v8169, %v9491
      %9493 = vmatmul.bf16.gmra.mxu0 %v5767
      %v9494 = vpop.f32.mrf.mxu0
      %v9495 = vadd.f32 %v8172, %v9494
      %v9496 = vpop.f32.mrf.mxu0
      %v9497 = vadd.f32 %v8174, %v9496
      %9498 = vmatmul.bf16.gmra.mxu0 %v5770
      %v9499 = vpop.f32.mrf.mxu0
      %v9500 = vadd.f32 %v8177, %v9499
      %v9501 = vpop.f32.mrf.mxu0
      %v9502 = vadd.f32 %v8179, %v9501
      %9503 = vmatmul.bf16.gmra.mxu0 %v5773
      %v9504 = vpop.f32.mrf.mxu0
      %v9505 = vadd.f32 %v8182, %v9504
      %v9506 = vpop.f32.mrf.mxu0
      %v9507 = vadd.f32 %v8184, %v9506
      %9508 = vmatmul.bf16.gmra.mxu0 %v5776
      %v9509 = vpop.f32.mrf.mxu0
      %v9510 = vadd.f32 %v8187, %v9509
      %v9511 = vpop.f32.mrf.mxu0
      %v9512 = vadd.f32 %v8189, %v9511
      %9513 = vmatmul.bf16.gmra.mxu0 %v5779
      %v9514 = vpop.f32.mrf.mxu0
      %v9515 = vadd.f32 %v8192, %v9514
      %v9516 = vpop.f32.mrf.mxu0
      %v9517 = vadd.f32 %v8194, %v9516
      %9518 = vmatmul.bf16.gmra.mxu0 %v5782
      %v9519 = vpop.f32.mrf.mxu0
      %v9520 = vadd.f32 %v8197, %v9519
      %v9521 = vpop.f32.mrf.mxu0
      %v9522 = vadd.f32 %v8199, %v9521
      %9523 = vmatmul.bf16.gmra.mxu0 %v5785
      %v9524 = vpop.f32.mrf.mxu0
      %v9525 = vadd.f32 %v8202, %v9524
      %v9526 = vpop.f32.mrf.mxu0
      %v9527 = vadd.f32 %v8204, %v9526
      %9528 = vmatmul.bf16.gmra.mxu0 %v5788
      %v9529 = vpop.f32.mrf.mxu0
      %v9530 = vadd.f32 %v8207, %v9529
      %v9531 = vpop.f32.mrf.mxu0
      %v9532 = vadd.f32 %v8209, %v9531
      %9533 = vmatmul.bf16.gmra.mxu0 %v5791
      %v9534 = vpop.f32.mrf.mxu0
      %v9535 = vadd.f32 %v8212, %v9534
      %v9536 = vpop.f32.mrf.mxu0
      %v9537 = vadd.f32 %v8214, %v9536
      %9538 = vmatmul.bf16.gmra.mxu0 %v5794
      %v9539 = vpop.f32.mrf.mxu0
      %v9540 = vadd.f32 %v8217, %v9539
      %v9541 = vpop.f32.mrf.mxu0
      %v9542 = vadd.f32 %v8219, %v9541
      %9543 = vmatmul.bf16.gmra.mxu0 %v5797
      %v9544 = vpop.f32.mrf.mxu0
      %v9545 = vadd.f32 %v8222, %v9544
      %v9546 = vpop.f32.mrf.mxu0
      %v9547 = vadd.f32 %v8224, %v9546
      %9548 = vmatmul.bf16.gmra.mxu0 %v5800
      %v9549 = vpop.f32.mrf.mxu0
      %v9550 = vadd.f32 %v8227, %v9549
      %v9551 = vpop.f32.mrf.mxu0
      %v9552 = vadd.f32 %v8229, %v9551
      %9553 = vmatmul.bf16.gmra.mxu0 %v5803
      %v9554 = vpop.f32.mrf.mxu0
      %v9555 = vadd.f32 %v8232, %v9554
      %v9556 = vpop.f32.mrf.mxu0
      %v9557 = vadd.f32 %v8234, %v9556
      %9558 = vmatmul.bf16.gmra.mxu0 %v5806
      %v9559 = vpop.f32.mrf.mxu0
      %v9560 = vadd.f32 %v8237, %v9559
      %v9561 = vpop.f32.mrf.mxu0
      %v9562 = vadd.f32 %v8239, %v9561
      %9563 = vmatmul.bf16.gmra.mxu0 %v5809
      %v9564 = vpop.f32.mrf.mxu0
      %v9565 = vadd.f32 %v8242, %v9564
      %v9566 = vpop.f32.mrf.mxu0
      %v9567 = vadd.f32 %v8244, %v9566
      %9568 = vmatmul.bf16.gmra.mxu0 %v5812
      %v9569 = vpop.f32.mrf.mxu0
      %v9570 = vadd.f32 %v8247, %v9569
      %v9571 = vpop.f32.mrf.mxu0
      %v9572 = vadd.f32 %v8249, %v9571
      %9573 = vmatmul.bf16.gmra.mxu0 %v5815
      %v9574 = vpop.f32.mrf.mxu0
      %v9575 = vadd.f32 %v8252, %v9574
      %v9576 = vpop.f32.mrf.mxu0
      %v9577 = vadd.f32 %v8254, %v9576
      %9578 = vmatmul.bf16.gmra.mxu0 %v5818
      %v9579 = vpop.f32.mrf.mxu0
      %v9580 = vadd.f32 %v8257, %v9579
      %v9581 = vpop.f32.mrf.mxu0
      %v9582 = vadd.f32 %v8259, %v9581
      %9583 = vmatmul.bf16.gmra.mxu0 %v5821
      %v9584 = vpop.f32.mrf.mxu0
      %v9585 = vadd.f32 %v8262, %v9584
      %v9586 = vpop.f32.mrf.mxu0
      %v9587 = vadd.f32 %v8264, %v9586
      %9588 = vmatmul.bf16.gmra.mxu0 %v5824
      %v9589 = vpop.f32.mrf.mxu0
      %v9590 = vadd.f32 %v8267, %v9589
      %v9591 = vpop.f32.mrf.mxu0
      %v9592 = vadd.f32 %v8269, %v9591
      %9593 = vmatmul.bf16.gmra.mxu0 %v5827
      %v9594 = vpop.f32.mrf.mxu0
      %v9595 = vadd.f32 %v8272, %v9594
      %v9596 = vpop.f32.mrf.mxu0
      %v9597 = vadd.f32 %v8274, %v9596
      %9598 = vmatmul.bf16.gmra.mxu0 %v5830
      %v9599 = vpop.f32.mrf.mxu0
      %v9600 = vadd.f32 %v8277, %v9599
      %v9601 = vpop.f32.mrf.mxu0
      %v9602 = vadd.f32 %v8279, %v9601
      %9603 = vmatmul.bf16.gmra.mxu0 %v5833
      %v9604 = vpop.f32.mrf.mxu0
      %v9605 = vadd.f32 %v8282, %v9604
      %v9606 = vpop.f32.mrf.mxu0
      %v9607 = vadd.f32 %v8284, %v9606
      %9608 = vmatmul.bf16.gmra.mxu0 %v5836
      %v9609 = vpop.f32.mrf.mxu0
      %v9610 = vadd.f32 %v8287, %v9609
      %v9611 = vpop.f32.mrf.mxu0
      %v9612 = vadd.f32 %v8289, %v9611
      %9613 = vmatmul.bf16.gmra.mxu0 %v5839
      %v9614 = vpop.f32.mrf.mxu0
      %v9615 = vadd.f32 %v8292, %v9614
      %v9616 = vpop.f32.mrf.mxu0
      %v9617 = vadd.f32 %v8294, %v9616
      %9618 = vmatmul.bf16.gmra.mxu0 %v5842
      %v9619 = vpop.f32.mrf.mxu0
      %v9620 = vadd.f32 %v8297, %v9619
      %v9621 = vpop.f32.mrf.mxu0
      %v9622 = vadd.f32 %v8299, %v9621
      %9623 = vmatmul.bf16.gmra.mxu0 %v5845
      %v9624 = vpop.f32.mrf.mxu0
      %v9625 = vadd.f32 %v8302, %v9624
      %v9626 = vpop.f32.mrf.mxu0
      %v9627 = vadd.f32 %v8304, %v9626
      %9628 = vmatmul.bf16.gmra.mxu0 %v5848
      %v9629 = vpop.f32.mrf.mxu0
      %v9630 = vadd.f32 %v8307, %v9629
      %v9631 = vpop.f32.mrf.mxu0
      %v9632 = vadd.f32 %v8309, %v9631
      %9633 = vmatmul.bf16.gmra.mxu0 %v5851
      %v9634 = vpop.f32.mrf.mxu0
      %v9635 = vadd.f32 %v8312, %v9634
      %v9636 = vpop.f32.mrf.mxu0
      %v9637 = vadd.f32 %v8314, %v9636
      %9638 = vmatmul.bf16.gmra.mxu0 %v5854
      %v9639 = vpop.f32.mrf.mxu0
      %v9640 = vadd.f32 %v8317, %v9639
      %v9641 = vpop.f32.mrf.mxu0
      %v9642 = vadd.f32 %v8319, %v9641
      %9643 = vmatmul.bf16.gmra.mxu0 %v5857
      %v9644 = vpop.f32.mrf.mxu0
      %v9645 = vadd.f32 %v8322, %v9644
      %v9646 = vpop.f32.mrf.mxu0
      %v9647 = vadd.f32 %v8324, %v9646
      %9648 = vmatmul.bf16.gmra.mxu0 %v5860
      %v9649 = vpop.f32.mrf.mxu0
      %v9650 = vadd.f32 %v8327, %v9649
      %v9651 = vpop.f32.mrf.mxu0
      %v9652 = vadd.f32 %v8329, %v9651
      %9653 = vmatmul.bf16.gmra.mxu0 %v5863
      %v9654 = vpop.f32.mrf.mxu0
      %v9655 = vadd.f32 %v8332, %v9654
      %v9656 = vpop.f32.mrf.mxu0
      %v9657 = vadd.f32 %v8334, %v9656
      %9658 = vmatmul.bf16.gmra.mxu0 %v5866
      %v9659 = vpop.f32.mrf.mxu0
      %v9660 = vadd.f32 %v8337, %v9659
      %v9661 = vpop.f32.mrf.mxu0
      %v9662 = vadd.f32 %v8339, %v9661
      %9663 = vmatmul.bf16.gmra.mxu0 %v5869
      %v9664 = vpop.f32.mrf.mxu0
      %v9665 = vadd.f32 %v8342, %v9664
      %v9666 = vpop.f32.mrf.mxu0
      %v9667 = vadd.f32 %v8344, %v9666
      %9668 = vmatmul.bf16.gmra.mxu0 %v5872
      %v9669 = vpop.f32.mrf.mxu0
      %v9670 = vadd.f32 %v8347, %v9669
      %v9671 = vpop.f32.mrf.mxu0
      %v9672 = vadd.f32 %v8349, %v9671
      %9673 = vmatmul.bf16.gmra.mxu0 %v5875
      %v9674 = vpop.f32.mrf.mxu0
      %v9675 = vadd.f32 %v8352, %v9674
      %v9676 = vpop.f32.mrf.mxu0
      %v9677 = vadd.f32 %v8354, %v9676
      %9678 = vmatmul.bf16.gmra.mxu0 %v5878
      %v9679 = vpop.f32.mrf.mxu0
      %v9680 = vadd.f32 %v8357, %v9679
      %v9681 = vpop.f32.mrf.mxu0
      %v9682 = vadd.f32 %v8359, %v9681
      %9683 = vmatmul.bf16.gmra.mxu0 %v5881
      %v9684 = vpop.f32.mrf.mxu0
      %v9685 = vadd.f32 %v8362, %v9684
      %v9686 = vpop.f32.mrf.mxu0
      %v9687 = vadd.f32 %v8364, %v9686
      %9688 = vmatmul.bf16.gmra.mxu0 %v5884
      %v9689 = vpop.f32.mrf.mxu0
      %v9690 = vadd.f32 %v8367, %v9689
      %v9691 = vpop.f32.mrf.mxu0
      %v9692 = vadd.f32 %v8369, %v9691
      %9693 = vmatmul.bf16.gmra.mxu0 %v5887
      %v9694 = vpop.f32.mrf.mxu0
      %v9695 = vadd.f32 %v8372, %v9694
      %v9696 = vpop.f32.mrf.mxu0
      %v9697 = vadd.f32 %v8374, %v9696
      %9698 = vmatmul.bf16.gmra.mxu0 %v5890
      %v9699 = vpop.f32.mrf.mxu0
      %v9700 = vadd.f32 %v8377, %v9699
      %v9701 = vpop.f32.mrf.mxu0
      %v9702 = vadd.f32 %v8379, %v9701
      %9703 = vmatmul.bf16.gmra.mxu0 %v5893
      %v9704 = vpop.f32.mrf.mxu0
      %v9705 = vadd.f32 %v8382, %v9704
      %v9706 = vpop.f32.mrf.mxu0
      %v9707 = vadd.f32 %v8384, %v9706
      %9708 = vmatmul.bf16.gmra.mxu0 %v5896
      %v9709 = vpop.f32.mrf.mxu0
      %v9710 = vadd.f32 %v8387, %v9709
      %v9711 = vpop.f32.mrf.mxu0
      %v9712 = vadd.f32 %v8389, %v9711
      %9713 = vmatmul.bf16.gmra.mxu0 %v5899
      %v9714 = vpop.f32.mrf.mxu0
      %v9715 = vadd.f32 %v8392, %v9714
      %v9716 = vpop.f32.mrf.mxu0
      %v9717 = vadd.f32 %v8394, %v9716
      %9718 = vmatmul.bf16.gmra.mxu0 %v5902
      %v9719 = vpop.f32.mrf.mxu0
      %v9720 = vadd.f32 %v8397, %v9719
      %v9721 = vpop.f32.mrf.mxu0
      %v9722 = vadd.f32 %v8399, %v9721
      %9723 = vmatmul.bf16.gmra.mxu0 %v5905
      %v9724 = vpop.f32.mrf.mxu0
      %v9725 = vadd.f32 %v8402, %v9724
      %v9726 = vpop.f32.mrf.mxu0
      %v9727 = vadd.f32 %v8404, %v9726
      %9728 = vmatmul.bf16.gmra.mxu0 %v5908
      %v9729 = vpop.f32.mrf.mxu0
      %v9730 = vadd.f32 %v8407, %v9729
      %v9731 = vpop.f32.mrf.mxu0
      %v9732 = vadd.f32 %v8409, %v9731
      %9733 = vmatmul.bf16.gmra.mxu0 %v5911
      %v9734 = vpop.f32.mrf.mxu0
      %v9735 = vadd.f32 %v8412, %v9734
      %v9736 = vpop.f32.mrf.mxu0
      %v9737 = vadd.f32 %v8414, %v9736
      %9738 = vmatmul.bf16.gmra.mxu0 %v5914
      %v9739 = vpop.f32.mrf.mxu0
      %v9740 = vadd.f32 %v8417, %v9739
      %v9741 = vpop.f32.mrf.mxu0
      %v9742 = vadd.f32 %v8419, %v9741
      %9743 = vmatmul.bf16.gmra.mxu0 %v5917
      %v9744 = vpop.f32.mrf.mxu0
      %v9745 = vadd.f32 %v8422, %v9744
      %v9746 = vpop.f32.mrf.mxu0
      %v9747 = vadd.f32 %v8424, %v9746
      %9748 = vmatmul.bf16.gmra.mxu0 %v5920
      %v9749 = vpop.f32.mrf.mxu0
      %v9750 = vadd.f32 %v8427, %v9749
      %v9751 = vpop.f32.mrf.mxu0
      %v9752 = vadd.f32 %v8429, %v9751
      %9753 = vmatmul.bf16.gmra.mxu0 %v5923
      %v9754 = vpop.f32.mrf.mxu0
      %v9755 = vadd.f32 %v8432, %v9754
      %v9756 = vpop.f32.mrf.mxu0
      %v9757 = vadd.f32 %v8434, %v9756
      %9758 = vmatmul.bf16.gmra.mxu0 %v5926
      %v9759 = vpop.f32.mrf.mxu0
      %v9760 = vadd.f32 %v8437, %v9759
      %v9761 = vpop.f32.mrf.mxu0
      %v9762 = vadd.f32 %v8439, %v9761
      %9763 = vmatmul.bf16.gmra.mxu0 %v5929
      %v9764 = vpop.f32.mrf.mxu0
      %v9765 = vadd.f32 %v8442, %v9764
      %v9766 = vpop.f32.mrf.mxu0
      %v9767 = vadd.f32 %v8444, %v9766
      %9768 = vmatmul.bf16.gmra.mxu0 %v5932
      %v9769 = vpop.f32.mrf.mxu0
      %v9770 = vadd.f32 %v8447, %v9769
      %v9771 = vpop.f32.mrf.mxu0
      %v9772 = vadd.f32 %v8449, %v9771
      %9773 = vmatmul.bf16.gmra.mxu0 %v5935
      %v9774 = vpop.f32.mrf.mxu0
      %v9775 = vadd.f32 %v8452, %v9774
      %v9776 = vpop.f32.mrf.mxu0
      %v9777 = vadd.f32 %v8454, %v9776
      %9778 = vmatmul.bf16.gmra.mxu0 %v5938
      %v9779 = vpop.f32.mrf.mxu0
      %v9780 = vadd.f32 %v8457, %v9779
      %v9781 = vpop.f32.mrf.mxu0
      %v9782 = vadd.f32 %v8459, %v9781
      %9783 = vmatmul.bf16.gmra.mxu0 %v5941
      %v9784 = vpop.f32.mrf.mxu0
      %v9785 = vadd.f32 %v8462, %v9784
      %v9786 = vpop.f32.mrf.mxu0
      %v9787 = vadd.f32 %v8464, %v9786
      %9788 = vmatmul.bf16.gmra.mxu0 %v5944
      %v9789 = vpop.f32.mrf.mxu0
      %v9790 = vadd.f32 %v8467, %v9789
      %v9791 = vpop.f32.mrf.mxu0
      %v9792 = vadd.f32 %v8469, %v9791
      %9793 = vmatmul.bf16.gmra.mxu0 %v5947
      %v9794 = vpop.f32.mrf.mxu0
      %v9795 = vadd.f32 %v8472, %v9794
      %v9796 = vpop.f32.mrf.mxu0
      %v9797 = vadd.f32 %v8474, %v9796
      %9798 = vmatmul.bf16.gmra.mxu0 %v5950
      %v9799 = vpop.f32.mrf.mxu0
      %v9800 = vadd.f32 %v8477, %v9799
      %v9801 = vpop.f32.mrf.mxu0
      %v9802 = vadd.f32 %v8479, %v9801
      %9803 = vmatmul.bf16.gmra.mxu0 %v5953
      %v9804 = vpop.f32.mrf.mxu0
      %v9805 = vadd.f32 %v8482, %v9804
      %v9806 = vpop.f32.mrf.mxu0
      %v9807 = vadd.f32 %v8484, %v9806
      %9808 = vmatmul.bf16.gmra.mxu0 %v5956
      %v9809 = vpop.f32.mrf.mxu0
      %v9810 = vadd.f32 %v8487, %v9809
      %v9811 = vpop.f32.mrf.mxu0
      %v9812 = vadd.f32 %v8489, %v9811
      %9813 = vmatmul.bf16.gmra.mxu0 %v5959
      %v9814 = vpop.f32.mrf.mxu0
      %v9815 = vadd.f32 %v8492, %v9814
      %v9816 = vpop.f32.mrf.mxu0
      %v9817 = vadd.f32 %v8494, %v9816
      %9818 = vmatmul.bf16.gmra.mxu0 %v5962
      %v9819 = vpop.f32.mrf.mxu0
      %v9820 = vadd.f32 %v8497, %v9819
      %v9821 = vpop.f32.mrf.mxu0
      %v9822 = vadd.f32 %v8499, %v9821
      %9823 = vmatmul.bf16.gmra.mxu0 %v5965
      %v9824 = vpop.f32.mrf.mxu0
      %v9825 = vadd.f32 %v8502, %v9824
      %v9826 = vpop.f32.mrf.mxu0
      %v9827 = vadd.f32 %v8504, %v9826
      %9828 = vmatmul.bf16.gmra.mxu0 %v5968
      %v9829 = vpop.f32.mrf.mxu0
      %v9830 = vadd.f32 %v8507, %v9829
      %v9831 = vpop.f32.mrf.mxu0
      %v9832 = vadd.f32 %v8509, %v9831
      %9833 = vmatmul.bf16.gmra.mxu0 %v5971
      %v9834 = vpop.f32.mrf.mxu0
      %v9835 = vadd.f32 %v8512, %v9834
      %v9836 = vpop.f32.mrf.mxu0
      %v9837 = vadd.f32 %v8514, %v9836
      %9838 = vmatmul.bf16.gmra.mxu0 %v5974
      %v9839 = vpop.f32.mrf.mxu0
      %v9840 = vadd.f32 %v8517, %v9839
      %v9841 = vpop.f32.mrf.mxu0
      %v9842 = vadd.f32 %v8519, %v9841
      %9843 = vmatmul.bf16.gmra.mxu0 %v5977
      %v9844 = vpop.f32.mrf.mxu0
      %v9845 = vadd.f32 %v8522, %v9844
      %v9846 = vpop.f32.mrf.mxu0
      %v9847 = vadd.f32 %v8524, %v9846
      %9848 = vmatmul.bf16.gmra.mxu0 %v5980
      %v9849 = vpop.f32.mrf.mxu0
      %v9850 = vadd.f32 %v8527, %v9849
      %v9851 = vpop.f32.mrf.mxu0
      %v9852 = vadd.f32 %v8529, %v9851
      %9853 = vmatmul.bf16.gmra.mxu0 %v5983
      %v9854 = vpop.f32.mrf.mxu0
      %v9855 = vadd.f32 %v8532, %v9854
      %v9856 = vpop.f32.mrf.mxu0
      %v9857 = vadd.f32 %v8534, %v9856
      %9858 = vmatmul.bf16.gmra.mxu0 %v5986
      %v9859 = vpop.f32.mrf.mxu0
      %v9860 = vadd.f32 %v8537, %v9859
      %v9861 = vpop.f32.mrf.mxu0
      %v9862 = vadd.f32 %v8539, %v9861
      %9863 = vmatmul.bf16.gmra.mxu0 %v5989
      %v9864 = vpop.f32.mrf.mxu0
      %v9865 = vadd.f32 %v8542, %v9864
      %v9866 = vpop.f32.mrf.mxu0
      %v9867 = vadd.f32 %v8544, %v9866
      %9868 = vmatmul.bf16.gmra.mxu0 %v5992
      %v9869 = vpop.f32.mrf.mxu0
      %v9870 = vadd.f32 %v8547, %v9869
      %v9871 = vpop.f32.mrf.mxu0
      %v9872 = vadd.f32 %v8549, %v9871
      %9873 = vmatmul.bf16.gmra.mxu0 %v5995
      %v9874 = vpop.f32.mrf.mxu0
      %v9875 = vadd.f32 %v8552, %v9874
      %v9876 = vpop.f32.mrf.mxu0
      %v9877 = vadd.f32 %v8554, %v9876
      %9878 = vmatmul.bf16.gmra.mxu0 %v5998
      %v9879 = vpop.f32.mrf.mxu0
      %v9880 = vadd.f32 %v8557, %v9879
      %v9881 = vpop.f32.mrf.mxu0
      %v9882 = vadd.f32 %v8559, %v9881
      %9883 = vmatmul.bf16.gmra.mxu0 %v6001
      %v9884 = vpop.f32.mrf.mxu0
      %v9885 = vadd.f32 %v8562, %v9884
      %v9886 = vpop.f32.mrf.mxu0
      %v9887 = vadd.f32 %v8564, %v9886
      %9888 = vmatmul.bf16.gmra.mxu0 %v6004
      %v9889 = vpop.f32.mrf.mxu0
      %v9890 = vadd.f32 %v8567, %v9889
      %v9891 = vpop.f32.mrf.mxu0
      %v9892 = vadd.f32 %v8569, %v9891
      %9893 = vmatmul.bf16.gmra.mxu0 %v6007
      %v9894 = vpop.f32.mrf.mxu0
      %v9895 = vadd.f32 %v8572, %v9894
      %v9896 = vpop.f32.mrf.mxu0
      %v9897 = vadd.f32 %v8574, %v9896
      %9898 = vmatmul.bf16.gmra.mxu0 %v6010
      %v9899 = vpop.f32.mrf.mxu0
      %v9900 = vadd.f32 %v8577, %v9899
      %v9901 = vpop.f32.mrf.mxu0
      %v9902 = vadd.f32 %v8579, %v9901
      %9903 = vmatmul.bf16.gmra.mxu0 %v6013
      %v9904 = vpop.f32.mrf.mxu0
      %v9905 = vadd.f32 %v8582, %v9904
      %v9906 = vpop.f32.mrf.mxu0
      %v9907 = vadd.f32 %v8584, %v9906
      %9908 = vmatmul.bf16.gmra.mxu0 %v6016
      %v9909 = vpop.f32.mrf.mxu0
      %v9910 = vadd.f32 %v8587, %v9909
      %v9911 = vpop.f32.mrf.mxu0
      %v9912 = vadd.f32 %v8589, %v9911
      %9913 = vmatmul.bf16.gmra.mxu0 %v6019
      %v9914 = vpop.f32.mrf.mxu0
      %v9915 = vadd.f32 %v8592, %v9914
      %v9916 = vpop.f32.mrf.mxu0
      %v9917 = vadd.f32 %v8594, %v9916
      %9918 = vmatmul.bf16.gmra.mxu0 %v6022
      %v9919 = vpop.f32.mrf.mxu0
      %v9920 = vadd.f32 %v8597, %v9919
      %v9921 = vpop.f32.mrf.mxu0
      %v9922 = vadd.f32 %v8599, %v9921
      %9923 = vmatmul.bf16.gmra.mxu0 %v6025
      %v9924 = vpop.f32.mrf.mxu0
      %v9925 = vadd.f32 %v8602, %v9924
      %v9926 = vpop.f32.mrf.mxu0
      %v9927 = vadd.f32 %v8604, %v9926
      %9928 = vmatmul.bf16.gmra.mxu0 %v6028
      %v9929 = vpop.f32.mrf.mxu0
      %v9930 = vadd.f32 %v8607, %v9929
      %v9931 = vpop.f32.mrf.mxu0
      %v9932 = vadd.f32 %v8609, %v9931
      %9933 = vmatmul.bf16.gmra.mxu0 %v6031
      %v9934 = vpop.f32.mrf.mxu0
      %v9935 = vadd.f32 %v8612, %v9934
      %v9936 = vpop.f32.mrf.mxu0
      %v9937 = vadd.f32 %v8614, %v9936
      %9938 = vmatmul.bf16.gmra.mxu0 %v6034
      %v9939 = vpop.f32.mrf.mxu0
      %v9940 = vadd.f32 %v8617, %v9939
      %v9941 = vpop.f32.mrf.mxu0
      %v9942 = vadd.f32 %v8619, %v9941
      %9943 = vmatmul.bf16.gmra.mxu0 %v6037
      %v9944 = vpop.f32.mrf.mxu0
      %v9945 = vadd.f32 %v8622, %v9944
      %v9946 = vpop.f32.mrf.mxu0
      %v9947 = vadd.f32 %v8624, %v9946
      %9948 = vmatmul.bf16.gmra.mxu0 %v6040
      %v9949 = vpop.f32.mrf.mxu0
      %v9950 = vadd.f32 %v8627, %v9949
      %v9951 = vpop.f32.mrf.mxu0
      %v9952 = vadd.f32 %v8629, %v9951
      %9953 = vmatmul.bf16.gmra.mxu0 %v6043
      %v9954 = vpop.f32.mrf.mxu0
      %v9955 = vadd.f32 %v8632, %v9954
      %v9956 = vpop.f32.mrf.mxu0
      %v9957 = vadd.f32 %v8634, %v9956
      %9958 = vmatmul.bf16.gmra.mxu0 %v6046
      %v9959 = vpop.f32.mrf.mxu0
      %v9960 = vadd.f32 %v8637, %v9959
      %v9961 = vpop.f32.mrf.mxu0
      %v9962 = vadd.f32 %v8639, %v9961
      %9963 = vmatmul.bf16.gmra.mxu0 %v6049
      %v9964 = vpop.f32.mrf.mxu0
      %v9965 = vadd.f32 %v8642, %v9964
      %v9966 = vpop.f32.mrf.mxu0
      %v9967 = vadd.f32 %v8644, %v9966
      %9968 = vmatmul.bf16.gmra.mxu0 %v6052
      %v9969 = vpop.f32.mrf.mxu0
      %v9970 = vadd.f32 %v8647, %v9969
      %v9971 = vpop.f32.mrf.mxu0
      %v9972 = vadd.f32 %v8649, %v9971
      %9973 = vmatmul.bf16.gmra.mxu0 %v6055
      %v9974 = vpop.f32.mrf.mxu0
      %v9975 = vadd.f32 %v8652, %v9974
      %v9976 = vpop.f32.mrf.mxu0
      %v9977 = vadd.f32 %v8654, %v9976
      %9978 = vmatmul.bf16.gmra.mxu0 %v6058
      %v9979 = vpop.f32.mrf.mxu0
      %v9980 = vadd.f32 %v8657, %v9979
      %v9981 = vpop.f32.mrf.mxu0
      %v9982 = vadd.f32 %v8659, %v9981
      %9983 = vmatmul.bf16.gmra.mxu0 %v6061
      %v9984 = vpop.f32.mrf.mxu0
      %v9985 = vadd.f32 %v8662, %v9984
      %v9986 = vpop.f32.mrf.mxu0
      %v9987 = vadd.f32 %v8664, %v9986
      %9988 = vmatmul.bf16.gmra.mxu0 %v6064
      %v9989 = vpop.f32.mrf.mxu0
      %v9990 = vadd.f32 %v8667, %v9989
      %v9991 = vpop.f32.mrf.mxu0
      %v9992 = vadd.f32 %v8669, %v9991
      %9993 = vmatmul.bf16.gmra.mxu0 %v6067
      %v9994 = vpop.f32.mrf.mxu0
      %v9995 = vadd.f32 %v8672, %v9994
      %v9996 = vpop.f32.mrf.mxu0
      %v9997 = vadd.f32 %v8674, %v9996
      %9998 = vmatmul.bf16.gmra.mxu0 %v6070
      %v9999 = vpop.f32.mrf.mxu0
      %v10000 = vadd.f32 %v8677, %v9999
      %v10001 = vpop.f32.mrf.mxu0
      %v10002 = vadd.f32 %v8679, %v10001
      %10003 = vmatmul.bf16.gmra.mxu0 %v6073
      %v10004 = vpop.f32.mrf.mxu0
      %v10005 = vadd.f32 %v8682, %v10004
      %v10006 = vpop.f32.mrf.mxu0
      %v10007 = vadd.f32 %v8684, %v10006
      %10008 = vmatmul.bf16.gmra.mxu0 %v6076
      %v10009 = vpop.f32.mrf.mxu0
      %v10010 = vadd.f32 %v8687, %v10009
      %v10011 = vpop.f32.mrf.mxu0
      %v10012 = vadd.f32 %v8689, %v10011
      %10013 = vmatmul.bf16.gmra.mxu0 %v6079
      %v10014 = vpop.f32.mrf.mxu0
      %v10015 = vadd.f32 %v8692, %v10014
      %v10016 = vpop.f32.mrf.mxu0
      %v10017 = vadd.f32 %v8694, %v10016
      %10018 = vmatmul.bf16.gmra.mxu0 %v6082
      %v10019 = vpop.f32.mrf.mxu0
      %v10020 = vadd.f32 %v8697, %v10019
      %v10021 = vpop.f32.mrf.mxu0
      %v10022 = vadd.f32 %v8699, %v10021
      %10023 = vmatmul.bf16.gmra.mxu0 %v6085
      %v10024 = vpop.f32.mrf.mxu0
      %v10025 = vadd.f32 %v8702, %v10024
      %v10026 = vpop.f32.mrf.mxu0
      %v10027 = vadd.f32 %v8704, %v10026
      %10028 = vmatmul.bf16.gmra.mxu0 %v6088
      %v10029 = vpop.f32.mrf.mxu0
      %v10030 = vadd.f32 %v8707, %v10029
      %v10031 = vpop.f32.mrf.mxu0
      %v10032 = vadd.f32 %v8709, %v10031
      %10033 = vmatmul.bf16.gmra.mxu0 %v6091
      %v10034 = vpop.f32.mrf.mxu0
      %v10035 = vadd.f32 %v8712, %v10034
      %v10036 = vpop.f32.mrf.mxu0
      %v10037 = vadd.f32 %v8714, %v10036
      %10038 = vmatmul.bf16.gmra.mxu0 %v6094
      %v10039 = vpop.f32.mrf.mxu0
      %v10040 = vadd.f32 %v8717, %v10039
      %v10041 = vpop.f32.mrf.mxu0
      %v10042 = vadd.f32 %v8719, %v10041
      %10043 = vmatmul.bf16.gmra.mxu0 %v6097
      %v10044 = vpop.f32.mrf.mxu0
      %v10045 = vadd.f32 %v8722, %v10044
      %v10046 = vpop.f32.mrf.mxu0
      %v10047 = vadd.f32 %v8724, %v10046
      %10048 = vmatmul.bf16.gmra.mxu0 %v6100
      %v10049 = vpop.f32.mrf.mxu0
      %v10050 = vadd.f32 %v8727, %v10049
      %v10051 = vpop.f32.mrf.mxu0
      %v10052 = vadd.f32 %v8729, %v10051
      %10053 = vmatmul.bf16.gmra.mxu0 %v6103
      %v10054 = vpop.f32.mrf.mxu0
      %v10055 = vadd.f32 %v8732, %v10054
      %v10056 = vpop.f32.mrf.mxu0
      %v10057 = vadd.f32 %v8734, %v10056
      %10058 = vmatmul.bf16.gmra.mxu0 %v6106
      %v10059 = vpop.f32.mrf.mxu0
      %v10060 = vadd.f32 %v8737, %v10059
      %v10061 = vpop.f32.mrf.mxu0
      %v10062 = vadd.f32 %v8739, %v10061
      %10063 = vmatmul.bf16.gmra.mxu0 %v6109
      %v10064 = vpop.f32.mrf.mxu0
      %v10065 = vadd.f32 %v8742, %v10064
      %v10066 = vpop.f32.mrf.mxu0
      %v10067 = vadd.f32 %v8744, %v10066
      %10068 = vmatmul.bf16.gmra.mxu0 %v6112
      %v10069 = vpop.f32.mrf.mxu0
      %v10070 = vadd.f32 %v8747, %v10069
      %v10071 = vpop.f32.mrf.mxu0
      %v10072 = vadd.f32 %v8749, %v10071
      %10073 = vmatmul.bf16.gmra.mxu0 %v6115
      %v10074 = vpop.f32.mrf.mxu0
      %v10075 = vadd.f32 %v8752, %v10074
      %v10076 = vpop.f32.mrf.mxu0
      %v10077 = vadd.f32 %v8754, %v10076
      %10078 = vmatmul.bf16.gmra.mxu0 %v6118
      %v10079 = vpop.f32.mrf.mxu0
      %v10080 = vadd.f32 %v8757, %v10079
      %v10081 = vpop.f32.mrf.mxu0
      %v10082 = vadd.f32 %v8759, %v10081
      %10083 = vmatmul.bf16.gmra.mxu0 %v6121
      %v10084 = vpop.f32.mrf.mxu0
      %v10085 = vadd.f32 %v8762, %v10084
      %v10086 = vpop.f32.mrf.mxu0
      %v10087 = vadd.f32 %v8764, %v10086
      %10088 = vmatmul.bf16.gmra.mxu0 %v6124
      %v10089 = vpop.f32.mrf.mxu0
      %v10090 = vadd.f32 %v8767, %v10089
      %v10091 = vpop.f32.mrf.mxu0
      %v10092 = vadd.f32 %v8769, %v10091
      %10093 = vmatmul.bf16.gmra.mxu0 %v6127
      %v10094 = vpop.f32.mrf.mxu0
      %v10095 = vadd.f32 %v8772, %v10094
      %v10096 = vpop.f32.mrf.mxu0
      %10097 = vdwg.mxu0
      %v10098 = vld [vmem:[%s2] sm:$0x1]
      %v10100 = vperm.slane %v10098, 0
      %v10102 = vmul.f32 %v8785, %v10100
      %v10103 = vmul.f32 %v8787, %v10100
      %v10104 = vmul.f32 %v8790, %v10100
      %v10105 = vmul.f32 %v8792, %v10100
      %v10106 = vmul.f32 %v8795, %v10100
      %v10107 = vmul.f32 %v8797, %v10100
      %v10108 = vmul.f32 %v8800, %v10100
      %v10109 = vmul.f32 %v8802, %v10100
      %v10110 = vmul.f32 %v8805, %v10100
      %v10111 = vmul.f32 %v8807, %v10100
      %v10112 = vmul.f32 %v8810, %v10100
      %v10113 = vmul.f32 %v8812, %v10100
      %v10114 = vmul.f32 %v8815, %v10100
      %v10115 = vmul.f32 %v8817, %v10100
      %v10116 = vmul.f32 %v8820, %v10100
      %v10117 = vmul.f32 %v8822, %v10100
      %v10118 = vmul.f32 %v8825, %v10100
      %v10119 = vmul.f32 %v8827, %v10100
      %v10120 = vmul.f32 %v8830, %v10100
      %v10121 = vmul.f32 %v8832, %v10100
      %v10122 = vmul.f32 %v8835, %v10100
      %v10123 = vmul.f32 %v8837, %v10100
      %v10124 = vmul.f32 %v8840, %v10100
      %v10125 = vmul.f32 %v8842, %v10100
      %v10126 = vmul.f32 %v8845, %v10100
      %v10127 = vmul.f32 %v8847, %v10100
      %v10128 = vmul.f32 %v8850, %v10100
      %v10129 = vmul.f32 %v8852, %v10100
      %v10130 = vmul.f32 %v8855, %v10100
      %v10131 = vmul.f32 %v8857, %v10100
      %v10132 = vmul.f32 %v8860, %v10100
      %v10133 = vmul.f32 %v8862, %v10100
      %v10134 = vmul.f32 %v8865, %v10100
      %v10135 = vmul.f32 %v8867, %v10100
      %v10136 = vmul.f32 %v8870, %v10100
      %v10137 = vmul.f32 %v8872, %v10100
      %v10138 = vmul.f32 %v8875, %v10100
      %v10139 = vmul.f32 %v8877, %v10100
      %v10140 = vmul.f32 %v8880, %v10100
      %v10141 = vmul.f32 %v8882, %v10100
      %v10142 = vmul.f32 %v8885, %v10100
      %v10143 = vmul.f32 %v8887, %v10100
      %v10144 = vmul.f32 %v8890, %v10100
      %v10145 = vmul.f32 %v8892, %v10100
      %v10146 = vmul.f32 %v8895, %v10100
      %v10147 = vmul.f32 %v8897, %v10100
      %v10148 = vmul.f32 %v8900, %v10100
      %v10149 = vmul.f32 %v8902, %v10100
      %v10150 = vmul.f32 %v8905, %v10100
      %v10151 = vmul.f32 %v8907, %v10100
      %v10152 = vmul.f32 %v8910, %v10100
      %v10153 = vmul.f32 %v8912, %v10100
      %v10154 = vmul.f32 %v8915, %v10100
      %v10155 = vmul.f32 %v8917, %v10100
      %v10156 = vmul.f32 %v8920, %v10100
      %v10157 = vmul.f32 %v8922, %v10100
      %v10158 = vmul.f32 %v8925, %v10100
      %v10159 = vmul.f32 %v8927, %v10100
      %v10160 = vmul.f32 %v8930, %v10100
      %v10161 = vmul.f32 %v8932, %v10100
      %v10162 = vmul.f32 %v8935, %v10100
      %v10163 = vmul.f32 %v8937, %v10100
      %v10164 = vmul.f32 %v8940, %v10100
      %v10165 = vmul.f32 %v8942, %v10100
      %v10166 = vmul.f32 %v8945, %v10100
      %v10167 = vmul.f32 %v8947, %v10100
      %v10168 = vmul.f32 %v8950, %v10100
      %v10169 = vmul.f32 %v8952, %v10100
      %v10170 = vmul.f32 %v8955, %v10100
      %v10171 = vmul.f32 %v8957, %v10100
      %v10172 = vmul.f32 %v8960, %v10100
      %v10173 = vmul.f32 %v8962, %v10100
      %v10174 = vmul.f32 %v8965, %v10100
      %v10175 = vmul.f32 %v8967, %v10100
      %v10176 = vmul.f32 %v8970, %v10100
      %v10177 = vmul.f32 %v8972, %v10100
      %v10178 = vmul.f32 %v8975, %v10100
      %v10179 = vmul.f32 %v8977, %v10100
      %v10180 = vmul.f32 %v8980, %v10100
      %v10181 = vmul.f32 %v8982, %v10100
      %v10182 = vmul.f32 %v8985, %v10100
      %v10183 = vmul.f32 %v8987, %v10100
      %v10184 = vmul.f32 %v8990, %v10100
      %v10185 = vmul.f32 %v8992, %v10100
      %v10186 = vmul.f32 %v8995, %v10100
      %v10187 = vmul.f32 %v8997, %v10100
      %v10188 = vmul.f32 %v9000, %v10100
      %v10189 = vmul.f32 %v9002, %v10100
      %v10190 = vmul.f32 %v9005, %v10100
      %v10191 = vmul.f32 %v9007, %v10100
      %v10192 = vmul.f32 %v9010, %v10100
      %v10193 = vmul.f32 %v9012, %v10100
      %v10194 = vmul.f32 %v9015, %v10100
      %v10195 = vmul.f32 %v9017, %v10100
      %v10196 = vmul.f32 %v9020, %v10100
      %v10197 = vmul.f32 %v9022, %v10100
      %v10198 = vmul.f32 %v9025, %v10100
      %v10199 = vmul.f32 %v9027, %v10100
      %v10200 = vmul.f32 %v9030, %v10100
      %v10201 = vmul.f32 %v9032, %v10100
      %v10202 = vmul.f32 %v9035, %v10100
      %v10203 = vmul.f32 %v9037, %v10100
      %v10204 = vmul.f32 %v9040, %v10100
      %v10205 = vmul.f32 %v9042, %v10100
      %v10206 = vmul.f32 %v9045, %v10100
      %v10207 = vmul.f32 %v9047, %v10100
      %v10208 = vmul.f32 %v9050, %v10100
      %v10209 = vmul.f32 %v9052, %v10100
      %v10210 = vmul.f32 %v9055, %v10100
      %v10211 = vmul.f32 %v9057, %v10100
      %v10212 = vmul.f32 %v9060, %v10100
      %v10213 = vmul.f32 %v9062, %v10100
      %v10214 = vmul.f32 %v9065, %v10100
      %v10215 = vmul.f32 %v9067, %v10100
      %v10216 = vmul.f32 %v9070, %v10100
      %v10217 = vmul.f32 %v9072, %v10100
      %v10218 = vmul.f32 %v9075, %v10100
      %v10219 = vmul.f32 %v9077, %v10100
      %v10220 = vmul.f32 %v9080, %v10100
      %v10221 = vmul.f32 %v9082, %v10100
      %v10222 = vmul.f32 %v9085, %v10100
      %v10223 = vmul.f32 %v9087, %v10100
      %v10224 = vmul.f32 %v9090, %v10100
      %v10225 = vmul.f32 %v9092, %v10100
      %v10226 = vmul.f32 %v9095, %v10100
      %v10227 = vmul.f32 %v9097, %v10100
      %v10228 = vmul.f32 %v9100, %v10100
      %v10229 = vmul.f32 %v9102, %v10100
      %v10230 = vmul.f32 %v9105, %v10100
      %v10231 = vmul.f32 %v9107, %v10100
      %v10232 = vmul.f32 %v9110, %v10100
      %v10233 = vmul.f32 %v9112, %v10100
      %v10234 = vmul.f32 %v9115, %v10100
      %v10235 = vmul.f32 %v9117, %v10100
      %v10236 = vmul.f32 %v9120, %v10100
      %v10237 = vmul.f32 %v9122, %v10100
      %v10238 = vmul.f32 %v9125, %v10100
      %v10239 = vmul.f32 %v9127, %v10100
      %v10240 = vmul.f32 %v9130, %v10100
      %v10241 = vmul.f32 %v9132, %v10100
      %v10242 = vmul.f32 %v9135, %v10100
      %v10243 = vmul.f32 %v9137, %v10100
      %v10244 = vmul.f32 %v9140, %v10100
      %v10245 = vmul.f32 %v9142, %v10100
      %v10246 = vmul.f32 %v9145, %v10100
      %v10247 = vmul.f32 %v9147, %v10100
      %v10248 = vmul.f32 %v9150, %v10100
      %v10249 = vmul.f32 %v9152, %v10100
      %v10250 = vmul.f32 %v9155, %v10100
      %v10251 = vmul.f32 %v9157, %v10100
      %v10252 = vmul.f32 %v9160, %v10100
      %v10253 = vmul.f32 %v9162, %v10100
      %v10254 = vmul.f32 %v9165, %v10100
      %v10255 = vmul.f32 %v9167, %v10100
      %v10256 = vmul.f32 %v9170, %v10100
      %v10257 = vmul.f32 %v9172, %v10100
      %v10258 = vmul.f32 %v9175, %v10100
      %v10259 = vmul.f32 %v9177, %v10100
      %v10260 = vmul.f32 %v9180, %v10100
      %v10261 = vmul.f32 %v9182, %v10100
      %v10262 = vmul.f32 %v9185, %v10100
      %v10263 = vmul.f32 %v9187, %v10100
      %v10264 = vmul.f32 %v9190, %v10100
      %v10265 = vmul.f32 %v9192, %v10100
      %v10266 = vmul.f32 %v9195, %v10100
      %v10267 = vmul.f32 %v9197, %v10100
      %v10268 = vmul.f32 %v9200, %v10100
      %v10269 = vmul.f32 %v9202, %v10100
      %v10270 = vmul.f32 %v9205, %v10100
      %v10271 = vmul.f32 %v9207, %v10100
      %v10272 = vmul.f32 %v9210, %v10100
      %v10273 = vmul.f32 %v9212, %v10100
      %v10274 = vmul.f32 %v9215, %v10100
      %v10275 = vmul.f32 %v9217, %v10100
      %v10276 = vmul.f32 %v9220, %v10100
      %v10277 = vmul.f32 %v9222, %v10100
      %v10278 = vmul.f32 %v9225, %v10100
      %v10279 = vmul.f32 %v9227, %v10100
      %v10280 = vmul.f32 %v9230, %v10100
      %v10281 = vmul.f32 %v9232, %v10100
      %v10282 = vmul.f32 %v9235, %v10100
      %v10283 = vmul.f32 %v9237, %v10100
      %v10284 = vmul.f32 %v9240, %v10100
      %v10285 = vmul.f32 %v9242, %v10100
      %v10286 = vmul.f32 %v9245, %v10100
      %v10287 = vmul.f32 %v9247, %v10100
      %v10288 = vmul.f32 %v9250, %v10100
      %v10289 = vmul.f32 %v9252, %v10100
      %v10290 = vmul.f32 %v9255, %v10100
      %v10291 = vmul.f32 %v9257, %v10100
      %v10292 = vmul.f32 %v9260, %v10100
      %v10293 = vmul.f32 %v9262, %v10100
      %v10294 = vmul.f32 %v9265, %v10100
      %v10295 = vmul.f32 %v9267, %v10100
      %v10296 = vmul.f32 %v9270, %v10100
      %v10297 = vmul.f32 %v9272, %v10100
      %v10298 = vmul.f32 %v9275, %v10100
      %v10299 = vmul.f32 %v9277, %v10100
      %v10300 = vmul.f32 %v9280, %v10100
      %v10301 = vmul.f32 %v9282, %v10100
      %v10302 = vmul.f32 %v9285, %v10100
      %v10303 = vmul.f32 %v9287, %v10100
      %v10304 = vmul.f32 %v9290, %v10100
      %v10305 = vmul.f32 %v9292, %v10100
      %v10306 = vmul.f32 %v9295, %v10100
      %v10307 = vmul.f32 %v9297, %v10100
      %v10308 = vmul.f32 %v9300, %v10100
      %v10309 = vmul.f32 %v9302, %v10100
      %v10310 = vmul.f32 %v9305, %v10100
      %v10311 = vmul.f32 %v9307, %v10100
      %v10312 = vmul.f32 %v9310, %v10100
      %v10313 = vmul.f32 %v9312, %v10100
      %v10314 = vmul.f32 %v9315, %v10100
      %v10315 = vmul.f32 %v9317, %v10100
      %v10316 = vmul.f32 %v9320, %v10100
      %v10317 = vmul.f32 %v9322, %v10100
      %v10318 = vmul.f32 %v9325, %v10100
      %v10319 = vmul.f32 %v9327, %v10100
      %v10320 = vmul.f32 %v9330, %v10100
      %v10321 = vmul.f32 %v9332, %v10100
      %v10322 = vmul.f32 %v9335, %v10100
      %v10323 = vmul.f32 %v9337, %v10100
      %v10324 = vmul.f32 %v9340, %v10100
      %v10325 = vmul.f32 %v9342, %v10100
      %v10326 = vmul.f32 %v9345, %v10100
      %v10327 = vmul.f32 %v9347, %v10100
      %v10328 = vmul.f32 %v9350, %v10100
      %v10329 = vmul.f32 %v9352, %v10100
      %v10330 = vmul.f32 %v9355, %v10100
      %v10331 = vmul.f32 %v9357, %v10100
      %v10332 = vmul.f32 %v9360, %v10100
      %v10333 = vmul.f32 %v9362, %v10100
      %v10334 = vmul.f32 %v9365, %v10100
      %v10335 = vmul.f32 %v9367, %v10100
      %v10336 = vmul.f32 %v9370, %v10100
      %v10337 = vmul.f32 %v9372, %v10100
      %v10338 = vmul.f32 %v9375, %v10100
      %v10339 = vmul.f32 %v9377, %v10100
      %v10340 = vmul.f32 %v9380, %v10100
      %v10341 = vmul.f32 %v9382, %v10100
      %v10342 = vmul.f32 %v9385, %v10100
      %v10343 = vmul.f32 %v9387, %v10100
      %v10344 = vmul.f32 %v9390, %v10100
      %v10345 = vmul.f32 %v9392, %v10100
      %v10346 = vmul.f32 %v9395, %v10100
      %v10347 = vmul.f32 %v9397, %v10100
      %v10348 = vmul.f32 %v9400, %v10100
      %v10349 = vmul.f32 %v9402, %v10100
      %v10350 = vmul.f32 %v9405, %v10100
      %v10351 = vmul.f32 %v9407, %v10100
      %v10352 = vmul.f32 %v9410, %v10100
      %v10353 = vmul.f32 %v9412, %v10100
      %v10354 = vmul.f32 %v9415, %v10100
      %v10355 = vmul.f32 %v9417, %v10100
      %v10356 = vmul.f32 %v9420, %v10100
      %v10357 = vmul.f32 %v9422, %v10100
      %v10358 = vmul.f32 %v9425, %v10100
      %v10359 = vmul.f32 %v9427, %v10100
      %v10360 = vmul.f32 %v9430, %v10100
      %v10361 = vmul.f32 %v9432, %v10100
      %v10362 = vmul.f32 %v9435, %v10100
      %v10363 = vmul.f32 %v9437, %v10100
      %v10364 = vmul.f32 %v9440, %v10100
      %v10365 = vmul.f32 %v9442, %v10100
      %v10366 = vmul.f32 %v9445, %v10100
      %v10367 = vmul.f32 %v9447, %v10100
      %v10368 = vmul.f32 %v9450, %v10100
      %v10369 = vmul.f32 %v9452, %v10100
      %v10370 = vmul.f32 %v9455, %v10100
      %v10371 = vmul.f32 %v9457, %v10100
      %v10372 = vmul.f32 %v9460, %v10100
      %v10373 = vmul.f32 %v9462, %v10100
      %v10374 = vmul.f32 %v9465, %v10100
      %v10375 = vmul.f32 %v9467, %v10100
      %v10376 = vmul.f32 %v9470, %v10100
      %v10377 = vmul.f32 %v9472, %v10100
      %v10378 = vmul.f32 %v9475, %v10100
      %v10379 = vmul.f32 %v9477, %v10100
      %v10380 = vmul.f32 %v9480, %v10100
      %v10381 = vmul.f32 %v9482, %v10100
      %v10382 = vmul.f32 %v9485, %v10100
      %v10383 = vmul.f32 %v9487, %v10100
      %v10384 = vmul.f32 %v9490, %v10100
      %v10385 = vmul.f32 %v9492, %v10100
      %v10386 = vmul.f32 %v9495, %v10100
      %v10387 = vmul.f32 %v9497, %v10100
      %v10388 = vmul.f32 %v9500, %v10100
      %v10389 = vmul.f32 %v9502, %v10100
      %v10390 = vmul.f32 %v9505, %v10100
      %v10391 = vmul.f32 %v9507, %v10100
      %v10392 = vmul.f32 %v9510, %v10100
      %v10393 = vmul.f32 %v9512, %v10100
      %v10394 = vmul.f32 %v9515, %v10100
      %v10395 = vmul.f32 %v9517, %v10100
      %v10396 = vmul.f32 %v9520, %v10100
      %v10397 = vmul.f32 %v9522, %v10100
      %v10398 = vmul.f32 %v9525, %v10100
      %v10399 = vmul.f32 %v9527, %v10100
      %v10400 = vmul.f32 %v9530, %v10100
      %v10401 = vmul.f32 %v9532, %v10100
      %v10402 = vmul.f32 %v9535, %v10100
      %v10403 = vmul.f32 %v9537, %v10100
      %v10404 = vmul.f32 %v9540, %v10100
      %v10405 = vmul.f32 %v9542, %v10100
      %v10406 = vmul.f32 %v9545, %v10100
      %v10407 = vmul.f32 %v9547, %v10100
      %v10408 = vmul.f32 %v9550, %v10100
      %v10409 = vmul.f32 %v9552, %v10100
      %v10410 = vmul.f32 %v9555, %v10100
      %v10411 = vmul.f32 %v9557, %v10100
      %v10412 = vmul.f32 %v9560, %v10100
      %v10413 = vmul.f32 %v9562, %v10100
      %v10414 = vmul.f32 %v9565, %v10100
      %v10415 = vmul.f32 %v9567, %v10100
      %v10416 = vmul.f32 %v9570, %v10100
      %v10417 = vmul.f32 %v9572, %v10100
      %v10418 = vmul.f32 %v9575, %v10100
      %v10419 = vmul.f32 %v9577, %v10100
      %v10420 = vmul.f32 %v9580, %v10100
      %v10421 = vmul.f32 %v9582, %v10100
      %v10422 = vmul.f32 %v9585, %v10100
      %v10423 = vmul.f32 %v9587, %v10100
      %v10424 = vmul.f32 %v9590, %v10100
      %v10425 = vmul.f32 %v9592, %v10100
      %v10426 = vmul.f32 %v9595, %v10100
      %v10427 = vmul.f32 %v9597, %v10100
      %v10428 = vmul.f32 %v9600, %v10100
      %v10429 = vmul.f32 %v9602, %v10100
      %v10430 = vmul.f32 %v9605, %v10100
      %v10431 = vmul.f32 %v9607, %v10100
      %v10432 = vmul.f32 %v9610, %v10100
      %v10433 = vmul.f32 %v9612, %v10100
      %v10434 = vmul.f32 %v9615, %v10100
      %v10435 = vmul.f32 %v9617, %v10100
      %v10436 = vmul.f32 %v9620, %v10100
      %v10437 = vmul.f32 %v9622, %v10100
      %v10438 = vmul.f32 %v9625, %v10100
      %v10439 = vmul.f32 %v9627, %v10100
      %v10440 = vmul.f32 %v9630, %v10100
      %v10441 = vmul.f32 %v9632, %v10100
      %v10442 = vmul.f32 %v9635, %v10100
      %v10443 = vmul.f32 %v9637, %v10100
      %v10444 = vmul.f32 %v9640, %v10100
      %v10445 = vmul.f32 %v9642, %v10100
      %v10446 = vmul.f32 %v9645, %v10100
      %v10447 = vmul.f32 %v9647, %v10100
      %v10448 = vmul.f32 %v9650, %v10100
      %v10449 = vmul.f32 %v9652, %v10100
      %v10450 = vmul.f32 %v9655, %v10100
      %v10451 = vmul.f32 %v9657, %v10100
      %v10452 = vmul.f32 %v9660, %v10100
      %v10453 = vmul.f32 %v9662, %v10100
      %v10454 = vmul.f32 %v9665, %v10100
      %v10455 = vmul.f32 %v9667, %v10100
      %v10456 = vmul.f32 %v9670, %v10100
      %v10457 = vmul.f32 %v9672, %v10100
      %v10458 = vmul.f32 %v9675, %v10100
      %v10459 = vmul.f32 %v9677, %v10100
      %v10460 = vmul.f32 %v9680, %v10100
      %v10461 = vmul.f32 %v9682, %v10100
      %v10462 = vmul.f32 %v9685, %v10100
      %v10463 = vmul.f32 %v9687, %v10100
      %v10464 = vmul.f32 %v9690, %v10100
      %v10465 = vmul.f32 %v9692, %v10100
      %v10466 = vmul.f32 %v9695, %v10100
      %v10467 = vmul.f32 %v9697, %v10100
      %v10468 = vmul.f32 %v9700, %v10100
      %v10469 = vmul.f32 %v9702, %v10100
      %v10470 = vmul.f32 %v9705, %v10100
      %v10471 = vmul.f32 %v9707, %v10100
      %v10472 = vmul.f32 %v9710, %v10100
      %v10473 = vmul.f32 %v9712, %v10100
      %v10474 = vmul.f32 %v9715, %v10100
      %v10475 = vmul.f32 %v9717, %v10100
      %v10476 = vmul.f32 %v9720, %v10100
      %v10477 = vmul.f32 %v9722, %v10100
      %v10478 = vmul.f32 %v9725, %v10100
      %v10479 = vmul.f32 %v9727, %v10100
      %v10480 = vmul.f32 %v9730, %v10100
      %v10481 = vmul.f32 %v9732, %v10100
      %v10482 = vmul.f32 %v9735, %v10100
      %v10483 = vmul.f32 %v9737, %v10100
      %v10484 = vmul.f32 %v9740, %v10100
      %v10485 = vmul.f32 %v9742, %v10100
      %v10486 = vmul.f32 %v9745, %v10100
      %v10487 = vmul.f32 %v9747, %v10100
      %v10488 = vmul.f32 %v9750, %v10100
      %v10489 = vmul.f32 %v9752, %v10100
      %v10490 = vmul.f32 %v9755, %v10100
      %v10491 = vmul.f32 %v9757, %v10100
      %v10492 = vmul.f32 %v9760, %v10100
      %v10493 = vmul.f32 %v9762, %v10100
      %v10494 = vmul.f32 %v9765, %v10100
      %v10495 = vmul.f32 %v9767, %v10100
      %v10496 = vmul.f32 %v9770, %v10100
      %v10497 = vmul.f32 %v9772, %v10100
      %v10498 = vmul.f32 %v9775, %v10100
      %v10499 = vmul.f32 %v9777, %v10100
      %v10500 = vmul.f32 %v9780, %v10100
      %v10501 = vmul.f32 %v9782, %v10100
      %v10502 = vmul.f32 %v9785, %v10100
      %v10503 = vmul.f32 %v9787, %v10100
      %v10504 = vmul.f32 %v9790, %v10100
      %v10505 = vmul.f32 %v9792, %v10100
      %v10506 = vmul.f32 %v9795, %v10100
      %v10507 = vmul.f32 %v9797, %v10100
      %v10508 = vmul.f32 %v9800, %v10100
      %v10509 = vmul.f32 %v9802, %v10100
      %v10510 = vmul.f32 %v9805, %v10100
      %v10511 = vmul.f32 %v9807, %v10100
      %v10512 = vmul.f32 %v9810, %v10100
      %v10513 = vmul.f32 %v9812, %v10100
      %v10514 = vmul.f32 %v9815, %v10100
      %v10515 = vmul.f32 %v9817, %v10100
      %v10516 = vmul.f32 %v9820, %v10100
      %v10517 = vmul.f32 %v9822, %v10100
      %v10518 = vmul.f32 %v9825, %v10100
      %v10519 = vmul.f32 %v9827, %v10100
      %v10520 = vmul.f32 %v9830, %v10100
      %v10521 = vmul.f32 %v9832, %v10100
      %v10522 = vmul.f32 %v9835, %v10100
      %v10523 = vmul.f32 %v9837, %v10100
      %v10524 = vmul.f32 %v9840, %v10100
      %v10525 = vmul.f32 %v9842, %v10100
      %v10526 = vmul.f32 %v9845, %v10100
      %v10527 = vmul.f32 %v9847, %v10100
      %v10528 = vmul.f32 %v9850, %v10100
      %v10529 = vmul.f32 %v9852, %v10100
      %v10530 = vmul.f32 %v9855, %v10100
      %v10531 = vmul.f32 %v9857, %v10100
      %v10532 = vmul.f32 %v9860, %v10100
      %v10533 = vmul.f32 %v9862, %v10100
      %v10534 = vmul.f32 %v9865, %v10100
      %v10535 = vmul.f32 %v9867, %v10100
      %v10536 = vmul.f32 %v9870, %v10100
      %v10537 = vmul.f32 %v9872, %v10100
      %v10538 = vmul.f32 %v9875, %v10100
      %v10539 = vmul.f32 %v9877, %v10100
      %v10540 = vmul.f32 %v9880, %v10100
      %v10541 = vmul.f32 %v9882, %v10100
      %v10542 = vmul.f32 %v9885, %v10100
      %v10543 = vmul.f32 %v9887, %v10100
      %v10544 = vmul.f32 %v9890, %v10100
      %v10545 = vmul.f32 %v9892, %v10100
      %v10546 = vmul.f32 %v9895, %v10100
      %v10547 = vmul.f32 %v9897, %v10100
      %v10548 = vmul.f32 %v9900, %v10100
      %v10549 = vmul.f32 %v9902, %v10100
      %v10550 = vmul.f32 %v9905, %v10100
      %v10551 = vmul.f32 %v9907, %v10100
      %v10552 = vmul.f32 %v9910, %v10100
      %v10553 = vmul.f32 %v9912, %v10100
      %v10554 = vmul.f32 %v9915, %v10100
      %v10555 = vmul.f32 %v9917, %v10100
      %v10556 = vmul.f32 %v9920, %v10100
      %v10557 = vmul.f32 %v9922, %v10100
      %v10558 = vmul.f32 %v9925, %v10100
      %v10559 = vmul.f32 %v9927, %v10100
      %v10560 = vmul.f32 %v9930, %v10100
      %v10561 = vmul.f32 %v9932, %v10100
      %v10562 = vmul.f32 %v9935, %v10100
      %v10563 = vmul.f32 %v9937, %v10100
      %v10564 = vmul.f32 %v9940, %v10100
      %v10565 = vmul.f32 %v9942, %v10100
      %v10566 = vmul.f32 %v9945, %v10100
      %v10567 = vmul.f32 %v9947, %v10100
      %v10568 = vmul.f32 %v9950, %v10100
      %v10569 = vmul.f32 %v9952, %v10100
      %v10570 = vmul.f32 %v9955, %v10100
      %v10571 = vmul.f32 %v9957, %v10100
      %v10572 = vmul.f32 %v9960, %v10100
      %v10573 = vmul.f32 %v9962, %v10100
      %v10574 = vmul.f32 %v9965, %v10100
      %v10575 = vmul.f32 %v9967, %v10100
      %v10576 = vmul.f32 %v9970, %v10100
      %v10577 = vmul.f32 %v9972, %v10100
      %v10578 = vmul.f32 %v9975, %v10100
      %v10579 = vmul.f32 %v9977, %v10100
      %v10580 = vmul.f32 %v9980, %v10100
      %v10581 = vmul.f32 %v9982, %v10100
      %v10582 = vmul.f32 %v9985, %v10100
      %v10583 = vmul.f32 %v9987, %v10100
      %v10584 = vmul.f32 %v9990, %v10100
      %v10585 = vmul.f32 %v9992, %v10100
      %v10586 = vmul.f32 %v9995, %v10100
      %v10587 = vmul.f32 %v9997, %v10100
      %v10588 = vmul.f32 %v10000, %v10100
      %v10589 = vmul.f32 %v10002, %v10100
      %v10590 = vmul.f32 %v10005, %v10100
      %v10591 = vmul.f32 %v10007, %v10100
      %v10592 = vmul.f32 %v10010, %v10100
      %v10593 = vmul.f32 %v10012, %v10100
      %v10594 = vmul.f32 %v10015, %v10100
      %v10595 = vmul.f32 %v10017, %v10100
      %v10596 = vmul.f32 %v10020, %v10100
      %v10597 = vmul.f32 %v10022, %v10100
      %v10598 = vmul.f32 %v10025, %v10100
      %v10599 = vmul.f32 %v10027, %v10100
      %v10600 = vmul.f32 %v10030, %v10100
      %v10601 = vmul.f32 %v10032, %v10100
      %v10602 = vmul.f32 %v10035, %v10100
      %v10603 = vmul.f32 %v10037, %v10100
      %v10604 = vmul.f32 %v10040, %v10100
      %v10605 = vmul.f32 %v10042, %v10100
      %v10606 = vmul.f32 %v10045, %v10100
      %v10607 = vmul.f32 %v10047, %v10100
      %v10608 = vmul.f32 %v10050, %v10100
      %v10609 = vmul.f32 %v10052, %v10100
      %v10610 = vmul.f32 %v10055, %v10100
      %v10611 = vmul.f32 %v10057, %v10100
      %v10612 = vmul.f32 %v10060, %v10100
      %v10613 = vmul.f32 %v10062, %v10100
      %v10614 = vmul.f32 %v10065, %v10100
      %v10615 = vmul.f32 %v10067, %v10100
      %v10616 = vmul.f32 %v10070, %v10100
      %v10617 = vmul.f32 %v10072, %v10100
      %v10618 = vmul.f32 %v10075, %v10100
      %v10619 = vmul.f32 %v10077, %v10100
      %v10620 = vmul.f32 %v10080, %v10100
      %v10621 = vmul.f32 %v10082, %v10100
      %v10622 = vmul.f32 %v10085, %v10100
      %v10623 = vmul.f32 %v10087, %v10100
      %v10624 = vmul.f32 %v10090, %v10100
      %v10625 = vmul.f32 %v10092, %v10100
      %v10626 = vmul.f32 %v10095, %v10100
      %v10627 = vld [vmem:[%s3] sm:$0x1]
      %v10629 = vperm.slane %v10627, 0
      %v10631 = vadd.f32 %v10102, %v10629
      %v10632 = vadd.f32 %v10103, %v10629
      %v10633 = vadd.f32 %v10104, %v10629
      %v10634 = vadd.f32 %v10105, %v10629
      %v10635 = vadd.f32 %v10106, %v10629
      %v10636 = vadd.f32 %v10107, %v10629
      %v10637 = vadd.f32 %v10108, %v10629
      %v10638 = vadd.f32 %v10109, %v10629
      %v10639 = vadd.f32 %v10110, %v10629
      %v10640 = vadd.f32 %v10111, %v10629
      %v10641 = vadd.f32 %v10112, %v10629
      %v10642 = vadd.f32 %v10113, %v10629
      %v10643 = vadd.f32 %v10114, %v10629
      %v10644 = vadd.f32 %v10115, %v10629
      %v10645 = vadd.f32 %v10116, %v10629
      %v10646 = vadd.f32 %v10117, %v10629
      %v10647 = vadd.f32 %v10118, %v10629
      %v10648 = vadd.f32 %v10119, %v10629
      %v10649 = vadd.f32 %v10120, %v10629
      %v10650 = vadd.f32 %v10121, %v10629
      %v10651 = vadd.f32 %v10122, %v10629
      %v10652 = vadd.f32 %v10123, %v10629
      %v10653 = vadd.f32 %v10124, %v10629
      %v10654 = vadd.f32 %v10125, %v10629
      %v10655 = vadd.f32 %v10126, %v10629
      %v10656 = vadd.f32 %v10127, %v10629
      %v10657 = vadd.f32 %v10128, %v10629
      %v10658 = vadd.f32 %v10129, %v10629
      %v10659 = vadd.f32 %v10130, %v10629
      %v10660 = vadd.f32 %v10131, %v10629
      %v10661 = vadd.f32 %v10132, %v10629
      %v10662 = vadd.f32 %v10133, %v10629
      %v10663 = vadd.f32 %v10134, %v10629
      %v10664 = vadd.f32 %v10135, %v10629
      %v10665 = vadd.f32 %v10136, %v10629
      %v10666 = vadd.f32 %v10137, %v10629
      %v10667 = vadd.f32 %v10138, %v10629
      %v10668 = vadd.f32 %v10139, %v10629
      %v10669 = vadd.f32 %v10140, %v10629
      %v10670 = vadd.f32 %v10141, %v10629
      %v10671 = vadd.f32 %v10142, %v10629
      %v10672 = vadd.f32 %v10143, %v10629
      %v10673 = vadd.f32 %v10144, %v10629
      %v10674 = vadd.f32 %v10145, %v10629
      %v10675 = vadd.f32 %v10146, %v10629
      %v10676 = vadd.f32 %v10147, %v10629
      %v10677 = vadd.f32 %v10148, %v10629
      %v10678 = vadd.f32 %v10149, %v10629
      %v10679 = vadd.f32 %v10150, %v10629
      %v10680 = vadd.f32 %v10151, %v10629
      %v10681 = vadd.f32 %v10152, %v10629
      %v10682 = vadd.f32 %v10153, %v10629
      %v10683 = vadd.f32 %v10154, %v10629
      %v10684 = vadd.f32 %v10155, %v10629
      %v10685 = vadd.f32 %v10156, %v10629
      %v10686 = vadd.f32 %v10157, %v10629
      %v10687 = vadd.f32 %v10158, %v10629
      %v10688 = vadd.f32 %v10159, %v10629
      %v10689 = vadd.f32 %v10160, %v10629
      %v10690 = vadd.f32 %v10161, %v10629
      %v10691 = vadd.f32 %v10162, %v10629
      %v10692 = vadd.f32 %v10163, %v10629
      %v10693 = vadd.f32 %v10164, %v10629
      %v10694 = vadd.f32 %v10165, %v10629
      %v10695 = vadd.f32 %v10166, %v10629
      %v10696 = vadd.f32 %v10167, %v10629
      %v10697 = vadd.f32 %v10168, %v10629
      %v10698 = vadd.f32 %v10169, %v10629
      %v10699 = vadd.f32 %v10170, %v10629
      %v10700 = vadd.f32 %v10171, %v10629
      %v10701 = vadd.f32 %v10172, %v10629
      %v10702 = vadd.f32 %v10173, %v10629
      %v10703 = vadd.f32 %v10174, %v10629
      %v10704 = vadd.f32 %v10175, %v10629
      %v10705 = vadd.f32 %v10176, %v10629
      %v10706 = vadd.f32 %v10177, %v10629
      %v10707 = vadd.f32 %v10178, %v10629
      %v10708 = vadd.f32 %v10179, %v10629
      %v10709 = vadd.f32 %v10180, %v10629
      %v10710 = vadd.f32 %v10181, %v10629
      %v10711 = vadd.f32 %v10182, %v10629
      %v10712 = vadd.f32 %v10183, %v10629
      %v10713 = vadd.f32 %v10184, %v10629
      %v10714 = vadd.f32 %v10185, %v10629
      %v10715 = vadd.f32 %v10186, %v10629
      %v10716 = vadd.f32 %v10187, %v10629
      %v10717 = vadd.f32 %v10188, %v10629
      %v10718 = vadd.f32 %v10189, %v10629
      %v10719 = vadd.f32 %v10190, %v10629
      %v10720 = vadd.f32 %v10191, %v10629
      %v10721 = vadd.f32 %v10192, %v10629
      %v10722 = vadd.f32 %v10193, %v10629
      %v10723 = vadd.f32 %v10194, %v10629
      %v10724 = vadd.f32 %v10195, %v10629
      %v10725 = vadd.f32 %v10196, %v10629
      %v10726 = vadd.f32 %v10197, %v10629
      %v10727 = vadd.f32 %v10198, %v10629
      %v10728 = vadd.f32 %v10199, %v10629
      %v10729 = vadd.f32 %v10200, %v10629
      %v10730 = vadd.f32 %v10201, %v10629
      %v10731 = vadd.f32 %v10202, %v10629
      %v10732 = vadd.f32 %v10203, %v10629
      %v10733 = vadd.f32 %v10204, %v10629
      %v10734 = vadd.f32 %v10205, %v10629
      %v10735 = vadd.f32 %v10206, %v10629
      %v10736 = vadd.f32 %v10207, %v10629
      %v10737 = vadd.f32 %v10208, %v10629
      %v10738 = vadd.f32 %v10209, %v10629
      %v10739 = vadd.f32 %v10210, %v10629
      %v10740 = vadd.f32 %v10211, %v10629
      %v10741 = vadd.f32 %v10212, %v10629
      %v10742 = vadd.f32 %v10213, %v10629
      %v10743 = vadd.f32 %v10214, %v10629
      %v10744 = vadd.f32 %v10215, %v10629
      %v10745 = vadd.f32 %v10216, %v10629
      %v10746 = vadd.f32 %v10217, %v10629
      %v10747 = vadd.f32 %v10218, %v10629
      %v10748 = vadd.f32 %v10219, %v10629
      %v10749 = vadd.f32 %v10220, %v10629
      %v10750 = vadd.f32 %v10221, %v10629
      %v10751 = vadd.f32 %v10222, %v10629
      %v10752 = vadd.f32 %v10223, %v10629
      %v10753 = vadd.f32 %v10224, %v10629
      %v10754 = vadd.f32 %v10225, %v10629
      %v10755 = vadd.f32 %v10226, %v10629
      %v10756 = vadd.f32 %v10227, %v10629
      %v10757 = vadd.f32 %v10228, %v10629
      %v10758 = vadd.f32 %v10229, %v10629
      %v10759 = vadd.f32 %v10230, %v10629
      %v10760 = vadd.f32 %v10231, %v10629
      %v10761 = vadd.f32 %v10232, %v10629
      %v10762 = vadd.f32 %v10233, %v10629
      %v10763 = vadd.f32 %v10234, %v10629
      %v10764 = vadd.f32 %v10235, %v10629
      %v10765 = vadd.f32 %v10236, %v10629
      %v10766 = vadd.f32 %v10237, %v10629
      %v10767 = vadd.f32 %v10238, %v10629
      %v10768 = vadd.f32 %v10239, %v10629
      %v10769 = vadd.f32 %v10240, %v10629
      %v10770 = vadd.f32 %v10241, %v10629
      %v10771 = vadd.f32 %v10242, %v10629
      %v10772 = vadd.f32 %v10243, %v10629
      %v10773 = vadd.f32 %v10244, %v10629
      %v10774 = vadd.f32 %v10245, %v10629
      %v10775 = vadd.f32 %v10246, %v10629
      %v10776 = vadd.f32 %v10247, %v10629
      %v10777 = vadd.f32 %v10248, %v10629
      %v10778 = vadd.f32 %v10249, %v10629
      %v10779 = vadd.f32 %v10250, %v10629
      %v10780 = vadd.f32 %v10251, %v10629
      %v10781 = vadd.f32 %v10252, %v10629
      %v10782 = vadd.f32 %v10253, %v10629
      %v10783 = vadd.f32 %v10254, %v10629
      %v10784 = vadd.f32 %v10255, %v10629
      %v10785 = vadd.f32 %v10256, %v10629
      %v10786 = vadd.f32 %v10257, %v10629
      %v10787 = vadd.f32 %v10258, %v10629
      %v10788 = vadd.f32 %v10259, %v10629
      %v10789 = vadd.f32 %v10260, %v10629
      %v10790 = vadd.f32 %v10261, %v10629
      %v10791 = vadd.f32 %v10262, %v10629
      %v10792 = vadd.f32 %v10263, %v10629
      %v10793 = vadd.f32 %v10264, %v10629
      %v10794 = vadd.f32 %v10265, %v10629
      %v10795 = vadd.f32 %v10266, %v10629
      %v10796 = vadd.f32 %v10267, %v10629
      %v10797 = vadd.f32 %v10268, %v10629
      %v10798 = vadd.f32 %v10269, %v10629
      %v10799 = vadd.f32 %v10270, %v10629
      %v10800 = vadd.f32 %v10271, %v10629
      %v10801 = vadd.f32 %v10272, %v10629
      %v10802 = vadd.f32 %v10273, %v10629
      %v10803 = vadd.f32 %v10274, %v10629
      %v10804 = vadd.f32 %v10275, %v10629
      %v10805 = vadd.f32 %v10276, %v10629
      %v10806 = vadd.f32 %v10277, %v10629
      %v10807 = vadd.f32 %v10278, %v10629
      %v10808 = vadd.f32 %v10279, %v10629
      %v10809 = vadd.f32 %v10280, %v10629
      %v10810 = vadd.f32 %v10281, %v10629
      %v10811 = vadd.f32 %v10282, %v10629
      %v10812 = vadd.f32 %v10283, %v10629
      %v10813 = vadd.f32 %v10284, %v10629
      %v10814 = vadd.f32 %v10285, %v10629
      %v10815 = vadd.f32 %v10286, %v10629
      %v10816 = vadd.f32 %v10287, %v10629
      %v10817 = vadd.f32 %v10288, %v10629
      %v10818 = vadd.f32 %v10289, %v10629
      %v10819 = vadd.f32 %v10290, %v10629
      %v10820 = vadd.f32 %v10291, %v10629
      %v10821 = vadd.f32 %v10292, %v10629
      %v10822 = vadd.f32 %v10293, %v10629
      %v10823 = vadd.f32 %v10294, %v10629
      %v10824 = vadd.f32 %v10295, %v10629
      %v10825 = vadd.f32 %v10296, %v10629
      %v10826 = vadd.f32 %v10297, %v10629
      %v10827 = vadd.f32 %v10298, %v10629
      %v10828 = vadd.f32 %v10299, %v10629
      %v10829 = vadd.f32 %v10300, %v10629
      %v10830 = vadd.f32 %v10301, %v10629
      %v10831 = vadd.f32 %v10302, %v10629
      %v10832 = vadd.f32 %v10303, %v10629
      %v10833 = vadd.f32 %v10304, %v10629
      %v10834 = vadd.f32 %v10305, %v10629
      %v10835 = vadd.f32 %v10306, %v10629
      %v10836 = vadd.f32 %v10307, %v10629
      %v10837 = vadd.f32 %v10308, %v10629
      %v10838 = vadd.f32 %v10309, %v10629
      %v10839 = vadd.f32 %v10310, %v10629
      %v10840 = vadd.f32 %v10311, %v10629
      %v10841 = vadd.f32 %v10312, %v10629
      %v10842 = vadd.f32 %v10313, %v10629
      %v10843 = vadd.f32 %v10314, %v10629
      %v10844 = vadd.f32 %v10315, %v10629
      %v10845 = vadd.f32 %v10316, %v10629
      %v10846 = vadd.f32 %v10317, %v10629
      %v10847 = vadd.f32 %v10318, %v10629
      %v10848 = vadd.f32 %v10319, %v10629
      %v10849 = vadd.f32 %v10320, %v10629
      %v10850 = vadd.f32 %v10321, %v10629
      %v10851 = vadd.f32 %v10322, %v10629
      %v10852 = vadd.f32 %v10323, %v10629
      %v10853 = vadd.f32 %v10324, %v10629
      %v10854 = vadd.f32 %v10325, %v10629
      %v10855 = vadd.f32 %v10326, %v10629
      %v10856 = vadd.f32 %v10327, %v10629
      %v10857 = vadd.f32 %v10328, %v10629
      %v10858 = vadd.f32 %v10329, %v10629
      %v10859 = vadd.f32 %v10330, %v10629
      %v10860 = vadd.f32 %v10331, %v10629
      %v10861 = vadd.f32 %v10332, %v10629
      %v10862 = vadd.f32 %v10333, %v10629
      %v10863 = vadd.f32 %v10334, %v10629
      %v10864 = vadd.f32 %v10335, %v10629
      %v10865 = vadd.f32 %v10336, %v10629
      %v10866 = vadd.f32 %v10337, %v10629
      %v10867 = vadd.f32 %v10338, %v10629
      %v10868 = vadd.f32 %v10339, %v10629
      %v10869 = vadd.f32 %v10340, %v10629
      %v10870 = vadd.f32 %v10341, %v10629
      %v10871 = vadd.f32 %v10342, %v10629
      %v10872 = vadd.f32 %v10343, %v10629
      %v10873 = vadd.f32 %v10344, %v10629
      %v10874 = vadd.f32 %v10345, %v10629
      %v10875 = vadd.f32 %v10346, %v10629
      %v10876 = vadd.f32 %v10347, %v10629
      %v10877 = vadd.f32 %v10348, %v10629
      %v10878 = vadd.f32 %v10349, %v10629
      %v10879 = vadd.f32 %v10350, %v10629
      %v10880 = vadd.f32 %v10351, %v10629
      %v10881 = vadd.f32 %v10352, %v10629
      %v10882 = vadd.f32 %v10353, %v10629
      %v10883 = vadd.f32 %v10354, %v10629
      %v10884 = vadd.f32 %v10355, %v10629
      %v10885 = vadd.f32 %v10356, %v10629
      %v10886 = vadd.f32 %v10357, %v10629
      %v10887 = vadd.f32 %v10358, %v10629
      %v10888 = vadd.f32 %v10359, %v10629
      %v10889 = vadd.f32 %v10360, %v10629
      %v10890 = vadd.f32 %v10361, %v10629
      %v10891 = vadd.f32 %v10362, %v10629
      %v10892 = vadd.f32 %v10363, %v10629
      %v10893 = vadd.f32 %v10364, %v10629
      %v10894 = vadd.f32 %v10365, %v10629
      %v10895 = vadd.f32 %v10366, %v10629
      %v10896 = vadd.f32 %v10367, %v10629
      %v10897 = vadd.f32 %v10368, %v10629
      %v10898 = vadd.f32 %v10369, %v10629
      %v10899 = vadd.f32 %v10370, %v10629
      %v10900 = vadd.f32 %v10371, %v10629
      %v10901 = vadd.f32 %v10372, %v10629
      %v10902 = vadd.f32 %v10373, %v10629
      %v10903 = vadd.f32 %v10374, %v10629
      %v10904 = vadd.f32 %v10375, %v10629
      %v10905 = vadd.f32 %v10376, %v10629
      %v10906 = vadd.f32 %v10377, %v10629
      %v10907 = vadd.f32 %v10378, %v10629
      %v10908 = vadd.f32 %v10379, %v10629
      %v10909 = vadd.f32 %v10380, %v10629
      %v10910 = vadd.f32 %v10381, %v10629
      %v10911 = vadd.f32 %v10382, %v10629
      %v10912 = vadd.f32 %v10383, %v10629
      %v10913 = vadd.f32 %v10384, %v10629
      %v10914 = vadd.f32 %v10385, %v10629
      %v10915 = vadd.f32 %v10386, %v10629
      %v10916 = vadd.f32 %v10387, %v10629
      %v10917 = vadd.f32 %v10388, %v10629
      %v10918 = vadd.f32 %v10389, %v10629
      %v10919 = vadd.f32 %v10390, %v10629
      %v10920 = vadd.f32 %v10391, %v10629
      %v10921 = vadd.f32 %v10392, %v10629
      %v10922 = vadd.f32 %v10393, %v10629
      %v10923 = vadd.f32 %v10394, %v10629
      %v10924 = vadd.f32 %v10395, %v10629
      %v10925 = vadd.f32 %v10396, %v10629
      %v10926 = vadd.f32 %v10397, %v10629
      %v10927 = vadd.f32 %v10398, %v10629
      %v10928 = vadd.f32 %v10399, %v10629
      %v10929 = vadd.f32 %v10400, %v10629
      %v10930 = vadd.f32 %v10401, %v10629
      %v10931 = vadd.f32 %v10402, %v10629
      %v10932 = vadd.f32 %v10403, %v10629
      %v10933 = vadd.f32 %v10404, %v10629
      %v10934 = vadd.f32 %v10405, %v10629
      %v10935 = vadd.f32 %v10406, %v10629
      %v10936 = vadd.f32 %v10407, %v10629
      %v10937 = vadd.f32 %v10408, %v10629
      %v10938 = vadd.f32 %v10409, %v10629
      %v10939 = vadd.f32 %v10410, %v10629
      %v10940 = vadd.f32 %v10411, %v10629
      %v10941 = vadd.f32 %v10412, %v10629
      %v10942 = vadd.f32 %v10413, %v10629
      %v10943 = vadd.f32 %v10414, %v10629
      %v10944 = vadd.f32 %v10415, %v10629
      %v10945 = vadd.f32 %v10416, %v10629
      %v10946 = vadd.f32 %v10417, %v10629
      %v10947 = vadd.f32 %v10418, %v10629
      %v10948 = vadd.f32 %v10419, %v10629
      %v10949 = vadd.f32 %v10420, %v10629
      %v10950 = vadd.f32 %v10421, %v10629
      %v10951 = vadd.f32 %v10422, %v10629
      %v10952 = vadd.f32 %v10423, %v10629
      %v10953 = vadd.f32 %v10424, %v10629
      %v10954 = vadd.f32 %v10425, %v10629
      %v10955 = vadd.f32 %v10426, %v10629
      %v10956 = vadd.f32 %v10427, %v10629
      %v10957 = vadd.f32 %v10428, %v10629
      %v10958 = vadd.f32 %v10429, %v10629
      %v10959 = vadd.f32 %v10430, %v10629
      %v10960 = vadd.f32 %v10431, %v10629
      %v10961 = vadd.f32 %v10432, %v10629
      %v10962 = vadd.f32 %v10433, %v10629
      %v10963 = vadd.f32 %v10434, %v10629
      %v10964 = vadd.f32 %v10435, %v10629
      %v10965 = vadd.f32 %v10436, %v10629
      %v10966 = vadd.f32 %v10437, %v10629
      %v10967 = vadd.f32 %v10438, %v10629
      %v10968 = vadd.f32 %v10439, %v10629
      %v10969 = vadd.f32 %v10440, %v10629
      %v10970 = vadd.f32 %v10441, %v10629
      %v10971 = vadd.f32 %v10442, %v10629
      %v10972 = vadd.f32 %v10443, %v10629
      %v10973 = vadd.f32 %v10444, %v10629
      %v10974 = vadd.f32 %v10445, %v10629
      %v10975 = vadd.f32 %v10446, %v10629
      %v10976 = vadd.f32 %v10447, %v10629
      %v10977 = vadd.f32 %v10448, %v10629
      %v10978 = vadd.f32 %v10449, %v10629
      %v10979 = vadd.f32 %v10450, %v10629
      %v10980 = vadd.f32 %v10451, %v10629
      %v10981 = vadd.f32 %v10452, %v10629
      %v10982 = vadd.f32 %v10453, %v10629
      %v10983 = vadd.f32 %v10454, %v10629
      %v10984 = vadd.f32 %v10455, %v10629
      %v10985 = vadd.f32 %v10456, %v10629
      %v10986 = vadd.f32 %v10457, %v10629
      %v10987 = vadd.f32 %v10458, %v10629
      %v10988 = vadd.f32 %v10459, %v10629
      %v10989 = vadd.f32 %v10460, %v10629
      %v10990 = vadd.f32 %v10461, %v10629
      %v10991 = vadd.f32 %v10462, %v10629
      %v10992 = vadd.f32 %v10463, %v10629
      %v10993 = vadd.f32 %v10464, %v10629
      %v10994 = vadd.f32 %v10465, %v10629
      %v10995 = vadd.f32 %v10466, %v10629
      %v10996 = vadd.f32 %v10467, %v10629
      %v10997 = vadd.f32 %v10468, %v10629
      %v10998 = vadd.f32 %v10469, %v10629
      %v10999 = vadd.f32 %v10470, %v10629
      %v11000 = vadd.f32 %v10471, %v10629
      %v11001 = vadd.f32 %v10472, %v10629
      %v11002 = vadd.f32 %v10473, %v10629
      %v11003 = vadd.f32 %v10474, %v10629
      %v11004 = vadd.f32 %v10475, %v10629
      %v11005 = vadd.f32 %v10476, %v10629
      %v11006 = vadd.f32 %v10477, %v10629
      %v11007 = vadd.f32 %v10478, %v10629
      %v11008 = vadd.f32 %v10479, %v10629
      %v11009 = vadd.f32 %v10480, %v10629
      %v11010 = vadd.f32 %v10481, %v10629
      %v11011 = vadd.f32 %v10482, %v10629
      %v11012 = vadd.f32 %v10483, %v10629
      %v11013 = vadd.f32 %v10484, %v10629
      %v11014 = vadd.f32 %v10485, %v10629
      %v11015 = vadd.f32 %v10486, %v10629
      %v11016 = vadd.f32 %v10487, %v10629
      %v11017 = vadd.f32 %v10488, %v10629
      %v11018 = vadd.f32 %v10489, %v10629
      %v11019 = vadd.f32 %v10490, %v10629
      %v11020 = vadd.f32 %v10491, %v10629
      %v11021 = vadd.f32 %v10492, %v10629
      %v11022 = vadd.f32 %v10493, %v10629
      %v11023 = vadd.f32 %v10494, %v10629
      %v11024 = vadd.f32 %v10495, %v10629
      %v11025 = vadd.f32 %v10496, %v10629
      %v11026 = vadd.f32 %v10497, %v10629
      %v11027 = vadd.f32 %v10498, %v10629
      %v11028 = vadd.f32 %v10499, %v10629
      %v11029 = vadd.f32 %v10500, %v10629
      %v11030 = vadd.f32 %v10501, %v10629
      %v11031 = vadd.f32 %v10502, %v10629
      %v11032 = vadd.f32 %v10503, %v10629
      %v11033 = vadd.f32 %v10504, %v10629
      %v11034 = vadd.f32 %v10505, %v10629
      %v11035 = vadd.f32 %v10506, %v10629
      %v11036 = vadd.f32 %v10507, %v10629
      %v11037 = vadd.f32 %v10508, %v10629
      %v11038 = vadd.f32 %v10509, %v10629
      %v11039 = vadd.f32 %v10510, %v10629
      %v11040 = vadd.f32 %v10511, %v10629
      %v11041 = vadd.f32 %v10512, %v10629
      %v11042 = vadd.f32 %v10513, %v10629
      %v11043 = vadd.f32 %v10514, %v10629
      %v11044 = vadd.f32 %v10515, %v10629
      %v11045 = vadd.f32 %v10516, %v10629
      %v11046 = vadd.f32 %v10517, %v10629
      %v11047 = vadd.f32 %v10518, %v10629
      %v11048 = vadd.f32 %v10519, %v10629
      %v11049 = vadd.f32 %v10520, %v10629
      %v11050 = vadd.f32 %v10521, %v10629
      %v11051 = vadd.f32 %v10522, %v10629
      %v11052 = vadd.f32 %v10523, %v10629
      %v11053 = vadd.f32 %v10524, %v10629
      %v11054 = vadd.f32 %v10525, %v10629
      %v11055 = vadd.f32 %v10526, %v10629
      %v11056 = vadd.f32 %v10527, %v10629
      %v11057 = vadd.f32 %v10528, %v10629
      %v11058 = vadd.f32 %v10529, %v10629
      %v11059 = vadd.f32 %v10530, %v10629
      %v11060 = vadd.f32 %v10531, %v10629
      %v11061 = vadd.f32 %v10532, %v10629
      %v11062 = vadd.f32 %v10533, %v10629
      %v11063 = vadd.f32 %v10534, %v10629
      %v11064 = vadd.f32 %v10535, %v10629
      %v11065 = vadd.f32 %v10536, %v10629
      %v11066 = vadd.f32 %v10537, %v10629
      %v11067 = vadd.f32 %v10538, %v10629
      %v11068 = vadd.f32 %v10539, %v10629
      %v11069 = vadd.f32 %v10540, %v10629
      %v11070 = vadd.f32 %v10541, %v10629
      %v11071 = vadd.f32 %v10542, %v10629
      %v11072 = vadd.f32 %v10543, %v10629
      %v11073 = vadd.f32 %v10544, %v10629
      %v11074 = vadd.f32 %v10545, %v10629
      %v11075 = vadd.f32 %v10546, %v10629
      %v11076 = vadd.f32 %v10547, %v10629
      %v11077 = vadd.f32 %v10548, %v10629
      %v11078 = vadd.f32 %v10549, %v10629
      %v11079 = vadd.f32 %v10550, %v10629
      %v11080 = vadd.f32 %v10551, %v10629
      %v11081 = vadd.f32 %v10552, %v10629
      %v11082 = vadd.f32 %v10553, %v10629
      %v11083 = vadd.f32 %v10554, %v10629
      %v11084 = vadd.f32 %v10555, %v10629
      %v11085 = vadd.f32 %v10556, %v10629
      %v11086 = vadd.f32 %v10557, %v10629
      %v11087 = vadd.f32 %v10558, %v10629
      %v11088 = vadd.f32 %v10559, %v10629
      %v11089 = vadd.f32 %v10560, %v10629
      %v11090 = vadd.f32 %v10561, %v10629
      %v11091 = vadd.f32 %v10562, %v10629
      %v11092 = vadd.f32 %v10563, %v10629
      %v11093 = vadd.f32 %v10564, %v10629
      %v11094 = vadd.f32 %v10565, %v10629
      %v11095 = vadd.f32 %v10566, %v10629
      %v11096 = vadd.f32 %v10567, %v10629
      %v11097 = vadd.f32 %v10568, %v10629
      %v11098 = vadd.f32 %v10569, %v10629
      %v11099 = vadd.f32 %v10570, %v10629
      %v11100 = vadd.f32 %v10571, %v10629
      %v11101 = vadd.f32 %v10572, %v10629
      %v11102 = vadd.f32 %v10573, %v10629
      %v11103 = vadd.f32 %v10574, %v10629
      %v11104 = vadd.f32 %v10575, %v10629
      %v11105 = vadd.f32 %v10576, %v10629
      %v11106 = vadd.f32 %v10577, %v10629
      %v11107 = vadd.f32 %v10578, %v10629
      %v11108 = vadd.f32 %v10579, %v10629
      %v11109 = vadd.f32 %v10580, %v10629
      %v11110 = vadd.f32 %v10581, %v10629
      %v11111 = vadd.f32 %v10582, %v10629
      %v11112 = vadd.f32 %v10583, %v10629
      %v11113 = vadd.f32 %v10584, %v10629
      %v11114 = vadd.f32 %v10585, %v10629
      %v11115 = vadd.f32 %v10586, %v10629
      %v11116 = vadd.f32 %v10587, %v10629
      %v11117 = vadd.f32 %v10588, %v10629
      %v11118 = vadd.f32 %v10589, %v10629
      %v11119 = vadd.f32 %v10590, %v10629
      %v11120 = vadd.f32 %v10591, %v10629
      %v11121 = vadd.f32 %v10592, %v10629
      %v11122 = vadd.f32 %v10593, %v10629
      %v11123 = vadd.f32 %v10594, %v10629
      %v11124 = vadd.f32 %v10595, %v10629
      %v11125 = vadd.f32 %v10596, %v10629
      %v11126 = vadd.f32 %v10597, %v10629
      %v11127 = vadd.f32 %v10598, %v10629
      %v11128 = vadd.f32 %v10599, %v10629
      %v11129 = vadd.f32 %v10600, %v10629
      %v11130 = vadd.f32 %v10601, %v10629
      %v11131 = vadd.f32 %v10602, %v10629
      %v11132 = vadd.f32 %v10603, %v10629
      %v11133 = vadd.f32 %v10604, %v10629
      %v11134 = vadd.f32 %v10605, %v10629
      %v11135 = vadd.f32 %v10606, %v10629
      %v11136 = vadd.f32 %v10607, %v10629
      %v11137 = vadd.f32 %v10608, %v10629
      %v11138 = vadd.f32 %v10609, %v10629
      %v11139 = vadd.f32 %v10610, %v10629
      %v11140 = vadd.f32 %v10611, %v10629
      %v11141 = vadd.f32 %v10612, %v10629
      %v11142 = vadd.f32 %v10613, %v10629
      %v11143 = vadd.f32 %v10614, %v10629
      %v11144 = vadd.f32 %v10615, %v10629
      %v11145 = vadd.f32 %v10616, %v10629
      %v11146 = vadd.f32 %v10617, %v10629
      %v11147 = vadd.f32 %v10618, %v10629
      %v11148 = vadd.f32 %v10619, %v10629
      %v11149 = vadd.f32 %v10620, %v10629
      %v11150 = vadd.f32 %v10621, %v10629
      %v11151 = vadd.f32 %v10622, %v10629
      %v11152 = vadd.f32 %v10623, %v10629
      %v11153 = vadd.f32 %v10624, %v10629
      %v11154 = vadd.f32 %v10625, %v10629
      %v11155 = vadd.f32 %v10626, %v10629
      %v11156 = vmax.f32 %v10631, 0.0
      %v11157 = vmax.f32 %v10632, 0.0
      %v11158 = vmax.f32 %v10633, 0.0
      %v11159 = vmax.f32 %v10634, 0.0
      %v11160 = vmax.f32 %v10635, 0.0
      %v11161 = vmax.f32 %v10636, 0.0
      %v11162 = vmax.f32 %v10637, 0.0
      %v11163 = vmax.f32 %v10638, 0.0
      %v11164 = vmax.f32 %v10639, 0.0
      %v11165 = vmax.f32 %v10640, 0.0
      %v11166 = vmax.f32 %v10641, 0.0
      %v11167 = vmax.f32 %v10642, 0.0
      %v11168 = vmax.f32 %v10643, 0.0
      %v11169 = vmax.f32 %v10644, 0.0
      %v11170 = vmax.f32 %v10645, 0.0
      %v11171 = vmax.f32 %v10646, 0.0
      %v11172 = vmax.f32 %v10647, 0.0
      %v11173 = vmax.f32 %v10648, 0.0
      %v11174 = vmax.f32 %v10649, 0.0
      %v11175 = vmax.f32 %v10650, 0.0
      %v11176 = vmax.f32 %v10651, 0.0
      %v11177 = vmax.f32 %v10652, 0.0
      %v11178 = vmax.f32 %v10653, 0.0
      %v11179 = vmax.f32 %v10654, 0.0
      %v11180 = vmax.f32 %v10655, 0.0
      %v11181 = vmax.f32 %v10656, 0.0
      %v11182 = vmax.f32 %v10657, 0.0
      %v11183 = vmax.f32 %v10658, 0.0
      %v11184 = vmax.f32 %v10659, 0.0
      %v11185 = vmax.f32 %v10660, 0.0
      %v11186 = vmax.f32 %v10661, 0.0
      %v11187 = vmax.f32 %v10662, 0.0
      %v11188 = vmax.f32 %v10663, 0.0
      %v11189 = vmax.f32 %v10664, 0.0
      %v11190 = vmax.f32 %v10665, 0.0
      %v11191 = vmax.f32 %v10666, 0.0
      %v11192 = vmax.f32 %v10667, 0.0
      %v11193 = vmax.f32 %v10668, 0.0
      %v11194 = vmax.f32 %v10669, 0.0
      %v11195 = vmax.f32 %v10670, 0.0
      %v11196 = vmax.f32 %v10671, 0.0
      %v11197 = vmax.f32 %v10672, 0.0
      %v11198 = vmax.f32 %v10673, 0.0
      %v11199 = vmax.f32 %v10674, 0.0
      %v11200 = vmax.f32 %v10675, 0.0
      %v11201 = vmax.f32 %v10676, 0.0
      %v11202 = vmax.f32 %v10677, 0.0
      %v11203 = vmax.f32 %v10678, 0.0
      %v11204 = vmax.f32 %v10679, 0.0
      %v11205 = vmax.f32 %v10680, 0.0
      %v11206 = vmax.f32 %v10681, 0.0
      %v11207 = vmax.f32 %v10682, 0.0
      %v11208 = vmax.f32 %v10683, 0.0
      %v11209 = vmax.f32 %v10684, 0.0
      %v11210 = vmax.f32 %v10685, 0.0
      %v11211 = vmax.f32 %v10686, 0.0
      %v11212 = vmax.f32 %v10687, 0.0
      %v11213 = vmax.f32 %v10688, 0.0
      %v11214 = vmax.f32 %v10689, 0.0
      %v11215 = vmax.f32 %v10690, 0.0
      %v11216 = vmax.f32 %v10691, 0.0
      %v11217 = vmax.f32 %v10692, 0.0
      %v11218 = vmax.f32 %v10693, 0.0
      %v11219 = vmax.f32 %v10694, 0.0
      %v11220 = vmax.f32 %v10695, 0.0
      %v11221 = vmax.f32 %v10696, 0.0
      %v11222 = vmax.f32 %v10697, 0.0
      %v11223 = vmax.f32 %v10698, 0.0
      %v11224 = vmax.f32 %v10699, 0.0
      %v11225 = vmax.f32 %v10700, 0.0
      %v11226 = vmax.f32 %v10701, 0.0
      %v11227 = vmax.f32 %v10702, 0.0
      %v11228 = vmax.f32 %v10703, 0.0
      %v11229 = vmax.f32 %v10704, 0.0
      %v11230 = vmax.f32 %v10705, 0.0
      %v11231 = vmax.f32 %v10706, 0.0
      %v11232 = vmax.f32 %v10707, 0.0
      %v11233 = vmax.f32 %v10708, 0.0
      %v11234 = vmax.f32 %v10709, 0.0
      %v11235 = vmax.f32 %v10710, 0.0
      %v11236 = vmax.f32 %v10711, 0.0
      %v11237 = vmax.f32 %v10712, 0.0
      %v11238 = vmax.f32 %v10713, 0.0
      %v11239 = vmax.f32 %v10714, 0.0
      %v11240 = vmax.f32 %v10715, 0.0
      %v11241 = vmax.f32 %v10716, 0.0
      %v11242 = vmax.f32 %v10717, 0.0
      %v11243 = vmax.f32 %v10718, 0.0
      %v11244 = vmax.f32 %v10719, 0.0
      %v11245 = vmax.f32 %v10720, 0.0
      %v11246 = vmax.f32 %v10721, 0.0
      %v11247 = vmax.f32 %v10722, 0.0
      %v11248 = vmax.f32 %v10723, 0.0
      %v11249 = vmax.f32 %v10724, 0.0
      %v11250 = vmax.f32 %v10725, 0.0
      %v11251 = vmax.f32 %v10726, 0.0
      %v11252 = vmax.f32 %v10727, 0.0
      %v11253 = vmax.f32 %v10728, 0.0
      %v11254 = vmax.f32 %v10729, 0.0
      %v11255 = vmax.f32 %v10730, 0.0
      %v11256 = vmax.f32 %v10731, 0.0
      %v11257 = vmax.f32 %v10732, 0.0
      %v11258 = vmax.f32 %v10733, 0.0
      %v11259 = vmax.f32 %v10734, 0.0
      %v11260 = vmax.f32 %v10735, 0.0
      %v11261 = vmax.f32 %v10736, 0.0
      %v11262 = vmax.f32 %v10737, 0.0
      %v11263 = vmax.f32 %v10738, 0.0
      %v11264 = vmax.f32 %v10739, 0.0
      %v11265 = vmax.f32 %v10740, 0.0
      %v11266 = vmax.f32 %v10741, 0.0
      %v11267 = vmax.f32 %v10742, 0.0
      %v11268 = vmax.f32 %v10743, 0.0
      %v11269 = vmax.f32 %v10744, 0.0
      %v11270 = vmax.f32 %v10745, 0.0
      %v11271 = vmax.f32 %v10746, 0.0
      %v11272 = vmax.f32 %v10747, 0.0
      %v11273 = vmax.f32 %v10748, 0.0
      %v11274 = vmax.f32 %v10749, 0.0
      %v11275 = vmax.f32 %v10750, 0.0
      %v11276 = vmax.f32 %v10751, 0.0
      %v11277 = vmax.f32 %v10752, 0.0
      %v11278 = vmax.f32 %v10753, 0.0
      %v11279 = vmax.f32 %v10754, 0.0
      %v11280 = vmax.f32 %v10755, 0.0
      %v11281 = vmax.f32 %v10756, 0.0
      %v11282 = vmax.f32 %v10757, 0.0
      %v11283 = vmax.f32 %v10758, 0.0
      %v11284 = vmax.f32 %v10759, 0.0
      %v11285 = vmax.f32 %v10760, 0.0
      %v11286 = vmax.f32 %v10761, 0.0
      %v11287 = vmax.f32 %v10762, 0.0
      %v11288 = vmax.f32 %v10763, 0.0
      %v11289 = vmax.f32 %v10764, 0.0
      %v11290 = vmax.f32 %v10765, 0.0
      %v11291 = vmax.f32 %v10766, 0.0
      %v11292 = vmax.f32 %v10767, 0.0
      %v11293 = vmax.f32 %v10768, 0.0
      %v11294 = vmax.f32 %v10769, 0.0
      %v11295 = vmax.f32 %v10770, 0.0
      %v11296 = vmax.f32 %v10771, 0.0
      %v11297 = vmax.f32 %v10772, 0.0
      %v11298 = vmax.f32 %v10773, 0.0
      %v11299 = vmax.f32 %v10774, 0.0
      %v11300 = vmax.f32 %v10775, 0.0
      %v11301 = vmax.f32 %v10776, 0.0
      %v11302 = vmax.f32 %v10777, 0.0
      %v11303 = vmax.f32 %v10778, 0.0
      %v11304 = vmax.f32 %v10779, 0.0
      %v11305 = vmax.f32 %v10780, 0.0
      %v11306 = vmax.f32 %v10781, 0.0
      %v11307 = vmax.f32 %v10782, 0.0
      %v11308 = vmax.f32 %v10783, 0.0
      %v11309 = vmax.f32 %v10784, 0.0
      %v11310 = vmax.f32 %v10785, 0.0
      %v11311 = vmax.f32 %v10786, 0.0
      %v11312 = vmax.f32 %v10787, 0.0
      %v11313 = vmax.f32 %v10788, 0.0
      %v11314 = vmax.f32 %v10789, 0.0
      %v11315 = vmax.f32 %v10790, 0.0
      %v11316 = vmax.f32 %v10791, 0.0
      %v11317 = vmax.f32 %v10792, 0.0
      %v11318 = vmax.f32 %v10793, 0.0
      %v11319 = vmax.f32 %v10794, 0.0
      %v11320 = vmax.f32 %v10795, 0.0
      %v11321 = vmax.f32 %v10796, 0.0
      %v11322 = vmax.f32 %v10797, 0.0
      %v11323 = vmax.f32 %v10798, 0.0
      %v11324 = vmax.f32 %v10799, 0.0
      %v11325 = vmax.f32 %v10800, 0.0
      %v11326 = vmax.f32 %v10801, 0.0
      %v11327 = vmax.f32 %v10802, 0.0
      %v11328 = vmax.f32 %v10803, 0.0
      %v11329 = vmax.f32 %v10804, 0.0
      %v11330 = vmax.f32 %v10805, 0.0
      %v11331 = vmax.f32 %v10806, 0.0
      %v11332 = vmax.f32 %v10807, 0.0
      %v11333 = vmax.f32 %v10808, 0.0
      %v11334 = vmax.f32 %v10809, 0.0
      %v11335 = vmax.f32 %v10810, 0.0
      %v11336 = vmax.f32 %v10811, 0.0
      %v11337 = vmax.f32 %v10812, 0.0
      %v11338 = vmax.f32 %v10813, 0.0
      %v11339 = vmax.f32 %v10814, 0.0
      %v11340 = vmax.f32 %v10815, 0.0
      %v11341 = vmax.f32 %v10816, 0.0
      %v11342 = vmax.f32 %v10817, 0.0
      %v11343 = vmax.f32 %v10818, 0.0
      %v11344 = vmax.f32 %v10819, 0.0
      %v11345 = vmax.f32 %v10820, 0.0
      %v11346 = vmax.f32 %v10821, 0.0
      %v11347 = vmax.f32 %v10822, 0.0
      %v11348 = vmax.f32 %v10823, 0.0
      %v11349 = vmax.f32 %v10824, 0.0
      %v11350 = vmax.f32 %v10825, 0.0
      %v11351 = vmax.f32 %v10826, 0.0
      %v11352 = vmax.f32 %v10827, 0.0
      %v11353 = vmax.f32 %v10828, 0.0
      %v11354 = vmax.f32 %v10829, 0.0
      %v11355 = vmax.f32 %v10830, 0.0
      %v11356 = vmax.f32 %v10831, 0.0
      %v11357 = vmax.f32 %v10832, 0.0
      %v11358 = vmax.f32 %v10833, 0.0
      %v11359 = vmax.f32 %v10834, 0.0
      %v11360 = vmax.f32 %v10835, 0.0
      %v11361 = vmax.f32 %v10836, 0.0
      %v11362 = vmax.f32 %v10837, 0.0
      %v11363 = vmax.f32 %v10838, 0.0
      %v11364 = vmax.f32 %v10839, 0.0
      %v11365 = vmax.f32 %v10840, 0.0
      %v11366 = vmax.f32 %v10841, 0.0
      %v11367 = vmax.f32 %v10842, 0.0
      %v11368 = vmax.f32 %v10843, 0.0
      %v11369 = vmax.f32 %v10844, 0.0
      %v11370 = vmax.f32 %v10845, 0.0
      %v11371 = vmax.f32 %v10846, 0.0
      %v11372 = vmax.f32 %v10847, 0.0
      %v11373 = vmax.f32 %v10848, 0.0
      %v11374 = vmax.f32 %v10849, 0.0
      %v11375 = vmax.f32 %v10850, 0.0
      %v11376 = vmax.f32 %v10851, 0.0
      %v11377 = vmax.f32 %v10852, 0.0
      %v11378 = vmax.f32 %v10853, 0.0
      %v11379 = vmax.f32 %v10854, 0.0
      %v11380 = vmax.f32 %v10855, 0.0
      %v11381 = vmax.f32 %v10856, 0.0
      %v11382 = vmax.f32 %v10857, 0.0
      %v11383 = vmax.f32 %v10858, 0.0
      %v11384 = vmax.f32 %v10859, 0.0
      %v11385 = vmax.f32 %v10860, 0.0
      %v11386 = vmax.f32 %v10861, 0.0
      %v11387 = vmax.f32 %v10862, 0.0
      %v11388 = vmax.f32 %v10863, 0.0
      %v11389 = vmax.f32 %v10864, 0.0
      %v11390 = vmax.f32 %v10865, 0.0
      %v11391 = vmax.f32 %v10866, 0.0
      %v11392 = vmax.f32 %v10867, 0.0
      %v11393 = vmax.f32 %v10868, 0.0
      %v11394 = vmax.f32 %v10869, 0.0
      %v11395 = vmax.f32 %v10870, 0.0
      %v11396 = vmax.f32 %v10871, 0.0
      %v11397 = vmax.f32 %v10872, 0.0
      %v11398 = vmax.f32 %v10873, 0.0
      %v11399 = vmax.f32 %v10874, 0.0
      %v11400 = vmax.f32 %v10875, 0.0
      %v11401 = vmax.f32 %v10876, 0.0
      %v11402 = vmax.f32 %v10877, 0.0
      %v11403 = vmax.f32 %v10878, 0.0
      %v11404 = vmax.f32 %v10879, 0.0
      %v11405 = vmax.f32 %v10880, 0.0
      %v11406 = vmax.f32 %v10881, 0.0
      %v11407 = vmax.f32 %v10882, 0.0
      %v11408 = vmax.f32 %v10883, 0.0
      %v11409 = vmax.f32 %v10884, 0.0
      %v11410 = vmax.f32 %v10885, 0.0
      %v11411 = vmax.f32 %v10886, 0.0
      %v11412 = vmax.f32 %v10887, 0.0
      %v11413 = vmax.f32 %v10888, 0.0
      %v11414 = vmax.f32 %v10889, 0.0
      %v11415 = vmax.f32 %v10890, 0.0
      %v11416 = vmax.f32 %v10891, 0.0
      %v11417 = vmax.f32 %v10892, 0.0
      %v11418 = vmax.f32 %v10893, 0.0
      %v11419 = vmax.f32 %v10894, 0.0
      %v11420 = vmax.f32 %v10895, 0.0
      %v11421 = vmax.f32 %v10896, 0.0
      %v11422 = vmax.f32 %v10897, 0.0
      %v11423 = vmax.f32 %v10898, 0.0
      %v11424 = vmax.f32 %v10899, 0.0
      %v11425 = vmax.f32 %v10900, 0.0
      %v11426 = vmax.f32 %v10901, 0.0
      %v11427 = vmax.f32 %v10902, 0.0
      %v11428 = vmax.f32 %v10903, 0.0
      %v11429 = vmax.f32 %v10904, 0.0
      %v11430 = vmax.f32 %v10905, 0.0
      %v11431 = vmax.f32 %v10906, 0.0
      %v11432 = vmax.f32 %v10907, 0.0
      %v11433 = vmax.f32 %v10908, 0.0
      %v11434 = vmax.f32 %v10909, 0.0
      %v11435 = vmax.f32 %v10910, 0.0
      %v11436 = vmax.f32 %v10911, 0.0
      %v11437 = vmax.f32 %v10912, 0.0
      %v11438 = vmax.f32 %v10913, 0.0
      %v11439 = vmax.f32 %v10914, 0.0
      %v11440 = vmax.f32 %v10915, 0.0
      %v11441 = vmax.f32 %v10916, 0.0
      %v11442 = vmax.f32 %v10917, 0.0
      %v11443 = vmax.f32 %v10918, 0.0
      %v11444 = vmax.f32 %v10919, 0.0
      %v11445 = vmax.f32 %v10920, 0.0
      %v11446 = vmax.f32 %v10921, 0.0
      %v11447 = vmax.f32 %v10922, 0.0
      %v11448 = vmax.f32 %v10923, 0.0
      %v11449 = vmax.f32 %v10924, 0.0
      %v11450 = vmax.f32 %v10925, 0.0
      %v11451 = vmax.f32 %v10926, 0.0
      %v11452 = vmax.f32 %v10927, 0.0
      %v11453 = vmax.f32 %v10928, 0.0
      %v11454 = vmax.f32 %v10929, 0.0
      %v11455 = vmax.f32 %v10930, 0.0
      %v11456 = vmax.f32 %v10931, 0.0
      %v11457 = vmax.f32 %v10932, 0.0
      %v11458 = vmax.f32 %v10933, 0.0
      %v11459 = vmax.f32 %v10934, 0.0
      %v11460 = vmax.f32 %v10935, 0.0
      %v11461 = vmax.f32 %v10936, 0.0
      %v11462 = vmax.f32 %v10937, 0.0
      %v11463 = vmax.f32 %v10938, 0.0
      %v11464 = vmax.f32 %v10939, 0.0
      %v11465 = vmax.f32 %v10940, 0.0
      %v11466 = vmax.f32 %v10941, 0.0
      %v11467 = vmax.f32 %v10942, 0.0
      %v11468 = vmax.f32 %v10943, 0.0
      %v11469 = vmax.f32 %v10944, 0.0
      %v11470 = vmax.f32 %v10945, 0.0
      %v11471 = vmax.f32 %v10946, 0.0
      %v11472 = vmax.f32 %v10947, 0.0
      %v11473 = vmax.f32 %v10948, 0.0
      %v11474 = vmax.f32 %v10949, 0.0
      %v11475 = vmax.f32 %v10950, 0.0
      %v11476 = vmax.f32 %v10951, 0.0
      %v11477 = vmax.f32 %v10952, 0.0
      %v11478 = vmax.f32 %v10953, 0.0
      %v11479 = vmax.f32 %v10954, 0.0
      %v11480 = vmax.f32 %v10955, 0.0
      %v11481 = vmax.f32 %v10956, 0.0
      %v11482 = vmax.f32 %v10957, 0.0
      %v11483 = vmax.f32 %v10958, 0.0
      %v11484 = vmax.f32 %v10959, 0.0
      %v11485 = vmax.f32 %v10960, 0.0
      %v11486 = vmax.f32 %v10961, 0.0
      %v11487 = vmax.f32 %v10962, 0.0
      %v11488 = vmax.f32 %v10963, 0.0
      %v11489 = vmax.f32 %v10964, 0.0
      %v11490 = vmax.f32 %v10965, 0.0
      %v11491 = vmax.f32 %v10966, 0.0
      %v11492 = vmax.f32 %v10967, 0.0
      %v11493 = vmax.f32 %v10968, 0.0
      %v11494 = vmax.f32 %v10969, 0.0
      %v11495 = vmax.f32 %v10970, 0.0
      %v11496 = vmax.f32 %v10971, 0.0
      %v11497 = vmax.f32 %v10972, 0.0
      %v11498 = vmax.f32 %v10973, 0.0
      %v11499 = vmax.f32 %v10974, 0.0
      %v11500 = vmax.f32 %v10975, 0.0
      %v11501 = vmax.f32 %v10976, 0.0
      %v11502 = vmax.f32 %v10977, 0.0
      %v11503 = vmax.f32 %v10978, 0.0
      %v11504 = vmax.f32 %v10979, 0.0
      %v11505 = vmax.f32 %v10980, 0.0
      %v11506 = vmax.f32 %v10981, 0.0
      %v11507 = vmax.f32 %v10982, 0.0
      %v11508 = vmax.f32 %v10983, 0.0
      %v11509 = vmax.f32 %v10984, 0.0
      %v11510 = vmax.f32 %v10985, 0.0
      %v11511 = vmax.f32 %v10986, 0.0
      %v11512 = vmax.f32 %v10987, 0.0
      %v11513 = vmax.f32 %v10988, 0.0
      %v11514 = vmax.f32 %v10989, 0.0
      %v11515 = vmax.f32 %v10990, 0.0
      %v11516 = vmax.f32 %v10991, 0.0
      %v11517 = vmax.f32 %v10992, 0.0
      %v11518 = vmax.f32 %v10993, 0.0
      %v11519 = vmax.f32 %v10994, 0.0
      %v11520 = vmax.f32 %v10995, 0.0
      %v11521 = vmax.f32 %v10996, 0.0
      %v11522 = vmax.f32 %v10997, 0.0
      %v11523 = vmax.f32 %v10998, 0.0
      %v11524 = vmax.f32 %v10999, 0.0
      %v11525 = vmax.f32 %v11000, 0.0
      %v11526 = vmax.f32 %v11001, 0.0
      %v11527 = vmax.f32 %v11002, 0.0
      %v11528 = vmax.f32 %v11003, 0.0
      %v11529 = vmax.f32 %v11004, 0.0
      %v11530 = vmax.f32 %v11005, 0.0
      %v11531 = vmax.f32 %v11006, 0.0
      %v11532 = vmax.f32 %v11007, 0.0
      %v11533 = vmax.f32 %v11008, 0.0
      %v11534 = vmax.f32 %v11009, 0.0
      %v11535 = vmax.f32 %v11010, 0.0
      %v11536 = vmax.f32 %v11011, 0.0
      %v11537 = vmax.f32 %v11012, 0.0
      %v11538 = vmax.f32 %v11013, 0.0
      %v11539 = vmax.f32 %v11014, 0.0
      %v11540 = vmax.f32 %v11015, 0.0
      %v11541 = vmax.f32 %v11016, 0.0
      %v11542 = vmax.f32 %v11017, 0.0
      %v11543 = vmax.f32 %v11018, 0.0
      %v11544 = vmax.f32 %v11019, 0.0
      %v11545 = vmax.f32 %v11020, 0.0
      %v11546 = vmax.f32 %v11021, 0.0
      %v11547 = vmax.f32 %v11022, 0.0
      %v11548 = vmax.f32 %v11023, 0.0
      %v11549 = vmax.f32 %v11024, 0.0
      %v11550 = vmax.f32 %v11025, 0.0
      %v11551 = vmax.f32 %v11026, 0.0
      %v11552 = vmax.f32 %v11027, 0.0
      %v11553 = vmax.f32 %v11028, 0.0
      %v11554 = vmax.f32 %v11029, 0.0
      %v11555 = vmax.f32 %v11030, 0.0
      %v11556 = vmax.f32 %v11031, 0.0
      %v11557 = vmax.f32 %v11032, 0.0
      %v11558 = vmax.f32 %v11033, 0.0
      %v11559 = vmax.f32 %v11034, 0.0
      %v11560 = vmax.f32 %v11035, 0.0
      %v11561 = vmax.f32 %v11036, 0.0
      %v11562 = vmax.f32 %v11037, 0.0
      %v11563 = vmax.f32 %v11038, 0.0
      %v11564 = vmax.f32 %v11039, 0.0
      %v11565 = vmax.f32 %v11040, 0.0
      %v11566 = vmax.f32 %v11041, 0.0
      %v11567 = vmax.f32 %v11042, 0.0
      %v11568 = vmax.f32 %v11043, 0.0
      %v11569 = vmax.f32 %v11044, 0.0
      %v11570 = vmax.f32 %v11045, 0.0
      %v11571 = vmax.f32 %v11046, 0.0
      %v11572 = vmax.f32 %v11047, 0.0
      %v11573 = vmax.f32 %v11048, 0.0
      %v11574 = vmax.f32 %v11049, 0.0
      %v11575 = vmax.f32 %v11050, 0.0
      %v11576 = vmax.f32 %v11051, 0.0
      %v11577 = vmax.f32 %v11052, 0.0
      %v11578 = vmax.f32 %v11053, 0.0
      %v11579 = vmax.f32 %v11054, 0.0
      %v11580 = vmax.f32 %v11055, 0.0
      %v11581 = vmax.f32 %v11056, 0.0
      %v11582 = vmax.f32 %v11057, 0.0
      %v11583 = vmax.f32 %v11058, 0.0
      %v11584 = vmax.f32 %v11059, 0.0
      %v11585 = vmax.f32 %v11060, 0.0
      %v11586 = vmax.f32 %v11061, 0.0
      %v11587 = vmax.f32 %v11062, 0.0
      %v11588 = vmax.f32 %v11063, 0.0
      %v11589 = vmax.f32 %v11064, 0.0
      %v11590 = vmax.f32 %v11065, 0.0
      %v11591 = vmax.f32 %v11066, 0.0
      %v11592 = vmax.f32 %v11067, 0.0
      %v11593 = vmax.f32 %v11068, 0.0
      %v11594 = vmax.f32 %v11069, 0.0
      %v11595 = vmax.f32 %v11070, 0.0
      %v11596 = vmax.f32 %v11071, 0.0
      %v11597 = vmax.f32 %v11072, 0.0
      %v11598 = vmax.f32 %v11073, 0.0
      %v11599 = vmax.f32 %v11074, 0.0
      %v11600 = vmax.f32 %v11075, 0.0
      %v11601 = vmax.f32 %v11076, 0.0
      %v11602 = vmax.f32 %v11077, 0.0
      %v11603 = vmax.f32 %v11078, 0.0
      %v11604 = vmax.f32 %v11079, 0.0
      %v11605 = vmax.f32 %v11080, 0.0
      %v11606 = vmax.f32 %v11081, 0.0
      %v11607 = vmax.f32 %v11082, 0.0
      %v11608 = vmax.f32 %v11083, 0.0
      %v11609 = vmax.f32 %v11084, 0.0
      %v11610 = vmax.f32 %v11085, 0.0
      %v11611 = vmax.f32 %v11086, 0.0
      %v11612 = vmax.f32 %v11087, 0.0
      %v11613 = vmax.f32 %v11088, 0.0
      %v11614 = vmax.f32 %v11089, 0.0
      %v11615 = vmax.f32 %v11090, 0.0
      %v11616 = vmax.f32 %v11091, 0.0
      %v11617 = vmax.f32 %v11092, 0.0
      %v11618 = vmax.f32 %v11093, 0.0
      %v11619 = vmax.f32 %v11094, 0.0
      %v11620 = vmax.f32 %v11095, 0.0
      %v11621 = vmax.f32 %v11096, 0.0
      %v11622 = vmax.f32 %v11097, 0.0
      %v11623 = vmax.f32 %v11098, 0.0
      %v11624 = vmax.f32 %v11099, 0.0
      %v11625 = vmax.f32 %v11100, 0.0
      %v11626 = vmax.f32 %v11101, 0.0
      %v11627 = vmax.f32 %v11102, 0.0
      %v11628 = vmax.f32 %v11103, 0.0
      %v11629 = vmax.f32 %v11104, 0.0
      %v11630 = vmax.f32 %v11105, 0.0
      %v11631 = vmax.f32 %v11106, 0.0
      %v11632 = vmax.f32 %v11107, 0.0
      %v11633 = vmax.f32 %v11108, 0.0
      %v11634 = vmax.f32 %v11109, 0.0
      %v11635 = vmax.f32 %v11110, 0.0
      %v11636 = vmax.f32 %v11111, 0.0
      %v11637 = vmax.f32 %v11112, 0.0
      %v11638 = vmax.f32 %v11113, 0.0
      %v11639 = vmax.f32 %v11114, 0.0
      %v11640 = vmax.f32 %v11115, 0.0
      %v11641 = vmax.f32 %v11116, 0.0
      %v11642 = vmax.f32 %v11117, 0.0
      %v11643 = vmax.f32 %v11118, 0.0
      %v11644 = vmax.f32 %v11119, 0.0
      %v11645 = vmax.f32 %v11120, 0.0
      %v11646 = vmax.f32 %v11121, 0.0
      %v11647 = vmax.f32 %v11122, 0.0
      %v11648 = vmax.f32 %v11123, 0.0
      %v11649 = vmax.f32 %v11124, 0.0
      %v11650 = vmax.f32 %v11125, 0.0
      %v11651 = vmax.f32 %v11126, 0.0
      %v11652 = vmax.f32 %v11127, 0.0
      %v11653 = vmax.f32 %v11128, 0.0
      %v11654 = vmax.f32 %v11129, 0.0
      %v11655 = vmax.f32 %v11130, 0.0
      %v11656 = vmax.f32 %v11131, 0.0
      %v11657 = vmax.f32 %v11132, 0.0
      %v11658 = vmax.f32 %v11133, 0.0
      %v11659 = vmax.f32 %v11134, 0.0
      %v11660 = vmax.f32 %v11135, 0.0
      %v11661 = vmax.f32 %v11136, 0.0
      %v11662 = vmax.f32 %v11137, 0.0
      %v11663 = vmax.f32 %v11138, 0.0
      %v11664 = vmax.f32 %v11139, 0.0
      %v11665 = vmax.f32 %v11140, 0.0
      %v11666 = vmax.f32 %v11141, 0.0
      %v11667 = vmax.f32 %v11142, 0.0
      %v11668 = vmax.f32 %v11143, 0.0
      %v11669 = vmax.f32 %v11144, 0.0
      %v11670 = vmax.f32 %v11145, 0.0
      %v11671 = vmax.f32 %v11146, 0.0
      %v11672 = vmax.f32 %v11147, 0.0
      %v11673 = vmax.f32 %v11148, 0.0
      %v11674 = vmax.f32 %v11149, 0.0
      %v11675 = vmax.f32 %v11150, 0.0
      %v11676 = vmax.f32 %v11151, 0.0
      %v11677 = vmax.f32 %v11152, 0.0
      %v11678 = vmax.f32 %v11153, 0.0
      %v11679 = vmax.f32 %v11154, 0.0
      %v11680 = vmax.f32 %v11155, 0.0
      %v11681 = vpack.c.bf16 %v11156, %v11156
      %v11682 = vpack.c.bf16 %v11157, %v11157
      %v11683 = vpack.c.bf16 %v11158, %v11158
      %v11684 = vpack.c.bf16 %v11159, %v11159
      %v11685 = vpack.c.bf16 %v11160, %v11160
      %v11686 = vpack.c.bf16 %v11161, %v11161
      %v11687 = vpack.c.bf16 %v11162, %v11162
      %v11688 = vpack.c.bf16 %v11163, %v11163
      %v11689 = vpack.c.bf16 %v11164, %v11164
      %v11690 = vpack.c.bf16 %v11165, %v11165
      %v11691 = vpack.c.bf16 %v11166, %v11166
      %v11692 = vpack.c.bf16 %v11167, %v11167
      %v11693 = vpack.c.bf16 %v11168, %v11168
      %v11694 = vpack.c.bf16 %v11169, %v11169
      %v11695 = vpack.c.bf16 %v11170, %v11170
      %v11696 = vpack.c.bf16 %v11171, %v11171
      %v11697 = vpack.c.bf16 %v11172, %v11172
      %v11698 = vpack.c.bf16 %v11173, %v11173
      %v11699 = vpack.c.bf16 %v11174, %v11174
      %v11700 = vpack.c.bf16 %v11175, %v11175
      %v11701 = vpack.c.bf16 %v11176, %v11176
      %v11702 = vpack.c.bf16 %v11177, %v11177
      %v11703 = vpack.c.bf16 %v11178, %v11178
      %v11704 = vpack.c.bf16 %v11179, %v11179
      %v11705 = vpack.c.bf16 %v11180, %v11180
      %v11706 = vpack.c.bf16 %v11181, %v11181
      %v11707 = vpack.c.bf16 %v11182, %v11182
      %v11708 = vpack.c.bf16 %v11183, %v11183
      %v11709 = vpack.c.bf16 %v11184, %v11184
      %v11710 = vpack.c.bf16 %v11185, %v11185
      %v11711 = vpack.c.bf16 %v11186, %v11186
      %v11712 = vpack.c.bf16 %v11187, %v11187
      %v11713 = vpack.c.bf16 %v11188, %v11188
      %v11714 = vpack.c.bf16 %v11189, %v11189
      %v11715 = vpack.c.bf16 %v11190, %v11190
      %v11716 = vpack.c.bf16 %v11191, %v11191
      %v11717 = vpack.c.bf16 %v11192, %v11192
      %v11718 = vpack.c.bf16 %v11193, %v11193
      %v11719 = vpack.c.bf16 %v11194, %v11194
      %v11720 = vpack.c.bf16 %v11195, %v11195
      %v11721 = vpack.c.bf16 %v11196, %v11196
      %v11722 = vpack.c.bf16 %v11197, %v11197
      %v11723 = vpack.c.bf16 %v11198, %v11198
      %v11724 = vpack.c.bf16 %v11199, %v11199
      %v11725 = vpack.c.bf16 %v11200, %v11200
      %v11726 = vpack.c.bf16 %v11201, %v11201
      %v11727 = vpack.c.bf16 %v11202, %v11202
      %v11728 = vpack.c.bf16 %v11203, %v11203
      %v11729 = vpack.c.bf16 %v11204, %v11204
      %v11730 = vpack.c.bf16 %v11205, %v11205
      %v11731 = vpack.c.bf16 %v11206, %v11206
      %v11732 = vpack.c.bf16 %v11207, %v11207
      %v11733 = vpack.c.bf16 %v11208, %v11208
      %v11734 = vpack.c.bf16 %v11209, %v11209
      %v11735 = vpack.c.bf16 %v11210, %v11210
      %v11736 = vpack.c.bf16 %v11211, %v11211
      %v11737 = vpack.c.bf16 %v11212, %v11212
      %v11738 = vpack.c.bf16 %v11213, %v11213
      %v11739 = vpack.c.bf16 %v11214, %v11214
      %v11740 = vpack.c.bf16 %v11215, %v11215
      %v11741 = vpack.c.bf16 %v11216, %v11216
      %v11742 = vpack.c.bf16 %v11217, %v11217
      %v11743 = vpack.c.bf16 %v11218, %v11218
      %v11744 = vpack.c.bf16 %v11219, %v11219
      %v11745 = vpack.c.bf16 %v11220, %v11220
      %v11746 = vpack.c.bf16 %v11221, %v11221
      %v11747 = vpack.c.bf16 %v11222, %v11222
      %v11748 = vpack.c.bf16 %v11223, %v11223
      %v11749 = vpack.c.bf16 %v11224, %v11224
      %v11750 = vpack.c.bf16 %v11225, %v11225
      %v11751 = vpack.c.bf16 %v11226, %v11226
      %v11752 = vpack.c.bf16 %v11227, %v11227
      %v11753 = vpack.c.bf16 %v11228, %v11228
      %v11754 = vpack.c.bf16 %v11229, %v11229
      %v11755 = vpack.c.bf16 %v11230, %v11230
      %v11756 = vpack.c.bf16 %v11231, %v11231
      %v11757 = vpack.c.bf16 %v11232, %v11232
      %v11758 = vpack.c.bf16 %v11233, %v11233
      %v11759 = vpack.c.bf16 %v11234, %v11234
      %v11760 = vpack.c.bf16 %v11235, %v11235
      %v11761 = vpack.c.bf16 %v11236, %v11236
      %v11762 = vpack.c.bf16 %v11237, %v11237
      %v11763 = vpack.c.bf16 %v11238, %v11238
      %v11764 = vpack.c.bf16 %v11239, %v11239
      %v11765 = vpack.c.bf16 %v11240, %v11240
      %v11766 = vpack.c.bf16 %v11241, %v11241
      %v11767 = vpack.c.bf16 %v11242, %v11242
      %v11768 = vpack.c.bf16 %v11243, %v11243
      %v11769 = vpack.c.bf16 %v11244, %v11244
      %v11770 = vpack.c.bf16 %v11245, %v11245
      %v11771 = vpack.c.bf16 %v11246, %v11246
      %v11772 = vpack.c.bf16 %v11247, %v11247
      %v11773 = vpack.c.bf16 %v11248, %v11248
      %v11774 = vpack.c.bf16 %v11249, %v11249
      %v11775 = vpack.c.bf16 %v11250, %v11250
      %v11776 = vpack.c.bf16 %v11251, %v11251
      %v11777 = vpack.c.bf16 %v11252, %v11252
      %v11778 = vpack.c.bf16 %v11253, %v11253
      %v11779 = vpack.c.bf16 %v11254, %v11254
      %v11780 = vpack.c.bf16 %v11255, %v11255
      %v11781 = vpack.c.bf16 %v11256, %v11256
      %v11782 = vpack.c.bf16 %v11257, %v11257
      %v11783 = vpack.c.bf16 %v11258, %v11258
      %v11784 = vpack.c.bf16 %v11259, %v11259
      %v11785 = vpack.c.bf16 %v11260, %v11260
      %v11786 = vpack.c.bf16 %v11261, %v11261
      %v11787 = vpack.c.bf16 %v11262, %v11262
      %v11788 = vpack.c.bf16 %v11263, %v11263
      %v11789 = vpack.c.bf16 %v11264, %v11264
      %v11790 = vpack.c.bf16 %v11265, %v11265
      %v11791 = vpack.c.bf16 %v11266, %v11266
      %v11792 = vpack.c.bf16 %v11267, %v11267
      %v11793 = vpack.c.bf16 %v11268, %v11268
      %v11794 = vpack.c.bf16 %v11269, %v11269
      %v11795 = vpack.c.bf16 %v11270, %v11270
      %v11796 = vpack.c.bf16 %v11271, %v11271
      %v11797 = vpack.c.bf16 %v11272, %v11272
      %v11798 = vpack.c.bf16 %v11273, %v11273
      %v11799 = vpack.c.bf16 %v11274, %v11274
      %v11800 = vpack.c.bf16 %v11275, %v11275
      %v11801 = vpack.c.bf16 %v11276, %v11276
      %v11802 = vpack.c.bf16 %v11277, %v11277
      %v11803 = vpack.c.bf16 %v11278, %v11278
      %v11804 = vpack.c.bf16 %v11279, %v11279
      %v11805 = vpack.c.bf16 %v11280, %v11280
      %v11806 = vpack.c.bf16 %v11281, %v11281
      %v11807 = vpack.c.bf16 %v11282, %v11282
      %v11808 = vpack.c.bf16 %v11283, %v11283
      %v11809 = vpack.c.bf16 %v11284, %v11284
      %v11810 = vpack.c.bf16 %v11285, %v11285
      %v11811 = vpack.c.bf16 %v11286, %v11286
      %v11812 = vpack.c.bf16 %v11287, %v11287
      %v11813 = vpack.c.bf16 %v11288, %v11288
      %v11814 = vpack.c.bf16 %v11289, %v11289
      %v11815 = vpack.c.bf16 %v11290, %v11290
      %v11816 = vpack.c.bf16 %v11291, %v11291
      %v11817 = vpack.c.bf16 %v11292, %v11292
      %v11818 = vpack.c.bf16 %v11293, %v11293
      %v11819 = vpack.c.bf16 %v11294, %v11294
      %v11820 = vpack.c.bf16 %v11295, %v11295
      %v11821 = vpack.c.bf16 %v11296, %v11296
      %v11822 = vpack.c.bf16 %v11297, %v11297
      %v11823 = vpack.c.bf16 %v11298, %v11298
      %v11824 = vpack.c.bf16 %v11299, %v11299
      %v11825 = vpack.c.bf16 %v11300, %v11300
      %v11826 = vpack.c.bf16 %v11301, %v11301
      %v11827 = vpack.c.bf16 %v11302, %v11302
      %v11828 = vpack.c.bf16 %v11303, %v11303
      %v11829 = vpack.c.bf16 %v11304, %v11304
      %v11830 = vpack.c.bf16 %v11305, %v11305
      %v11831 = vpack.c.bf16 %v11306, %v11306
      %v11832 = vpack.c.bf16 %v11307, %v11307
      %v11833 = vpack.c.bf16 %v11308, %v11308
      %v11834 = vpack.c.bf16 %v11309, %v11309
      %v11835 = vpack.c.bf16 %v11310, %v11310
      %v11836 = vpack.c.bf16 %v11311, %v11311
      %v11837 = vpack.c.bf16 %v11312, %v11312
      %v11838 = vpack.c.bf16 %v11313, %v11313
      %v11839 = vpack.c.bf16 %v11314, %v11314
      %v11840 = vpack.c.bf16 %v11315, %v11315
      %v11841 = vpack.c.bf16 %v11316, %v11316
      %v11842 = vpack.c.bf16 %v11317, %v11317
      %v11843 = vpack.c.bf16 %v11318, %v11318
      %v11844 = vpack.c.bf16 %v11319, %v11319
      %v11845 = vpack.c.bf16 %v11320, %v11320
      %v11846 = vpack.c.bf16 %v11321, %v11321
      %v11847 = vpack.c.bf16 %v11322, %v11322
      %v11848 = vpack.c.bf16 %v11323, %v11323
      %v11849 = vpack.c.bf16 %v11324, %v11324
      %v11850 = vpack.c.bf16 %v11325, %v11325
      %v11851 = vpack.c.bf16 %v11326, %v11326
      %v11852 = vpack.c.bf16 %v11327, %v11327
      %v11853 = vpack.c.bf16 %v11328, %v11328
      %v11854 = vpack.c.bf16 %v11329, %v11329
      %v11855 = vpack.c.bf16 %v11330, %v11330
      %v11856 = vpack.c.bf16 %v11331, %v11331
      %v11857 = vpack.c.bf16 %v11332, %v11332
      %v11858 = vpack.c.bf16 %v11333, %v11333
      %v11859 = vpack.c.bf16 %v11334, %v11334
      %v11860 = vpack.c.bf16 %v11335, %v11335
      %v11861 = vpack.c.bf16 %v11336, %v11336
      %v11862 = vpack.c.bf16 %v11337, %v11337
      %v11863 = vpack.c.bf16 %v11338, %v11338
      %v11864 = vpack.c.bf16 %v11339, %v11339
      %v11865 = vpack.c.bf16 %v11340, %v11340
      %v11866 = vpack.c.bf16 %v11341, %v11341
      %v11867 = vpack.c.bf16 %v11342, %v11342
      %v11868 = vpack.c.bf16 %v11343, %v11343
      %v11869 = vpack.c.bf16 %v11344, %v11344
      %v11870 = vpack.c.bf16 %v11345, %v11345
      %v11871 = vpack.c.bf16 %v11346, %v11346
      %v11872 = vpack.c.bf16 %v11347, %v11347
      %v11873 = vpack.c.bf16 %v11348, %v11348
      %v11874 = vpack.c.bf16 %v11349, %v11349
      %v11875 = vpack.c.bf16 %v11350, %v11350
      %v11876 = vpack.c.bf16 %v11351, %v11351
      %v11877 = vpack.c.bf16 %v11352, %v11352
      %v11878 = vpack.c.bf16 %v11353, %v11353
      %v11879 = vpack.c.bf16 %v11354, %v11354
      %v11880 = vpack.c.bf16 %v11355, %v11355
      %v11881 = vpack.c.bf16 %v11356, %v11356
      %v11882 = vpack.c.bf16 %v11357, %v11357
      %v11883 = vpack.c.bf16 %v11358, %v11358
      %v11884 = vpack.c.bf16 %v11359, %v11359
      %v11885 = vpack.c.bf16 %v11360, %v11360
      %v11886 = vpack.c.bf16 %v11361, %v11361
      %v11887 = vpack.c.bf16 %v11362, %v11362
      %v11888 = vpack.c.bf16 %v11363, %v11363
      %v11889 = vpack.c.bf16 %v11364, %v11364
      %v11890 = vpack.c.bf16 %v11365, %v11365
      %v11891 = vpack.c.bf16 %v11366, %v11366
      %v11892 = vpack.c.bf16 %v11367, %v11367
      %v11893 = vpack.c.bf16 %v11368, %v11368
      %v11894 = vpack.c.bf16 %v11369, %v11369
      %v11895 = vpack.c.bf16 %v11370, %v11370
      %v11896 = vpack.c.bf16 %v11371, %v11371
      %v11897 = vpack.c.bf16 %v11372, %v11372
      %v11898 = vpack.c.bf16 %v11373, %v11373
      %v11899 = vpack.c.bf16 %v11374, %v11374
      %v11900 = vpack.c.bf16 %v11375, %v11375
      %v11901 = vpack.c.bf16 %v11376, %v11376
      %v11902 = vpack.c.bf16 %v11377, %v11377
      %v11903 = vpack.c.bf16 %v11378, %v11378
      %v11904 = vpack.c.bf16 %v11379, %v11379
      %v11905 = vpack.c.bf16 %v11380, %v11380
      %v11906 = vpack.c.bf16 %v11381, %v11381
      %v11907 = vpack.c.bf16 %v11382, %v11382
      %v11908 = vpack.c.bf16 %v11383, %v11383
      %v11909 = vpack.c.bf16 %v11384, %v11384
      %v11910 = vpack.c.bf16 %v11385, %v11385
      %v11911 = vpack.c.bf16 %v11386, %v11386
      %v11912 = vpack.c.bf16 %v11387, %v11387
      %v11913 = vpack.c.bf16 %v11388, %v11388
      %v11914 = vpack.c.bf16 %v11389, %v11389
      %v11915 = vpack.c.bf16 %v11390, %v11390
      %v11916 = vpack.c.bf16 %v11391, %v11391
      %v11917 = vpack.c.bf16 %v11392, %v11392
      %v11918 = vpack.c.bf16 %v11393, %v11393
      %v11919 = vpack.c.bf16 %v11394, %v11394
      %v11920 = vpack.c.bf16 %v11395, %v11395
      %v11921 = vpack.c.bf16 %v11396, %v11396
      %v11922 = vpack.c.bf16 %v11397, %v11397
      %v11923 = vpack.c.bf16 %v11398, %v11398
      %v11924 = vpack.c.bf16 %v11399, %v11399
      %v11925 = vpack.c.bf16 %v11400, %v11400
      %v11926 = vpack.c.bf16 %v11401, %v11401
      %v11927 = vpack.c.bf16 %v11402, %v11402
      %v11928 = vpack.c.bf16 %v11403, %v11403
      %v11929 = vpack.c.bf16 %v11404, %v11404
      %v11930 = vpack.c.bf16 %v11405, %v11405
      %v11931 = vpack.c.bf16 %v11406, %v11406
      %v11932 = vpack.c.bf16 %v11407, %v11407
      %v11933 = vpack.c.bf16 %v11408, %v11408
      %v11934 = vpack.c.bf16 %v11409, %v11409
      %v11935 = vpack.c.bf16 %v11410, %v11410
      %v11936 = vpack.c.bf16 %v11411, %v11411
      %v11937 = vpack.c.bf16 %v11412, %v11412
      %v11938 = vpack.c.bf16 %v11413, %v11413
      %v11939 = vpack.c.bf16 %v11414, %v11414
      %v11940 = vpack.c.bf16 %v11415, %v11415
      %v11941 = vpack.c.bf16 %v11416, %v11416
      %v11942 = vpack.c.bf16 %v11417, %v11417
      %v11943 = vpack.c.bf16 %v11418, %v11418
      %v11944 = vpack.c.bf16 %v11419, %v11419
      %v11945 = vpack.c.bf16 %v11420, %v11420
      %v11946 = vpack.c.bf16 %v11421, %v11421
      %v11947 = vpack.c.bf16 %v11422, %v11422
      %v11948 = vpack.c.bf16 %v11423, %v11423
      %v11949 = vpack.c.bf16 %v11424, %v11424
      %v11950 = vpack.c.bf16 %v11425, %v11425
      %v11951 = vpack.c.bf16 %v11426, %v11426
      %v11952 = vpack.c.bf16 %v11427, %v11427
      %v11953 = vpack.c.bf16 %v11428, %v11428
      %v11954 = vpack.c.bf16 %v11429, %v11429
      %v11955 = vpack.c.bf16 %v11430, %v11430
      %v11956 = vpack.c.bf16 %v11431, %v11431
      %v11957 = vpack.c.bf16 %v11432, %v11432
      %v11958 = vpack.c.bf16 %v11433, %v11433
      %v11959 = vpack.c.bf16 %v11434, %v11434
      %v11960 = vpack.c.bf16 %v11435, %v11435
      %v11961 = vpack.c.bf16 %v11436, %v11436
      %v11962 = vpack.c.bf16 %v11437, %v11437
      %v11963 = vpack.c.bf16 %v11438, %v11438
      %v11964 = vpack.c.bf16 %v11439, %v11439
      %v11965 = vpack.c.bf16 %v11440, %v11440
      %v11966 = vpack.c.bf16 %v11441, %v11441
      %v11967 = vpack.c.bf16 %v11442, %v11442
      %v11968 = vpack.c.bf16 %v11443, %v11443
      %v11969 = vpack.c.bf16 %v11444, %v11444
      %v11970 = vpack.c.bf16 %v11445, %v11445
      %v11971 = vpack.c.bf16 %v11446, %v11446
      %v11972 = vpack.c.bf16 %v11447, %v11447
      %v11973 = vpack.c.bf16 %v11448, %v11448
      %v11974 = vpack.c.bf16 %v11449, %v11449
      %v11975 = vpack.c.bf16 %v11450, %v11450
      %v11976 = vpack.c.bf16 %v11451, %v11451
      %v11977 = vpack.c.bf16 %v11452, %v11452
      %v11978 = vpack.c.bf16 %v11453, %v11453
      %v11979 = vpack.c.bf16 %v11454, %v11454
      %v11980 = vpack.c.bf16 %v11455, %v11455
      %v11981 = vpack.c.bf16 %v11456, %v11456
      %v11982 = vpack.c.bf16 %v11457, %v11457
      %v11983 = vpack.c.bf16 %v11458, %v11458
      %v11984 = vpack.c.bf16 %v11459, %v11459
      %v11985 = vpack.c.bf16 %v11460, %v11460
      %v11986 = vpack.c.bf16 %v11461, %v11461
      %v11987 = vpack.c.bf16 %v11462, %v11462
      %v11988 = vpack.c.bf16 %v11463, %v11463
      %v11989 = vpack.c.bf16 %v11464, %v11464
      %v11990 = vpack.c.bf16 %v11465, %v11465
      %v11991 = vpack.c.bf16 %v11466, %v11466
      %v11992 = vpack.c.bf16 %v11467, %v11467
      %v11993 = vpack.c.bf16 %v11468, %v11468
      %v11994 = vpack.c.bf16 %v11469, %v11469
      %v11995 = vpack.c.bf16 %v11470, %v11470
      %v11996 = vpack.c.bf16 %v11471, %v11471
      %v11997 = vpack.c.bf16 %v11472, %v11472
      %v11998 = vpack.c.bf16 %v11473, %v11473
      %v11999 = vpack.c.bf16 %v11474, %v11474
      %v12000 = vpack.c.bf16 %v11475, %v11475
      %v12001 = vpack.c.bf16 %v11476, %v11476
      %v12002 = vpack.c.bf16 %v11477, %v11477
      %v12003 = vpack.c.bf16 %v11478, %v11478
      %v12004 = vpack.c.bf16 %v11479, %v11479
      %v12005 = vpack.c.bf16 %v11480, %v11480
      %v12006 = vpack.c.bf16 %v11481, %v11481
      %v12007 = vpack.c.bf16 %v11482, %v11482
      %v12008 = vpack.c.bf16 %v11483, %v11483
      %v12009 = vpack.c.bf16 %v11484, %v11484
      %v12010 = vpack.c.bf16 %v11485, %v11485
      %v12011 = vpack.c.bf16 %v11486, %v11486
      %v12012 = vpack.c.bf16 %v11487, %v11487
      %v12013 = vpack.c.bf16 %v11488, %v11488
      %v12014 = vpack.c.bf16 %v11489, %v11489
      %v12015 = vpack.c.bf16 %v11490, %v11490
      %v12016 = vpack.c.bf16 %v11491, %v11491
      %v12017 = vpack.c.bf16 %v11492, %v11492
      %v12018 = vpack.c.bf16 %v11493, %v11493
      %v12019 = vpack.c.bf16 %v11494, %v11494
      %v12020 = vpack.c.bf16 %v11495, %v11495
      %v12021 = vpack.c.bf16 %v11496, %v11496
      %v12022 = vpack.c.bf16 %v11497, %v11497
      %v12023 = vpack.c.bf16 %v11498, %v11498
      %v12024 = vpack.c.bf16 %v11499, %v11499
      %v12025 = vpack.c.bf16 %v11500, %v11500
      %v12026 = vpack.c.bf16 %v11501, %v11501
      %v12027 = vpack.c.bf16 %v11502, %v11502
      %v12028 = vpack.c.bf16 %v11503, %v11503
      %v12029 = vpack.c.bf16 %v11504, %v11504
      %v12030 = vpack.c.bf16 %v11505, %v11505
      %v12031 = vpack.c.bf16 %v11506, %v11506
      %v12032 = vpack.c.bf16 %v11507, %v11507
      %v12033 = vpack.c.bf16 %v11508, %v11508
      %v12034 = vpack.c.bf16 %v11509, %v11509
      %v12035 = vpack.c.bf16 %v11510, %v11510
      %v12036 = vpack.c.bf16 %v11511, %v11511
      %v12037 = vpack.c.bf16 %v11512, %v11512
      %v12038 = vpack.c.bf16 %v11513, %v11513
      %v12039 = vpack.c.bf16 %v11514, %v11514
      %v12040 = vpack.c.bf16 %v11515, %v11515
      %v12041 = vpack.c.bf16 %v11516, %v11516
      %v12042 = vpack.c.bf16 %v11517, %v11517
      %v12043 = vpack.c.bf16 %v11518, %v11518
      %v12044 = vpack.c.bf16 %v11519, %v11519
      %v12045 = vpack.c.bf16 %v11520, %v11520
      %v12046 = vpack.c.bf16 %v11521, %v11521
      %v12047 = vpack.c.bf16 %v11522, %v11522
      %v12048 = vpack.c.bf16 %v11523, %v11523
      %v12049 = vpack.c.bf16 %v11524, %v11524
      %v12050 = vpack.c.bf16 %v11525, %v11525
      %v12051 = vpack.c.bf16 %v11526, %v11526
      %v12052 = vpack.c.bf16 %v11527, %v11527
      %v12053 = vpack.c.bf16 %v11528, %v11528
      %v12054 = vpack.c.bf16 %v11529, %v11529
      %v12055 = vpack.c.bf16 %v11530, %v11530
      %v12056 = vpack.c.bf16 %v11531, %v11531
      %v12057 = vpack.c.bf16 %v11532, %v11532
      %v12058 = vpack.c.bf16 %v11533, %v11533
      %v12059 = vpack.c.bf16 %v11534, %v11534
      %v12060 = vpack.c.bf16 %v11535, %v11535
      %v12061 = vpack.c.bf16 %v11536, %v11536
      %v12062 = vpack.c.bf16 %v11537, %v11537
      %v12063 = vpack.c.bf16 %v11538, %v11538
      %v12064 = vpack.c.bf16 %v11539, %v11539
      %v12065 = vpack.c.bf16 %v11540, %v11540
      %v12066 = vpack.c.bf16 %v11541, %v11541
      %v12067 = vpack.c.bf16 %v11542, %v11542
      %v12068 = vpack.c.bf16 %v11543, %v11543
      %v12069 = vpack.c.bf16 %v11544, %v11544
      %v12070 = vpack.c.bf16 %v11545, %v11545
      %v12071 = vpack.c.bf16 %v11546, %v11546
      %v12072 = vpack.c.bf16 %v11547, %v11547
      %v12073 = vpack.c.bf16 %v11548, %v11548
      %v12074 = vpack.c.bf16 %v11549, %v11549
      %v12075 = vpack.c.bf16 %v11550, %v11550
      %v12076 = vpack.c.bf16 %v11551, %v11551
      %v12077 = vpack.c.bf16 %v11552, %v11552
      %v12078 = vpack.c.bf16 %v11553, %v11553
      %v12079 = vpack.c.bf16 %v11554, %v11554
      %v12080 = vpack.c.bf16 %v11555, %v11555
      %v12081 = vpack.c.bf16 %v11556, %v11556
      %v12082 = vpack.c.bf16 %v11557, %v11557
      %v12083 = vpack.c.bf16 %v11558, %v11558
      %v12084 = vpack.c.bf16 %v11559, %v11559
      %v12085 = vpack.c.bf16 %v11560, %v11560
      %v12086 = vpack.c.bf16 %v11561, %v11561
      %v12087 = vpack.c.bf16 %v11562, %v11562
      %v12088 = vpack.c.bf16 %v11563, %v11563
      %v12089 = vpack.c.bf16 %v11564, %v11564
      %v12090 = vpack.c.bf16 %v11565, %v11565
      %v12091 = vpack.c.bf16 %v11566, %v11566
      %v12092 = vpack.c.bf16 %v11567, %v11567
      %v12093 = vpack.c.bf16 %v11568, %v11568
      %v12094 = vpack.c.bf16 %v11569, %v11569
      %v12095 = vpack.c.bf16 %v11570, %v11570
      %v12096 = vpack.c.bf16 %v11571, %v11571
      %v12097 = vpack.c.bf16 %v11572, %v11572
      %v12098 = vpack.c.bf16 %v11573, %v11573
      %v12099 = vpack.c.bf16 %v11574, %v11574
      %v12100 = vpack.c.bf16 %v11575, %v11575
      %v12101 = vpack.c.bf16 %v11576, %v11576
      %v12102 = vpack.c.bf16 %v11577, %v11577
      %v12103 = vpack.c.bf16 %v11578, %v11578
      %v12104 = vpack.c.bf16 %v11579, %v11579
      %v12105 = vpack.c.bf16 %v11580, %v11580
      %v12106 = vpack.c.bf16 %v11581, %v11581
      %v12107 = vpack.c.bf16 %v11582, %v11582
      %v12108 = vpack.c.bf16 %v11583, %v11583
      %v12109 = vpack.c.bf16 %v11584, %v11584
      %v12110 = vpack.c.bf16 %v11585, %v11585
      %v12111 = vpack.c.bf16 %v11586, %v11586
      %v12112 = vpack.c.bf16 %v11587, %v11587
      %v12113 = vpack.c.bf16 %v11588, %v11588
      %v12114 = vpack.c.bf16 %v11589, %v11589
      %v12115 = vpack.c.bf16 %v11590, %v11590
      %v12116 = vpack.c.bf16 %v11591, %v11591
      %v12117 = vpack.c.bf16 %v11592, %v11592
      %v12118 = vpack.c.bf16 %v11593, %v11593
      %v12119 = vpack.c.bf16 %v11594, %v11594
      %v12120 = vpack.c.bf16 %v11595, %v11595
      %v12121 = vpack.c.bf16 %v11596, %v11596
      %v12122 = vpack.c.bf16 %v11597, %v11597
      %v12123 = vpack.c.bf16 %v11598, %v11598
      %v12124 = vpack.c.bf16 %v11599, %v11599
      %v12125 = vpack.c.bf16 %v11600, %v11600
      %v12126 = vpack.c.bf16 %v11601, %v11601
      %v12127 = vpack.c.bf16 %v11602, %v11602
      %v12128 = vpack.c.bf16 %v11603, %v11603
      %v12129 = vpack.c.bf16 %v11604, %v11604
      %v12130 = vpack.c.bf16 %v11605, %v11605
      %v12131 = vpack.c.bf16 %v11606, %v11606
      %v12132 = vpack.c.bf16 %v11607, %v11607
      %v12133 = vpack.c.bf16 %v11608, %v11608
      %v12134 = vpack.c.bf16 %v11609, %v11609
      %v12135 = vpack.c.bf16 %v11610, %v11610
      %v12136 = vpack.c.bf16 %v11611, %v11611
      %v12137 = vpack.c.bf16 %v11612, %v11612
      %v12138 = vpack.c.bf16 %v11613, %v11613
      %v12139 = vpack.c.bf16 %v11614, %v11614
      %v12140 = vpack.c.bf16 %v11615, %v11615
      %v12141 = vpack.c.bf16 %v11616, %v11616
      %v12142 = vpack.c.bf16 %v11617, %v11617
      %v12143 = vpack.c.bf16 %v11618, %v11618
      %v12144 = vpack.c.bf16 %v11619, %v11619
      %v12145 = vpack.c.bf16 %v11620, %v11620
      %v12146 = vpack.c.bf16 %v11621, %v11621
      %v12147 = vpack.c.bf16 %v11622, %v11622
      %v12148 = vpack.c.bf16 %v11623, %v11623
      %v12149 = vpack.c.bf16 %v11624, %v11624
      %v12150 = vpack.c.bf16 %v11625, %v11625
      %v12151 = vpack.c.bf16 %v11626, %v11626
      %v12152 = vpack.c.bf16 %v11627, %v11627
      %v12153 = vpack.c.bf16 %v11628, %v11628
      %v12154 = vpack.c.bf16 %v11629, %v11629
      %v12155 = vpack.c.bf16 %v11630, %v11630
      %v12156 = vpack.c.bf16 %v11631, %v11631
      %v12157 = vpack.c.bf16 %v11632, %v11632
      %v12158 = vpack.c.bf16 %v11633, %v11633
      %v12159 = vpack.c.bf16 %v11634, %v11634
      %v12160 = vpack.c.bf16 %v11635, %v11635
      %v12161 = vpack.c.bf16 %v11636, %v11636
      %v12162 = vpack.c.bf16 %v11637, %v11637
      %v12163 = vpack.c.bf16 %v11638, %v11638
      %v12164 = vpack.c.bf16 %v11639, %v11639
      %v12165 = vpack.c.bf16 %v11640, %v11640
      %v12166 = vpack.c.bf16 %v11641, %v11641
      %v12167 = vpack.c.bf16 %v11642, %v11642
      %v12168 = vpack.c.bf16 %v11643, %v11643
      %v12169 = vpack.c.bf16 %v11644, %v11644
      %v12170 = vpack.c.bf16 %v11645, %v11645
      %v12171 = vpack.c.bf16 %v11646, %v11646
      %v12172 = vpack.c.bf16 %v11647, %v11647
      %v12173 = vpack.c.bf16 %v11648, %v11648
      %v12174 = vpack.c.bf16 %v11649, %v11649
      %v12175 = vpack.c.bf16 %v11650, %v11650
      %v12176 = vpack.c.bf16 %v11651, %v11651
      %v12177 = vpack.c.bf16 %v11652, %v11652
      %v12178 = vpack.c.bf16 %v11653, %v11653
      %v12179 = vpack.c.bf16 %v11654, %v11654
      %v12180 = vpack.c.bf16 %v11655, %v11655
      %v12181 = vpack.c.bf16 %v11656, %v11656
      %v12182 = vpack.c.bf16 %v11657, %v11657
      %v12183 = vpack.c.bf16 %v11658, %v11658
      %v12184 = vpack.c.bf16 %v11659, %v11659
      %v12185 = vpack.c.bf16 %v11660, %v11660
      %v12186 = vpack.c.bf16 %v11661, %v11661
      %v12187 = vpack.c.bf16 %v11662, %v11662
      %v12188 = vpack.c.bf16 %v11663, %v11663
      %v12189 = vpack.c.bf16 %v11664, %v11664
      %v12190 = vpack.c.bf16 %v11665, %v11665
      %v12191 = vpack.c.bf16 %v11666, %v11666
      %v12192 = vpack.c.bf16 %v11667, %v11667
      %v12193 = vpack.c.bf16 %v11668, %v11668
      %v12194 = vpack.c.bf16 %v11669, %v11669
      %v12195 = vpack.c.bf16 %v11670, %v11670
      %v12196 = vpack.c.bf16 %v11671, %v11671
      %v12197 = vpack.c.bf16 %v11672, %v11672
      %v12198 = vpack.c.bf16 %v11673, %v11673
      %v12199 = vpack.c.bf16 %v11674, %v11674
      %v12200 = vpack.c.bf16 %v11675, %v11675
      %v12201 = vpack.c.bf16 %v11676, %v11676
      %v12202 = vpack.c.bf16 %v11677, %v11677
      %v12203 = vpack.c.bf16 %v11678, %v11678
      %v12204 = vpack.c.bf16 %v11679, %v11679
      %v12205 = vpack.c.bf16 %v11680, %v11680
      %vm12206 = vcmask 519168
      %12207 = vst.msk [vmem:[%s202] sm:$0xf] %vm12206, %v11681
      %12208 = vst.msk [vmem:[%s202 + $0x4] sm:$0xf] %vm12206, %v11682
      %12209 = vst.msk [vmem:[%s202 + $0x8] sm:$0xf] %vm12206, %v11683
      %12210 = vst.msk [vmem:[%s202 + $0xc] sm:$0xf] %vm12206, %v11684
      %12211 = vst.msk [vmem:[%s202 + $0x10] sm:$0xf] %vm12206, %v11685
      %12212 = vst.msk [vmem:[%s202 + $0x14] sm:$0xf] %vm12206, %v11686
      %12213 = vst.msk [vmem:[%s202 + $0x18] sm:$0xf] %vm12206, %v11687
      %12214 = vst.msk [vmem:[%s202 + $0x1c] sm:$0xf] %vm12206, %v11688
      %12215 = vst.msk [vmem:[%s202 + $0x20] sm:$0xf] %vm12206, %v11689
      %12216 = vst.msk [vmem:[%s202 + $0x24] sm:$0xf] %vm12206, %v11690
      %12217 = vst.msk [vmem:[%s202 + $0x28] sm:$0xf] %vm12206, %v11691
      %12218 = vst.msk [vmem:[%s202 + $0x2c] sm:$0xf] %vm12206, %v11692
      %12219 = vst.msk [vmem:[%s202 + $0x30] sm:$0xf] %vm12206, %v11693
      %12220 = vst.msk [vmem:[%s202 + $0x34] sm:$0xf] %vm12206, %v11694
      %12221 = vst.msk [vmem:[%s202 + $0x38] sm:$0xf] %vm12206, %v11695
      %12222 = vst.msk [vmem:[%s202 + $0x3c] sm:$0xf] %vm12206, %v11696
      %12223 = vst.msk [vmem:[%s202 + $0x40] sm:$0xf] %vm12206, %v11697
      %12224 = vst.msk [vmem:[%s202 + $0x44] sm:$0xf] %vm12206, %v11698
      %12225 = vst.msk [vmem:[%s202 + $0x48] sm:$0xf] %vm12206, %v11699
      %12226 = vst.msk [vmem:[%s202 + $0x4c] sm:$0xf] %vm12206, %v11700
      %12227 = vst.msk [vmem:[%s202 + $0x50] sm:$0xf] %vm12206, %v11701
      %12228 = vst.msk [vmem:[%s202 + $0x54] sm:$0xf] %vm12206, %v11702
      %12229 = vst.msk [vmem:[%s202 + $0x58] sm:$0xf] %vm12206, %v11703
      %12230 = vst.msk [vmem:[%s202 + $0x5c] sm:$0xf] %vm12206, %v11704
      %12231 = vst.msk [vmem:[%s202 + $0x60] sm:$0xf] %vm12206, %v11705
      %12232 = vst.msk [vmem:[%s202 + $0x64] sm:$0xf] %vm12206, %v11706
      %12233 = vst.msk [vmem:[%s202 + $0x68] sm:$0xf] %vm12206, %v11707
      %12234 = vst.msk [vmem:[%s202 + $0x6c] sm:$0xf] %vm12206, %v11708
      %12235 = vst.msk [vmem:[%s202 + $0x70] sm:$0xf] %vm12206, %v11709
      %12236 = vst.msk [vmem:[%s202 + $0x74] sm:$0xf] %vm12206, %v11710
      %12237 = vst.msk [vmem:[%s202 + $0x78] sm:$0xf] %vm12206, %v11711
      %12238 = vst.msk [vmem:[%s202 + $0x7c] sm:$0xf] %vm12206, %v11712
      %12239 = vst.msk [vmem:[%s202 + $0x80] sm:$0xf] %vm12206, %v11713
      %12240 = vst.msk [vmem:[%s202 + $0x84] sm:$0xf] %vm12206, %v11714
      %12241 = vst.msk [vmem:[%s202 + $0x88] sm:$0xf] %vm12206, %v11715
      %12242 = vst.msk [vmem:[%s202 + $0x8c] sm:$0xf] %vm12206, %v11716
      %12243 = vst.msk [vmem:[%s202 + $0x90] sm:$0xf] %vm12206, %v11717
      %12244 = vst.msk [vmem:[%s202 + $0x94] sm:$0xf] %vm12206, %v11718
      %12245 = vst.msk [vmem:[%s202 + $0x98] sm:$0xf] %vm12206, %v11719
      %12246 = vst.msk [vmem:[%s202 + $0x9c] sm:$0xf] %vm12206, %v11720
      %12247 = vst.msk [vmem:[%s202 + $0xa0] sm:$0xf] %vm12206, %v11721
      %12248 = vst.msk [vmem:[%s202 + $0xa4] sm:$0xf] %vm12206, %v11722
      %12249 = vst.msk [vmem:[%s202 + $0xa8] sm:$0xf] %vm12206, %v11723
      %12250 = vst.msk [vmem:[%s202 + $0xac] sm:$0xf] %vm12206, %v11724
      %12251 = vst.msk [vmem:[%s202 + $0xb0] sm:$0xf] %vm12206, %v11725
      %12252 = vst.msk [vmem:[%s202 + $0xb4] sm:$0xf] %vm12206, %v11726
      %12253 = vst.msk [vmem:[%s202 + $0xb8] sm:$0xf] %vm12206, %v11727
      %12254 = vst.msk [vmem:[%s202 + $0xbc] sm:$0xf] %vm12206, %v11728
      %12255 = vst.msk [vmem:[%s202 + $0xc0] sm:$0xf] %vm12206, %v11729
      %12256 = vst.msk [vmem:[%s202 + $0xc4] sm:$0xf] %vm12206, %v11730
      %12257 = vst.msk [vmem:[%s202 + $0xc8] sm:$0xf] %vm12206, %v11731
      %12258 = vst.msk [vmem:[%s202 + $0xcc] sm:$0xf] %vm12206, %v11732
      %12259 = vst.msk [vmem:[%s202 + $0xd0] sm:$0xf] %vm12206, %v11733
      %12260 = vst.msk [vmem:[%s202 + $0xd4] sm:$0xf] %vm12206, %v11734
      %12261 = vst.msk [vmem:[%s202 + $0xd8] sm:$0xf] %vm12206, %v11735
      %12262 = vst.msk [vmem:[%s202 + $0xdc] sm:$0xf] %vm12206, %v11736
      %12263 = vst.msk [vmem:[%s202 + $0xe0] sm:$0xf] %vm12206, %v11737
      %12264 = vst.msk [vmem:[%s202 + $0xe4] sm:$0xf] %vm12206, %v11738
      %12265 = vst.msk [vmem:[%s202 + $0xe8] sm:$0xf] %vm12206, %v11739
      %12266 = vst.msk [vmem:[%s202 + $0xec] sm:$0xf] %vm12206, %v11740
      %12267 = vst.msk [vmem:[%s202 + $0xf0] sm:$0xf] %vm12206, %v11741
      %12268 = vst.msk [vmem:[%s202 + $0xf4] sm:$0xf] %vm12206, %v11742
      %12269 = vst.msk [vmem:[%s202 + $0xf8] sm:$0xf] %vm12206, %v11743
      %12270 = vst.msk [vmem:[%s202 + $0xfc] sm:$0xf] %vm12206, %v11744
      %12271 = vst.msk [vmem:[%s202 + $0x100] sm:$0xf] %vm12206, %v11745
      %12272 = vst.msk [vmem:[%s202 + $0x104] sm:$0xf] %vm12206, %v11746
      %12273 = vst.msk [vmem:[%s202 + $0x108] sm:$0xf] %vm12206, %v11747
      %12274 = vst.msk [vmem:[%s202 + $0x10c] sm:$0xf] %vm12206, %v11748
      %12275 = vst.msk [vmem:[%s202 + $0x110] sm:$0xf] %vm12206, %v11749
      %12276 = vst.msk [vmem:[%s202 + $0x114] sm:$0xf] %vm12206, %v11750
      %12277 = vst.msk [vmem:[%s202 + $0x118] sm:$0xf] %vm12206, %v11751
      %12278 = vst.msk [vmem:[%s202 + $0x11c] sm:$0xf] %vm12206, %v11752
      %12279 = vst.msk [vmem:[%s202 + $0x120] sm:$0xf] %vm12206, %v11753
      %12280 = vst.msk [vmem:[%s202 + $0x124] sm:$0xf] %vm12206, %v11754
      %12281 = vst.msk [vmem:[%s202 + $0x128] sm:$0xf] %vm12206, %v11755
      %12282 = vst.msk [vmem:[%s202 + $0x12c] sm:$0xf] %vm12206, %v11756
      %12283 = vst.msk [vmem:[%s202 + $0x130] sm:$0xf] %vm12206, %v11757
      %12284 = vst.msk [vmem:[%s202 + $0x134] sm:$0xf] %vm12206, %v11758
      %12285 = vst.msk [vmem:[%s202 + $0x138] sm:$0xf] %vm12206, %v11759
      %12286 = vst.msk [vmem:[%s202 + $0x13c] sm:$0xf] %vm12206, %v11760
      %12287 = vst.msk [vmem:[%s202 + $0x140] sm:$0xf] %vm12206, %v11761
      %12288 = vst.msk [vmem:[%s202 + $0x144] sm:$0xf] %vm12206, %v11762
      %12289 = vst.msk [vmem:[%s202 + $0x148] sm:$0xf] %vm12206, %v11763
      %12290 = vst.msk [vmem:[%s202 + $0x14c] sm:$0xf] %vm12206, %v11764
      %12291 = vst.msk [vmem:[%s202 + $0x150] sm:$0xf] %vm12206, %v11765
      %12292 = vst.msk [vmem:[%s202 + $0x154] sm:$0xf] %vm12206, %v11766
      %12293 = vst.msk [vmem:[%s202 + $0x158] sm:$0xf] %vm12206, %v11767
      %12294 = vst.msk [vmem:[%s202 + $0x15c] sm:$0xf] %vm12206, %v11768
      %12295 = vst.msk [vmem:[%s202 + $0x160] sm:$0xf] %vm12206, %v11769
      %12296 = vst.msk [vmem:[%s202 + $0x164] sm:$0xf] %vm12206, %v11770
      %12297 = vst.msk [vmem:[%s202 + $0x168] sm:$0xf] %vm12206, %v11771
      %12298 = vst.msk [vmem:[%s202 + $0x16c] sm:$0xf] %vm12206, %v11772
      %12299 = vst.msk [vmem:[%s202 + $0x170] sm:$0xf] %vm12206, %v11773
      %12300 = vst.msk [vmem:[%s202 + $0x174] sm:$0xf] %vm12206, %v11774
      %12301 = vst.msk [vmem:[%s202 + $0x178] sm:$0xf] %vm12206, %v11775
      %12302 = vst.msk [vmem:[%s202 + $0x17c] sm:$0xf] %vm12206, %v11776
      %12303 = vst.msk [vmem:[%s202 + $0x180] sm:$0xf] %vm12206, %v11777
      %12304 = vst.msk [vmem:[%s202 + $0x184] sm:$0xf] %vm12206, %v11778
      %12305 = vst.msk [vmem:[%s202 + $0x188] sm:$0xf] %vm12206, %v11779
      %12306 = vst.msk [vmem:[%s202 + $0x18c] sm:$0xf] %vm12206, %v11780
      %12307 = vst.msk [vmem:[%s202 + $0x190] sm:$0xf] %vm12206, %v11781
      %12308 = vst.msk [vmem:[%s202 + $0x194] sm:$0xf] %vm12206, %v11782
      %12309 = vst.msk [vmem:[%s202 + $0x198] sm:$0xf] %vm12206, %v11783
      %12310 = vst.msk [vmem:[%s202 + $0x19c] sm:$0xf] %vm12206, %v11784
      %12311 = vst.msk [vmem:[%s202 + $0x1a0] sm:$0xf] %vm12206, %v11785
      %12312 = vst.msk [vmem:[%s202 + $0x1a4] sm:$0xf] %vm12206, %v11786
      %12313 = vst.msk [vmem:[%s202 + $0x1a8] sm:$0xf] %vm12206, %v11787
      %12314 = vst.msk [vmem:[%s202 + $0x1ac] sm:$0xf] %vm12206, %v11788
      %12315 = vst.msk [vmem:[%s202 + $0x1b0] sm:$0xf] %vm12206, %v11789
      %12316 = vst.msk [vmem:[%s202 + $0x1b4] sm:$0xf] %vm12206, %v11790
      %12317 = vst.msk [vmem:[%s202 + $0x1b8] sm:$0xf] %vm12206, %v11791
      %12318 = vst.msk [vmem:[%s202 + $0x1bc] sm:$0xf] %vm12206, %v11792
      %12319 = vst.msk [vmem:[%s202 + $0x1c0] sm:$0xf] %vm12206, %v11793
      %12320 = vst.msk [vmem:[%s202 + $0x1c4] sm:$0xf] %vm12206, %v11794
      %12321 = vst.msk [vmem:[%s202 + $0x1c8] sm:$0xf] %vm12206, %v11795
      %12322 = vst.msk [vmem:[%s202 + $0x1cc] sm:$0xf] %vm12206, %v11796
      %12323 = vst.msk [vmem:[%s202 + $0x1d0] sm:$0xf] %vm12206, %v11797
      %12324 = vst.msk [vmem:[%s202 + $0x1d4] sm:$0xf] %vm12206, %v11798
      %12325 = vst.msk [vmem:[%s202 + $0x1d8] sm:$0xf] %vm12206, %v11799
      %12326 = vst.msk [vmem:[%s202 + $0x1dc] sm:$0xf] %vm12206, %v11800
      %12327 = vst.msk [vmem:[%s202 + $0x1e0] sm:$0xf] %vm12206, %v11801
      %12328 = vst.msk [vmem:[%s202 + $0x1e4] sm:$0xf] %vm12206, %v11802
      %12329 = vst.msk [vmem:[%s202 + $0x1e8] sm:$0xf] %vm12206, %v11803
      %12330 = vst.msk [vmem:[%s202 + $0x1ec] sm:$0xf] %vm12206, %v11804
      %12331 = vst.msk [vmem:[%s202 + $0x1f0] sm:$0xf] %vm12206, %v11805
      %12332 = vst.msk [vmem:[%s202 + $0x1f4] sm:$0xf] %vm12206, %v11806
      %12333 = vst.msk [vmem:[%s202 + $0x1f8] sm:$0xf] %vm12206, %v11807
      %12334 = vst.msk [vmem:[%s202 + $0x1fc] sm:$0xf] %vm12206, %v11808
      %12335 = vst.msk [vmem:[%s202 + $0x200] sm:$0xf] %vm12206, %v11809
      %12336 = vst.msk [vmem:[%s202 + $0x204] sm:$0xf] %vm12206, %v11810
      %12337 = vst.msk [vmem:[%s202 + $0x208] sm:$0xf] %vm12206, %v11811
      %12338 = vst.msk [vmem:[%s202 + $0x20c] sm:$0xf] %vm12206, %v11812
      %12339 = vst.msk [vmem:[%s202 + $0x210] sm:$0xf] %vm12206, %v11813
      %12340 = vst.msk [vmem:[%s202 + $0x214] sm:$0xf] %vm12206, %v11814
      %12341 = vst.msk [vmem:[%s202 + $0x218] sm:$0xf] %vm12206, %v11815
      %12342 = vst.msk [vmem:[%s202 + $0x21c] sm:$0xf] %vm12206, %v11816
      %12343 = vst.msk [vmem:[%s202 + $0x220] sm:$0xf] %vm12206, %v11817
      %12344 = vst.msk [vmem:[%s202 + $0x224] sm:$0xf] %vm12206, %v11818
      %12345 = vst.msk [vmem:[%s202 + $0x228] sm:$0xf] %vm12206, %v11819
      %12346 = vst.msk [vmem:[%s202 + $0x22c] sm:$0xf] %vm12206, %v11820
      %12347 = vst.msk [vmem:[%s202 + $0x230] sm:$0xf] %vm12206, %v11821
      %12348 = vst.msk [vmem:[%s202 + $0x234] sm:$0xf] %vm12206, %v11822
      %12349 = vst.msk [vmem:[%s202 + $0x238] sm:$0xf] %vm12206, %v11823
      %12350 = vst.msk [vmem:[%s202 + $0x23c] sm:$0xf] %vm12206, %v11824
      %12351 = vst.msk [vmem:[%s202 + $0x240] sm:$0xf] %vm12206, %v11825
      %12352 = vst.msk [vmem:[%s202 + $0x244] sm:$0xf] %vm12206, %v11826
      %12353 = vst.msk [vmem:[%s202 + $0x248] sm:$0xf] %vm12206, %v11827
      %12354 = vst.msk [vmem:[%s202 + $0x24c] sm:$0xf] %vm12206, %v11828
      %12355 = vst.msk [vmem:[%s202 + $0x250] sm:$0xf] %vm12206, %v11829
      %12356 = vst.msk [vmem:[%s202 + $0x254] sm:$0xf] %vm12206, %v11830
      %12357 = vst.msk [vmem:[%s202 + $0x258] sm:$0xf] %vm12206, %v11831
      %12358 = vst.msk [vmem:[%s202 + $0x25c] sm:$0xf] %vm12206, %v11832
      %12359 = vst.msk [vmem:[%s202 + $0x260] sm:$0xf] %vm12206, %v11833
      %12360 = vst.msk [vmem:[%s202 + $0x264] sm:$0xf] %vm12206, %v11834
      %12361 = vst.msk [vmem:[%s202 + $0x268] sm:$0xf] %vm12206, %v11835
      %12362 = vst.msk [vmem:[%s202 + $0x26c] sm:$0xf] %vm12206, %v11836
      %12363 = vst.msk [vmem:[%s202 + $0x270] sm:$0xf] %vm12206, %v11837
      %12364 = vst.msk [vmem:[%s202 + $0x274] sm:$0xf] %vm12206, %v11838
      %12365 = vst.msk [vmem:[%s202 + $0x278] sm:$0xf] %vm12206, %v11839
      %12366 = vst.msk [vmem:[%s202 + $0x27c] sm:$0xf] %vm12206, %v11840
      %12367 = vst.msk [vmem:[%s202 + $0x280] sm:$0xf] %vm12206, %v11841
      %12368 = vst.msk [vmem:[%s202 + $0x284] sm:$0xf] %vm12206, %v11842
      %12369 = vst.msk [vmem:[%s202 + $0x288] sm:$0xf] %vm12206, %v11843
      %12370 = vst.msk [vmem:[%s202 + $0x28c] sm:$0xf] %vm12206, %v11844
      %12371 = vst.msk [vmem:[%s202 + $0x290] sm:$0xf] %vm12206, %v11845
      %12372 = vst.msk [vmem:[%s202 + $0x294] sm:$0xf] %vm12206, %v11846
      %12373 = vst.msk [vmem:[%s202 + $0x298] sm:$0xf] %vm12206, %v11847
      %12374 = vst.msk [vmem:[%s202 + $0x29c] sm:$0xf] %vm12206, %v11848
      %12375 = vst.msk [vmem:[%s202 + $0x2a0] sm:$0xf] %vm12206, %v11849
      %12376 = vst.msk [vmem:[%s202 + $0x2a4] sm:$0xf] %vm12206, %v11850
      %12377 = vst.msk [vmem:[%s202 + $0x2a8] sm:$0xf] %vm12206, %v11851
      %12378 = vst.msk [vmem:[%s202 + $0x2ac] sm:$0xf] %vm12206, %v11852
      %12379 = vst.msk [vmem:[%s202 + $0x2b0] sm:$0xf] %vm12206, %v11853
      %12380 = vst.msk [vmem:[%s202 + $0x2b4] sm:$0xf] %vm12206, %v11854
      %12381 = vst.msk [vmem:[%s202 + $0x2b8] sm:$0xf] %vm12206, %v11855
      %12382 = vst.msk [vmem:[%s202 + $0x2bc] sm:$0xf] %vm12206, %v11856
      %12383 = vst.msk [vmem:[%s202 + $0x2c0] sm:$0xf] %vm12206, %v11857
      %12384 = vst.msk [vmem:[%s202 + $0x2c4] sm:$0xf] %vm12206, %v11858
      %12385 = vst.msk [vmem:[%s202 + $0x2c8] sm:$0xf] %vm12206, %v11859
      %12386 = vst.msk [vmem:[%s202 + $0x2cc] sm:$0xf] %vm12206, %v11860
      %12387 = vst.msk [vmem:[%s202 + $0x2d0] sm:$0xf] %vm12206, %v11861
      %12388 = vst.msk [vmem:[%s202 + $0x2d4] sm:$0xf] %vm12206, %v11862
      %12389 = vst.msk [vmem:[%s202 + $0x2d8] sm:$0xf] %vm12206, %v11863
      %12390 = vst.msk [vmem:[%s202 + $0x2dc] sm:$0xf] %vm12206, %v11864
      %12391 = vst.msk [vmem:[%s202 + $0x2e0] sm:$0xf] %vm12206, %v11865
      %12392 = vst.msk [vmem:[%s202 + $0x2e4] sm:$0xf] %vm12206, %v11866
      %12393 = vst.msk [vmem:[%s202 + $0x2e8] sm:$0xf] %vm12206, %v11867
      %12394 = vst.msk [vmem:[%s202 + $0x2ec] sm:$0xf] %vm12206, %v11868
      %12395 = vst.msk [vmem:[%s202 + $0x2f0] sm:$0xf] %vm12206, %v11869
      %12396 = vst.msk [vmem:[%s202 + $0x2f4] sm:$0xf] %vm12206, %v11870
      %12397 = vst.msk [vmem:[%s202 + $0x2f8] sm:$0xf] %vm12206, %v11871
      %12398 = vst.msk [vmem:[%s202 + $0x2fc] sm:$0xf] %vm12206, %v11872
      %12399 = vst.msk [vmem:[%s202 + $0x300] sm:$0xf] %vm12206, %v11873
      %12400 = vst.msk [vmem:[%s202 + $0x304] sm:$0xf] %vm12206, %v11874
      %12401 = vst.msk [vmem:[%s202 + $0x308] sm:$0xf] %vm12206, %v11875
      %12402 = vst.msk [vmem:[%s202 + $0x30c] sm:$0xf] %vm12206, %v11876
      %12403 = vst.msk [vmem:[%s202 + $0x310] sm:$0xf] %vm12206, %v11877
      %12404 = vst.msk [vmem:[%s202 + $0x314] sm:$0xf] %vm12206, %v11878
      %12405 = vst.msk [vmem:[%s202 + $0x318] sm:$0xf] %vm12206, %v11879
      %12406 = vst.msk [vmem:[%s202 + $0x31c] sm:$0xf] %vm12206, %v11880
      %12407 = vst.msk [vmem:[%s202 + $0x320] sm:$0xf] %vm12206, %v11881
      %12408 = vst.msk [vmem:[%s202 + $0x324] sm:$0xf] %vm12206, %v11882
      %12409 = vst.msk [vmem:[%s202 + $0x328] sm:$0xf] %vm12206, %v11883
      %12410 = vst.msk [vmem:[%s202 + $0x32c] sm:$0xf] %vm12206, %v11884
      %12411 = vst.msk [vmem:[%s202 + $0x330] sm:$0xf] %vm12206, %v11885
      %12412 = vst.msk [vmem:[%s202 + $0x334] sm:$0xf] %vm12206, %v11886
      %12413 = vst.msk [vmem:[%s202 + $0x338] sm:$0xf] %vm12206, %v11887
      %12414 = vst.msk [vmem:[%s202 + $0x33c] sm:$0xf] %vm12206, %v11888
      %12415 = vst.msk [vmem:[%s202 + $0x340] sm:$0xf] %vm12206, %v11889
      %12416 = vst.msk [vmem:[%s202 + $0x344] sm:$0xf] %vm12206, %v11890
      %12417 = vst.msk [vmem:[%s202 + $0x348] sm:$0xf] %vm12206, %v11891
      %12418 = vst.msk [vmem:[%s202 + $0x34c] sm:$0xf] %vm12206, %v11892
      %12419 = vst.msk [vmem:[%s202 + $0x350] sm:$0xf] %vm12206, %v11893
      %12420 = vst.msk [vmem:[%s202 + $0x354] sm:$0xf] %vm12206, %v11894
      %12421 = vst.msk [vmem:[%s202 + $0x358] sm:$0xf] %vm12206, %v11895
      %12422 = vst.msk [vmem:[%s202 + $0x35c] sm:$0xf] %vm12206, %v11896
      %12423 = vst.msk [vmem:[%s202 + $0x360] sm:$0xf] %vm12206, %v11897
      %12424 = vst.msk [vmem:[%s202 + $0x364] sm:$0xf] %vm12206, %v11898
      %12425 = vst.msk [vmem:[%s202 + $0x368] sm:$0xf] %vm12206, %v11899
      %12426 = vst.msk [vmem:[%s202 + $0x36c] sm:$0xf] %vm12206, %v11900
      %12427 = vst.msk [vmem:[%s202 + $0x370] sm:$0xf] %vm12206, %v11901
      %12428 = vst.msk [vmem:[%s202 + $0x374] sm:$0xf] %vm12206, %v11902
      %12429 = vst.msk [vmem:[%s202 + $0x378] sm:$0xf] %vm12206, %v11903
      %12430 = vst.msk [vmem:[%s202 + $0x37c] sm:$0xf] %vm12206, %v11904
      %12431 = vst.msk [vmem:[%s202 + $0x380] sm:$0xf] %vm12206, %v11905
      %12432 = vst.msk [vmem:[%s202 + $0x384] sm:$0xf] %vm12206, %v11906
      %12433 = vst.msk [vmem:[%s202 + $0x388] sm:$0xf] %vm12206, %v11907
      %12434 = vst.msk [vmem:[%s202 + $0x38c] sm:$0xf] %vm12206, %v11908
      %12435 = vst.msk [vmem:[%s202 + $0x390] sm:$0xf] %vm12206, %v11909
      %12436 = vst.msk [vmem:[%s202 + $0x394] sm:$0xf] %vm12206, %v11910
      %12437 = vst.msk [vmem:[%s202 + $0x398] sm:$0xf] %vm12206, %v11911
      %12438 = vst.msk [vmem:[%s202 + $0x39c] sm:$0xf] %vm12206, %v11912
      %12439 = vst.msk [vmem:[%s202 + $0x3a0] sm:$0xf] %vm12206, %v11913
      %12440 = vst.msk [vmem:[%s202 + $0x3a4] sm:$0xf] %vm12206, %v11914
      %12441 = vst.msk [vmem:[%s202 + $0x3a8] sm:$0xf] %vm12206, %v11915
      %12442 = vst.msk [vmem:[%s202 + $0x3ac] sm:$0xf] %vm12206, %v11916
      %12443 = vst.msk [vmem:[%s202 + $0x3b0] sm:$0xf] %vm12206, %v11917
      %12444 = vst.msk [vmem:[%s202 + $0x3b4] sm:$0xf] %vm12206, %v11918
      %12445 = vst.msk [vmem:[%s202 + $0x3b8] sm:$0xf] %vm12206, %v11919
      %12446 = vst.msk [vmem:[%s202 + $0x3bc] sm:$0xf] %vm12206, %v11920
      %12447 = vst.msk [vmem:[%s202 + $0x3c0] sm:$0xf] %vm12206, %v11921
      %12448 = vst.msk [vmem:[%s202 + $0x3c4] sm:$0xf] %vm12206, %v11922
      %12449 = vst.msk [vmem:[%s202 + $0x3c8] sm:$0xf] %vm12206, %v11923
      %12450 = vst.msk [vmem:[%s202 + $0x3cc] sm:$0xf] %vm12206, %v11924
      %12451 = vst.msk [vmem:[%s202 + $0x3d0] sm:$0xf] %vm12206, %v11925
      %12452 = vst.msk [vmem:[%s202 + $0x3d4] sm:$0xf] %vm12206, %v11926
      %12453 = vst.msk [vmem:[%s202 + $0x3d8] sm:$0xf] %vm12206, %v11927
      %12454 = vst.msk [vmem:[%s202 + $0x3dc] sm:$0xf] %vm12206, %v11928
      %12455 = vst.msk [vmem:[%s202 + $0x3e0] sm:$0xf] %vm12206, %v11929
      %12456 = vst.msk [vmem:[%s202 + $0x3e4] sm:$0xf] %vm12206, %v11930
      %12457 = vst.msk [vmem:[%s202 + $0x3e8] sm:$0xf] %vm12206, %v11931
      %12458 = vst.msk [vmem:[%s202 + $0x3ec] sm:$0xf] %vm12206, %v11932
      %12459 = vst.msk [vmem:[%s202 + $0x3f0] sm:$0xf] %vm12206, %v11933
      %12460 = vst.msk [vmem:[%s202 + $0x3f4] sm:$0xf] %vm12206, %v11934
      %12461 = vst.msk [vmem:[%s202 + $0x3f8] sm:$0xf] %vm12206, %v11935
      %12462 = vst.msk [vmem:[%s202 + $0x3fc] sm:$0xf] %vm12206, %v11936
      %12463 = vst.msk [vmem:[%s202 + $0x400] sm:$0xf] %vm12206, %v11937
      %12464 = vst.msk [vmem:[%s202 + $0x404] sm:$0xf] %vm12206, %v11938
      %12465 = vst.msk [vmem:[%s202 + $0x408] sm:$0xf] %vm12206, %v11939
      %12466 = vst.msk [vmem:[%s202 + $0x40c] sm:$0xf] %vm12206, %v11940
      %12467 = vst.msk [vmem:[%s202 + $0x410] sm:$0xf] %vm12206, %v11941
      %12468 = vst.msk [vmem:[%s202 + $0x414] sm:$0xf] %vm12206, %v11942
      %12469 = vst.msk [vmem:[%s202 + $0x418] sm:$0xf] %vm12206, %v11943
      %12470 = vst.msk [vmem:[%s202 + $0x41c] sm:$0xf] %vm12206, %v11944
      %12471 = vst.msk [vmem:[%s202 + $0x420] sm:$0xf] %vm12206, %v11945
      %12472 = vst.msk [vmem:[%s202 + $0x424] sm:$0xf] %vm12206, %v11946
      %12473 = vst.msk [vmem:[%s202 + $0x428] sm:$0xf] %vm12206, %v11947
      %12474 = vst.msk [vmem:[%s202 + $0x42c] sm:$0xf] %vm12206, %v11948
      %12475 = vst.msk [vmem:[%s202 + $0x430] sm:$0xf] %vm12206, %v11949
      %12476 = vst.msk [vmem:[%s202 + $0x434] sm:$0xf] %vm12206, %v11950
      %12477 = vst.msk [vmem:[%s202 + $0x438] sm:$0xf] %vm12206, %v11951
      %12478 = vst.msk [vmem:[%s202 + $0x43c] sm:$0xf] %vm12206, %v11952
      %12479 = vst.msk [vmem:[%s202 + $0x440] sm:$0xf] %vm12206, %v11953
      %12480 = vst.msk [vmem:[%s202 + $0x444] sm:$0xf] %vm12206, %v11954
      %12481 = vst.msk [vmem:[%s202 + $0x448] sm:$0xf] %vm12206, %v11955
      %12482 = vst.msk [vmem:[%s202 + $0x44c] sm:$0xf] %vm12206, %v11956
      %12483 = vst.msk [vmem:[%s202 + $0x450] sm:$0xf] %vm12206, %v11957
      %12484 = vst.msk [vmem:[%s202 + $0x454] sm:$0xf] %vm12206, %v11958
      %12485 = vst.msk [vmem:[%s202 + $0x458] sm:$0xf] %vm12206, %v11959
      %12486 = vst.msk [vmem:[%s202 + $0x45c] sm:$0xf] %vm12206, %v11960
      %12487 = vst.msk [vmem:[%s202 + $0x460] sm:$0xf] %vm12206, %v11961
      %12488 = vst.msk [vmem:[%s202 + $0x464] sm:$0xf] %vm12206, %v11962
      %12489 = vst.msk [vmem:[%s202 + $0x468] sm:$0xf] %vm12206, %v11963
      %12490 = vst.msk [vmem:[%s202 + $0x46c] sm:$0xf] %vm12206, %v11964
      %12491 = vst.msk [vmem:[%s202 + $0x470] sm:$0xf] %vm12206, %v11965
      %12492 = vst.msk [vmem:[%s202 + $0x474] sm:$0xf] %vm12206, %v11966
      %12493 = vst.msk [vmem:[%s202 + $0x478] sm:$0xf] %vm12206, %v11967
      %12494 = vst.msk [vmem:[%s202 + $0x47c] sm:$0xf] %vm12206, %v11968
      %12495 = vst.msk [vmem:[%s202 + $0x480] sm:$0xf] %vm12206, %v11969
      %12496 = vst.msk [vmem:[%s202 + $0x484] sm:$0xf] %vm12206, %v11970
      %12497 = vst.msk [vmem:[%s202 + $0x488] sm:$0xf] %vm12206, %v11971
      %12498 = vst.msk [vmem:[%s202 + $0x48c] sm:$0xf] %vm12206, %v11972
      %12499 = vst.msk [vmem:[%s202 + $0x490] sm:$0xf] %vm12206, %v11973
      %12500 = vst.msk [vmem:[%s202 + $0x494] sm:$0xf] %vm12206, %v11974
      %12501 = vst.msk [vmem:[%s202 + $0x498] sm:$0xf] %vm12206, %v11975
      %12502 = vst.msk [vmem:[%s202 + $0x49c] sm:$0xf] %vm12206, %v11976
      %12503 = vst.msk [vmem:[%s202 + $0x4a0] sm:$0xf] %vm12206, %v11977
      %12504 = vst.msk [vmem:[%s202 + $0x4a4] sm:$0xf] %vm12206, %v11978
      %12505 = vst.msk [vmem:[%s202 + $0x4a8] sm:$0xf] %vm12206, %v11979
      %12506 = vst.msk [vmem:[%s202 + $0x4ac] sm:$0xf] %vm12206, %v11980
      %12507 = vst.msk [vmem:[%s202 + $0x4b0] sm:$0xf] %vm12206, %v11981
      %12508 = vst.msk [vmem:[%s202 + $0x4b4] sm:$0xf] %vm12206, %v11982
      %12509 = vst.msk [vmem:[%s202 + $0x4b8] sm:$0xf] %vm12206, %v11983
      %12510 = vst.msk [vmem:[%s202 + $0x4bc] sm:$0xf] %vm12206, %v11984
      %12511 = vst.msk [vmem:[%s202 + $0x4c0] sm:$0xf] %vm12206, %v11985
      %12512 = vst.msk [vmem:[%s202 + $0x4c4] sm:$0xf] %vm12206, %v11986
      %12513 = vst.msk [vmem:[%s202 + $0x4c8] sm:$0xf] %vm12206, %v11987
      %12514 = vst.msk [vmem:[%s202 + $0x4cc] sm:$0xf] %vm12206, %v11988
      %12515 = vst.msk [vmem:[%s202 + $0x4d0] sm:$0xf] %vm12206, %v11989
      %12516 = vst.msk [vmem:[%s202 + $0x4d4] sm:$0xf] %vm12206, %v11990
      %12517 = vst.msk [vmem:[%s202 + $0x4d8] sm:$0xf] %vm12206, %v11991
      %12518 = vst.msk [vmem:[%s202 + $0x4dc] sm:$0xf] %vm12206, %v11992
      %12519 = vst.msk [vmem:[%s202 + $0x4e0] sm:$0xf] %vm12206, %v11993
      %12520 = vst.msk [vmem:[%s202 + $0x4e4] sm:$0xf] %vm12206, %v11994
      %12521 = vst.msk [vmem:[%s202 + $0x4e8] sm:$0xf] %vm12206, %v11995
      %12522 = vst.msk [vmem:[%s202 + $0x4ec] sm:$0xf] %vm12206, %v11996
      %12523 = vst.msk [vmem:[%s202 + $0x4f0] sm:$0xf] %vm12206, %v11997
      %12524 = vst.msk [vmem:[%s202 + $0x4f4] sm:$0xf] %vm12206, %v11998
      %12525 = vst.msk [vmem:[%s202 + $0x4f8] sm:$0xf] %vm12206, %v11999
      %12526 = vst.msk [vmem:[%s202 + $0x4fc] sm:$0xf] %vm12206, %v12000
      %12527 = vst.msk [vmem:[%s202 + $0x500] sm:$0xf] %vm12206, %v12001
      %12528 = vst.msk [vmem:[%s202 + $0x504] sm:$0xf] %vm12206, %v12002
      %12529 = vst.msk [vmem:[%s202 + $0x508] sm:$0xf] %vm12206, %v12003
      %12530 = vst.msk [vmem:[%s202 + $0x50c] sm:$0xf] %vm12206, %v12004
      %12531 = vst.msk [vmem:[%s202 + $0x510] sm:$0xf] %vm12206, %v12005
      %12532 = vst.msk [vmem:[%s202 + $0x514] sm:$0xf] %vm12206, %v12006
      %12533 = vst.msk [vmem:[%s202 + $0x518] sm:$0xf] %vm12206, %v12007
      %12534 = vst.msk [vmem:[%s202 + $0x51c] sm:$0xf] %vm12206, %v12008
      %12535 = vst.msk [vmem:[%s202 + $0x520] sm:$0xf] %vm12206, %v12009
      %12536 = vst.msk [vmem:[%s202 + $0x524] sm:$0xf] %vm12206, %v12010
      %12537 = vst.msk [vmem:[%s202 + $0x528] sm:$0xf] %vm12206, %v12011
      %12538 = vst.msk [vmem:[%s202 + $0x52c] sm:$0xf] %vm12206, %v12012
      %12539 = vst.msk [vmem:[%s202 + $0x530] sm:$0xf] %vm12206, %v12013
      %12540 = vst.msk [vmem:[%s202 + $0x534] sm:$0xf] %vm12206, %v12014
      %12541 = vst.msk [vmem:[%s202 + $0x538] sm:$0xf] %vm12206, %v12015
      %12542 = vst.msk [vmem:[%s202 + $0x53c] sm:$0xf] %vm12206, %v12016
      %12543 = vst.msk [vmem:[%s202 + $0x540] sm:$0xf] %vm12206, %v12017
      %12544 = vst.msk [vmem:[%s202 + $0x544] sm:$0xf] %vm12206, %v12018
      %12545 = vst.msk [vmem:[%s202 + $0x548] sm:$0xf] %vm12206, %v12019
      %12546 = vst.msk [vmem:[%s202 + $0x54c] sm:$0xf] %vm12206, %v12020
      %12547 = vst.msk [vmem:[%s202 + $0x550] sm:$0xf] %vm12206, %v12021
      %12548 = vst.msk [vmem:[%s202 + $0x554] sm:$0xf] %vm12206, %v12022
      %12549 = vst.msk [vmem:[%s202 + $0x558] sm:$0xf] %vm12206, %v12023
      %12550 = vst.msk [vmem:[%s202 + $0x55c] sm:$0xf] %vm12206, %v12024
      %12551 = vst.msk [vmem:[%s202 + $0x560] sm:$0xf] %vm12206, %v12025
      %12552 = vst.msk [vmem:[%s202 + $0x564] sm:$0xf] %vm12206, %v12026
      %12553 = vst.msk [vmem:[%s202 + $0x568] sm:$0xf] %vm12206, %v12027
      %12554 = vst.msk [vmem:[%s202 + $0x56c] sm:$0xf] %vm12206, %v12028
      %12555 = vst.msk [vmem:[%s202 + $0x570] sm:$0xf] %vm12206, %v12029
      %12556 = vst.msk [vmem:[%s202 + $0x574] sm:$0xf] %vm12206, %v12030
      %12557 = vst.msk [vmem:[%s202 + $0x578] sm:$0xf] %vm12206, %v12031
      %12558 = vst.msk [vmem:[%s202 + $0x57c] sm:$0xf] %vm12206, %v12032
      %12559 = vst.msk [vmem:[%s202 + $0x580] sm:$0xf] %vm12206, %v12033
      %12560 = vst.msk [vmem:[%s202 + $0x584] sm:$0xf] %vm12206, %v12034
      %12561 = vst.msk [vmem:[%s202 + $0x588] sm:$0xf] %vm12206, %v12035
      %12562 = vst.msk [vmem:[%s202 + $0x58c] sm:$0xf] %vm12206, %v12036
      %12563 = vst.msk [vmem:[%s202 + $0x590] sm:$0xf] %vm12206, %v12037
      %12564 = vst.msk [vmem:[%s202 + $0x594] sm:$0xf] %vm12206, %v12038
      %12565 = vst.msk [vmem:[%s202 + $0x598] sm:$0xf] %vm12206, %v12039
      %12566 = vst.msk [vmem:[%s202 + $0x59c] sm:$0xf] %vm12206, %v12040
      %12567 = vst.msk [vmem:[%s202 + $0x5a0] sm:$0xf] %vm12206, %v12041
      %12568 = vst.msk [vmem:[%s202 + $0x5a4] sm:$0xf] %vm12206, %v12042
      %12569 = vst.msk [vmem:[%s202 + $0x5a8] sm:$0xf] %vm12206, %v12043
      %12570 = vst.msk [vmem:[%s202 + $0x5ac] sm:$0xf] %vm12206, %v12044
      %12571 = vst.msk [vmem:[%s202 + $0x5b0] sm:$0xf] %vm12206, %v12045
      %12572 = vst.msk [vmem:[%s202 + $0x5b4] sm:$0xf] %vm12206, %v12046
      %12573 = vst.msk [vmem:[%s202 + $0x5b8] sm:$0xf] %vm12206, %v12047
      %12574 = vst.msk [vmem:[%s202 + $0x5bc] sm:$0xf] %vm12206, %v12048
      %12575 = vst.msk [vmem:[%s202 + $0x5c0] sm:$0xf] %vm12206, %v12049
      %12576 = vst.msk [vmem:[%s202 + $0x5c4] sm:$0xf] %vm12206, %v12050
      %12577 = vst.msk [vmem:[%s202 + $0x5c8] sm:$0xf] %vm12206, %v12051
      %12578 = vst.msk [vmem:[%s202 + $0x5cc] sm:$0xf] %vm12206, %v12052
      %12579 = vst.msk [vmem:[%s202 + $0x5d0] sm:$0xf] %vm12206, %v12053
      %12580 = vst.msk [vmem:[%s202 + $0x5d4] sm:$0xf] %vm12206, %v12054
      %12581 = vst.msk [vmem:[%s202 + $0x5d8] sm:$0xf] %vm12206, %v12055
      %12582 = vst.msk [vmem:[%s202 + $0x5dc] sm:$0xf] %vm12206, %v12056
      %12583 = vst.msk [vmem:[%s202 + $0x5e0] sm:$0xf] %vm12206, %v12057
      %12584 = vst.msk [vmem:[%s202 + $0x5e4] sm:$0xf] %vm12206, %v12058
      %12585 = vst.msk [vmem:[%s202 + $0x5e8] sm:$0xf] %vm12206, %v12059
      %12586 = vst.msk [vmem:[%s202 + $0x5ec] sm:$0xf] %vm12206, %v12060
      %12587 = vst.msk [vmem:[%s202 + $0x5f0] sm:$0xf] %vm12206, %v12061
      %12588 = vst.msk [vmem:[%s202 + $0x5f4] sm:$0xf] %vm12206, %v12062
      %12589 = vst.msk [vmem:[%s202 + $0x5f8] sm:$0xf] %vm12206, %v12063
      %12590 = vst.msk [vmem:[%s202 + $0x5fc] sm:$0xf] %vm12206, %v12064
      %12591 = vst.msk [vmem:[%s202 + $0x600] sm:$0xf] %vm12206, %v12065
      %12592 = vst.msk [vmem:[%s202 + $0x604] sm:$0xf] %vm12206, %v12066
      %12593 = vst.msk [vmem:[%s202 + $0x608] sm:$0xf] %vm12206, %v12067
      %12594 = vst.msk [vmem:[%s202 + $0x60c] sm:$0xf] %vm12206, %v12068
      %12595 = vst.msk [vmem:[%s202 + $0x610] sm:$0xf] %vm12206, %v12069
      %12596 = vst.msk [vmem:[%s202 + $0x614] sm:$0xf] %vm12206, %v12070
      %12597 = vst.msk [vmem:[%s202 + $0x618] sm:$0xf] %vm12206, %v12071
      %12598 = vst.msk [vmem:[%s202 + $0x61c] sm:$0xf] %vm12206, %v12072
      %12599 = vst.msk [vmem:[%s202 + $0x620] sm:$0xf] %vm12206, %v12073
      %12600 = vst.msk [vmem:[%s202 + $0x624] sm:$0xf] %vm12206, %v12074
      %12601 = vst.msk [vmem:[%s202 + $0x628] sm:$0xf] %vm12206, %v12075
      %12602 = vst.msk [vmem:[%s202 + $0x62c] sm:$0xf] %vm12206, %v12076
      %12603 = vst.msk [vmem:[%s202 + $0x630] sm:$0xf] %vm12206, %v12077
      %12604 = vst.msk [vmem:[%s202 + $0x634] sm:$0xf] %vm12206, %v12078
      %12605 = vst.msk [vmem:[%s202 + $0x638] sm:$0xf] %vm12206, %v12079
      %12606 = vst.msk [vmem:[%s202 + $0x63c] sm:$0xf] %vm12206, %v12080
      %12607 = vst.msk [vmem:[%s202 + $0x640] sm:$0xf] %vm12206, %v12081
      %12608 = vst.msk [vmem:[%s202 + $0x644] sm:$0xf] %vm12206, %v12082
      %12609 = vst.msk [vmem:[%s202 + $0x648] sm:$0xf] %vm12206, %v12083
      %12610 = vst.msk [vmem:[%s202 + $0x64c] sm:$0xf] %vm12206, %v12084
      %12611 = vst.msk [vmem:[%s202 + $0x650] sm:$0xf] %vm12206, %v12085
      %12612 = vst.msk [vmem:[%s202 + $0x654] sm:$0xf] %vm12206, %v12086
      %12613 = vst.msk [vmem:[%s202 + $0x658] sm:$0xf] %vm12206, %v12087
      %12614 = vst.msk [vmem:[%s202 + $0x65c] sm:$0xf] %vm12206, %v12088
      %12615 = vst.msk [vmem:[%s202 + $0x660] sm:$0xf] %vm12206, %v12089
      %12616 = vst.msk [vmem:[%s202 + $0x664] sm:$0xf] %vm12206, %v12090
      %12617 = vst.msk [vmem:[%s202 + $0x668] sm:$0xf] %vm12206, %v12091
      %12618 = vst.msk [vmem:[%s202 + $0x66c] sm:$0xf] %vm12206, %v12092
      %12619 = vst.msk [vmem:[%s202 + $0x670] sm:$0xf] %vm12206, %v12093
      %12620 = vst.msk [vmem:[%s202 + $0x674] sm:$0xf] %vm12206, %v12094
      %12621 = vst.msk [vmem:[%s202 + $0x678] sm:$0xf] %vm12206, %v12095
      %12622 = vst.msk [vmem:[%s202 + $0x67c] sm:$0xf] %vm12206, %v12096
      %12623 = vst.msk [vmem:[%s202 + $0x680] sm:$0xf] %vm12206, %v12097
      %12624 = vst.msk [vmem:[%s202 + $0x684] sm:$0xf] %vm12206, %v12098
      %12625 = vst.msk [vmem:[%s202 + $0x688] sm:$0xf] %vm12206, %v12099
      %12626 = vst.msk [vmem:[%s202 + $0x68c] sm:$0xf] %vm12206, %v12100
      %12627 = vst.msk [vmem:[%s202 + $0x690] sm:$0xf] %vm12206, %v12101
      %12628 = vst.msk [vmem:[%s202 + $0x694] sm:$0xf] %vm12206, %v12102
      %12629 = vst.msk [vmem:[%s202 + $0x698] sm:$0xf] %vm12206, %v12103
      %12630 = vst.msk [vmem:[%s202 + $0x69c] sm:$0xf] %vm12206, %v12104
      %12631 = vst.msk [vmem:[%s202 + $0x6a0] sm:$0xf] %vm12206, %v12105
      %12632 = vst.msk [vmem:[%s202 + $0x6a4] sm:$0xf] %vm12206, %v12106
      %12633 = vst.msk [vmem:[%s202 + $0x6a8] sm:$0xf] %vm12206, %v12107
      %12634 = vst.msk [vmem:[%s202 + $0x6ac] sm:$0xf] %vm12206, %v12108
      %12635 = vst.msk [vmem:[%s202 + $0x6b0] sm:$0xf] %vm12206, %v12109
      %12636 = vst.msk [vmem:[%s202 + $0x6b4] sm:$0xf] %vm12206, %v12110
      %12637 = vst.msk [vmem:[%s202 + $0x6b8] sm:$0xf] %vm12206, %v12111
      %12638 = vst.msk [vmem:[%s202 + $0x6bc] sm:$0xf] %vm12206, %v12112
      %12639 = vst.msk [vmem:[%s202 + $0x6c0] sm:$0xf] %vm12206, %v12113
      %12640 = vst.msk [vmem:[%s202 + $0x6c4] sm:$0xf] %vm12206, %v12114
      %12641 = vst.msk [vmem:[%s202 + $0x6c8] sm:$0xf] %vm12206, %v12115
      %12642 = vst.msk [vmem:[%s202 + $0x6cc] sm:$0xf] %vm12206, %v12116
      %12643 = vst.msk [vmem:[%s202 + $0x6d0] sm:$0xf] %vm12206, %v12117
      %12644 = vst.msk [vmem:[%s202 + $0x6d4] sm:$0xf] %vm12206, %v12118
      %12645 = vst.msk [vmem:[%s202 + $0x6d8] sm:$0xf] %vm12206, %v12119
      %12646 = vst.msk [vmem:[%s202 + $0x6dc] sm:$0xf] %vm12206, %v12120
      %12647 = vst.msk [vmem:[%s202 + $0x6e0] sm:$0xf] %vm12206, %v12121
      %12648 = vst.msk [vmem:[%s202 + $0x6e4] sm:$0xf] %vm12206, %v12122
      %12649 = vst.msk [vmem:[%s202 + $0x6e8] sm:$0xf] %vm12206, %v12123
      %12650 = vst.msk [vmem:[%s202 + $0x6ec] sm:$0xf] %vm12206, %v12124
      %12651 = vst.msk [vmem:[%s202 + $0x6f0] sm:$0xf] %vm12206, %v12125
      %12652 = vst.msk [vmem:[%s202 + $0x6f4] sm:$0xf] %vm12206, %v12126
      %12653 = vst.msk [vmem:[%s202 + $0x6f8] sm:$0xf] %vm12206, %v12127
      %12654 = vst.msk [vmem:[%s202 + $0x6fc] sm:$0xf] %vm12206, %v12128
      %12655 = vst.msk [vmem:[%s202 + $0x700] sm:$0xf] %vm12206, %v12129
      %12656 = vst.msk [vmem:[%s202 + $0x704] sm:$0xf] %vm12206, %v12130
      %12657 = vst.msk [vmem:[%s202 + $0x708] sm:$0xf] %vm12206, %v12131
      %12658 = vst.msk [vmem:[%s202 + $0x70c] sm:$0xf] %vm12206, %v12132
      %12659 = vst.msk [vmem:[%s202 + $0x710] sm:$0xf] %vm12206, %v12133
      %12660 = vst.msk [vmem:[%s202 + $0x714] sm:$0xf] %vm12206, %v12134
      %12661 = vst.msk [vmem:[%s202 + $0x718] sm:$0xf] %vm12206, %v12135
      %12662 = vst.msk [vmem:[%s202 + $0x71c] sm:$0xf] %vm12206, %v12136
      %12663 = vst.msk [vmem:[%s202 + $0x720] sm:$0xf] %vm12206, %v12137
      %12664 = vst.msk [vmem:[%s202 + $0x724] sm:$0xf] %vm12206, %v12138
      %12665 = vst.msk [vmem:[%s202 + $0x728] sm:$0xf] %vm12206, %v12139
      %12666 = vst.msk [vmem:[%s202 + $0x72c] sm:$0xf] %vm12206, %v12140
      %12667 = vst.msk [vmem:[%s202 + $0x730] sm:$0xf] %vm12206, %v12141
      %12668 = vst.msk [vmem:[%s202 + $0x734] sm:$0xf] %vm12206, %v12142
      %12669 = vst.msk [vmem:[%s202 + $0x738] sm:$0xf] %vm12206, %v12143
      %12670 = vst.msk [vmem:[%s202 + $0x73c] sm:$0xf] %vm12206, %v12144
      %12671 = vst.msk [vmem:[%s202 + $0x740] sm:$0xf] %vm12206, %v12145
      %12672 = vst.msk [vmem:[%s202 + $0x744] sm:$0xf] %vm12206, %v12146
      %12673 = vst.msk [vmem:[%s202 + $0x748] sm:$0xf] %vm12206, %v12147
      %12674 = vst.msk [vmem:[%s202 + $0x74c] sm:$0xf] %vm12206, %v12148
      %12675 = vst.msk [vmem:[%s202 + $0x750] sm:$0xf] %vm12206, %v12149
      %12676 = vst.msk [vmem:[%s202 + $0x754] sm:$0xf] %vm12206, %v12150
      %12677 = vst.msk [vmem:[%s202 + $0x758] sm:$0xf] %vm12206, %v12151
      %12678 = vst.msk [vmem:[%s202 + $0x75c] sm:$0xf] %vm12206, %v12152
      %12679 = vst.msk [vmem:[%s202 + $0x760] sm:$0xf] %vm12206, %v12153
      %12680 = vst.msk [vmem:[%s202 + $0x764] sm:$0xf] %vm12206, %v12154
      %12681 = vst.msk [vmem:[%s202 + $0x768] sm:$0xf] %vm12206, %v12155
      %12682 = vst.msk [vmem:[%s202 + $0x76c] sm:$0xf] %vm12206, %v12156
      %12683 = vst.msk [vmem:[%s202 + $0x770] sm:$0xf] %vm12206, %v12157
      %12684 = vst.msk [vmem:[%s202 + $0x774] sm:$0xf] %vm12206, %v12158
      %12685 = vst.msk [vmem:[%s202 + $0x778] sm:$0xf] %vm12206, %v12159
      %12686 = vst.msk [vmem:[%s202 + $0x77c] sm:$0xf] %vm12206, %v12160
      %12687 = vst.msk [vmem:[%s202 + $0x780] sm:$0xf] %vm12206, %v12161
      %12688 = vst.msk [vmem:[%s202 + $0x784] sm:$0xf] %vm12206, %v12162
      %12689 = vst.msk [vmem:[%s202 + $0x788] sm:$0xf] %vm12206, %v12163
      %12690 = vst.msk [vmem:[%s202 + $0x78c] sm:$0xf] %vm12206, %v12164
      %12691 = vst.msk [vmem:[%s202 + $0x790] sm:$0xf] %vm12206, %v12165
      %12692 = vst.msk [vmem:[%s202 + $0x794] sm:$0xf] %vm12206, %v12166
      %12693 = vst.msk [vmem:[%s202 + $0x798] sm:$0xf] %vm12206, %v12167
      %12694 = vst.msk [vmem:[%s202 + $0x79c] sm:$0xf] %vm12206, %v12168
      %12695 = vst.msk [vmem:[%s202 + $0x7a0] sm:$0xf] %vm12206, %v12169
      %12696 = vst.msk [vmem:[%s202 + $0x7a4] sm:$0xf] %vm12206, %v12170
      %12697 = vst.msk [vmem:[%s202 + $0x7a8] sm:$0xf] %vm12206, %v12171
      %12698 = vst.msk [vmem:[%s202 + $0x7ac] sm:$0xf] %vm12206, %v12172
      %12699 = vst.msk [vmem:[%s202 + $0x7b0] sm:$0xf] %vm12206, %v12173
      %12700 = vst.msk [vmem:[%s202 + $0x7b4] sm:$0xf] %vm12206, %v12174
      %12701 = vst.msk [vmem:[%s202 + $0x7b8] sm:$0xf] %vm12206, %v12175
      %12702 = vst.msk [vmem:[%s202 + $0x7bc] sm:$0xf] %vm12206, %v12176
      %12703 = vst.msk [vmem:[%s202 + $0x7c0] sm:$0xf] %vm12206, %v12177
      %12704 = vst.msk [vmem:[%s202 + $0x7c4] sm:$0xf] %vm12206, %v12178
      %12705 = vst.msk [vmem:[%s202 + $0x7c8] sm:$0xf] %vm12206, %v12179
      %12706 = vst.msk [vmem:[%s202 + $0x7cc] sm:$0xf] %vm12206, %v12180
      %12707 = vst.msk [vmem:[%s202 + $0x7d0] sm:$0xf] %vm12206, %v12181
      %12708 = vst.msk [vmem:[%s202 + $0x7d4] sm:$0xf] %vm12206, %v12182
      %12709 = vst.msk [vmem:[%s202 + $0x7d8] sm:$0xf] %vm12206, %v12183
      %12710 = vst.msk [vmem:[%s202 + $0x7dc] sm:$0xf] %vm12206, %v12184
      %12711 = vst.msk [vmem:[%s202 + $0x7e0] sm:$0xf] %vm12206, %v12185
      %12712 = vst.msk [vmem:[%s202 + $0x7e4] sm:$0xf] %vm12206, %v12186
      %12713 = vst.msk [vmem:[%s202 + $0x7e8] sm:$0xf] %vm12206, %v12187
      %12714 = vst.msk [vmem:[%s202 + $0x7ec] sm:$0xf] %vm12206, %v12188
      %12715 = vst.msk [vmem:[%s202 + $0x7f0] sm:$0xf] %vm12206, %v12189
      %12716 = vst.msk [vmem:[%s202 + $0x7f4] sm:$0xf] %vm12206, %v12190
      %12717 = vst.msk [vmem:[%s202 + $0x7f8] sm:$0xf] %vm12206, %v12191
      %12718 = vst.msk [vmem:[%s202 + $0x7fc] sm:$0xf] %vm12206, %v12192
      %12719 = vst.msk [vmem:[%s202 + $0x800] sm:$0xf] %vm12206, %v12193
      %12720 = vst.msk [vmem:[%s202 + $0x804] sm:$0xf] %vm12206, %v12194
      %12721 = vst.msk [vmem:[%s202 + $0x808] sm:$0xf] %vm12206, %v12195
      %12722 = vst.msk [vmem:[%s202 + $0x80c] sm:$0xf] %vm12206, %v12196
      %12723 = vst.msk [vmem:[%s202 + $0x810] sm:$0xf] %vm12206, %v12197
      %12724 = vst.msk [vmem:[%s202 + $0x814] sm:$0xf] %vm12206, %v12198
      %12725 = vst.msk [vmem:[%s202 + $0x818] sm:$0xf] %vm12206, %v12199
      %12726 = vst.msk [vmem:[%s202 + $0x81c] sm:$0xf] %vm12206, %v12200
      %12727 = vst.msk [vmem:[%s202 + $0x820] sm:$0xf] %vm12206, %v12201
      %12728 = vst.msk [vmem:[%s202 + $0x824] sm:$0xf] %vm12206, %v12202
      %12729 = vst.msk [vmem:[%s202 + $0x828] sm:$0xf] %vm12206, %v12203
      %12730 = vst.msk [vmem:[%s202 + $0x82c] sm:$0xf] %vm12206, %v12204
      %12731 = vst.msk [vmem:[%s202 + $0x830] sm:$0xf] %vm12206, %v12205
      %s12732 = smul.u32 525, %s15
      %p12733 = scmp.lt.s32.totalorder %s12732, 1049
      %s12734 = scalar_select %p12733, %s12732, 1049
      %s12735 = smul.addr %s12734, 4
      %s12736 = scalar_lea.vmem %s4, %s12735
      // Predicated region
      $region37: #{tpu_custom_call.1} parent=35 // pred_check
        %p12737 = pneg %p122
      $region38: #{tpu_custom_call.1} parent=35 // pred_check_branch
        %12739 = sbr.rel (%p12737) target = $region40
      $region39: #{tpu_custom_call.1} parent=35 // pred_region
        %s12740 = smul.u32 525, %s15
      $region40: #{tpu_custom_call.1} parent=35 // pred_fallthru
        _
    $region36: #{tpu_custom_call.1} parent=5 // pred_fallthru
      _
    %p12741 = scmp.le.s32.totalorder 2, %s10
    // Predicated region
    $region41: #{tpu_custom_call.1} parent=5 // pred_check
      %p12742 = pneg %p12741
    $region42: #{tpu_custom_call.1} parent=5 // pred_check_branch
      %12744 = sbr.rel (%p12742) target = $region44
    $region43: #{tpu_custom_call.1} parent=5 // pred_region
      %s12745 = ssub.s32 %s10, 2
      // Predicated region
      $region45: #{tpu_custom_call.1} parent=43 // pred_check
        %p12746 = pneg %p128
      $region46: #{tpu_custom_call.1} parent=43 // pred_check_branch
        %12748 = sbr.rel (%p12746) target = $region48
      $region47: #{tpu_custom_call.1} parent=43 // pred_region
        %s12749 = smul.u32 525, %s16
        %p12750 = scmp.lt.s32.totalorder %s12749, 1049
        %s12751 = scalar_select %p12750, %s12749, 1049
        %s12752 = smul.addr %s12751, 4
        %s12753 = scalar_lea.vmem %s4, %s12752
      $region48: #{tpu_custom_call.1} parent=43 // pred_fallthru
        _
    $region44: #{tpu_custom_call.1} parent=5 // pred_fallthru
      _
  $region6: #{tpu_custom_call.1} parent=0 // loop_footer
    %s14 = sadd.s32 1, %s10
  $region7: #{tpu_custom_call.1} parent=0 // loop_footer_branch
    %9 = sbr.rel target = $region3
  $region8: #{tpu_custom_call.1} parent=0 // loop_exit
    _

</llo_original>
